<compile_context>
chip_gen: v7x
topology: tpu7x:2x2x1
jax: 0.10.0
libtpu: 0.0.40
codegen_flags: <defaults>
</compile_context>

<pallas_src>
import functools

import jax
import jax.numpy as jnp
from jax.experimental import pallas as pl
from jax.experimental.pallas import tpu as pltpu

_COMPUTE_DTYPE = jnp.bfloat16  # matmul operands / activations (f32 accumulate)


# ---------------------------------------------------------------------------
# Pallas kernels
# ---------------------------------------------------------------------------

def _fused_matmul_kernel(x_ref, w_ref, b_ref, o_ref, *, relu):
    # out = act(x @ w + bias)   (frozen-BN scale already folded into w, bias)
    acc = jnp.dot(x_ref[...], w_ref[...], preferred_element_type=jnp.float32)
    acc = acc + b_ref[...]
    if relu:
        acc = jnp.maximum(acc, 0.0)
    o_ref[...] = acc.astype(o_ref.dtype)


def _dual_matmul_kernel(x_ref, w_ref, s_ref, wd_ref, b_ref, o_ref, *, relu):
    # out = act(x @ w + s @ wd + bias)
    # Bottleneck expand 1x1 conv fused with the downsample-shortcut conv,
    # the residual add and the block ReLU (both BN affines folded in).
    acc = jnp.dot(x_ref[...], w_ref[...], preferred_element_type=jnp.float32)
    acc = acc + jnp.dot(s_ref[...], wd_ref[...],
                        preferred_element_type=jnp.float32)
    acc = acc + b_ref[...]
    if relu:
        acc = jnp.maximum(acc, 0.0)
    o_ref[...] = acc.astype(o_ref.dtype)


def _max_reduce_kernel(*refs):
    # Elementwise max over N tap inputs (pure VPU, no cross-lane reduce).
    out_ref = refs[-1]
    acc = refs[0][...]
    for r in refs[1:-1]:
        acc = jnp.maximum(acc, r[...])
    out_ref[...] = acc


# ---------------------------------------------------------------------------
# Tiling helpers
# ---------------------------------------------------------------------------

def _choose_tm(m8):
    """m8 is the row count padded to a multiple of 8."""
    if m8 > 512:
        return 512            # fat tiles: few grid steps, grid >= 2
    if m8 == 512:
        return 256            # expose 2 parallel steps for v7x megacore
    return m8                 # single full block (tiny layers)


def _pad_rows(a, m_pad, value=0):
    m = a.shape[0]
    if m_pad == m:
        return a
    return jnp.pad(a, ((0, m_pad - m),) + ((0, 0),) * (a.ndim - 1),
                   constant_values=value)


def _row_tiling(m):
    m8 = pl.cdiv(m, 8) * 8
    tm = _choose_tm(m8)
    m_pad = pl.cdiv(m8, tm) * tm
    return tm, m_pad, m_pad // tm


# ---------------------------------------------------------------------------
# Pallas wrappers
# ---------------------------------------------------------------------------

def matmul_bias_act(x2d, w2d, bias, relu=True):
    """x2d: (M, K), w2d: (K, C) -> (M, C) with folded-BN bias (+ReLU)."""
    m, k = x2d.shape
    _, c = w2d.shape
    tm, m_pad, grid = _row_tiling(m)

    x2d = _pad_rows(x2d.astype(_COMPUTE_DTYPE), m_pad)
    w2d = w2d.astype(_COMPUTE_DTYPE)
    bias = bias.reshape(1, c).astype(jnp.float32)

    out = pl.pallas_call(
        functools.partial(_fused_matmul_kernel, relu=relu),
        out_shape=jax.ShapeDtypeStruct((m_pad, c), _COMPUTE_DTYPE),
        grid=(grid,),
        in_specs=[
            pl.BlockSpec((tm, k), lambda i: (i, 0)),
            pl.BlockSpec((k, c), lambda i: (0, 0)),
            pl.BlockSpec((1, c), lambda i: (0, 0)),
        ],
        out_specs=pl.BlockSpec((tm, c), lambda i: (i, 0)),
        compiler_params=pltpu.CompilerParams(dimension_semantics=("parallel",)),
    )(x2d, w2d, bias)
    return out[:m] if m_pad != m else out


def dual_matmul_bias_act(x2d, w2d, s2d, wd2d, bias, relu=True):
    """out = act(x2d @ w2d + s2d @ wd2d + bias); expand+shortcut fusion."""
    m, k = x2d.shape
    _, c = w2d.shape
    kd = s2d.shape[1]
    tm, m_pad, grid = _row_tiling(m)

    x2d = _pad_rows(x2d.astype(_COMPUTE_DTYPE), m_pad)
    s2d = _pad_rows(s2d.astype(_COMPUTE_DTYPE), m_pad)
    w2d = w2d.astype(_COMPUTE_DTYPE)
    wd2d = wd2d.astype(_COMPUTE_DTYPE)
    bias = bias.reshape(1, c).astype(jnp.float32)

    out = pl.pallas_call(
        functools.partial(_dual_matmul_kernel, relu=relu),
        out_shape=jax.ShapeDtypeStruct((m_pad, c), _COMPUTE_DTYPE),
        grid=(grid,),
        in_specs=[
            pl.BlockSpec((tm, k), lambda i: (i, 0)),
            pl.BlockSpec((k, c), lambda i: (0, 0)),
            pl.BlockSpec((tm, kd), lambda i: (i, 0)),
            pl.BlockSpec((kd, c), lambda i: (0, 0)),
            pl.BlockSpec((1, c), lambda i: (0, 0)),
        ],
        out_specs=pl.BlockSpec((tm, c), lambda i: (i, 0)),
        compiler_params=pltpu.CompilerParams(dimension_semantics=("parallel",)),
    )(x2d, w2d, s2d, wd2d, bias)
    return out[:m] if m_pad != m else out


def _im2col(x, kh, kw, stride, padding, ho, wo):
    """NHWC -> (N*Ho*Wo, kh*kw*Cin) tap columns (row-major tap order)."""
    n, _, _, cin = x.shape
    xp = jnp.pad(x, ((0, 0), (padding, padding), (padding, padding), (0, 0))) \
        if padding > 0 else x
    taps = []
    for dy in range(kh):
        for dx in range(kw):
            taps.append(xp[:, dy:dy + stride * (ho - 1) + 1:stride,
                           dx:dx + stride * (wo - 1) + 1:stride, :])
    return jnp.concatenate(taps, axis=-1).reshape(n * ho * wo, kh * kw * cin)


def conv2d_bias_act(x, w, bias, stride=1, padding=None, relu=True):
    """x: NHWC, w: dense HWIO (grouped convs already expanded block-diagonally).

    Conv -> folded frozen-BN affine -> (ReLU), fused in one Pallas matmul.
    1x1/stride-1 convs need no im2col (free reshape).
    """
    n, h, wd, cin = x.shape
    kh, kw, _, cout = w.shape
    if padding is None:
        padding = kh // 2
    ho = (h + 2 * padding - kh) // stride + 1
    wo = (wd + 2 * padding - kw) // stride + 1
    m = n * ho * wo

    if kh == 1 and kw == 1 and stride == 1 and padding == 0:
        cols = x.reshape(m, cin)
    else:
        cols = _im2col(x, kh, kw, stride, padding, ho, wo)

    out = matmul_bias_act(cols, w.reshape(kh * kw * cin, cout), bias, relu=relu)
    return out.reshape(n, ho, wo, cout)


def expand_shortcut_fused(y, identity, expand_p, down_p):
    """Fused: expand 1x1 conv + (avgpool+)1x1 shortcut conv + res add + ReLU."""
    n, ho, wo, mid = y.shape
    m = n * ho * wo
    we = expand_p["w"].reshape(mid, -1)
    cout = we.shape[1]

    kh = down_p["w"].shape[0]
    if down_p["stride"] == 1 and kh == 1:
        s2d = identity.reshape(m, identity.shape[-1])
    else:
        s2d = _im2col(identity, kh, kh, down_p["stride"], down_p["padding"],
                      ho, wo)
    wdn = down_p["w"].reshape(-1, cout)
    bias = expand_p["bias"] + down_p["bias"]

    out = dual_matmul_bias_act(y.reshape(m, mid), we, s2d, wdn, bias, relu=True)
    return out.reshape(n, ho, wo, cout)


def maxpool2d_3x3_s2(x):
    """x: NHWC -> NHWC, 3x3/stride-2/pad-1 max pool via elementwise tap max."""
    n, h, w, c = x.shape
    ho = (h + 2 - 3) // 2 + 1
    wo = (w + 2 - 3) // 2 + 1
    xp = jnp.pad(x, ((0, 0), (1, 1), (1, 1), (0, 0)),
                 constant_values=-jnp.inf)
    taps = [xp[:, dy:dy + 2 * (ho - 1) + 1:2, dx:dx + 2 * (wo - 1) + 1:2, :]
            for dy in range(3) for dx in range(3)]

    m = n * ho * wo
    total = m * c
    if total % 128 == 0:                 # lane-dense view (elementwise op -> any
        rows, lanes = total // 128, 128  # consistent reshape is valid)
    else:
        rows, lanes = m, c
    taps = [t.reshape(rows, lanes) for t in taps]

    tm, m_pad, grid = _row_tiling(rows)
    if m_pad != rows:
        taps = [_pad_rows(t, m_pad, value=-jnp.inf) for t in taps]

    out = pl.pallas_call(
        _max_reduce_kernel,
        out_shape=jax.ShapeDtypeStruct((m_pad, lanes), x.dtype),
        grid=(grid,),
        in_specs=[pl.BlockSpec((tm, lanes), lambda i: (i, 0)) for _ in taps],
        out_specs=pl.BlockSpec((tm, lanes), lambda i: (i, 0)),
        compiler_params=pltpu.CompilerParams(dimension_semantics=("parallel",)),
    )(*taps)
    if m_pad != rows:
        out = out[:rows]
    return out.reshape(n, ho, wo, c)


# ---------------------------------------------------------------------------
# Deterministic parameter init (conv weight with frozen BN folded in)
# ---------------------------------------------------------------------------

def init_conv_bn(key, kh, kw, cin_g, cout, groups=1):
    k1, k2, k3, k4, k5 = jax.random.split(key, 5)
    fan_in = kh * kw * cin_g
    w = jax.random.normal(k1, (kh, kw, cin_g, cout), jnp.float32) * jnp.sqrt(2.0 / fan_in)
    gamma = 1.0 + 0.1 * jax.random.normal(k2, (cout,), jnp.float32)
    beta = 0.1 * jax.random.normal(k3, (cout,), jnp.float32)
    running_mean = 0.1 * jax.random.normal(k4, (cout,), jnp.float32)
    running_var = 1.0 + 0.1 * jax.random.uniform(k5, (cout,), jnp.float32)
    eps = 1e-5
    scale = gamma / jnp.sqrt(running_var + eps)     # frozen BN (eval) folded
    bias = beta - running_mean * scale
    w = w * scale                                   # fold scale into weights

    if groups > 1:
        # Expand grouped conv to a dense block-diagonal weight so the whole
        # grouped conv is ONE lane-dense matmul instead of `groups` narrow ones.
        cin = groups * cin_g
        cg_out = cout // groups
        wd = jnp.zeros((kh, kw, cin, cout), jnp.float32)
        for g in range(groups):
            wd = wd.at[:, :, g * cin_g:(g + 1) * cin_g,
                       g * cg_out:(g + 1) * cg_out].set(
                w[..., g * cg_out:(g + 1) * cg_out])
        w = wd
    return {"w": w, "bias": bias}


def make_down_params(p1x1, stride):
    """ResNet-D shortcut: avgpool(2x2,s2) + 1x1 conv + BN fused into one conv."""
    if stride == 1:
        return {"w": p1x1["w"], "bias": p1x1["bias"], "stride": 1, "padding": 0}
    w = jnp.tile(p1x1["w"] / 4.0, (2, 2, 1, 1))     # 2x2 s2 conv == avgpool+1x1
    return {"w": w, "bias": p1x1["bias"], "stride": 2, "padding": 0}


def init_encoder_params(key, in_ch=3, stem_mid=8,
                        filters=(16, 32, 64, 128, 256), groups=4):
    keys = iter(jax.random.split(key, 32))
    params = {"filters": list(filters)}
    # ResNet-D deep stem: 3x 3x3 convs (first stride 2)
    params["stem1"] = init_conv_bn(next(keys), 3, 3, in_ch, stem_mid)
    params["stem2"] = init_conv_bn(next(keys), 3, 3, stem_mid, stem_mid)
    params["stem3"] = init_conv_bn(next(keys), 3, 3, stem_mid, filters[0])
    stages = []
    in_c = filters[0]
    for si, out_c in enumerate(filters[1:]):
        mid = out_c // 2
        stride = 1 if si == 0 else 2
        stages.append({
            "reduce": init_conv_bn(next(keys), 1, 1, in_c, mid),
            "grouped": init_conv_bn(next(keys), 3, 3, mid // groups, mid,
                                    groups=groups),
            "expand": init_conv_bn(next(keys), 1, 1, mid, out_c),
            "down": make_down_params(init_conv_bn(next(keys), 1, 1, in_c, out_c),
                                     stride),
        })
        in_c = out_c
    params["stages"] = stages
    return params


# ---------------------------------------------------------------------------
# Encoder forward (returns list of multi-scale features, NCHW like timm/PyTorch)
# ---------------------------------------------------------------------------

def encoder1_forward(params, x_nchw):
    x = jnp.transpose(x_nchw, (0, 2, 3, 1)).astype(_COMPUTE_DTYPE)  # NCHW -> NHWC

    # deep stem (stride 2)
    x = conv2d_bias_act(x, params["stem1"]["w"], params["stem1"]["bias"], stride=2)
    x = conv2d_bias_act(x, params["stem2"]["w"], params["stem2"]["bias"], stride=1)
    x = conv2d_bias_act(x, params["stem3"]["w"], params["stem3"]["bias"], stride=1)
    feats = [x]                                   # feature 0: stride 2

    # maxpool 3x3 s2
    x = maxpool2d_3x3_s2(x)

    # 4 ResNeXt-D bottleneck stages (1x1 reduce, grouped 3x3, fused expand+shortcut)
    for i, stage in enumerate(params["stages"]):
        stride = 1 if i == 0 else 2
        identity = x
        y = conv2d_bias_act(x, stage["reduce"]["w"], stage["reduce"]["bias"],
                            stride=1, padding=0)
        y = conv2d_bias_act(y, stage["grouped"]["w"], stage["grouped"]["bias"],
                            stride=stride, padding=1)
        # expand 1x1 + shortcut conv + BN + residual add + ReLU in ONE kernel
        x = expand_shortcut_fused(y, identity, stage["expand"], stage["down"])
        feats.append(x)

    # back to NCHW f32, matching PyTorch list-of-features output
    return [jnp.transpose(f, (0, 3, 1, 2)).astype(jnp.float32) for f in feats]


# ---------------------------------------------------------------------------
# main
# ---------------------------------------------------------------------------

if __name__ == "__main__":
    key = jax.random.PRNGKey(0)
    pkey, xkey = jax.random.split(key)
    params = init_encoder_params(pkey)

    x = jax.random.normal(xkey, (2, 3, 64, 64), jnp.float32)  # NCHW, like PyTorch

    fwd = jax.jit(lambda inp: encoder1_forward(params, inp))
    feats = jax.block_until_ready(fwd(x))

    expected = [(2, 16, 32, 32), (2, 32, 16, 16), (2, 64, 8, 8),
                (2, 128, 4, 4), (2, 256, 2, 2)]
    assert [tuple(f.shape) for f in feats] == expected
    assert all(bool(jnp.all(jnp.isfinite(f))) for f in feats)
    print("KERNEL_OK")
</pallas_src>

<mosaic_0001>
module attributes {stable_mosaic.version = 11 : i64} {
  func.func @_fused_matmul_kernel(%arg0: i32, %arg1: memref<512x27xbf16, #tpu.memory_space<vmem>>, %arg2: memref<27x8xbf16, #tpu.memory_space<vmem>>, %arg3: memref<1x8xf32, #tpu.memory_space<vmem>>, %arg4: memref<512x8xbf16, #tpu.memory_space<vmem>>) attributes {dimension_semantics = [#tpu.dimension_semantics<parallel>], iteration_bounds = array<i64: 4>, scalar_prefetch = 0 : i64, scratch_operands = 0 : i64, tpu.core_type = #tpu.core_type<tc>, window_params = [{transform_indices = @transform_0, window_bounds = array<i64: 512, 27>}, {pipeline_mode = #tpu.pipeline_mode<synchronous>, transform_indices = @transform_1, window_bounds = array<i64: 27, 8>}, {pipeline_mode = #tpu.pipeline_mode<synchronous>, transform_indices = @transform_2, window_bounds = array<i64: 1, 8>}, {transform_indices = @transform_3, window_bounds = array<i64: 512, 8>}]} {
    %c0 = arith.constant 0 : index
    %c0_0 = arith.constant 0 : index
    %0 = vector.load %arg1[%c0, %c0_0] : memref<512x27xbf16, #tpu.memory_space<vmem>>, vector<512x27xbf16>
    %c0_1 = arith.constant 0 : index
    %c0_2 = arith.constant 0 : index
    %1 = vector.load %arg2[%c0_1, %c0_2] : memref<27x8xbf16, #tpu.memory_space<vmem>>, vector<27x8xbf16>
    %cst = arith.constant dense<0.000000e+00> : vector<512x8xf32>
    %2 = tpu.matmul %0, %1, %cst {dimension_numbers = #tpu.dot_dimension_numbers<[1], [0], [0], [1], [0, 0, 1, 1], [], []>} : vector<512x27xbf16>, vector<27x8xbf16>, vector<512x8xf32> -> vector<512x8xf32>
    %c0_3 = arith.constant 0 : index
    %c0_4 = arith.constant 0 : index
    %3 = vector.load %arg3[%c0_3, %c0_4] : memref<1x8xf32, #tpu.memory_space<vmem>>, vector<1x8xf32>
    %4 = vector.broadcast %3 : vector<1x8xf32> to vector<512x8xf32>
    %5 = arith.addf %2, %4 : vector<512x8xf32>
    %cst_5 = arith.constant 0.000000e+00 : f32
    %6 = vector.broadcast %cst_5 : f32 to vector<512x8xf32>
    %7 = arith.maximumf %5, %6 : vector<512x8xf32>
    %8 = arith.truncf %7 : vector<512x8xf32> to vector<512x8xbf16>
    %c0_6 = arith.constant 0 : index
    %c0_7 = arith.constant 0 : index
    %9 = vector.load %arg4[%c0_6, %c0_7] : memref<512x8xbf16, #tpu.memory_space<vmem>>, vector<512x8xbf16>
    tpu.vector_store %arg4[%c0_6, %c0_7], %8 {strides = array<i32>} : memref<512x8xbf16, #tpu.memory_space<vmem>>, vector<512x8xbf16>,
    return
  }
  func.func @transform_0(%arg0: i32) -> (i32, i32) {
    %c0_i32 = arith.constant 0 : i32
    %c0_i32_0 = arith.constant 0 : i32
    return %arg0, %c0_i32 : i32, i32
  }
  func.func @transform_1(%arg0: i32) -> (i32, i32) {
    %c0_i32 = arith.constant 0 : i32
    %c0_i32_0 = arith.constant 0 : i32
    %c0_i32_1 = arith.constant 0 : i32
    return %c0_i32, %c0_i32_0 : i32, i32
  }
  func.func @transform_2(%arg0: i32) -> (i32, i32) {
    %c0_i32 = arith.constant 0 : i32
    %c0_i32_0 = arith.constant 0 : i32
    %c0_i32_1 = arith.constant 0 : i32
    return %c0_i32, %c0_i32_0 : i32, i32
  }
  func.func @transform_3(%arg0: i32) -> (i32, i32) {
    %c0_i32 = arith.constant 0 : i32
    %c0_i32_0 = arith.constant 0 : i32
    return %arg0, %c0_i32 : i32, i32
  }
}

module attributes {stable_mosaic.version = 11 : i64} {
  func.func @_fused_matmul_kernel(%arg0: i32, %arg1: memref<512x72xbf16, #tpu.memory_space<vmem>>, %arg2: memref<72x8xbf16, #tpu.memory_space<vmem>>, %arg3: memref<1x8xf32, #tpu.memory_space<vmem>>, %arg4: memref<512x8xbf16, #tpu.memory_space<vmem>>) attributes {dimension_semantics = [#tpu.dimension_semantics<parallel>], iteration_bounds = array<i64: 4>, scalar_prefetch = 0 : i64, scratch_operands = 0 : i64, tpu.core_type = #tpu.core_type<tc>, window_params = [{transform_indices = @transform_0, window_bounds = array<i64: 512, 72>}, {pipeline_mode = #tpu.pipeline_mode<synchronous>, transform_indices = @transform_1, window_bounds = array<i64: 72, 8>}, {pipeline_mode = #tpu.pipeline_mode<synchronous>, transform_indices = @transform_2, window_bounds = array<i64: 1, 8>}, {transform_indices = @transform_3, window_bounds = array<i64: 512, 8>}]} {
    %c0 = arith.constant 0 : index
    %c0_0 = arith.constant 0 : index
    %0 = vector.load %arg1[%c0, %c0_0] : memref<512x72xbf16, #tpu.memory_space<vmem>>, vector<512x72xbf16>
    %c0_1 = arith.constant 0 : index
    %c0_2 = arith.constant 0 : index
    %1 = vector.load %arg2[%c0_1, %c0_2] : memref<72x8xbf16, #tpu.memory_space<vmem>>, vector<72x8xbf16>
    %cst = arith.constant dense<0.000000e+00> : vector<512x8xf32>
    %2 = tpu.matmul %0, %1, %cst {dimension_numbers = #tpu.dot_dimension_numbers<[1], [0], [0], [1], [0, 0, 1, 1], [], []>} : vector<512x72xbf16>, vector<72x8xbf16>, vector<512x8xf32> -> vector<512x8xf32>
    %c0_3 = arith.constant 0 : index
    %c0_4 = arith.constant 0 : index
    %3 = vector.load %arg3[%c0_3, %c0_4] : memref<1x8xf32, #tpu.memory_space<vmem>>, vector<1x8xf32>
    %4 = vector.broadcast %3 : vector<1x8xf32> to vector<512x8xf32>
    %5 = arith.addf %2, %4 : vector<512x8xf32>
    %cst_5 = arith.constant 0.000000e+00 : f32
    %6 = vector.broadcast %cst_5 : f32 to vector<512x8xf32>
    %7 = arith.maximumf %5, %6 : vector<512x8xf32>
    %8 = arith.truncf %7 : vector<512x8xf32> to vector<512x8xbf16>
    %c0_6 = arith.constant 0 : index
    %c0_7 = arith.constant 0 : index
    %9 = vector.load %arg4[%c0_6, %c0_7] : memref<512x8xbf16, #tpu.memory_space<vmem>>, vector<512x8xbf16>
    tpu.vector_store %arg4[%c0_6, %c0_7], %8 {strides = array<i32>} : memref<512x8xbf16, #tpu.memory_space<vmem>>, vector<512x8xbf16>,
    return
  }
  func.func @transform_0(%arg0: i32) -> (i32, i32) {
    %c0_i32 = arith.constant 0 : i32
    %c0_i32_0 = arith.constant 0 : i32
    return %arg0, %c0_i32 : i32, i32
  }
  func.func @transform_1(%arg0: i32) -> (i32, i32) {
    %c0_i32 = arith.constant 0 : i32
    %c0_i32_0 = arith.constant 0 : i32
    %c0_i32_1 = arith.constant 0 : i32
    return %c0_i32, %c0_i32_0 : i32, i32
  }
  func.func @transform_2(%arg0: i32) -> (i32, i32) {
    %c0_i32 = arith.constant 0 : i32
    %c0_i32_0 = arith.constant 0 : i32
    %c0_i32_1 = arith.constant 0 : i32
    return %c0_i32, %c0_i32_0 : i32, i32
  }
  func.func @transform_3(%arg0: i32) -> (i32, i32) {
    %c0_i32 = arith.constant 0 : i32
    %c0_i32_0 = arith.constant 0 : i32
    return %arg0, %c0_i32 : i32, i32
  }
}

module attributes {stable_mosaic.version = 11 : i64} {
  func.func @_fused_matmul_kernel(%arg0: i32, %arg1: memref<512x72xbf16, #tpu.memory_space<vmem>>, %arg2: memref<72x16xbf16, #tpu.memory_space<vmem>>, %arg3: memref<1x16xf32, #tpu.memory_space<vmem>>, %arg4: memref<512x16xbf16, #tpu.memory_space<vmem>>) attributes {dimension_semantics = [#tpu.dimension_semantics<parallel>], iteration_bounds = array<i64: 4>, scalar_prefetch = 0 : i64, scratch_operands = 0 : i64, tpu.core_type = #tpu.core_type<tc>, window_params = [{transform_indices = @transform_0, window_bounds = array<i64: 512, 72>}, {pipeline_mode = #tpu.pipeline_mode<synchronous>, transform_indices = @transform_1, window_bounds = array<i64: 72, 16>}, {pipeline_mode = #tpu.pipeline_mode<synchronous>, transform_indices = @transform_2, window_bounds = array<i64: 1, 16>}, {transform_indices = @transform_3, window_bounds = array<i64: 512, 16>}]} {
    %c0 = arith.constant 0 : index
    %c0_0 = arith.constant 0 : index
    %0 = vector.load %arg1[%c0, %c0_0] : memref<512x72xbf16, #tpu.memory_space<vmem>>, vector<512x72xbf16>
    %c0_1 = arith.constant 0 : index
    %c0_2 = arith.constant 0 : index
    %1 = vector.load %arg2[%c0_1, %c0_2] : memref<72x16xbf16, #tpu.memory_space<vmem>>, vector<72x16xbf16>
    %cst = arith.constant dense<0.000000e+00> : vector<512x16xf32>
    %2 = tpu.matmul %0, %1, %cst {dimension_numbers = #tpu.dot_dimension_numbers<[1], [0], [0], [1], [0, 0, 1, 1], [], []>} : vector<512x72xbf16>, vector<72x16xbf16>, vector<512x16xf32> -> vector<512x16xf32>
    %c0_3 = arith.constant 0 : index
    %c0_4 = arith.constant 0 : index
    %3 = vector.load %arg3[%c0_3, %c0_4] : memref<1x16xf32, #tpu.memory_space<vmem>>, vector<1x16xf32>
    %4 = vector.broadcast %3 : vector<1x16xf32> to vector<512x16xf32>
    %5 = arith.addf %2, %4 : vector<512x16xf32>
    %cst_5 = arith.constant 0.000000e+00 : f32
    %6 = vector.broadcast %cst_5 : f32 to vector<512x16xf32>
    %7 = arith.maximumf %5, %6 : vector<512x16xf32>
    %8 = arith.truncf %7 : vector<512x16xf32> to vector<512x16xbf16>
    %c0_6 = arith.constant 0 : index
    %c0_7 = arith.constant 0 : index
    %9 = vector.load %arg4[%c0_6, %c0_7] : memref<512x16xbf16, #tpu.memory_space<vmem>>, vector<512x16xbf16>
    tpu.vector_store %arg4[%c0_6, %c0_7], %8 {strides = array<i32>} : memref<512x16xbf16, #tpu.memory_space<vmem>>, vector<512x16xbf16>,
    return
  }
  func.func @transform_0(%arg0: i32) -> (i32, i32) {
    %c0_i32 = arith.constant 0 : i32
    %c0_i32_0 = arith.constant 0 : i32
    return %arg0, %c0_i32 : i32, i32
  }
  func.func @transform_1(%arg0: i32) -> (i32, i32) {
    %c0_i32 = arith.constant 0 : i32
    %c0_i32_0 = arith.constant 0 : i32
    %c0_i32_1 = arith.constant 0 : i32
    return %c0_i32, %c0_i32_0 : i32, i32
  }
  func.func @transform_2(%arg0: i32) -> (i32, i32) {
    %c0_i32 = arith.constant 0 : i32
    %c0_i32_0 = arith.constant 0 : i32
    %c0_i32_1 = arith.constant 0 : i32
    return %c0_i32, %c0_i32_0 : i32, i32
  }
  func.func @transform_3(%arg0: i32) -> (i32, i32) {
    %c0_i32 = arith.constant 0 : i32
    %c0_i32_0 = arith.constant 0 : i32
    return %arg0, %c0_i32 : i32, i32
  }
}

module attributes {stable_mosaic.version = 11 : i64} {
  func.func @_max_reduce_kernel(%arg0: i32, %arg1: memref<64x128xbf16, #tpu.memory_space<vmem>>, %arg2: memref<64x128xbf16, #tpu.memory_space<vmem>>, %arg3: memref<64x128xbf16, #tpu.memory_space<vmem>>, %arg4: memref<64x128xbf16, #tpu.memory_space<vmem>>, %arg5: memref<64x128xbf16, #tpu.memory_space<vmem>>, %arg6: memref<64x128xbf16, #tpu.memory_space<vmem>>, %arg7: memref<64x128xbf16, #tpu.memory_space<vmem>>, %arg8: memref<64x128xbf16, #tpu.memory_space<vmem>>, %arg9: memref<64x128xbf16, #tpu.memory_space<vmem>>, %arg10: memref<64x128xbf16, #tpu.memory_space<vmem>>) attributes {dimension_semantics = [#tpu.dimension_semantics<parallel>], iteration_bounds = array<i64: 1>, scalar_prefetch = 0 : i64, scratch_operands = 0 : i64, tpu.core_type = #tpu.core_type<tc>, window_params = [{transform_indices = @transform_0, window_bounds = array<i64: 64, 128>}, {transform_indices = @transform_1, window_bounds = array<i64: 64, 128>}, {transform_indices = @transform_2, window_bounds = array<i64: 64, 128>}, {transform_indices = @transform_3, window_bounds = array<i64: 64, 128>}, {transform_indices = @transform_4, window_bounds = array<i64: 64, 128>}, {transform_indices = @transform_5, window_bounds = array<i64: 64, 128>}, {transform_indices = @transform_6, window_bounds = array<i64: 64, 128>}, {transform_indices = @transform_7, window_bounds = array<i64: 64, 128>}, {transform_indices = @transform_8, window_bounds = array<i64: 64, 128>}, {transform_indices = @transform_9, window_bounds = array<i64: 64, 128>}]} {
    %c0 = arith.constant 0 : index
    %c0_0 = arith.constant 0 : index
    %0 = vector.load %arg1[%c0, %c0_0] : memref<64x128xbf16, #tpu.memory_space<vmem>>, vector<64x128xbf16>
    %c0_1 = arith.constant 0 : index
    %c0_2 = arith.constant 0 : index
    %1 = vector.load %arg2[%c0_1, %c0_2] : memref<64x128xbf16, #tpu.memory_space<vmem>>, vector<64x128xbf16>
    %2 = arith.maximumf %0, %1 : vector<64x128xbf16>
    %c0_3 = arith.constant 0 : index
    %c0_4 = arith.constant 0 : index
    %3 = vector.load %arg3[%c0_3, %c0_4] : memref<64x128xbf16, #tpu.memory_space<vmem>>, vector<64x128xbf16>
    %4 = arith.maximumf %2, %3 : vector<64x128xbf16>
    %c0_5 = arith.constant 0 : index
    %c0_6 = arith.constant 0 : index
    %5 = vector.load %arg4[%c0_5, %c0_6] : memref<64x128xbf16, #tpu.memory_space<vmem>>, vector<64x128xbf16>
    %6 = arith.maximumf %4, %5 : vector<64x128xbf16>
    %c0_7 = arith.constant 0 : index
    %c0_8 = arith.constant 0 : index
    %7 = vector.load %arg5[%c0_7, %c0_8] : memref<64x128xbf16, #tpu.memory_space<vmem>>, vector<64x128xbf16>
    %8 = arith.maximumf %6, %7 : vector<64x128xbf16>
    %c0_9 = arith.constant 0 : index
    %c0_10 = arith.constant 0 : index
    %9 = vector.load %arg6[%c0_9, %c0_10] : memref<64x128xbf16, #tpu.memory_space<vmem>>, vector<64x128xbf16>
    %10 = arith.maximumf %8, %9 : vector<64x128xbf16>
    %c0_11 = arith.constant 0 : index
    %c0_12 = arith.constant 0 : index
    %11 = vector.load %arg7[%c0_11, %c0_12] : memref<64x128xbf16, #tpu.memory_space<vmem>>, vector<64x128xbf16>
    %12 = arith.maximumf %10, %11 : vector<64x128xbf16>
    %c0_13 = arith.constant 0 : index
    %c0_14 = arith.constant 0 : index
    %13 = vector.load %arg8[%c0_13, %c0_14] : memref<64x128xbf16, #tpu.memory_space<vmem>>, vector<64x128xbf16>
    %14 = arith.maximumf %12, %13 : vector<64x128xbf16>
    %c0_15 = arith.constant 0 : index
    %c0_16 = arith.constant 0 : index
    %15 = vector.load %arg9[%c0_15, %c0_16] : memref<64x128xbf16, #tpu.memory_space<vmem>>, vector<64x128xbf16>
    %16 = arith.maximumf %14, %15 : vector<64x128xbf16>
    %c0_17 = arith.constant 0 : index
    %c0_18 = arith.constant 0 : index
    %17 = vector.load %arg10[%c0_17, %c0_18] : memref<64x128xbf16, #tpu.memory_space<vmem>>, vector<64x128xbf16>
    tpu.vector_store %arg10[%c0_17, %c0_18], %16 {strides = array<i32>} : memref<64x128xbf16, #tpu.memory_space<vmem>>, vector<64x128xbf16>,
    return
  }
  func.func @transform_0(%arg0: i32) -> (i32, i32) {
    %c0_i32 = arith.constant 0 : i32
    %c0_i32_0 = arith.constant 0 : i32
    return %arg0, %c0_i32 : i32, i32
  }
  func.func @transform_1(%arg0: i32) -> (i32, i32) {
    %c0_i32 = arith.constant 0 : i32
    %c0_i32_0 = arith.constant 0 : i32
    return %arg0, %c0_i32 : i32, i32
  }
  func.func @transform_2(%arg0: i32) -> (i32, i32) {
    %c0_i32 = arith.constant 0 : i32
    %c0_i32_0 = arith.constant 0 : i32
    return %arg0, %c0_i32 : i32, i32
  }
  func.func @transform_3(%arg0: i32) -> (i32, i32) {
    %c0_i32 = arith.constant 0 : i32
    %c0_i32_0 = arith.constant 0 : i32
    return %arg0, %c0_i32 : i32, i32
  }
  func.func @transform_4(%arg0: i32) -> (i32, i32) {
    %c0_i32 = arith.constant 0 : i32
    %c0_i32_0 = arith.constant 0 : i32
    return %arg0, %c0_i32 : i32, i32
  }
  func.func @transform_5(%arg0: i32) -> (i32, i32) {
    %c0_i32 = arith.constant 0 : i32
    %c0_i32_0 = arith.constant 0 : i32
    return %arg0, %c0_i32 : i32, i32
  }
  func.func @transform_6(%arg0: i32) -> (i32, i32) {
    %c0_i32 = arith.constant 0 : i32
    %c0_i32_0 = arith.constant 0 : i32
    return %arg0, %c0_i32 : i32, i32
  }
  func.func @transform_7(%arg0: i32) -> (i32, i32) {
    %c0_i32 = arith.constant 0 : i32
    %c0_i32_0 = arith.constant 0 : i32
    return %arg0, %c0_i32 : i32, i32
  }
  func.func @transform_8(%arg0: i32) -> (i32, i32) {
    %c0_i32 = arith.constant 0 : i32
    %c0_i32_0 = arith.constant 0 : i32
    return %arg0, %c0_i32 : i32, i32
  }
  func.func @transform_9(%arg0: i32) -> (i32, i32) {
    %c0_i32 = arith.constant 0 : i32
    %c0_i32_0 = arith.constant 0 : i32
    return %arg0, %c0_i32 : i32, i32
  }
}

module attributes {stable_mosaic.version = 11 : i64} {
  func.func @_fused_matmul_kernel(%arg0: i32, %arg1: memref<256x16xbf16, #tpu.memory_space<vmem>>, %arg2: memref<16x16xbf16, #tpu.memory_space<vmem>>, %arg3: memref<1x16xf32, #tpu.memory_space<vmem>>, %arg4: memref<256x16xbf16, #tpu.memory_space<vmem>>) attributes {dimension_semantics = [#tpu.dimension_semantics<parallel>], iteration_bounds = array<i64: 2>, scalar_prefetch = 0 : i64, scratch_operands = 0 : i64, tpu.core_type = #tpu.core_type<tc>, window_params = [{transform_indices = @transform_0, window_bounds = array<i64: 256, 16>}, {pipeline_mode = #tpu.pipeline_mode<synchronous>, transform_indices = @transform_1, window_bounds = array<i64: 16, 16>}, {pipeline_mode = #tpu.pipeline_mode<synchronous>, transform_indices = @transform_2, window_bounds = array<i64: 1, 16>}, {transform_indices = @transform_3, window_bounds = array<i64: 256, 16>}]} {
    %c0 = arith.constant 0 : index
    %c0_0 = arith.constant 0 : index
    %0 = vector.load %arg1[%c0, %c0_0] : memref<256x16xbf16, #tpu.memory_space<vmem>>, vector<256x16xbf16>
    %c0_1 = arith.constant 0 : index
    %c0_2 = arith.constant 0 : index
    %1 = vector.load %arg2[%c0_1, %c0_2] : memref<16x16xbf16, #tpu.memory_space<vmem>>, vector<16x16xbf16>
    %cst = arith.constant dense<0.000000e+00> : vector<256x16xf32>
    %2 = tpu.matmul %0, %1, %cst {dimension_numbers = #tpu.dot_dimension_numbers<[1], [0], [0], [1], [0, 0, 1, 1], [], []>} : vector<256x16xbf16>, vector<16x16xbf16>, vector<256x16xf32> -> vector<256x16xf32>
    %c0_3 = arith.constant 0 : index
    %c0_4 = arith.constant 0 : index
    %3 = vector.load %arg3[%c0_3, %c0_4] : memref<1x16xf32, #tpu.memory_space<vmem>>, vector<1x16xf32>
    %4 = vector.broadcast %3 : vector<1x16xf32> to vector<256x16xf32>
    %5 = arith.addf %2, %4 : vector<256x16xf32>
    %cst_5 = arith.constant 0.000000e+00 : f32
    %6 = vector.broadcast %cst_5 : f32 to vector<256x16xf32>
    %7 = arith.maximumf %5, %6 : vector<256x16xf32>
    %8 = arith.truncf %7 : vector<256x16xf32> to vector<256x16xbf16>
    %c0_6 = arith.constant 0 : index
    %c0_7 = arith.constant 0 : index
    %9 = vector.load %arg4[%c0_6, %c0_7] : memref<256x16xbf16, #tpu.memory_space<vmem>>, vector<256x16xbf16>
    tpu.vector_store %arg4[%c0_6, %c0_7], %8 {strides = array<i32>} : memref<256x16xbf16, #tpu.memory_space<vmem>>, vector<256x16xbf16>,
    return
  }
  func.func @transform_0(%arg0: i32) -> (i32, i32) {
    %c0_i32 = arith.constant 0 : i32
    %c0_i32_0 = arith.constant 0 : i32
    return %arg0, %c0_i32 : i32, i32
  }
  func.func @transform_1(%arg0: i32) -> (i32, i32) {
    %c0_i32 = arith.constant 0 : i32
    %c0_i32_0 = arith.constant 0 : i32
    %c0_i32_1 = arith.constant 0 : i32
    return %c0_i32, %c0_i32_0 : i32, i32
  }
  func.func @transform_2(%arg0: i32) -> (i32, i32) {
    %c0_i32 = arith.constant 0 : i32
    %c0_i32_0 = arith.constant 0 : i32
    %c0_i32_1 = arith.constant 0 : i32
    return %c0_i32, %c0_i32_0 : i32, i32
  }
  func.func @transform_3(%arg0: i32) -> (i32, i32) {
    %c0_i32 = arith.constant 0 : i32
    %c0_i32_0 = arith.constant 0 : i32
    return %arg0, %c0_i32 : i32, i32
  }
}

module attributes {stable_mosaic.version = 11 : i64} {
  func.func @_fused_matmul_kernel(%arg0: i32, %arg1: memref<256x144xbf16, #tpu.memory_space<vmem>>, %arg2: memref<144x16xbf16, #tpu.memory_space<vmem>>, %arg3: memref<1x16xf32, #tpu.memory_space<vmem>>, %arg4: memref<256x16xbf16, #tpu.memory_space<vmem>>) attributes {dimension_semantics = [#tpu.dimension_semantics<parallel>], iteration_bounds = array<i64: 2>, scalar_prefetch = 0 : i64, scratch_operands = 0 : i64, tpu.core_type = #tpu.core_type<tc>, window_params = [{transform_indices = @transform_0, window_bounds = array<i64: 256, 144>}, {pipeline_mode = #tpu.pipeline_mode<synchronous>, transform_indices = @transform_1, window_bounds = array<i64: 144, 16>}, {pipeline_mode = #tpu.pipeline_mode<synchronous>, transform_indices = @transform_2, window_bounds = array<i64: 1, 16>}, {transform_indices = @transform_3, window_bounds = array<i64: 256, 16>}]} {
    %c0 = arith.constant 0 : index
    %c0_0 = arith.constant 0 : index
    %0 = vector.load %arg1[%c0, %c0_0] : memref<256x144xbf16, #tpu.memory_space<vmem>>, vector<256x144xbf16>
    %c0_1 = arith.constant 0 : index
    %c0_2 = arith.constant 0 : index
    %1 = vector.load %arg2[%c0_1, %c0_2] : memref<144x16xbf16, #tpu.memory_space<vmem>>, vector<144x16xbf16>
    %cst = arith.constant dense<0.000000e+00> : vector<256x16xf32>
    %2 = tpu.matmul %0, %1, %cst {dimension_numbers = #tpu.dot_dimension_numbers<[1], [0], [0], [1], [0, 0, 1, 1], [], []>} : vector<256x144xbf16>, vector<144x16xbf16>, vector<256x16xf32> -> vector<256x16xf32>
    %c0_3 = arith.constant 0 : index
    %c0_4 = arith.constant 0 : index
    %3 = vector.load %arg3[%c0_3, %c0_4] : memref<1x16xf32, #tpu.memory_space<vmem>>, vector<1x16xf32>
    %4 = vector.broadcast %3 : vector<1x16xf32> to vector<256x16xf32>
    %5 = arith.addf %2, %4 : vector<256x16xf32>
    %cst_5 = arith.constant 0.000000e+00 : f32
    %6 = vector.broadcast %cst_5 : f32 to vector<256x16xf32>
    %7 = arith.maximumf %5, %6 : vector<256x16xf32>
    %8 = arith.truncf %7 : vector<256x16xf32> to vector<256x16xbf16>
    %c0_6 = arith.constant 0 : index
    %c0_7 = arith.constant 0 : index
    %9 = vector.load %arg4[%c0_6, %c0_7] : memref<256x16xbf16, #tpu.memory_space<vmem>>, vector<256x16xbf16>
    tpu.vector_store %arg4[%c0_6, %c0_7], %8 {strides = array<i32>} : memref<256x16xbf16, #tpu.memory_space<vmem>>, vector<256x16xbf16>,
    return
  }
  func.func @transform_0(%arg0: i32) -> (i32, i32) {
    %c0_i32 = arith.constant 0 : i32
    %c0_i32_0 = arith.constant 0 : i32
    return %arg0, %c0_i32 : i32, i32
  }
  func.func @transform_1(%arg0: i32) -> (i32, i32) {
    %c0_i32 = arith.constant 0 : i32
    %c0_i32_0 = arith.constant 0 : i32
    %c0_i32_1 = arith.constant 0 : i32
    return %c0_i32, %c0_i32_0 : i32, i32
  }
  func.func @transform_2(%arg0: i32) -> (i32, i32) {
    %c0_i32 = arith.constant 0 : i32
    %c0_i32_0 = arith.constant 0 : i32
    %c0_i32_1 = arith.constant 0 : i32
    return %c0_i32, %c0_i32_0 : i32, i32
  }
  func.func @transform_3(%arg0: i32) -> (i32, i32) {
    %c0_i32 = arith.constant 0 : i32
    %c0_i32_0 = arith.constant 0 : i32
    return %arg0, %c0_i32 : i32, i32
  }
}

module attributes {stable_mosaic.version = 11 : i64} {
  func.func @_dual_matmul_kernel(%arg0: i32, %arg1: memref<256x16xbf16, #tpu.memory_space<vmem>>, %arg2: memref<16x32xbf16, #tpu.memory_space<vmem>>, %arg3: memref<256x16xbf16, #tpu.memory_space<vmem>>, %arg4: memref<16x32xbf16, #tpu.memory_space<vmem>>, %arg5: memref<1x32xf32, #tpu.memory_space<vmem>>, %arg6: memref<256x32xbf16, #tpu.memory_space<vmem>>) attributes {dimension_semantics = [#tpu.dimension_semantics<parallel>], iteration_bounds = array<i64: 2>, scalar_prefetch = 0 : i64, scratch_operands = 0 : i64, tpu.core_type = #tpu.core_type<tc>, window_params = [{transform_indices = @transform_0, window_bounds = array<i64: 256, 16>}, {pipeline_mode = #tpu.pipeline_mode<synchronous>, transform_indices = @transform_1, window_bounds = array<i64: 16, 32>}, {transform_indices = @transform_2, window_bounds = array<i64: 256, 16>}, {pipeline_mode = #tpu.pipeline_mode<synchronous>, transform_indices = @transform_3, window_bounds = array<i64: 16, 32>}, {pipeline_mode = #tpu.pipeline_mode<synchronous>, transform_indices = @transform_4, window_bounds = array<i64: 1, 32>}, {transform_indices = @transform_5, window_bounds = array<i64: 256, 32>}]} {
    %c0 = arith.constant 0 : index
    %c0_0 = arith.constant 0 : index
    %0 = vector.load %arg1[%c0, %c0_0] : memref<256x16xbf16, #tpu.memory_space<vmem>>, vector<256x16xbf16>
    %c0_1 = arith.constant 0 : index
    %c0_2 = arith.constant 0 : index
    %1 = vector.load %arg2[%c0_1, %c0_2] : memref<16x32xbf16, #tpu.memory_space<vmem>>, vector<16x32xbf16>
    %cst = arith.constant dense<0.000000e+00> : vector<256x32xf32>
    %2 = tpu.matmul %0, %1, %cst {dimension_numbers = #tpu.dot_dimension_numbers<[1], [0], [0], [1], [0, 0, 1, 1], [], []>} : vector<256x16xbf16>, vector<16x32xbf16>, vector<256x32xf32> -> vector<256x32xf32>
    %c0_3 = arith.constant 0 : index
    %c0_4 = arith.constant 0 : index
    %3 = vector.load %arg3[%c0_3, %c0_4] : memref<256x16xbf16, #tpu.memory_space<vmem>>, vector<256x16xbf16>
    %c0_5 = arith.constant 0 : index
    %c0_6 = arith.constant 0 : index
    %4 = vector.load %arg4[%c0_5, %c0_6] : memref<16x32xbf16, #tpu.memory_space<vmem>>, vector<16x32xbf16>
    %cst_7 = arith.constant dense<0.000000e+00> : vector<256x32xf32>
    %5 = tpu.matmul %3, %4, %cst_7 {dimension_numbers = #tpu.dot_dimension_numbers<[1], [0], [0], [1], [0, 0, 1, 1], [], []>} : vector<256x16xbf16>, vector<16x32xbf16>, vector<256x32xf32> -> vector<256x32xf32>
    %6 = arith.addf %2, %5 : vector<256x32xf32>
    %c0_8 = arith.constant 0 : index
    %c0_9 = arith.constant 0 : index
    %7 = vector.load %arg5[%c0_8, %c0_9] : memref<1x32xf32, #tpu.memory_space<vmem>>, vector<1x32xf32>
    %8 = vector.broadcast %7 : vector<1x32xf32> to vector<256x32xf32>
    %9 = arith.addf %6, %8 : vector<256x32xf32>
    %cst_10 = arith.constant 0.000000e+00 : f32
    %10 = vector.broadcast %cst_10 : f32 to vector<256x32xf32>
    %11 = arith.maximumf %9, %10 : vector<256x32xf32>
    %12 = arith.truncf %11 : vector<256x32xf32> to vector<256x32xbf16>
    %c0_11 = arith.constant 0 : index
    %c0_12 = arith.constant 0 : index
    %13 = vector.load %arg6[%c0_11, %c0_12] : memref<256x32xbf16, #tpu.memory_space<vmem>>, vector<256x32xbf16>
    tpu.vector_store %arg6[%c0_11, %c0_12], %12 {strides = array<i32>} : memref<256x32xbf16, #tpu.memory_space<vmem>>, vector<256x32xbf16>,
    return
  }
  func.func @transform_0(%arg0: i32) -> (i32, i32) {
    %c0_i32 = arith.constant 0 : i32
    %c0_i32_0 = arith.constant 0 : i32
    return %arg0, %c0_i32 : i32, i32
  }
  func.func @transform_1(%arg0: i32) -> (i32, i32) {
    %c0_i32 = arith.constant 0 : i32
    %c0_i32_0 = arith.constant 0 : i32
    %c0_i32_1 = arith.constant 0 : i32
    return %c0_i32, %c0_i32_0 : i32, i32
  }
  func.func @transform_2(%arg0: i32) -> (i32, i32) {
    %c0_i32 = arith.constant 0 : i32
    %c0_i32_0 = arith.constant 0 : i32
    return %arg0, %c0_i32 : i32, i32
  }
  func.func @transform_3(%arg0: i32) -> (i32, i32) {
    %c0_i32 = arith.constant 0 : i32
    %c0_i32_0 = arith.constant 0 : i32
    %c0_i32_1 = arith.constant 0 : i32
    return %c0_i32, %c0_i32_0 : i32, i32
  }
  func.func @transform_4(%arg0: i32) -> (i32, i32) {
    %c0_i32 = arith.constant 0 : i32
    %c0_i32_0 = arith.constant 0 : i32
    %c0_i32_1 = arith.constant 0 : i32
    return %c0_i32, %c0_i32_0 : i32, i32
  }
  func.func @transform_5(%arg0: i32) -> (i32, i32) {
    %c0_i32 = arith.constant 0 : i32
    %c0_i32_0 = arith.constant 0 : i32
    return %arg0, %c0_i32 : i32, i32
  }
}

module attributes {stable_mosaic.version = 11 : i64} {
  func.func @_fused_matmul_kernel(%arg0: i32, %arg1: memref<256x32xbf16, #tpu.memory_space<vmem>>, %arg2: memref<32x32xbf16, #tpu.memory_space<vmem>>, %arg3: memref<1x32xf32, #tpu.memory_space<vmem>>, %arg4: memref<256x32xbf16, #tpu.memory_space<vmem>>) attributes {dimension_semantics = [#tpu.dimension_semantics<parallel>], iteration_bounds = array<i64: 2>, scalar_prefetch = 0 : i64, scratch_operands = 0 : i64, tpu.core_type = #tpu.core_type<tc>, window_params = [{transform_indices = @transform_0, window_bounds = array<i64: 256, 32>}, {pipeline_mode = #tpu.pipeline_mode<synchronous>, transform_indices = @transform_1, window_bounds = array<i64: 32, 32>}, {pipeline_mode = #tpu.pipeline_mode<synchronous>, transform_indices = @transform_2, window_bounds = array<i64: 1, 32>}, {transform_indices = @transform_3, window_bounds = array<i64: 256, 32>}]} {
    %c0 = arith.constant 0 : index
    %c0_0 = arith.constant 0 : index
    %0 = vector.load %arg1[%c0, %c0_0] : memref<256x32xbf16, #tpu.memory_space<vmem>>, vector<256x32xbf16>
    %c0_1 = arith.constant 0 : index
    %c0_2 = arith.constant 0 : index
    %1 = vector.load %arg2[%c0_1, %c0_2] : memref<32x32xbf16, #tpu.memory_space<vmem>>, vector<32x32xbf16>
    %cst = arith.constant dense<0.000000e+00> : vector<256x32xf32>
    %2 = tpu.matmul %0, %1, %cst {dimension_numbers = #tpu.dot_dimension_numbers<[1], [0], [0], [1], [0, 0, 1, 1], [], []>} : vector<256x32xbf16>, vector<32x32xbf16>, vector<256x32xf32> -> vector<256x32xf32>
    %c0_3 = arith.constant 0 : index
    %c0_4 = arith.constant 0 : index
    %3 = vector.load %arg3[%c0_3, %c0_4] : memref<1x32xf32, #tpu.memory_space<vmem>>, vector<1x32xf32>
    %4 = vector.broadcast %3 : vector<1x32xf32> to vector<256x32xf32>
    %5 = arith.addf %2, %4 : vector<256x32xf32>
    %cst_5 = arith.constant 0.000000e+00 : f32
    %6 = vector.broadcast %cst_5 : f32 to vector<256x32xf32>
    %7 = arith.maximumf %5, %6 : vector<256x32xf32>
    %8 = arith.truncf %7 : vector<256x32xf32> to vector<256x32xbf16>
    %c0_6 = arith.constant 0 : index
    %c0_7 = arith.constant 0 : index
    %9 = vector.load %arg4[%c0_6, %c0_7] : memref<256x32xbf16, #tpu.memory_space<vmem>>, vector<256x32xbf16>
    tpu.vector_store %arg4[%c0_6, %c0_7], %8 {strides = array<i32>} : memref<256x32xbf16, #tpu.memory_space<vmem>>, vector<256x32xbf16>,
    return
  }
  func.func @transform_0(%arg0: i32) -> (i32, i32) {
    %c0_i32 = arith.constant 0 : i32
    %c0_i32_0 = arith.constant 0 : i32
    return %arg0, %c0_i32 : i32, i32
  }
  func.func @transform_1(%arg0: i32) -> (i32, i32) {
    %c0_i32 = arith.constant 0 : i32
    %c0_i32_0 = arith.constant 0 : i32
    %c0_i32_1 = arith.constant 0 : i32
    return %c0_i32, %c0_i32_0 : i32, i32
  }
  func.func @transform_2(%arg0: i32) -> (i32, i32) {
    %c0_i32 = arith.constant 0 : i32
    %c0_i32_0 = arith.constant 0 : i32
    %c0_i32_1 = arith.constant 0 : i32
    return %c0_i32, %c0_i32_0 : i32, i32
  }
  func.func @transform_3(%arg0: i32) -> (i32, i32) {
    %c0_i32 = arith.constant 0 : i32
    %c0_i32_0 = arith.constant 0 : i32
    return %arg0, %c0_i32 : i32, i32
  }
}

module attributes {stable_mosaic.version = 11 : i64} {
  func.func @_dual_matmul_kernel(%arg0: i32, %arg1: memref<128x32xbf16, #tpu.memory_space<vmem>>, %arg2: memref<32x64xbf16, #tpu.memory_space<vmem>>, %arg3: memref<128x128xbf16, #tpu.memory_space<vmem>>, %arg4: memref<128x64xbf16, #tpu.memory_space<vmem>>, %arg5: memref<1x64xf32, #tpu.memory_space<vmem>>, %arg6: memref<128x64xbf16, #tpu.memory_space<vmem>>) attributes {dimension_semantics = [#tpu.dimension_semantics<parallel>], iteration_bounds = array<i64: 1>, scalar_prefetch = 0 : i64, scratch_operands = 0 : i64, tpu.core_type = #tpu.core_type<tc>, window_params = [{transform_indices = @transform_0, window_bounds = array<i64: 128, 32>}, {pipeline_mode = #tpu.pipeline_mode<synchronous>, transform_indices = @transform_1, window_bounds = array<i64: 32, 64>}, {transform_indices = @transform_2, window_bounds = array<i64: 128, 128>}, {pipeline_mode = #tpu.pipeline_mode<synchronous>, transform_indices = @transform_3, window_bounds = array<i64: 128, 64>}, {pipeline_mode = #tpu.pipeline_mode<synchronous>, transform_indices = @transform_4, window_bounds = array<i64: 1, 64>}, {transform_indices = @transform_5, window_bounds = array<i64: 128, 64>}]} {
    %c0 = arith.constant 0 : index
    %c0_0 = arith.constant 0 : index
    %0 = vector.load %arg1[%c0, %c0_0] : memref<128x32xbf16, #tpu.memory_space<vmem>>, vector<128x32xbf16>
    %c0_1 = arith.constant 0 : index
    %c0_2 = arith.constant 0 : index
    %1 = vector.load %arg2[%c0_1, %c0_2] : memref<32x64xbf16, #tpu.memory_space<vmem>>, vector<32x64xbf16>
    %cst = arith.constant dense<0.000000e+00> : vector<128x64xf32>
    %2 = tpu.matmul %0, %1, %cst {dimension_numbers = #tpu.dot_dimension_numbers<[1], [0], [0], [1], [0, 0, 1, 1], [], []>} : vector<128x32xbf16>, vector<32x64xbf16>, vector<128x64xf32> -> vector<128x64xf32>
    %c0_3 = arith.constant 0 : index
    %c0_4 = arith.constant 0 : index
    %3 = vector.load %arg3[%c0_3, %c0_4] : memref<128x128xbf16, #tpu.memory_space<vmem>>, vector<128x128xbf16>
    %c0_5 = arith.constant 0 : index
    %c0_6 = arith.constant 0 : index
    %4 = vector.load %arg4[%c0_5, %c0_6] : memref<128x64xbf16, #tpu.memory_space<vmem>>, vector<128x64xbf16>
    %cst_7 = arith.constant dense<0.000000e+00> : vector<128x64xf32>
    %5 = tpu.matmul %3, %4, %cst_7 {dimension_numbers = #tpu.dot_dimension_numbers<[1], [0], [0], [1], [0, 0, 1, 1], [], []>} : vector<128x128xbf16>, vector<128x64xbf16>, vector<128x64xf32> -> vector<128x64xf32>
    %6 = arith.addf %2, %5 : vector<128x64xf32>
    %c0_8 = arith.constant 0 : index
    %c0_9 = arith.constant 0 : index
    %7 = vector.load %arg5[%c0_8, %c0_9] : memref<1x64xf32, #tpu.memory_space<vmem>>, vector<1x64xf32>
    %8 = vector.broadcast %7 : vector<1x64xf32> to vector<128x64xf32>
    %9 = arith.addf %6, %8 : vector<128x64xf32>
    %cst_10 = arith.constant 0.000000e+00 : f32
    %10 = vector.broadcast %cst_10 : f32 to vector<128x64xf32>
    %11 = arith.maximumf %9, %10 : vector<128x64xf32>
    %12 = arith.truncf %11 : vector<128x64xf32> to vector<128x64xbf16>
    %c0_11 = arith.constant 0 : index
    %c0_12 = arith.constant 0 : index
    %13 = vector.load %arg6[%c0_11, %c0_12] : memref<128x64xbf16, #tpu.memory_space<vmem>>, vector<128x64xbf16>
    tpu.vector_store %arg6[%c0_11, %c0_12], %12 {strides = array<i32>} : memref<128x64xbf16, #tpu.memory_space<vmem>>, vector<128x64xbf16>,
    return
  }
  func.func @transform_0(%arg0: i32) -> (i32, i32) {
    %c0_i32 = arith.constant 0 : i32
    %c0_i32_0 = arith.constant 0 : i32
    return %arg0, %c0_i32 : i32, i32
  }
  func.func @transform_1(%arg0: i32) -> (i32, i32) {
    %c0_i32 = arith.constant 0 : i32
    %c0_i32_0 = arith.constant 0 : i32
    %c0_i32_1 = arith.constant 0 : i32
    return %c0_i32, %c0_i32_0 : i32, i32
  }
  func.func @transform_2(%arg0: i32) -> (i32, i32) {
    %c0_i32 = arith.constant 0 : i32
    %c0_i32_0 = arith.constant 0 : i32
    return %arg0, %c0_i32 : i32, i32
  }
  func.func @transform_3(%arg0: i32) -> (i32, i32) {
    %c0_i32 = arith.constant 0 : i32
    %c0_i32_0 = arith.constant 0 : i32
    %c0_i32_1 = arith.constant 0 : i32
    return %c0_i32, %c0_i32_0 : i32, i32
  }
  func.func @transform_4(%arg0: i32) -> (i32, i32) {
    %c0_i32 = arith.constant 0 : i32
    %c0_i32_0 = arith.constant 0 : i32
    %c0_i32_1 = arith.constant 0 : i32
    return %c0_i32, %c0_i32_0 : i32, i32
  }
  func.func @transform_5(%arg0: i32) -> (i32, i32) {
    %c0_i32 = arith.constant 0 : i32
    %c0_i32_0 = arith.constant 0 : i32
    return %arg0, %c0_i32 : i32, i32
  }
}

module attributes {stable_mosaic.version = 11 : i64} {
  func.func @_fused_matmul_kernel(%arg0: i32, %arg1: memref<128x288xbf16, #tpu.memory_space<vmem>>, %arg2: memref<288x32xbf16, #tpu.memory_space<vmem>>, %arg3: memref<1x32xf32, #tpu.memory_space<vmem>>, %arg4: memref<128x32xbf16, #tpu.memory_space<vmem>>) attributes {dimension_semantics = [#tpu.dimension_semantics<parallel>], iteration_bounds = array<i64: 1>, scalar_prefetch = 0 : i64, scratch_operands = 0 : i64, tpu.core_type = #tpu.core_type<tc>, window_params = [{transform_indices = @transform_0, window_bounds = array<i64: 128, 288>}, {pipeline_mode = #tpu.pipeline_mode<synchronous>, transform_indices = @transform_1, window_bounds = array<i64: 288, 32>}, {pipeline_mode = #tpu.pipeline_mode<synchronous>, transform_indices = @transform_2, window_bounds = array<i64: 1, 32>}, {transform_indices = @transform_3, window_bounds = array<i64: 128, 32>}]} {
    %c0 = arith.constant 0 : index
    %c0_0 = arith.constant 0 : index
    %0 = vector.load %arg1[%c0, %c0_0] : memref<128x288xbf16, #tpu.memory_space<vmem>>, vector<128x288xbf16>
    %c0_1 = arith.constant 0 : index
    %c0_2 = arith.constant 0 : index
    %1 = vector.load %arg2[%c0_1, %c0_2] : memref<288x32xbf16, #tpu.memory_space<vmem>>, vector<288x32xbf16>
    %cst = arith.constant dense<0.000000e+00> : vector<128x32xf32>
    %2 = tpu.matmul %0, %1, %cst {dimension_numbers = #tpu.dot_dimension_numbers<[1], [0], [0], [1], [0, 0, 1, 1], [], []>} : vector<128x288xbf16>, vector<288x32xbf16>, vector<128x32xf32> -> vector<128x32xf32>
    %c0_3 = arith.constant 0 : index
    %c0_4 = arith.constant 0 : index
    %3 = vector.load %arg3[%c0_3, %c0_4] : memref<1x32xf32, #tpu.memory_space<vmem>>, vector<1x32xf32>
    %4 = vector.broadcast %3 : vector<1x32xf32> to vector<128x32xf32>
    %5 = arith.addf %2, %4 : vector<128x32xf32>
    %cst_5 = arith.constant 0.000000e+00 : f32
    %6 = vector.broadcast %cst_5 : f32 to vector<128x32xf32>
    %7 = arith.maximumf %5, %6 : vector<128x32xf32>
    %8 = arith.truncf %7 : vector<128x32xf32> to vector<128x32xbf16>
    %c0_6 = arith.constant 0 : index
    %c0_7 = arith.constant 0 : index
    %9 = vector.load %arg4[%c0_6, %c0_7] : memref<128x32xbf16, #tpu.memory_space<vmem>>, vector<128x32xbf16>
    tpu.vector_store %arg4[%c0_6, %c0_7], %8 {strides = array<i32>} : memref<128x32xbf16, #tpu.memory_space<vmem>>, vector<128x32xbf16>,
    return
  }
  func.func @transform_0(%arg0: i32) -> (i32, i32) {
    %c0_i32 = arith.constant 0 : i32
    %c0_i32_0 = arith.constant 0 : i32
    return %arg0, %c0_i32 : i32, i32
  }
  func.func @transform_1(%arg0: i32) -> (i32, i32) {
    %c0_i32 = arith.constant 0 : i32
    %c0_i32_0 = arith.constant 0 : i32
    %c0_i32_1 = arith.constant 0 : i32
    return %c0_i32, %c0_i32_0 : i32, i32
  }
  func.func @transform_2(%arg0: i32) -> (i32, i32) {
    %c0_i32 = arith.constant 0 : i32
    %c0_i32_0 = arith.constant 0 : i32
    %c0_i32_1 = arith.constant 0 : i32
    return %c0_i32, %c0_i32_0 : i32, i32
  }
  func.func @transform_3(%arg0: i32) -> (i32, i32) {
    %c0_i32 = arith.constant 0 : i32
    %c0_i32_0 = arith.constant 0 : i32
    return %arg0, %c0_i32 : i32, i32
  }
}

module attributes {stable_mosaic.version = 11 : i64} {
  func.func @_fused_matmul_kernel(%arg0: i32, %arg1: memref<128x64xbf16, #tpu.memory_space<vmem>>, %arg2: memref<64x64xbf16, #tpu.memory_space<vmem>>, %arg3: memref<1x64xf32, #tpu.memory_space<vmem>>, %arg4: memref<128x64xbf16, #tpu.memory_space<vmem>>) attributes {dimension_semantics = [#tpu.dimension_semantics<parallel>], iteration_bounds = array<i64: 1>, scalar_prefetch = 0 : i64, scratch_operands = 0 : i64, tpu.core_type = #tpu.core_type<tc>, window_params = [{transform_indices = @transform_0, window_bounds = array<i64: 128, 64>}, {pipeline_mode = #tpu.pipeline_mode<synchronous>, transform_indices = @transform_1, window_bounds = array<i64: 64, 64>}, {pipeline_mode = #tpu.pipeline_mode<synchronous>, transform_indices = @transform_2, window_bounds = array<i64: 1, 64>}, {transform_indices = @transform_3, window_bounds = array<i64: 128, 64>}]} {
    %c0 = arith.constant 0 : index
    %c0_0 = arith.constant 0 : index
    %0 = vector.load %arg1[%c0, %c0_0] : memref<128x64xbf16, #tpu.memory_space<vmem>>, vector<128x64xbf16>
    %c0_1 = arith.constant 0 : index
    %c0_2 = arith.constant 0 : index
    %1 = vector.load %arg2[%c0_1, %c0_2] : memref<64x64xbf16, #tpu.memory_space<vmem>>, vector<64x64xbf16>
    %cst = arith.constant dense<0.000000e+00> : vector<128x64xf32>
    %2 = tpu.matmul %0, %1, %cst {dimension_numbers = #tpu.dot_dimension_numbers<[1], [0], [0], [1], [0, 0, 1, 1], [], []>} : vector<128x64xbf16>, vector<64x64xbf16>, vector<128x64xf32> -> vector<128x64xf32>
    %c0_3 = arith.constant 0 : index
    %c0_4 = arith.constant 0 : index
    %3 = vector.load %arg3[%c0_3, %c0_4] : memref<1x64xf32, #tpu.memory_space<vmem>>, vector<1x64xf32>
    %4 = vector.broadcast %3 : vector<1x64xf32> to vector<128x64xf32>
    %5 = arith.addf %2, %4 : vector<128x64xf32>
    %cst_5 = arith.constant 0.000000e+00 : f32
    %6 = vector.broadcast %cst_5 : f32 to vector<128x64xf32>
    %7 = arith.maximumf %5, %6 : vector<128x64xf32>
    %8 = arith.truncf %7 : vector<128x64xf32> to vector<128x64xbf16>
    %c0_6 = arith.constant 0 : index
    %c0_7 = arith.constant 0 : index
    %9 = vector.load %arg4[%c0_6, %c0_7] : memref<128x64xbf16, #tpu.memory_space<vmem>>, vector<128x64xbf16>
    tpu.vector_store %arg4[%c0_6, %c0_7], %8 {strides = array<i32>} : memref<128x64xbf16, #tpu.memory_space<vmem>>, vector<128x64xbf16>,
    return
  }
  func.func @transform_0(%arg0: i32) -> (i32, i32) {
    %c0_i32 = arith.constant 0 : i32
    %c0_i32_0 = arith.constant 0 : i32
    return %arg0, %c0_i32 : i32, i32
  }
  func.func @transform_1(%arg0: i32) -> (i32, i32) {
    %c0_i32 = arith.constant 0 : i32
    %c0_i32_0 = arith.constant 0 : i32
    %c0_i32_1 = arith.constant 0 : i32
    return %c0_i32, %c0_i32_0 : i32, i32
  }
  func.func @transform_2(%arg0: i32) -> (i32, i32) {
    %c0_i32 = arith.constant 0 : i32
    %c0_i32_0 = arith.constant 0 : i32
    %c0_i32_1 = arith.constant 0 : i32
    return %c0_i32, %c0_i32_0 : i32, i32
  }
  func.func @transform_3(%arg0: i32) -> (i32, i32) {
    %c0_i32 = arith.constant 0 : i32
    %c0_i32_0 = arith.constant 0 : i32
    return %arg0, %c0_i32 : i32, i32
  }
}

module attributes {stable_mosaic.version = 11 : i64} {
  func.func @_dual_matmul_kernel(%arg0: i32, %arg1: memref<32x64xbf16, #tpu.memory_space<vmem>>, %arg2: memref<64x128xbf16, #tpu.memory_space<vmem>>, %arg3: memref<32x256xbf16, #tpu.memory_space<vmem>>, %arg4: memref<256x128xbf16, #tpu.memory_space<vmem>>, %arg5: memref<1x128xf32, #tpu.memory_space<vmem>>, %arg6: memref<32x128xbf16, #tpu.memory_space<vmem>>) attributes {dimension_semantics = [#tpu.dimension_semantics<parallel>], iteration_bounds = array<i64: 1>, scalar_prefetch = 0 : i64, scratch_operands = 0 : i64, tpu.core_type = #tpu.core_type<tc>, window_params = [{transform_indices = @transform_0, window_bounds = array<i64: 32, 64>}, {pipeline_mode = #tpu.pipeline_mode<synchronous>, transform_indices = @transform_1, window_bounds = array<i64: 64, 128>}, {transform_indices = @transform_2, window_bounds = array<i64: 32, 256>}, {pipeline_mode = #tpu.pipeline_mode<synchronous>, transform_indices = @transform_3, window_bounds = array<i64: 256, 128>}, {pipeline_mode = #tpu.pipeline_mode<synchronous>, transform_indices = @transform_4, window_bounds = array<i64: 1, 128>}, {transform_indices = @transform_5, window_bounds = array<i64: 32, 128>}]} {
    %c0 = arith.constant 0 : index
    %c0_0 = arith.constant 0 : index
    %0 = vector.load %arg1[%c0, %c0_0] : memref<32x64xbf16, #tpu.memory_space<vmem>>, vector<32x64xbf16>
    %c0_1 = arith.constant 0 : index
    %c0_2 = arith.constant 0 : index
    %1 = vector.load %arg2[%c0_1, %c0_2] : memref<64x128xbf16, #tpu.memory_space<vmem>>, vector<64x128xbf16>
    %cst = arith.constant dense<0.000000e+00> : vector<32x128xf32>
    %2 = tpu.matmul %0, %1, %cst {dimension_numbers = #tpu.dot_dimension_numbers<[1], [0], [0], [1], [0, 0, 1, 1], [], []>} : vector<32x64xbf16>, vector<64x128xbf16>, vector<32x128xf32> -> vector<32x128xf32>
    %c0_3 = arith.constant 0 : index
    %c0_4 = arith.constant 0 : index
    %3 = vector.load %arg3[%c0_3, %c0_4] : memref<32x256xbf16, #tpu.memory_space<vmem>>, vector<32x256xbf16>
    %c0_5 = arith.constant 0 : index
    %c0_6 = arith.constant 0 : index
    %4 = vector.load %arg4[%c0_5, %c0_6] : memref<256x128xbf16, #tpu.memory_space<vmem>>, vector<256x128xbf16>
    %cst_7 = arith.constant dense<0.000000e+00> : vector<32x128xf32>
    %5 = tpu.matmul %3, %4, %cst_7 {dimension_numbers = #tpu.dot_dimension_numbers<[1], [0], [0], [1], [0, 0, 1, 1], [], []>} : vector<32x256xbf16>, vector<256x128xbf16>, vector<32x128xf32> -> vector<32x128xf32>
    %6 = arith.addf %2, %5 : vector<32x128xf32>
    %c0_8 = arith.constant 0 : index
    %c0_9 = arith.constant 0 : index
    %7 = vector.load %arg5[%c0_8, %c0_9] : memref<1x128xf32, #tpu.memory_space<vmem>>, vector<1x128xf32>
    %8 = vector.broadcast %7 : vector<1x128xf32> to vector<32x128xf32>
    %9 = arith.addf %6, %8 : vector<32x128xf32>
    %cst_10 = arith.constant 0.000000e+00 : f32
    %10 = vector.broadcast %cst_10 : f32 to vector<32x128xf32>
    %11 = arith.maximumf %9, %10 : vector<32x128xf32>
    %12 = arith.truncf %11 : vector<32x128xf32> to vector<32x128xbf16>
    %c0_11 = arith.constant 0 : index
    %c0_12 = arith.constant 0 : index
    %13 = vector.load %arg6[%c0_11, %c0_12] : memref<32x128xbf16, #tpu.memory_space<vmem>>, vector<32x128xbf16>
    tpu.vector_store %arg6[%c0_11, %c0_12], %12 {strides = array<i32>} : memref<32x128xbf16, #tpu.memory_space<vmem>>, vector<32x128xbf16>,
    return
  }
  func.func @transform_0(%arg0: i32) -> (i32, i32) {
    %c0_i32 = arith.constant 0 : i32
    %c0_i32_0 = arith.constant 0 : i32
    return %arg0, %c0_i32 : i32, i32
  }
  func.func @transform_1(%arg0: i32) -> (i32, i32) {
    %c0_i32 = arith.constant 0 : i32
    %c0_i32_0 = arith.constant 0 : i32
    %c0_i32_1 = arith.constant 0 : i32
    return %c0_i32, %c0_i32_0 : i32, i32
  }
  func.func @transform_2(%arg0: i32) -> (i32, i32) {
    %c0_i32 = arith.constant 0 : i32
    %c0_i32_0 = arith.constant 0 : i32
    return %arg0, %c0_i32 : i32, i32
  }
  func.func @transform_3(%arg0: i32) -> (i32, i32) {
    %c0_i32 = arith.constant 0 : i32
    %c0_i32_0 = arith.constant 0 : i32
    %c0_i32_1 = arith.constant 0 : i32
    return %c0_i32, %c0_i32_0 : i32, i32
  }
  func.func @transform_4(%arg0: i32) -> (i32, i32) {
    %c0_i32 = arith.constant 0 : i32
    %c0_i32_0 = arith.constant 0 : i32
    %c0_i32_1 = arith.constant 0 : i32
    return %c0_i32, %c0_i32_0 : i32, i32
  }
  func.func @transform_5(%arg0: i32) -> (i32, i32) {
    %c0_i32 = arith.constant 0 : i32
    %c0_i32_0 = arith.constant 0 : i32
    return %arg0, %c0_i32 : i32, i32
  }
}

module attributes {stable_mosaic.version = 11 : i64} {
  func.func @_fused_matmul_kernel(%arg0: i32, %arg1: memref<32x576xbf16, #tpu.memory_space<vmem>>, %arg2: memref<576x64xbf16, #tpu.memory_space<vmem>>, %arg3: memref<1x64xf32, #tpu.memory_space<vmem>>, %arg4: memref<32x64xbf16, #tpu.memory_space<vmem>>) attributes {dimension_semantics = [#tpu.dimension_semantics<parallel>], iteration_bounds = array<i64: 1>, scalar_prefetch = 0 : i64, scratch_operands = 0 : i64, tpu.core_type = #tpu.core_type<tc>, window_params = [{transform_indices = @transform_0, window_bounds = array<i64: 32, 576>}, {pipeline_mode = #tpu.pipeline_mode<synchronous>, transform_indices = @transform_1, window_bounds = array<i64: 576, 64>}, {pipeline_mode = #tpu.pipeline_mode<synchronous>, transform_indices = @transform_2, window_bounds = array<i64: 1, 64>}, {transform_indices = @transform_3, window_bounds = array<i64: 32, 64>}]} {
    %c0 = arith.constant 0 : index
    %c0_0 = arith.constant 0 : index
    %0 = vector.load %arg1[%c0, %c0_0] : memref<32x576xbf16, #tpu.memory_space<vmem>>, vector<32x576xbf16>
    %c0_1 = arith.constant 0 : index
    %c0_2 = arith.constant 0 : index
    %1 = vector.load %arg2[%c0_1, %c0_2] : memref<576x64xbf16, #tpu.memory_space<vmem>>, vector<576x64xbf16>
    %cst = arith.constant dense<0.000000e+00> : vector<32x64xf32>
    %2 = tpu.matmul %0, %1, %cst {dimension_numbers = #tpu.dot_dimension_numbers<[1], [0], [0], [1], [0, 0, 1, 1], [], []>} : vector<32x576xbf16>, vector<576x64xbf16>, vector<32x64xf32> -> vector<32x64xf32>
    %c0_3 = arith.constant 0 : index
    %c0_4 = arith.constant 0 : index
    %3 = vector.load %arg3[%c0_3, %c0_4] : memref<1x64xf32, #tpu.memory_space<vmem>>, vector<1x64xf32>
    %4 = vector.broadcast %3 : vector<1x64xf32> to vector<32x64xf32>
    %5 = arith.addf %2, %4 : vector<32x64xf32>
    %cst_5 = arith.constant 0.000000e+00 : f32
    %6 = vector.broadcast %cst_5 : f32 to vector<32x64xf32>
    %7 = arith.maximumf %5, %6 : vector<32x64xf32>
    %8 = arith.truncf %7 : vector<32x64xf32> to vector<32x64xbf16>
    %c0_6 = arith.constant 0 : index
    %c0_7 = arith.constant 0 : index
    %9 = vector.load %arg4[%c0_6, %c0_7] : memref<32x64xbf16, #tpu.memory_space<vmem>>, vector<32x64xbf16>
    tpu.vector_store %arg4[%c0_6, %c0_7], %8 {strides = array<i32>} : memref<32x64xbf16, #tpu.memory_space<vmem>>, vector<32x64xbf16>,
    return
  }
  func.func @transform_0(%arg0: i32) -> (i32, i32) {
    %c0_i32 = arith.constant 0 : i32
    %c0_i32_0 = arith.constant 0 : i32
    return %arg0, %c0_i32 : i32, i32
  }
  func.func @transform_1(%arg0: i32) -> (i32, i32) {
    %c0_i32 = arith.constant 0 : i32
    %c0_i32_0 = arith.constant 0 : i32
    %c0_i32_1 = arith.constant 0 : i32
    return %c0_i32, %c0_i32_0 : i32, i32
  }
  func.func @transform_2(%arg0: i32) -> (i32, i32) {
    %c0_i32 = arith.constant 0 : i32
    %c0_i32_0 = arith.constant 0 : i32
    %c0_i32_1 = arith.constant 0 : i32
    return %c0_i32, %c0_i32_0 : i32, i32
  }
  func.func @transform_3(%arg0: i32) -> (i32, i32) {
    %c0_i32 = arith.constant 0 : i32
    %c0_i32_0 = arith.constant 0 : i32
    return %arg0, %c0_i32 : i32, i32
  }
}

module attributes {stable_mosaic.version = 11 : i64} {
  func.func @_fused_matmul_kernel(%arg0: i32, %arg1: memref<32x128xbf16, #tpu.memory_space<vmem>>, %arg2: memref<128x128xbf16, #tpu.memory_space<vmem>>, %arg3: memref<1x128xf32, #tpu.memory_space<vmem>>, %arg4: memref<32x128xbf16, #tpu.memory_space<vmem>>) attributes {dimension_semantics = [#tpu.dimension_semantics<parallel>], iteration_bounds = array<i64: 1>, scalar_prefetch = 0 : i64, scratch_operands = 0 : i64, tpu.core_type = #tpu.core_type<tc>, window_params = [{transform_indices = @transform_0, window_bounds = array<i64: 32, 128>}, {pipeline_mode = #tpu.pipeline_mode<synchronous>, transform_indices = @transform_1, window_bounds = array<i64: 128, 128>}, {pipeline_mode = #tpu.pipeline_mode<synchronous>, transform_indices = @transform_2, window_bounds = array<i64: 1, 128>}, {transform_indices = @transform_3, window_bounds = array<i64: 32, 128>}]} {
    %c0 = arith.constant 0 : index
    %c0_0 = arith.constant 0 : index
    %0 = vector.load %arg1[%c0, %c0_0] : memref<32x128xbf16, #tpu.memory_space<vmem>>, vector<32x128xbf16>
    %c0_1 = arith.constant 0 : index
    %c0_2 = arith.constant 0 : index
    %1 = vector.load %arg2[%c0_1, %c0_2] : memref<128x128xbf16, #tpu.memory_space<vmem>>, vector<128x128xbf16>
    %cst = arith.constant dense<0.000000e+00> : vector<32x128xf32>
    %2 = tpu.matmul %0, %1, %cst {dimension_numbers = #tpu.dot_dimension_numbers<[1], [0], [0], [1], [0, 0, 1, 1], [], []>} : vector<32x128xbf16>, vector<128x128xbf16>, vector<32x128xf32> -> vector<32x128xf32>
    %c0_3 = arith.constant 0 : index
    %c0_4 = arith.constant 0 : index
    %3 = vector.load %arg3[%c0_3, %c0_4] : memref<1x128xf32, #tpu.memory_space<vmem>>, vector<1x128xf32>
    %4 = vector.broadcast %3 : vector<1x128xf32> to vector<32x128xf32>
    %5 = arith.addf %2, %4 : vector<32x128xf32>
    %cst_5 = arith.constant 0.000000e+00 : f32
    %6 = vector.broadcast %cst_5 : f32 to vector<32x128xf32>
    %7 = arith.maximumf %5, %6 : vector<32x128xf32>
    %8 = arith.truncf %7 : vector<32x128xf32> to vector<32x128xbf16>
    %c0_6 = arith.constant 0 : index
    %c0_7 = arith.constant 0 : index
    %9 = vector.load %arg4[%c0_6, %c0_7] : memref<32x128xbf16, #tpu.memory_space<vmem>>, vector<32x128xbf16>
    tpu.vector_store %arg4[%c0_6, %c0_7], %8 {strides = array<i32>} : memref<32x128xbf16, #tpu.memory_space<vmem>>, vector<32x128xbf16>,
    return
  }
  func.func @transform_0(%arg0: i32) -> (i32, i32) {
    %c0_i32 = arith.constant 0 : i32
    %c0_i32_0 = arith.constant 0 : i32
    return %arg0, %c0_i32 : i32, i32
  }
  func.func @transform_1(%arg0: i32) -> (i32, i32) {
    %c0_i32 = arith.constant 0 : i32
    %c0_i32_0 = arith.constant 0 : i32
    %c0_i32_1 = arith.constant 0 : i32
    return %c0_i32, %c0_i32_0 : i32, i32
  }
  func.func @transform_2(%arg0: i32) -> (i32, i32) {
    %c0_i32 = arith.constant 0 : i32
    %c0_i32_0 = arith.constant 0 : i32
    %c0_i32_1 = arith.constant 0 : i32
    return %c0_i32, %c0_i32_0 : i32, i32
  }
  func.func @transform_3(%arg0: i32) -> (i32, i32) {
    %c0_i32 = arith.constant 0 : i32
    %c0_i32_0 = arith.constant 0 : i32
    return %arg0, %c0_i32 : i32, i32
  }
}

module attributes {stable_mosaic.version = 11 : i64} {
  func.func @_fused_matmul_kernel(%arg0: i32, %arg1: memref<8x1152xbf16, #tpu.memory_space<vmem>>, %arg2: memref<1152x128xbf16, #tpu.memory_space<vmem>>, %arg3: memref<1x128xf32, #tpu.memory_space<vmem>>, %arg4: memref<8x128xbf16, #tpu.memory_space<vmem>>) attributes {dimension_semantics = [#tpu.dimension_semantics<parallel>], iteration_bounds = array<i64: 1>, scalar_prefetch = 0 : i64, scratch_operands = 0 : i64, tpu.core_type = #tpu.core_type<tc>, window_params = [{transform_indices = @transform_0, window_bounds = array<i64: 8, 1152>}, {pipeline_mode = #tpu.pipeline_mode<synchronous>, transform_indices = @transform_1, window_bounds = array<i64: 1152, 128>}, {pipeline_mode = #tpu.pipeline_mode<synchronous>, transform_indices = @transform_2, window_bounds = array<i64: 1, 128>}, {transform_indices = @transform_3, window_bounds = array<i64: 8, 128>}]} {
    %c0 = arith.constant 0 : index
    %c0_0 = arith.constant 0 : index
    %0 = vector.load %arg1[%c0, %c0_0] : memref<8x1152xbf16, #tpu.memory_space<vmem>>, vector<8x1152xbf16>
    %c0_1 = arith.constant 0 : index
    %c0_2 = arith.constant 0 : index
    %1 = vector.load %arg2[%c0_1, %c0_2] : memref<1152x128xbf16, #tpu.memory_space<vmem>>, vector<1152x128xbf16>
    %cst = arith.constant dense<0.000000e+00> : vector<8x128xf32>
    %2 = tpu.matmul %0, %1, %cst {dimension_numbers = #tpu.dot_dimension_numbers<[1], [0], [0], [1], [0, 0, 1, 1], [], []>} : vector<8x1152xbf16>, vector<1152x128xbf16>, vector<8x128xf32> -> vector<8x128xf32>
    %c0_3 = arith.constant 0 : index
    %c0_4 = arith.constant 0 : index
    %3 = vector.load %arg3[%c0_3, %c0_4] : memref<1x128xf32, #tpu.memory_space<vmem>>, vector<1x128xf32>
    %4 = vector.broadcast %3 : vector<1x128xf32> to vector<8x128xf32>
    %5 = arith.addf %2, %4 : vector<8x128xf32>
    %cst_5 = arith.constant 0.000000e+00 : f32
    %6 = vector.broadcast %cst_5 : f32 to vector<8x128xf32>
    %7 = arith.maximumf %5, %6 : vector<8x128xf32>
    %8 = arith.truncf %7 : vector<8x128xf32> to vector<8x128xbf16>
    %c0_6 = arith.constant 0 : index
    %c0_7 = arith.constant 0 : index
    %9 = vector.load %arg4[%c0_6, %c0_7] : memref<8x128xbf16, #tpu.memory_space<vmem>>, vector<8x128xbf16>
    tpu.vector_store %arg4[%c0_6, %c0_7], %8 {strides = array<i32>} : memref<8x128xbf16, #tpu.memory_space<vmem>>, vector<8x128xbf16>,
    return
  }
  func.func @transform_0(%arg0: i32) -> (i32, i32) {
    %c0_i32 = arith.constant 0 : i32
    %c0_i32_0 = arith.constant 0 : i32
    return %arg0, %c0_i32 : i32, i32
  }
  func.func @transform_1(%arg0: i32) -> (i32, i32) {
    %c0_i32 = arith.constant 0 : i32
    %c0_i32_0 = arith.constant 0 : i32
    %c0_i32_1 = arith.constant 0 : i32
    return %c0_i32, %c0_i32_0 : i32, i32
  }
  func.func @transform_2(%arg0: i32) -> (i32, i32) {
    %c0_i32 = arith.constant 0 : i32
    %c0_i32_0 = arith.constant 0 : i32
    %c0_i32_1 = arith.constant 0 : i32
    return %c0_i32, %c0_i32_0 : i32, i32
  }
  func.func @transform_3(%arg0: i32) -> (i32, i32) {
    %c0_i32 = arith.constant 0 : i32
    %c0_i32_0 = arith.constant 0 : i32
    return %arg0, %c0_i32 : i32, i32
  }
}

module attributes {stable_mosaic.version = 11 : i64} {
  func.func @_dual_matmul_kernel(%arg0: i32, %arg1: memref<8x128xbf16, #tpu.memory_space<vmem>>, %arg2: memref<128x256xbf16, #tpu.memory_space<vmem>>, %arg3: memref<8x512xbf16, #tpu.memory_space<vmem>>, %arg4: memref<512x256xbf16, #tpu.memory_space<vmem>>, %arg5: memref<1x256xf32, #tpu.memory_space<vmem>>, %arg6: memref<8x256xbf16, #tpu.memory_space<vmem>>) attributes {dimension_semantics = [#tpu.dimension_semantics<parallel>], iteration_bounds = array<i64: 1>, scalar_prefetch = 0 : i64, scratch_operands = 0 : i64, tpu.core_type = #tpu.core_type<tc>, window_params = [{transform_indices = @transform_0, window_bounds = array<i64: 8, 128>}, {pipeline_mode = #tpu.pipeline_mode<synchronous>, transform_indices = @transform_1, window_bounds = array<i64: 128, 256>}, {transform_indices = @transform_2, window_bounds = array<i64: 8, 512>}, {pipeline_mode = #tpu.pipeline_mode<synchronous>, transform_indices = @transform_3, window_bounds = array<i64: 512, 256>}, {pipeline_mode = #tpu.pipeline_mode<synchronous>, transform_indices = @transform_4, window_bounds = array<i64: 1, 256>}, {transform_indices = @transform_5, window_bounds = array<i64: 8, 256>}]} {
    %c0 = arith.constant 0 : index
    %c0_0 = arith.constant 0 : index
    %0 = vector.load %arg1[%c0, %c0_0] : memref<8x128xbf16, #tpu.memory_space<vmem>>, vector<8x128xbf16>
    %c0_1 = arith.constant 0 : index
    %c0_2 = arith.constant 0 : index
    %1 = vector.load %arg2[%c0_1, %c0_2] : memref<128x256xbf16, #tpu.memory_space<vmem>>, vector<128x256xbf16>
    %cst = arith.constant dense<0.000000e+00> : vector<8x256xf32>
    %2 = tpu.matmul %0, %1, %cst {dimension_numbers = #tpu.dot_dimension_numbers<[1], [0], [0], [1], [0, 0, 1, 1], [], []>} : vector<8x128xbf16>, vector<128x256xbf16>, vector<8x256xf32> -> vector<8x256xf32>
    %c0_3 = arith.constant 0 : index
    %c0_4 = arith.constant 0 : index
    %3 = vector.load %arg3[%c0_3, %c0_4] : memref<8x512xbf16, #tpu.memory_space<vmem>>, vector<8x512xbf16>
    %c0_5 = arith.constant 0 : index
    %c0_6 = arith.constant 0 : index
    %4 = vector.load %arg4[%c0_5, %c0_6] : memref<512x256xbf16, #tpu.memory_space<vmem>>, vector<512x256xbf16>
    %cst_7 = arith.constant dense<0.000000e+00> : vector<8x256xf32>
    %5 = tpu.matmul %3, %4, %cst_7 {dimension_numbers = #tpu.dot_dimension_numbers<[1], [0], [0], [1], [0, 0, 1, 1], [], []>} : vector<8x512xbf16>, vector<512x256xbf16>, vector<8x256xf32> -> vector<8x256xf32>
    %6 = arith.addf %2, %5 : vector<8x256xf32>
    %c0_8 = arith.constant 0 : index
    %c0_9 = arith.constant 0 : index
    %7 = vector.load %arg5[%c0_8, %c0_9] : memref<1x256xf32, #tpu.memory_space<vmem>>, vector<1x256xf32>
    %8 = vector.broadcast %7 : vector<1x256xf32> to vector<8x256xf32>
    %9 = arith.addf %6, %8 : vector<8x256xf32>
    %cst_10 = arith.constant 0.000000e+00 : f32
    %10 = vector.broadcast %cst_10 : f32 to vector<8x256xf32>
    %11 = arith.maximumf %9, %10 : vector<8x256xf32>
    %12 = arith.truncf %11 : vector<8x256xf32> to vector<8x256xbf16>
    %c0_11 = arith.constant 0 : index
    %c0_12 = arith.constant 0 : index
    %13 = vector.load %arg6[%c0_11, %c0_12] : memref<8x256xbf16, #tpu.memory_space<vmem>>, vector<8x256xbf16>
    tpu.vector_store %arg6[%c0_11, %c0_12], %12 {strides = array<i32>} : memref<8x256xbf16, #tpu.memory_space<vmem>>, vector<8x256xbf16>,
    return
  }
  func.func @transform_0(%arg0: i32) -> (i32, i32) {
    %c0_i32 = arith.constant 0 : i32
    %c0_i32_0 = arith.constant 0 : i32
    return %arg0, %c0_i32 : i32, i32
  }
  func.func @transform_1(%arg0: i32) -> (i32, i32) {
    %c0_i32 = arith.constant 0 : i32
    %c0_i32_0 = arith.constant 0 : i32
    %c0_i32_1 = arith.constant 0 : i32
    return %c0_i32, %c0_i32_0 : i32, i32
  }
  func.func @transform_2(%arg0: i32) -> (i32, i32) {
    %c0_i32 = arith.constant 0 : i32
    %c0_i32_0 = arith.constant 0 : i32
    return %arg0, %c0_i32 : i32, i32
  }
  func.func @transform_3(%arg0: i32) -> (i32, i32) {
    %c0_i32 = arith.constant 0 : i32
    %c0_i32_0 = arith.constant 0 : i32
    %c0_i32_1 = arith.constant 0 : i32
    return %c0_i32, %c0_i32_0 : i32, i32
  }
  func.func @transform_4(%arg0: i32) -> (i32, i32) {
    %c0_i32 = arith.constant 0 : i32
    %c0_i32_0 = arith.constant 0 : i32
    %c0_i32_1 = arith.constant 0 : i32
    return %c0_i32, %c0_i32_0 : i32, i32
  }
  func.func @transform_5(%arg0: i32) -> (i32, i32) {
    %c0_i32 = arith.constant 0 : i32
    %c0_i32_0 = arith.constant 0 : i32
    return %arg0, %c0_i32 : i32, i32
  }
}

</mosaic_0001>

<llo_original>
// kernel: _lambda_.16
$region0: #{_lambda_.16}
  #allocation0 [shape = 'u32[]', space=smem, size = 0x4, offset = 0x4, fixed_abs, tag = 'smem constant byte address 0x4 - core index']
  #allocation1 [shape = 'u32[144,128]{1,0:T(1,128)}', space=vmem, size = 0x12000, scoped, tag = 'internal scratch']
  %s0 = inlined_call_operand.vmem [shape: bf16[2048,27], index: 0, kind: input, shape index: {}]
  %s1 = inlined_call_operand.vmem [shape: bf16[27,8], index: 1, kind: input, shape index: {}]
  %s2 = inlined_call_operand.vmem [shape: f32[1,8], index: 2, kind: input, shape index: {}]
  %s3 = inlined_call_operand.vmem [shape: bf16[2048,8], index: 3, kind: output, shape index: {}]
  %s4 = sld [smem:[#allocation0]]
  $region45: #{_lambda_.16} parent=0
    _
  %s6 = ssub.s32 1, %s4
  %s7 = scalar_select 0, %s6, %s4
  loop: start=0, step=1, limit=6
  $region2: #{_lambda_.16} parent=0 // loop_pre_header
    _
  $region3: #{_lambda_.16} parent=0 // loop_header
    %s9 = sphi 0, %s13
    %p10 = scmp.ge.s32.totalorder %s9, 6
    %s19 = sphi 0, %s21
    %s22 = sphi 0, %s19
    %s23 = sphi 0, %s22
    %s39 = sphi 0, %s23
    %s43 = sphi 0, %s43
    %s45 = sphi 0, %s43
    %s46 = sphi 0, %s45
    %s60 = sphi 0, %s46
    %s64 = sphi 0, %s64
    %s66 = sphi 0, %s64
    %s67 = sphi 0, %s66
    %s81 = sphi 0, %s67
    %s87 = sphi 0, %s89
    %s90 = sphi 0, %s87
    %s91 = sphi 0, %s90
    %s107 = sphi 0, %s91
  $region4: #{_lambda_.16} parent=0 // loop_header_branch
    %12 = sbr.rel (%p10) target = $region8
  $region5: #{_lambda_.16} parent=0 // loop_body
    %s14 = ssub.s32 %s9, 1
    %s15 = ssub.s32 %s9, 2
    %s16 = sadd.s32 %s9, 1
    %s17 = ssub.s32 %s9, %s16
    %p18 = scmp.eq.s32.totalorder %s17, 0
    %s20 = sadd.s32 %s19, 1
    %s21 = scalar_select %p18, %s19, %s20
    %p24 = pneg %p18
    %p25 = scmp.eq.s32.totalorder %s9, 3
    %p26 = por %p24, %p25
    %p27 = scmp.ne.s32.totalorder %s19, %s22
    %p28 = scmp.eq.s32.totalorder %s9, 0
    %p29 = por %p27, %p28
    %p30 = scmp.ne.s32.totalorder %s19, %s22
    %p31 = scmp.eq.s32.totalorder %s14, 3
    %p32 = por %p30, %p31
    %p33 = scmp.ne.s32.totalorder %s22, %s23
    %p34 = scmp.eq.s32.totalorder %s14, 0
    %p35 = por %p33, %p34
    %p36 = scmp.ne.s32.totalorder %s22, %s23
    %p37 = scmp.eq.s32.totalorder %s15, 3
    %p38 = por %p36, %p37
    %p40 = scmp.ne.s32.totalorder %s23, %s39
    %p41 = scmp.eq.s32.totalorder %s15, 0
    %p42 = por %p40, %p41
    %s44 = sadd.s32 %s43, 1
    %p47 = scmp.eq.s32.totalorder %s9, 3
    %p48 = scmp.ne.s32.totalorder %s43, %s45
    %p49 = scmp.eq.s32.totalorder %s9, 0
    %p50 = por %p48, %p49
    %p51 = scmp.ne.s32.totalorder %s43, %s45
    %p52 = scmp.eq.s32.totalorder %s14, 3
    %p53 = por %p51, %p52
    %p54 = scmp.ne.s32.totalorder %s45, %s46
    %p55 = scmp.eq.s32.totalorder %s14, 0
    %p56 = por %p54, %p55
    %p57 = scmp.ne.s32.totalorder %s45, %s46
    %p58 = scmp.eq.s32.totalorder %s15, 3
    %p59 = por %p57, %p58
    %p61 = scmp.ne.s32.totalorder %s46, %s60
    %p62 = scmp.eq.s32.totalorder %s15, 0
    %p63 = por %p61, %p62
    %s65 = sadd.s32 %s64, 1
    %p68 = scmp.eq.s32.totalorder %s9, 3
    %p69 = scmp.ne.s32.totalorder %s64, %s66
    %p70 = scmp.eq.s32.totalorder %s9, 0
    %p71 = por %p69, %p70
    %p72 = scmp.ne.s32.totalorder %s64, %s66
    %p73 = scmp.eq.s32.totalorder %s14, 3
    %p74 = por %p72, %p73
    %p75 = scmp.ne.s32.totalorder %s66, %s67
    %p76 = scmp.eq.s32.totalorder %s14, 0
    %p77 = por %p75, %p76
    %p78 = scmp.ne.s32.totalorder %s66, %s67
    %p79 = scmp.eq.s32.totalorder %s15, 3
    %p80 = por %p78, %p79
    %p82 = scmp.ne.s32.totalorder %s67, %s81
    %p83 = scmp.eq.s32.totalorder %s15, 0
    %p84 = por %p82, %p83
    %s85 = ssub.s32 %s9, %s16
    %p86 = scmp.eq.s32.totalorder %s85, 0
    %s88 = sadd.s32 %s87, 1
    %s89 = scalar_select %p86, %s87, %s88
    %p92 = pneg %p86
    %p93 = scmp.eq.s32.totalorder %s9, 3
    %p94 = por %p92, %p93
    %p95 = scmp.ne.s32.totalorder %s87, %s90
    %p96 = scmp.eq.s32.totalorder %s9, 0
    %p97 = por %p95, %p96
    %p98 = scmp.ne.s32.totalorder %s87, %s90
    %p99 = scmp.eq.s32.totalorder %s14, 3
    %p100 = por %p98, %p99
    %p101 = scmp.ne.s32.totalorder %s90, %s91
    %p102 = scmp.eq.s32.totalorder %s14, 0
    %p103 = por %p101, %p102
    %p104 = scmp.ne.s32.totalorder %s90, %s91
    %p105 = scmp.eq.s32.totalorder %s15, 3
    %p106 = por %p104, %p105
    %p108 = scmp.ne.s32.totalorder %s91, %s107
    %p109 = scmp.eq.s32.totalorder %s15, 0
    %p110 = por %p108, %p109
    %p111 = scmp.le.s32.totalorder 1, %s9
    %p112 = scmp.lt.s32.totalorder %s9, 5
    %p113 = pnand %p111, %p112
    %p114 = pneg %p113
    // Predicated region
    $region9: #{_lambda_.16} parent=5 // pred_check
      _
    $region10: #{_lambda_.16} parent=5 // pred_check_branch
      %116 = sbr.rel (%p113) target = $region12
    $region11: #{_lambda_.16} parent=5 // pred_region
      %s117 = ssub.s32 %s9, 1
      // Predicated region
      $region13: #{_lambda_.16} parent=11 // pred_check
        %p118 = pneg %p56
      $region14: #{_lambda_.16} parent=11 // pred_check_branch
        %120 = sbr.rel (%p118) target = $region16
      $region15: #{_lambda_.16} parent=11 // pred_region
        _
      $region16: #{_lambda_.16} parent=11 // pred_fallthru
        _
      // Predicated region
      $region17: #{_lambda_.16} parent=11 // pred_check
        %p121 = pneg %p77
      $region18: #{_lambda_.16} parent=11 // pred_check_branch
        %123 = sbr.rel (%p121) target = $region20
      $region19: #{_lambda_.16} parent=11 // pred_region
        _
      $region20: #{_lambda_.16} parent=11 // pred_fallthru
        _
    $region12: #{_lambda_.16} parent=5 // pred_fallthru
      _
    %p124 = scmp.lt.s32.totalorder %s9, 4
    // Predicated region
    $region21: #{_lambda_.16} parent=5 // pred_check
      %p125 = pneg %p124
    $region22: #{_lambda_.16} parent=5 // pred_check_branch
      %127 = sbr.rel (%p125) target = $region24
    $region23: #{_lambda_.16} parent=5 // pred_region
      // Predicated region
      $region25: #{_lambda_.16} parent=23 // pred_check
        %p128 = pneg %p29
      $region26: #{_lambda_.16} parent=23 // pred_check_branch
        %130 = sbr.rel (%p128) target = $region28
      $region27: #{_lambda_.16} parent=23 // pred_region
        %s131 = smul.u32 64, %s9
        %p132 = scmp.lt.s32.totalorder %s131, 255
        %s133 = scalar_select %p132, %s131, 255
        %s134 = smul.addr %s133, 4
        %s135 = scalar_lea.vmem %s0, %s134
        %s136 = smul.u32 64, %s9
      $region28: #{_lambda_.16} parent=23 // pred_fallthru
        _
    $region24: #{_lambda_.16} parent=5 // pred_fallthru
      _
    %p137 = scmp.le.s32.totalorder 1, %s9
    %p138 = scmp.lt.s32.totalorder %s9, 5
    %p139 = pnand %p137, %p138
    %p140 = pneg %p139
    // Predicated region
    $region29: #{_lambda_.16} parent=5 // pred_check
      _
    $region30: #{_lambda_.16} parent=5 // pred_check_branch
      %142 = sbr.rel (%p139) target = $region32
    $region31: #{_lambda_.16} parent=5 // pred_region
      %s143 = ssub.s32 %s9, 1
      %s144 = smul.u32 64, %s14
      %p145 = scmp.lt.s32.totalorder %s144, 255
      %s146 = scalar_select %p145, %s144, 255
      %s147 = smul.addr %s146, 4
      %s148 = scalar_lea.vmem %s0, %s147
      %p149 = pneg %p35
      %p150 = pneg %p32
      %p151 = pneg %p56
      %p152 = pneg %p53
      %p153 = pneg %p77
      %p154 = pneg %p74
      %p155 = pneg %p103
      %p156 = pneg %p100
      %s157 = smul.u32 64, %s14
      %p158 = scmp.lt.s32.totalorder %s157, 255
      %s159 = scalar_select %p158, %s157, 255
      %s160 = smul.addr %s159, 4
      %s161 = scalar_lea.vmem %s3, %s160
      %s162 = smul.u32 64, %s14
      %p163 = scmp.lt.s32.totalorder %s162, 255
      %s164 = scalar_select %p163, %s162, 255
      %s165 = smul.addr %s164, 4
      %s166 = scalar_lea.vmem %s0, %s165
      %s167 = smul.u32 64, %s14
      %s168 = smul.u32 64, %s14
      %p169 = scmp.lt.s32.totalorder %s168, 255
      %s170 = scalar_select %p169, %s168, 255
      %s171 = smul.addr %s170, 4
      %s172 = scalar_lea.vmem %s3, %s171
      %s173 = smul.u32 64, %s14
      %v175 = vld [vmem:[%s166] sm:$0xf]
      %v176 = vld [vmem:[%s166 + $0x4] sm:$0xf]
      %v177 = vld [vmem:[%s166 + $0x8] sm:$0xf]
      %v178 = vld [vmem:[%s166 + $0xc] sm:$0xf]
      %v179 = vld [vmem:[%s166 + $0x10] sm:$0xf]
      %v180 = vld [vmem:[%s166 + $0x14] sm:$0xf]
      %v181 = vld [vmem:[%s166 + $0x18] sm:$0xf]
      %v182 = vld [vmem:[%s166 + $0x1c] sm:$0xf]
      %v183 = vld [vmem:[%s166 + $0x20] sm:$0xf]
      %v184 = vld [vmem:[%s166 + $0x24] sm:$0xf]
      %v185 = vld [vmem:[%s166 + $0x28] sm:$0xf]
      %v186 = vld [vmem:[%s166 + $0x2c] sm:$0xf]
      %v187 = vld [vmem:[%s166 + $0x30] sm:$0xf]
      %v188 = vld [vmem:[%s166 + $0x34] sm:$0xf]
      %v189 = vld [vmem:[%s166 + $0x38] sm:$0xf]
      %v190 = vld [vmem:[%s166 + $0x3c] sm:$0xf]
      %v191 = vld [vmem:[%s166 + $0x40] sm:$0xf]
      %v192 = vld [vmem:[%s166 + $0x44] sm:$0xf]
      %v193 = vld [vmem:[%s166 + $0x48] sm:$0xf]
      %v194 = vld [vmem:[%s166 + $0x4c] sm:$0xf]
      %v195 = vld [vmem:[%s166 + $0x50] sm:$0xf]
      %v196 = vld [vmem:[%s166 + $0x54] sm:$0xf]
      %v197 = vld [vmem:[%s166 + $0x58] sm:$0xf]
      %v198 = vld [vmem:[%s166 + $0x5c] sm:$0xf]
      %v199 = vld [vmem:[%s166 + $0x60] sm:$0xf]
      %v200 = vld [vmem:[%s166 + $0x64] sm:$0xf]
      %v201 = vld [vmem:[%s166 + $0x68] sm:$0xf]
      %v202 = vld [vmem:[%s166 + $0x6c] sm:$0xf]
      %v203 = vld [vmem:[%s166 + $0x70] sm:$0xf]
      %v204 = vld [vmem:[%s166 + $0x74] sm:$0xf]
      %v205 = vld [vmem:[%s166 + $0x78] sm:$0xf]
      %v206 = vld [vmem:[%s166 + $0x7c] sm:$0xf]
      %v207 = vld [vmem:[%s166 + $0x80] sm:$0xf]
      %v208 = vld [vmem:[%s166 + $0x84] sm:$0xf]
      %v209 = vld [vmem:[%s166 + $0x88] sm:$0xf]
      %v210 = vld [vmem:[%s166 + $0x8c] sm:$0xf]
      %v211 = vld [vmem:[%s166 + $0x90] sm:$0xf]
      %v212 = vld [vmem:[%s166 + $0x94] sm:$0xf]
      %v213 = vld [vmem:[%s166 + $0x98] sm:$0xf]
      %v214 = vld [vmem:[%s166 + $0x9c] sm:$0xf]
      %v215 = vld [vmem:[%s166 + $0xa0] sm:$0xf]
      %v216 = vld [vmem:[%s166 + $0xa4] sm:$0xf]
      %v217 = vld [vmem:[%s166 + $0xa8] sm:$0xf]
      %v218 = vld [vmem:[%s166 + $0xac] sm:$0xf]
      %v219 = vld [vmem:[%s166 + $0xb0] sm:$0xf]
      %v220 = vld [vmem:[%s166 + $0xb4] sm:$0xf]
      %v221 = vld [vmem:[%s166 + $0xb8] sm:$0xf]
      %v222 = vld [vmem:[%s166 + $0xbc] sm:$0xf]
      %v223 = vld [vmem:[%s166 + $0xc0] sm:$0xf]
      %v224 = vld [vmem:[%s166 + $0xc4] sm:$0xf]
      %v225 = vld [vmem:[%s166 + $0xc8] sm:$0xf]
      %v226 = vld [vmem:[%s166 + $0xcc] sm:$0xf]
      %v227 = vld [vmem:[%s166 + $0xd0] sm:$0xf]
      %v228 = vld [vmem:[%s166 + $0xd4] sm:$0xf]
      %v229 = vld [vmem:[%s166 + $0xd8] sm:$0xf]
      %v230 = vld [vmem:[%s166 + $0xdc] sm:$0xf]
      %v231 = vld [vmem:[%s166 + $0xe0] sm:$0xf]
      %v232 = vld [vmem:[%s166 + $0xe4] sm:$0xf]
      %v233 = vld [vmem:[%s166 + $0xe8] sm:$0xf]
      %v234 = vld [vmem:[%s166 + $0xec] sm:$0xf]
      %v235 = vld [vmem:[%s166 + $0xf0] sm:$0xf]
      %v236 = vld [vmem:[%s166 + $0xf4] sm:$0xf]
      %v237 = vld [vmem:[%s166 + $0xf8] sm:$0xf]
      %v238 = vld [vmem:[%s166 + $0xfc] sm:$0xf]
      %v239 = vld [vmem:[%s1] sm:$0xf]
      %v240 = vld [vmem:[%s1 + $0x4] sm:$0xf]
      %v241 = vld [vmem:[%s1 + $0x8] sm:$0xf]
      %v242 = vld [vmem:[%s1 + $0xc] sm:$0x3]
      %v243 = vld [vmem:[%s2] sm:$0x1]
      %v245 = vlaneseq
      %v246 = vshrl.u32 %v245, 7
      %v247 = vsub.s32 0, %v246
      %v248 = vrot.slane %v243, %v247
      %v314 = vunpack.c.l.b16 %v175
      %v315 = vunpack.c.l.b16 %v176
      %v316 = vunpack.c.l.b16 %v177
      %v317 = vunpack.c.l.b16 %v178
      %v318 = vunpack.c.l.b16 %v179
      %v319 = vunpack.c.l.b16 %v180
      %v320 = vunpack.c.l.b16 %v181
      %v321 = vunpack.c.l.b16 %v182
      %v322 = vunpack.c.l.b16 %v183
      %v323 = vunpack.c.l.b16 %v184
      %v324 = vunpack.c.l.b16 %v185
      %v325 = vunpack.c.l.b16 %v186
      %v326 = vunpack.c.l.b16 %v187
      %v327 = vunpack.c.l.b16 %v188
      %v328 = vunpack.c.l.b16 %v189
      %v329 = vunpack.c.l.b16 %v190
      %v330 = vunpack.c.l.b16 %v191
      %v331 = vunpack.c.l.b16 %v192
      %v332 = vunpack.c.l.b16 %v193
      %v333 = vunpack.c.l.b16 %v194
      %v334 = vunpack.c.l.b16 %v195
      %v335 = vunpack.c.l.b16 %v196
      %v336 = vunpack.c.l.b16 %v197
      %v337 = vunpack.c.l.b16 %v198
      %v338 = vunpack.c.l.b16 %v199
      %v339 = vunpack.c.l.b16 %v200
      %v340 = vunpack.c.l.b16 %v201
      %v341 = vunpack.c.l.b16 %v202
      %v342 = vunpack.c.l.b16 %v203
      %v343 = vunpack.c.l.b16 %v204
      %v344 = vunpack.c.l.b16 %v205
      %v345 = vunpack.c.l.b16 %v206
      %v346 = vunpack.c.l.b16 %v207
      %v347 = vunpack.c.l.b16 %v208
      %v348 = vunpack.c.l.b16 %v209
      %v349 = vunpack.c.l.b16 %v210
      %v350 = vunpack.c.l.b16 %v211
      %v351 = vunpack.c.l.b16 %v212
      %v352 = vunpack.c.l.b16 %v213
      %v353 = vunpack.c.l.b16 %v214
      %v354 = vunpack.c.l.b16 %v215
      %v355 = vunpack.c.l.b16 %v216
      %v356 = vunpack.c.l.b16 %v217
      %v357 = vunpack.c.l.b16 %v218
      %v358 = vunpack.c.l.b16 %v219
      %v359 = vunpack.c.l.b16 %v220
      %v360 = vunpack.c.l.b16 %v221
      %v361 = vunpack.c.l.b16 %v222
      %v362 = vunpack.c.l.b16 %v223
      %v363 = vunpack.c.l.b16 %v224
      %v364 = vunpack.c.l.b16 %v225
      %v365 = vunpack.c.l.b16 %v226
      %v366 = vunpack.c.l.b16 %v227
      %v367 = vunpack.c.l.b16 %v228
      %v368 = vunpack.c.l.b16 %v229
      %v369 = vunpack.c.l.b16 %v230
      %v370 = vunpack.c.l.b16 %v231
      %v371 = vunpack.c.l.b16 %v232
      %v372 = vunpack.c.l.b16 %v233
      %v373 = vunpack.c.l.b16 %v234
      %v374 = vunpack.c.l.b16 %v235
      %v375 = vunpack.c.l.b16 %v236
      %v376 = vunpack.c.l.b16 %v237
      %v377 = vunpack.c.l.b16 %v238
      %v378 = vpack.c.b16 %v315, %v314
      %v379 = vpack.c.b16 %v317, %v316
      %v380 = vpack.c.b16 %v319, %v318
      %v381 = vpack.c.b16 %v321, %v320
      %v382 = vpack.c.b16 %v323, %v322
      %v383 = vpack.c.b16 %v325, %v324
      %v384 = vpack.c.b16 %v327, %v326
      %v385 = vpack.c.b16 %v329, %v328
      %v386 = vpack.c.b16 %v331, %v330
      %v387 = vpack.c.b16 %v333, %v332
      %v388 = vpack.c.b16 %v335, %v334
      %v389 = vpack.c.b16 %v337, %v336
      %v390 = vpack.c.b16 %v339, %v338
      %v391 = vpack.c.b16 %v341, %v340
      %v392 = vpack.c.b16 %v343, %v342
      %v393 = vpack.c.b16 %v345, %v344
      %v394 = vpack.c.b16 %v347, %v346
      %v395 = vpack.c.b16 %v349, %v348
      %v396 = vpack.c.b16 %v351, %v350
      %v397 = vpack.c.b16 %v353, %v352
      %v398 = vpack.c.b16 %v355, %v354
      %v399 = vpack.c.b16 %v357, %v356
      %v400 = vpack.c.b16 %v359, %v358
      %v401 = vpack.c.b16 %v361, %v360
      %v402 = vpack.c.b16 %v363, %v362
      %v403 = vpack.c.b16 %v365, %v364
      %v404 = vpack.c.b16 %v367, %v366
      %v405 = vpack.c.b16 %v369, %v368
      %v406 = vpack.c.b16 %v371, %v370
      %v407 = vpack.c.b16 %v373, %v372
      %v408 = vpack.c.b16 %v375, %v374
      %v409 = vpack.c.b16 %v377, %v376
      %v414 = vunpack.c.l.b16 %v239
      %v415 = vunpack.c.l.b16 %v240
      %v416 = vunpack.c.l.b16 %v241
      %v417 = vunpack.c.l.b16 %v242
      %v418 = vpack.c.b16 %v415, %v414
      %v419 = vpack.c.b16 %v417, %v416
      %vm421 = vcmask 220160
      %v423 = vsel %vm421, %v378, 0
      %v426 = vsel %vm421, %v379, 0
      %v429 = vsel %vm421, %v380, 0
      %v432 = vsel %vm421, %v381, 0
      %v435 = vsel %vm421, %v382, 0
      %v438 = vsel %vm421, %v383, 0
      %v441 = vsel %vm421, %v384, 0
      %v444 = vsel %vm421, %v385, 0
      %v447 = vsel %vm421, %v386, 0
      %v450 = vsel %vm421, %v387, 0
      %v453 = vsel %vm421, %v388, 0
      %v456 = vsel %vm421, %v389, 0
      %v459 = vsel %vm421, %v390, 0
      %v462 = vsel %vm421, %v391, 0
      %v465 = vsel %vm421, %v392, 0
      %v468 = vsel %vm421, %v393, 0
      %v471 = vsel %vm421, %v394, 0
      %v474 = vsel %vm421, %v395, 0
      %v477 = vsel %vm421, %v396, 0
      %v480 = vsel %vm421, %v397, 0
      %v483 = vsel %vm421, %v398, 0
      %v486 = vsel %vm421, %v399, 0
      %v489 = vsel %vm421, %v400, 0
      %v492 = vsel %vm421, %v401, 0
      %v495 = vsel %vm421, %v402, 0
      %v498 = vsel %vm421, %v403, 0
      %v501 = vsel %vm421, %v404, 0
      %v504 = vsel %vm421, %v405, 0
      %v507 = vsel %vm421, %v406, 0
      %v510 = vsel %vm421, %v407, 0
      %v513 = vsel %vm421, %v408, 0
      %v516 = vsel %vm421, %v409, 0
      %vm518 = vcmask 1044480
      %vm519 = vcmask 1045504
      %v520 = vsel %vm518, 4294967295, 65535
      %v521 = vsel %vm519, %v520, 0
      %v523 = vand.u32 %v419, %v521
      %525 = vmatprep.subr.bf16.mxu0 0
      %526 = vmatpush1.bf16.msra.mxu0 %v418
      %527 = vmatprep.subr.bf16.mxu0 0
      %528 = vmatpush1.bf16.msra.mxu0 %v523
      %529 = vmatprep.subr.bf16.mxu0 0
      %530 = vmatpush1.bf16.msra.mxu0 0
      %531 = vmatprep.subr.bf16.mxu0 0
      %532 = vmatpush1.bf16.msra.mxu0 0
      %533 = vmatprep.subr.bf16.mxu0 0
      %534 = vmatpush1.bf16.msra.mxu0 0
      %535 = vmatprep.subr.bf16.mxu0 0
      %536 = vmatpush1.bf16.msra.mxu0 0
      %537 = vmatprep.subr.bf16.mxu0 0
      %538 = vmatpush1.bf16.msra.mxu0 0
      %539 = vmatprep.subr.bf16.mxu0 0
      %540 = vmatpush1.bf16.msra.mxu0 0
      %541 = vmatprep.subr.bf16.mxu0 0
      %542 = vmatpush1.bf16.msra.mxu0 0
      %543 = vmatprep.subr.bf16.mxu0 0
      %544 = vmatpush1.bf16.msra.mxu0 0
      %545 = vmatprep.subr.bf16.mxu0 0
      %546 = vmatpush1.bf16.msra.mxu0 0
      %547 = vmatprep.subr.bf16.mxu0 0
      %548 = vmatpush1.bf16.msra.mxu0 0
      %549 = vmatprep.subr.bf16.mxu0 0
      %550 = vmatpush1.bf16.msra.mxu0 0
      %551 = vmatprep.subr.bf16.mxu0 0
      %552 = vmatpush1.bf16.msra.mxu0 0
      %553 = vmatprep.subr.bf16.mxu0 0
      %554 = vmatpush1.bf16.msra.mxu0 0
      %555 = vmatprep.subr.bf16.mxu0 0
      %556 = vmatpush1.bf16.msra.mxu0 0
      %557 = vmatprep.mubr.bf16.mxu0 0
      %558 = vmatmul.mubr.bf16.gmra.mrb[0].mxu0 %v423
      %v559 = vpop.f32.mrb[0].mxu0
      %v560 = vadd.f32 %v248, %v559
      %v561 = vpop.f32.mrb[0].mxu0
      %v562 = vpop.f32.mrb[0].mxu0
      %v563 = vadd.f32 %v248, %v562
      %v564 = vpop.f32.mrb[0].mxu0
      %565 = vmatprep.mubr.bf16.mxu0 0
      %566 = vmatmul.mubr.bf16.gmra.mrb[0].mxu0 %v426
      %v567 = vpop.f32.mrb[0].mxu0
      %v568 = vadd.f32 %v248, %v567
      %v569 = vpop.f32.mrb[0].mxu0
      %v570 = vpop.f32.mrb[0].mxu0
      %v571 = vadd.f32 %v248, %v570
      %v572 = vpop.f32.mrb[0].mxu0
      %573 = vmatprep.mubr.bf16.mxu0 0
      %574 = vmatmul.mubr.bf16.gmra.mrb[0].mxu0 %v429
      %v575 = vpop.f32.mrb[0].mxu0
      %v576 = vadd.f32 %v248, %v575
      %v577 = vpop.f32.mrb[0].mxu0
      %v578 = vpop.f32.mrb[0].mxu0
      %v579 = vadd.f32 %v248, %v578
      %v580 = vpop.f32.mrb[0].mxu0
      %581 = vmatprep.mubr.bf16.mxu0 0
      %582 = vmatmul.mubr.bf16.gmra.mrb[0].mxu0 %v432
      %v583 = vpop.f32.mrb[0].mxu0
      %v584 = vadd.f32 %v248, %v583
      %v585 = vpop.f32.mrb[0].mxu0
      %v586 = vpop.f32.mrb[0].mxu0
      %v587 = vadd.f32 %v248, %v586
      %v588 = vpop.f32.mrb[0].mxu0
      %589 = vmatprep.mubr.bf16.mxu0 0
      %590 = vmatmul.mubr.bf16.gmra.mrb[0].mxu0 %v435
      %v591 = vpop.f32.mrb[0].mxu0
      %v592 = vadd.f32 %v248, %v591
      %v593 = vpop.f32.mrb[0].mxu0
      %v594 = vpop.f32.mrb[0].mxu0
      %v595 = vadd.f32 %v248, %v594
      %v596 = vpop.f32.mrb[0].mxu0
      %597 = vmatprep.mubr.bf16.mxu0 0
      %598 = vmatmul.mubr.bf16.gmra.mrb[0].mxu0 %v438
      %v599 = vpop.f32.mrb[0].mxu0
      %v600 = vadd.f32 %v248, %v599
      %v601 = vpop.f32.mrb[0].mxu0
      %v602 = vpop.f32.mrb[0].mxu0
      %v603 = vadd.f32 %v248, %v602
      %v604 = vpop.f32.mrb[0].mxu0
      %605 = vmatprep.mubr.bf16.mxu0 0
      %606 = vmatmul.mubr.bf16.gmra.mrb[0].mxu0 %v441
      %v607 = vpop.f32.mrb[0].mxu0
      %v608 = vadd.f32 %v248, %v607
      %v609 = vpop.f32.mrb[0].mxu0
      %v610 = vpop.f32.mrb[0].mxu0
      %v611 = vadd.f32 %v248, %v610
      %v612 = vpop.f32.mrb[0].mxu0
      %613 = vmatprep.mubr.bf16.mxu0 0
      %614 = vmatmul.mubr.bf16.gmra.mrb[0].mxu0 %v444
      %v615 = vpop.f32.mrb[0].mxu0
      %v616 = vadd.f32 %v248, %v615
      %v617 = vpop.f32.mrb[0].mxu0
      %v618 = vpop.f32.mrb[0].mxu0
      %v619 = vadd.f32 %v248, %v618
      %v620 = vpop.f32.mrb[0].mxu0
      %621 = vmatprep.mubr.bf16.mxu0 0
      %622 = vmatmul.mubr.bf16.gmra.mrb[0].mxu0 %v447
      %v623 = vpop.f32.mrb[0].mxu0
      %v624 = vadd.f32 %v248, %v623
      %v625 = vpop.f32.mrb[0].mxu0
      %v626 = vpop.f32.mrb[0].mxu0
      %v627 = vadd.f32 %v248, %v626
      %v628 = vpop.f32.mrb[0].mxu0
      %629 = vmatprep.mubr.bf16.mxu0 0
      %630 = vmatmul.mubr.bf16.gmra.mrb[0].mxu0 %v450
      %v631 = vpop.f32.mrb[0].mxu0
      %v632 = vadd.f32 %v248, %v631
      %v633 = vpop.f32.mrb[0].mxu0
      %v634 = vpop.f32.mrb[0].mxu0
      %v635 = vadd.f32 %v248, %v634
      %v636 = vpop.f32.mrb[0].mxu0
      %637 = vmatprep.mubr.bf16.mxu0 0
      %638 = vmatmul.mubr.bf16.gmra.mrb[0].mxu0 %v453
      %v639 = vpop.f32.mrb[0].mxu0
      %v640 = vadd.f32 %v248, %v639
      %v641 = vpop.f32.mrb[0].mxu0
      %v642 = vpop.f32.mrb[0].mxu0
      %v643 = vadd.f32 %v248, %v642
      %v644 = vpop.f32.mrb[0].mxu0
      %645 = vmatprep.mubr.bf16.mxu0 0
      %646 = vmatmul.mubr.bf16.gmra.mrb[0].mxu0 %v456
      %v647 = vpop.f32.mrb[0].mxu0
      %v648 = vadd.f32 %v248, %v647
      %v649 = vpop.f32.mrb[0].mxu0
      %v650 = vpop.f32.mrb[0].mxu0
      %v651 = vadd.f32 %v248, %v650
      %v652 = vpop.f32.mrb[0].mxu0
      %653 = vmatprep.mubr.bf16.mxu0 0
      %654 = vmatmul.mubr.bf16.gmra.mrb[0].mxu0 %v459
      %v655 = vpop.f32.mrb[0].mxu0
      %v656 = vadd.f32 %v248, %v655
      %v657 = vpop.f32.mrb[0].mxu0
      %v658 = vpop.f32.mrb[0].mxu0
      %v659 = vadd.f32 %v248, %v658
      %v660 = vpop.f32.mrb[0].mxu0
      %661 = vmatprep.mubr.bf16.mxu0 0
      %662 = vmatmul.mubr.bf16.gmra.mrb[0].mxu0 %v462
      %v663 = vpop.f32.mrb[0].mxu0
      %v664 = vadd.f32 %v248, %v663
      %v665 = vpop.f32.mrb[0].mxu0
      %v666 = vpop.f32.mrb[0].mxu0
      %v667 = vadd.f32 %v248, %v666
      %v668 = vpop.f32.mrb[0].mxu0
      %669 = vmatprep.mubr.bf16.mxu0 0
      %670 = vmatmul.mubr.bf16.gmra.mrb[0].mxu0 %v465
      %v671 = vpop.f32.mrb[0].mxu0
      %v672 = vadd.f32 %v248, %v671
      %v673 = vpop.f32.mrb[0].mxu0
      %v674 = vpop.f32.mrb[0].mxu0
      %v675 = vadd.f32 %v248, %v674
      %v676 = vpop.f32.mrb[0].mxu0
      %677 = vmatprep.mubr.bf16.mxu0 0
      %678 = vmatmul.mubr.bf16.gmra.mrb[0].mxu0 %v468
      %v679 = vpop.f32.mrb[0].mxu0
      %v680 = vadd.f32 %v248, %v679
      %v681 = vpop.f32.mrb[0].mxu0
      %v682 = vpop.f32.mrb[0].mxu0
      %v683 = vadd.f32 %v248, %v682
      %v684 = vpop.f32.mrb[0].mxu0
      %685 = vmatprep.mubr.bf16.mxu0 0
      %686 = vmatmul.mubr.bf16.gmra.mrb[0].mxu0 %v471
      %v687 = vpop.f32.mrb[0].mxu0
      %v688 = vadd.f32 %v248, %v687
      %v689 = vpop.f32.mrb[0].mxu0
      %v690 = vpop.f32.mrb[0].mxu0
      %v691 = vadd.f32 %v248, %v690
      %v692 = vpop.f32.mrb[0].mxu0
      %693 = vmatprep.mubr.bf16.mxu0 0
      %694 = vmatmul.mubr.bf16.gmra.mrb[0].mxu0 %v474
      %v695 = vpop.f32.mrb[0].mxu0
      %v696 = vadd.f32 %v248, %v695
      %v697 = vpop.f32.mrb[0].mxu0
      %v698 = vpop.f32.mrb[0].mxu0
      %v699 = vadd.f32 %v248, %v698
      %v700 = vpop.f32.mrb[0].mxu0
      %701 = vmatprep.mubr.bf16.mxu0 0
      %702 = vmatmul.mubr.bf16.gmra.mrb[0].mxu0 %v477
      %v703 = vpop.f32.mrb[0].mxu0
      %v704 = vadd.f32 %v248, %v703
      %v705 = vpop.f32.mrb[0].mxu0
      %v706 = vpop.f32.mrb[0].mxu0
      %v707 = vadd.f32 %v248, %v706
      %v708 = vpop.f32.mrb[0].mxu0
      %709 = vmatprep.mubr.bf16.mxu0 0
      %710 = vmatmul.mubr.bf16.gmra.mrb[0].mxu0 %v480
      %v711 = vpop.f32.mrb[0].mxu0
      %v712 = vadd.f32 %v248, %v711
      %v713 = vpop.f32.mrb[0].mxu0
      %v714 = vpop.f32.mrb[0].mxu0
      %v715 = vadd.f32 %v248, %v714
      %v716 = vpop.f32.mrb[0].mxu0
      %717 = vmatprep.mubr.bf16.mxu0 0
      %718 = vmatmul.mubr.bf16.gmra.mrb[0].mxu0 %v483
      %v719 = vpop.f32.mrb[0].mxu0
      %v720 = vadd.f32 %v248, %v719
      %v721 = vpop.f32.mrb[0].mxu0
      %v722 = vpop.f32.mrb[0].mxu0
      %v723 = vadd.f32 %v248, %v722
      %v724 = vpop.f32.mrb[0].mxu0
      %725 = vmatprep.mubr.bf16.mxu0 0
      %726 = vmatmul.mubr.bf16.gmra.mrb[0].mxu0 %v486
      %v727 = vpop.f32.mrb[0].mxu0
      %v728 = vadd.f32 %v248, %v727
      %v729 = vpop.f32.mrb[0].mxu0
      %v730 = vpop.f32.mrb[0].mxu0
      %v731 = vadd.f32 %v248, %v730
      %v732 = vpop.f32.mrb[0].mxu0
      %733 = vmatprep.mubr.bf16.mxu0 0
      %734 = vmatmul.mubr.bf16.gmra.mrb[0].mxu0 %v489
      %v735 = vpop.f32.mrb[0].mxu0
      %v736 = vadd.f32 %v248, %v735
      %v737 = vpop.f32.mrb[0].mxu0
      %v738 = vpop.f32.mrb[0].mxu0
      %v739 = vadd.f32 %v248, %v738
      %v740 = vpop.f32.mrb[0].mxu0
      %741 = vmatprep.mubr.bf16.mxu0 0
      %742 = vmatmul.mubr.bf16.gmra.mrb[0].mxu0 %v492
      %v743 = vpop.f32.mrb[0].mxu0
      %v744 = vadd.f32 %v248, %v743
      %v745 = vpop.f32.mrb[0].mxu0
      %v746 = vpop.f32.mrb[0].mxu0
      %v747 = vadd.f32 %v248, %v746
      %v748 = vpop.f32.mrb[0].mxu0
      %749 = vmatprep.mubr.bf16.mxu0 0
      %750 = vmatmul.mubr.bf16.gmra.mrb[0].mxu0 %v495
      %v751 = vpop.f32.mrb[0].mxu0
      %v752 = vadd.f32 %v248, %v751
      %v753 = vpop.f32.mrb[0].mxu0
      %v754 = vpop.f32.mrb[0].mxu0
      %v755 = vadd.f32 %v248, %v754
      %v756 = vpop.f32.mrb[0].mxu0
      %757 = vmatprep.mubr.bf16.mxu0 0
      %758 = vmatmul.mubr.bf16.gmra.mrb[0].mxu0 %v498
      %v759 = vpop.f32.mrb[0].mxu0
      %v760 = vadd.f32 %v248, %v759
      %v761 = vpop.f32.mrb[0].mxu0
      %v762 = vpop.f32.mrb[0].mxu0
      %v763 = vadd.f32 %v248, %v762
      %v764 = vpop.f32.mrb[0].mxu0
      %765 = vmatprep.mubr.bf16.mxu0 0
      %766 = vmatmul.mubr.bf16.gmra.mrb[0].mxu0 %v501
      %v767 = vpop.f32.mrb[0].mxu0
      %v768 = vadd.f32 %v248, %v767
      %v769 = vpop.f32.mrb[0].mxu0
      %v770 = vpop.f32.mrb[0].mxu0
      %v771 = vadd.f32 %v248, %v770
      %v772 = vpop.f32.mrb[0].mxu0
      %773 = vmatprep.mubr.bf16.mxu0 0
      %774 = vmatmul.mubr.bf16.gmra.mrb[0].mxu0 %v504
      %v775 = vpop.f32.mrb[0].mxu0
      %v776 = vadd.f32 %v248, %v775
      %v777 = vpop.f32.mrb[0].mxu0
      %v778 = vpop.f32.mrb[0].mxu0
      %v779 = vadd.f32 %v248, %v778
      %v780 = vpop.f32.mrb[0].mxu0
      %781 = vmatprep.mubr.bf16.mxu0 0
      %782 = vmatmul.mubr.bf16.gmra.mrb[0].mxu0 %v507
      %v783 = vpop.f32.mrb[0].mxu0
      %v784 = vadd.f32 %v248, %v783
      %v785 = vpop.f32.mrb[0].mxu0
      %v786 = vpop.f32.mrb[0].mxu0
      %v787 = vadd.f32 %v248, %v786
      %v788 = vpop.f32.mrb[0].mxu0
      %789 = vmatprep.mubr.bf16.mxu0 0
      %790 = vmatmul.mubr.bf16.gmra.mrb[0].mxu0 %v510
      %v791 = vpop.f32.mrb[0].mxu0
      %v792 = vadd.f32 %v248, %v791
      %v793 = vpop.f32.mrb[0].mxu0
      %v794 = vpop.f32.mrb[0].mxu0
      %v795 = vadd.f32 %v248, %v794
      %v796 = vpop.f32.mrb[0].mxu0
      %797 = vmatprep.mubr.bf16.mxu0 0
      %798 = vmatmul.mubr.bf16.gmra.mrb[0].mxu0 %v513
      %v799 = vpop.f32.mrb[0].mxu0
      %v800 = vadd.f32 %v248, %v799
      %v801 = vpop.f32.mrb[0].mxu0
      %v802 = vpop.f32.mrb[0].mxu0
      %v803 = vadd.f32 %v248, %v802
      %v804 = vpop.f32.mrb[0].mxu0
      %805 = vmatprep.mubr.bf16.mxu0 0
      %806 = vmatmul.mubr.bf16.gmra.mrb[0].mxu0 %v516
      %v807 = vpop.f32.mrb[0].mxu0
      %v808 = vadd.f32 %v248, %v807
      %v809 = vpop.f32.mrb[0].mxu0
      %v810 = vpop.f32.mrb[0].mxu0
      %v811 = vadd.f32 %v248, %v810
      %v812 = vpop.f32.mrb[0].mxu0
      %813 = vdwg.mxu0
      %v814 = vmax.f32 %v560, 0.0
      %v815 = vmax.f32 %v563, 0.0
      %v816 = vmax.f32 %v568, 0.0
      %v817 = vmax.f32 %v571, 0.0
      %v818 = vmax.f32 %v576, 0.0
      %v819 = vmax.f32 %v579, 0.0
      %v820 = vmax.f32 %v584, 0.0
      %v821 = vmax.f32 %v587, 0.0
      %v822 = vmax.f32 %v592, 0.0
      %v823 = vmax.f32 %v595, 0.0
      %v824 = vmax.f32 %v600, 0.0
      %v825 = vmax.f32 %v603, 0.0
      %v826 = vmax.f32 %v608, 0.0
      %v827 = vmax.f32 %v611, 0.0
      %v828 = vmax.f32 %v616, 0.0
      %v829 = vmax.f32 %v619, 0.0
      %v830 = vmax.f32 %v624, 0.0
      %v831 = vmax.f32 %v627, 0.0
      %v832 = vmax.f32 %v632, 0.0
      %v833 = vmax.f32 %v635, 0.0
      %v834 = vmax.f32 %v640, 0.0
      %v835 = vmax.f32 %v643, 0.0
      %v836 = vmax.f32 %v648, 0.0
      %v837 = vmax.f32 %v651, 0.0
      %v838 = vmax.f32 %v656, 0.0
      %v839 = vmax.f32 %v659, 0.0
      %v840 = vmax.f32 %v664, 0.0
      %v841 = vmax.f32 %v667, 0.0
      %v842 = vmax.f32 %v672, 0.0
      %v843 = vmax.f32 %v675, 0.0
      %v844 = vmax.f32 %v680, 0.0
      %v845 = vmax.f32 %v683, 0.0
      %v846 = vmax.f32 %v688, 0.0
      %v847 = vmax.f32 %v691, 0.0
      %v848 = vmax.f32 %v696, 0.0
      %v849 = vmax.f32 %v699, 0.0
      %v850 = vmax.f32 %v704, 0.0
      %v851 = vmax.f32 %v707, 0.0
      %v852 = vmax.f32 %v712, 0.0
      %v853 = vmax.f32 %v715, 0.0
      %v854 = vmax.f32 %v720, 0.0
      %v855 = vmax.f32 %v723, 0.0
      %v856 = vmax.f32 %v728, 0.0
      %v857 = vmax.f32 %v731, 0.0
      %v858 = vmax.f32 %v736, 0.0
      %v859 = vmax.f32 %v739, 0.0
      %v860 = vmax.f32 %v744, 0.0
      %v861 = vmax.f32 %v747, 0.0
      %v862 = vmax.f32 %v752, 0.0
      %v863 = vmax.f32 %v755, 0.0
      %v864 = vmax.f32 %v760, 0.0
      %v865 = vmax.f32 %v763, 0.0
      %v866 = vmax.f32 %v768, 0.0
      %v867 = vmax.f32 %v771, 0.0
      %v868 = vmax.f32 %v776, 0.0
      %v869 = vmax.f32 %v779, 0.0
      %v870 = vmax.f32 %v784, 0.0
      %v871 = vmax.f32 %v787, 0.0
      %v872 = vmax.f32 %v792, 0.0
      %v873 = vmax.f32 %v795, 0.0
      %v874 = vmax.f32 %v800, 0.0
      %v875 = vmax.f32 %v803, 0.0
      %v876 = vmax.f32 %v808, 0.0
      %v877 = vmax.f32 %v811, 0.0
      %v878 = vpack.c.bf16 %v815, %v814
      %v879 = vpack.c.bf16 %v817, %v816
      %v880 = vpack.c.bf16 %v819, %v818
      %v881 = vpack.c.bf16 %v821, %v820
      %v882 = vpack.c.bf16 %v823, %v822
      %v883 = vpack.c.bf16 %v825, %v824
      %v884 = vpack.c.bf16 %v827, %v826
      %v885 = vpack.c.bf16 %v829, %v828
      %v886 = vpack.c.bf16 %v831, %v830
      %v887 = vpack.c.bf16 %v833, %v832
      %v888 = vpack.c.bf16 %v835, %v834
      %v889 = vpack.c.bf16 %v837, %v836
      %v890 = vpack.c.bf16 %v839, %v838
      %v891 = vpack.c.bf16 %v841, %v840
      %v892 = vpack.c.bf16 %v843, %v842
      %v893 = vpack.c.bf16 %v845, %v844
      %v894 = vpack.c.bf16 %v847, %v846
      %v895 = vpack.c.bf16 %v849, %v848
      %v896 = vpack.c.bf16 %v851, %v850
      %v897 = vpack.c.bf16 %v853, %v852
      %v898 = vpack.c.bf16 %v855, %v854
      %v899 = vpack.c.bf16 %v857, %v856
      %v900 = vpack.c.bf16 %v859, %v858
      %v901 = vpack.c.bf16 %v861, %v860
      %v902 = vpack.c.bf16 %v863, %v862
      %v903 = vpack.c.bf16 %v865, %v864
      %v904 = vpack.c.bf16 %v867, %v866
      %v905 = vpack.c.bf16 %v869, %v868
      %v906 = vpack.c.bf16 %v871, %v870
      %v907 = vpack.c.bf16 %v873, %v872
      %v908 = vpack.c.bf16 %v875, %v874
      %v909 = vpack.c.bf16 %v877, %v876
      %v942 = vunpack.c.l.b16 %v878
      %v943 = vunpack.c.h.b16 %v878
      %v944 = vunpack.c.l.b16 %v879
      %v945 = vunpack.c.h.b16 %v879
      %v946 = vunpack.c.l.b16 %v880
      %v947 = vunpack.c.h.b16 %v880
      %v948 = vunpack.c.l.b16 %v881
      %v949 = vunpack.c.h.b16 %v881
      %v950 = vunpack.c.l.b16 %v882
      %v951 = vunpack.c.h.b16 %v882
      %v952 = vunpack.c.l.b16 %v883
      %v953 = vunpack.c.h.b16 %v883
      %v954 = vunpack.c.l.b16 %v884
      %v955 = vunpack.c.h.b16 %v884
      %v956 = vunpack.c.l.b16 %v885
      %v957 = vunpack.c.h.b16 %v885
      %v958 = vunpack.c.l.b16 %v886
      %v959 = vunpack.c.h.b16 %v886
      %v960 = vunpack.c.l.b16 %v887
      %v961 = vunpack.c.h.b16 %v887
      %v962 = vunpack.c.l.b16 %v888
      %v963 = vunpack.c.h.b16 %v888
      %v964 = vunpack.c.l.b16 %v889
      %v965 = vunpack.c.h.b16 %v889
      %v966 = vunpack.c.l.b16 %v890
      %v967 = vunpack.c.h.b16 %v890
      %v968 = vunpack.c.l.b16 %v891
      %v969 = vunpack.c.h.b16 %v891
      %v970 = vunpack.c.l.b16 %v892
      %v971 = vunpack.c.h.b16 %v892
      %v972 = vunpack.c.l.b16 %v893
      %v973 = vunpack.c.h.b16 %v893
      %v974 = vunpack.c.l.b16 %v894
      %v975 = vunpack.c.h.b16 %v894
      %v976 = vunpack.c.l.b16 %v895
      %v977 = vunpack.c.h.b16 %v895
      %v978 = vunpack.c.l.b16 %v896
      %v979 = vunpack.c.h.b16 %v896
      %v980 = vunpack.c.l.b16 %v897
      %v981 = vunpack.c.h.b16 %v897
      %v982 = vunpack.c.l.b16 %v898
      %v983 = vunpack.c.h.b16 %v898
      %v984 = vunpack.c.l.b16 %v899
      %v985 = vunpack.c.h.b16 %v899
      %v986 = vunpack.c.l.b16 %v900
      %v987 = vunpack.c.h.b16 %v900
      %v988 = vunpack.c.l.b16 %v901
      %v989 = vunpack.c.h.b16 %v901
      %v990 = vunpack.c.l.b16 %v902
      %v991 = vunpack.c.h.b16 %v902
      %v992 = vunpack.c.l.b16 %v903
      %v993 = vunpack.c.h.b16 %v903
      %v994 = vunpack.c.l.b16 %v904
      %v995 = vunpack.c.h.b16 %v904
      %v996 = vunpack.c.l.b16 %v905
      %v997 = vunpack.c.h.b16 %v905
      %v998 = vunpack.c.l.b16 %v906
      %v999 = vunpack.c.h.b16 %v906
      %v1000 = vunpack.c.l.b16 %v907
      %v1001 = vunpack.c.h.b16 %v907
      %v1002 = vunpack.c.l.b16 %v908
      %v1003 = vunpack.c.h.b16 %v908
      %v1004 = vunpack.c.l.b16 %v909
      %v1005 = vunpack.c.h.b16 %v909
      %v1006 = vpack.c.b16 %v942, %v942
      %v1007 = vpack.c.b16 %v943, %v943
      %v1008 = vpack.c.b16 %v944, %v944
      %v1009 = vpack.c.b16 %v945, %v945
      %v1010 = vpack.c.b16 %v946, %v946
      %v1011 = vpack.c.b16 %v947, %v947
      %v1012 = vpack.c.b16 %v948, %v948
      %v1013 = vpack.c.b16 %v949, %v949
      %v1014 = vpack.c.b16 %v950, %v950
      %v1015 = vpack.c.b16 %v951, %v951
      %v1016 = vpack.c.b16 %v952, %v952
      %v1017 = vpack.c.b16 %v953, %v953
      %v1018 = vpack.c.b16 %v954, %v954
      %v1019 = vpack.c.b16 %v955, %v955
      %v1020 = vpack.c.b16 %v956, %v956
      %v1021 = vpack.c.b16 %v957, %v957
      %v1022 = vpack.c.b16 %v958, %v958
      %v1023 = vpack.c.b16 %v959, %v959
      %v1024 = vpack.c.b16 %v960, %v960
      %v1025 = vpack.c.b16 %v961, %v961
      %v1026 = vpack.c.b16 %v962, %v962
      %v1027 = vpack.c.b16 %v963, %v963
      %v1028 = vpack.c.b16 %v964, %v964
      %v1029 = vpack.c.b16 %v965, %v965
      %v1030 = vpack.c.b16 %v966, %v966
      %v1031 = vpack.c.b16 %v967, %v967
      %v1032 = vpack.c.b16 %v968, %v968
      %v1033 = vpack.c.b16 %v969, %v969
      %v1034 = vpack.c.b16 %v970, %v970
      %v1035 = vpack.c.b16 %v971, %v971
      %v1036 = vpack.c.b16 %v972, %v972
      %v1037 = vpack.c.b16 %v973, %v973
      %v1038 = vpack.c.b16 %v974, %v974
      %v1039 = vpack.c.b16 %v975, %v975
      %v1040 = vpack.c.b16 %v976, %v976
      %v1041 = vpack.c.b16 %v977, %v977
      %v1042 = vpack.c.b16 %v978, %v978
      %v1043 = vpack.c.b16 %v979, %v979
      %v1044 = vpack.c.b16 %v980, %v980
      %v1045 = vpack.c.b16 %v981, %v981
      %v1046 = vpack.c.b16 %v982, %v982
      %v1047 = vpack.c.b16 %v983, %v983
      %v1048 = vpack.c.b16 %v984, %v984
      %v1049 = vpack.c.b16 %v985, %v985
      %v1050 = vpack.c.b16 %v986, %v986
      %v1051 = vpack.c.b16 %v987, %v987
      %v1052 = vpack.c.b16 %v988, %v988
      %v1053 = vpack.c.b16 %v989, %v989
      %v1054 = vpack.c.b16 %v990, %v990
      %v1055 = vpack.c.b16 %v991, %v991
      %v1056 = vpack.c.b16 %v992, %v992
      %v1057 = vpack.c.b16 %v993, %v993
      %v1058 = vpack.c.b16 %v994, %v994
      %v1059 = vpack.c.b16 %v995, %v995
      %v1060 = vpack.c.b16 %v996, %v996
      %v1061 = vpack.c.b16 %v997, %v997
      %v1062 = vpack.c.b16 %v998, %v998
      %v1063 = vpack.c.b16 %v999, %v999
      %v1064 = vpack.c.b16 %v1000, %v1000
      %v1065 = vpack.c.b16 %v1001, %v1001
      %v1066 = vpack.c.b16 %v1002, %v1002
      %v1067 = vpack.c.b16 %v1003, %v1003
      %v1068 = vpack.c.b16 %v1004, %v1004
      %v1069 = vpack.c.b16 %v1005, %v1005
      %vm1134 = vcmask 60416
      %1135 = vst.msk [vmem:[%s172] sm:$0xf] %vm1134, %v1006
      %1136 = vst.msk [vmem:[%s172 + $0x4] sm:$0xf] %vm1134, %v1007
      %1137 = vst.msk [vmem:[%s172 + $0x8] sm:$0xf] %vm1134, %v1008
      %1138 = vst.msk [vmem:[%s172 + $0xc] sm:$0xf] %vm1134, %v1009
      %1139 = vst.msk [vmem:[%s172 + $0x10] sm:$0xf] %vm1134, %v1010
      %1140 = vst.msk [vmem:[%s172 + $0x14] sm:$0xf] %vm1134, %v1011
      %1141 = vst.msk [vmem:[%s172 + $0x18] sm:$0xf] %vm1134, %v1012
      %1142 = vst.msk [vmem:[%s172 + $0x1c] sm:$0xf] %vm1134, %v1013
      %1143 = vst.msk [vmem:[%s172 + $0x20] sm:$0xf] %vm1134, %v1014
      %1144 = vst.msk [vmem:[%s172 + $0x24] sm:$0xf] %vm1134, %v1015
      %1145 = vst.msk [vmem:[%s172 + $0x28] sm:$0xf] %vm1134, %v1016
      %1146 = vst.msk [vmem:[%s172 + $0x2c] sm:$0xf] %vm1134, %v1017
      %1147 = vst.msk [vmem:[%s172 + $0x30] sm:$0xf] %vm1134, %v1018
      %1148 = vst.msk [vmem:[%s172 + $0x34] sm:$0xf] %vm1134, %v1019
      %1149 = vst.msk [vmem:[%s172 + $0x38] sm:$0xf] %vm1134, %v1020
      %1150 = vst.msk [vmem:[%s172 + $0x3c] sm:$0xf] %vm1134, %v1021
      %1151 = vst.msk [vmem:[%s172 + $0x40] sm:$0xf] %vm1134, %v1022
      %1152 = vst.msk [vmem:[%s172 + $0x44] sm:$0xf] %vm1134, %v1023
      %1153 = vst.msk [vmem:[%s172 + $0x48] sm:$0xf] %vm1134, %v1024
      %1154 = vst.msk [vmem:[%s172 + $0x4c] sm:$0xf] %vm1134, %v1025
      %1155 = vst.msk [vmem:[%s172 + $0x50] sm:$0xf] %vm1134, %v1026
      %1156 = vst.msk [vmem:[%s172 + $0x54] sm:$0xf] %vm1134, %v1027
      %1157 = vst.msk [vmem:[%s172 + $0x58] sm:$0xf] %vm1134, %v1028
      %1158 = vst.msk [vmem:[%s172 + $0x5c] sm:$0xf] %vm1134, %v1029
      %1159 = vst.msk [vmem:[%s172 + $0x60] sm:$0xf] %vm1134, %v1030
      %1160 = vst.msk [vmem:[%s172 + $0x64] sm:$0xf] %vm1134, %v1031
      %1161 = vst.msk [vmem:[%s172 + $0x68] sm:$0xf] %vm1134, %v1032
      %1162 = vst.msk [vmem:[%s172 + $0x6c] sm:$0xf] %vm1134, %v1033
      %1163 = vst.msk [vmem:[%s172 + $0x70] sm:$0xf] %vm1134, %v1034
      %1164 = vst.msk [vmem:[%s172 + $0x74] sm:$0xf] %vm1134, %v1035
      %1165 = vst.msk [vmem:[%s172 + $0x78] sm:$0xf] %vm1134, %v1036
      %1166 = vst.msk [vmem:[%s172 + $0x7c] sm:$0xf] %vm1134, %v1037
      %1167 = vst.msk [vmem:[%s172 + $0x80] sm:$0xf] %vm1134, %v1038
      %1168 = vst.msk [vmem:[%s172 + $0x84] sm:$0xf] %vm1134, %v1039
      %1169 = vst.msk [vmem:[%s172 + $0x88] sm:$0xf] %vm1134, %v1040
      %1170 = vst.msk [vmem:[%s172 + $0x8c] sm:$0xf] %vm1134, %v1041
      %1171 = vst.msk [vmem:[%s172 + $0x90] sm:$0xf] %vm1134, %v1042
      %1172 = vst.msk [vmem:[%s172 + $0x94] sm:$0xf] %vm1134, %v1043
      %1173 = vst.msk [vmem:[%s172 + $0x98] sm:$0xf] %vm1134, %v1044
      %1174 = vst.msk [vmem:[%s172 + $0x9c] sm:$0xf] %vm1134, %v1045
      %1175 = vst.msk [vmem:[%s172 + $0xa0] sm:$0xf] %vm1134, %v1046
      %1176 = vst.msk [vmem:[%s172 + $0xa4] sm:$0xf] %vm1134, %v1047
      %1177 = vst.msk [vmem:[%s172 + $0xa8] sm:$0xf] %vm1134, %v1048
      %1178 = vst.msk [vmem:[%s172 + $0xac] sm:$0xf] %vm1134, %v1049
      %1179 = vst.msk [vmem:[%s172 + $0xb0] sm:$0xf] %vm1134, %v1050
      %1180 = vst.msk [vmem:[%s172 + $0xb4] sm:$0xf] %vm1134, %v1051
      %1181 = vst.msk [vmem:[%s172 + $0xb8] sm:$0xf] %vm1134, %v1052
      %1182 = vst.msk [vmem:[%s172 + $0xbc] sm:$0xf] %vm1134, %v1053
      %1183 = vst.msk [vmem:[%s172 + $0xc0] sm:$0xf] %vm1134, %v1054
      %1184 = vst.msk [vmem:[%s172 + $0xc4] sm:$0xf] %vm1134, %v1055
      %1185 = vst.msk [vmem:[%s172 + $0xc8] sm:$0xf] %vm1134, %v1056
      %1186 = vst.msk [vmem:[%s172 + $0xcc] sm:$0xf] %vm1134, %v1057
      %1187 = vst.msk [vmem:[%s172 + $0xd0] sm:$0xf] %vm1134, %v1058
      %1188 = vst.msk [vmem:[%s172 + $0xd4] sm:$0xf] %vm1134, %v1059
      %1189 = vst.msk [vmem:[%s172 + $0xd8] sm:$0xf] %vm1134, %v1060
      %1190 = vst.msk [vmem:[%s172 + $0xdc] sm:$0xf] %vm1134, %v1061
      %1191 = vst.msk [vmem:[%s172 + $0xe0] sm:$0xf] %vm1134, %v1062
      %1192 = vst.msk [vmem:[%s172 + $0xe4] sm:$0xf] %vm1134, %v1063
      %1193 = vst.msk [vmem:[%s172 + $0xe8] sm:$0xf] %vm1134, %v1064
      %1194 = vst.msk [vmem:[%s172 + $0xec] sm:$0xf] %vm1134, %v1065
      %1195 = vst.msk [vmem:[%s172 + $0xf0] sm:$0xf] %vm1134, %v1066
      %1196 = vst.msk [vmem:[%s172 + $0xf4] sm:$0xf] %vm1134, %v1067
      %1197 = vst.msk [vmem:[%s172 + $0xf8] sm:$0xf] %vm1134, %v1068
      %1198 = vst.msk [vmem:[%s172 + $0xfc] sm:$0xf] %vm1134, %v1069
      %s1199 = smul.u32 64, %s14
      %p1200 = scmp.lt.s32.totalorder %s1199, 255
      %s1201 = scalar_select %p1200, %s1199, 255
      %s1202 = smul.addr %s1201, 4
      %s1203 = scalar_lea.vmem %s3, %s1202
      // Predicated region
      $region33: #{_lambda_.16} parent=31 // pred_check
        %p1204 = pneg %p100
      $region34: #{_lambda_.16} parent=31 // pred_check_branch
        %1206 = sbr.rel (%p1204) target = $region36
      $region35: #{_lambda_.16} parent=31 // pred_region
        %s1207 = smul.u32 64, %s14
      $region36: #{_lambda_.16} parent=31 // pred_fallthru
        _
    $region32: #{_lambda_.16} parent=5 // pred_fallthru
      _
    %p1208 = scmp.le.s32.totalorder 2, %s9
    // Predicated region
    $region37: #{_lambda_.16} parent=5 // pred_check
      %p1209 = pneg %p1208
    $region38: #{_lambda_.16} parent=5 // pred_check_branch
      %1211 = sbr.rel (%p1209) target = $region40
    $region39: #{_lambda_.16} parent=5 // pred_region
      %s1212 = ssub.s32 %s9, 2
      // Predicated region
      $region41: #{_lambda_.16} parent=39 // pred_check
        %p1213 = pneg %p106
      $region42: #{_lambda_.16} parent=39 // pred_check_branch
        %1215 = sbr.rel (%p1213) target = $region44
      $region43: #{_lambda_.16} parent=39 // pred_region
        %s1216 = smul.u32 64, %s15
        %p1217 = scmp.lt.s32.totalorder %s1216, 255
        %s1218 = scalar_select %p1217, %s1216, 255
        %s1219 = smul.addr %s1218, 4
        %s1220 = scalar_lea.vmem %s3, %s1219
      $region44: #{_lambda_.16} parent=39 // pred_fallthru
        _
    $region40: #{_lambda_.16} parent=5 // pred_fallthru
      _
  $region6: #{_lambda_.16} parent=0 // loop_footer
    %s13 = sadd.s32 1, %s9
  $region7: #{_lambda_.16} parent=0 // loop_footer_branch
    %8 = sbr.rel target = $region3
  $region8: #{_lambda_.16} parent=0 // loop_exit
    _

// kernel: _lambda_.17
$region0: #{_lambda_.17}
  #allocation0 [shape = 'u32[]', space=smem, size = 0x4, offset = 0x4, fixed_abs, tag = 'smem constant byte address 0x4 - core index']
  #allocation1 [shape = 'u32[144,128]{1,0:T(1,128)}', space=vmem, size = 0x12000, scoped, tag = 'internal scratch']
  %s0 = inlined_call_operand.vmem [shape: bf16[2048,72], index: 0, kind: input, shape index: {}]
  %s1 = inlined_call_operand.vmem [shape: bf16[72,8], index: 1, kind: input, shape index: {}]
  %s2 = inlined_call_operand.vmem [shape: f32[1,8], index: 2, kind: input, shape index: {}]
  %s3 = inlined_call_operand.vmem [shape: bf16[2048,8], index: 3, kind: output, shape index: {}]
  %s4 = sld [smem:[#allocation0]]
  $region45: #{_lambda_.17} parent=0
    _
  %s6 = ssub.s32 1, %s4
  %s7 = scalar_select 0, %s6, %s4
  loop: start=0, step=1, limit=6
  $region2: #{_lambda_.17} parent=0 // loop_pre_header
    _
  $region3: #{_lambda_.17} parent=0 // loop_header
    %s9 = sphi 0, %s13
    %p10 = scmp.ge.s32.totalorder %s9, 6
    %s19 = sphi 0, %s21
    %s22 = sphi 0, %s19
    %s23 = sphi 0, %s22
    %s39 = sphi 0, %s23
    %s43 = sphi 0, %s43
    %s45 = sphi 0, %s43
    %s46 = sphi 0, %s45
    %s60 = sphi 0, %s46
    %s64 = sphi 0, %s64
    %s66 = sphi 0, %s64
    %s67 = sphi 0, %s66
    %s81 = sphi 0, %s67
    %s87 = sphi 0, %s89
    %s90 = sphi 0, %s87
    %s91 = sphi 0, %s90
    %s107 = sphi 0, %s91
  $region4: #{_lambda_.17} parent=0 // loop_header_branch
    %12 = sbr.rel (%p10) target = $region8
  $region5: #{_lambda_.17} parent=0 // loop_body
    %s14 = ssub.s32 %s9, 1
    %s15 = ssub.s32 %s9, 2
    %s16 = sadd.s32 %s9, 1
    %s17 = ssub.s32 %s9, %s16
    %p18 = scmp.eq.s32.totalorder %s17, 0
    %s20 = sadd.s32 %s19, 1
    %s21 = scalar_select %p18, %s19, %s20
    %p24 = pneg %p18
    %p25 = scmp.eq.s32.totalorder %s9, 3
    %p26 = por %p24, %p25
    %p27 = scmp.ne.s32.totalorder %s19, %s22
    %p28 = scmp.eq.s32.totalorder %s9, 0
    %p29 = por %p27, %p28
    %p30 = scmp.ne.s32.totalorder %s19, %s22
    %p31 = scmp.eq.s32.totalorder %s14, 3
    %p32 = por %p30, %p31
    %p33 = scmp.ne.s32.totalorder %s22, %s23
    %p34 = scmp.eq.s32.totalorder %s14, 0
    %p35 = por %p33, %p34
    %p36 = scmp.ne.s32.totalorder %s22, %s23
    %p37 = scmp.eq.s32.totalorder %s15, 3
    %p38 = por %p36, %p37
    %p40 = scmp.ne.s32.totalorder %s23, %s39
    %p41 = scmp.eq.s32.totalorder %s15, 0
    %p42 = por %p40, %p41
    %s44 = sadd.s32 %s43, 1
    %p47 = scmp.eq.s32.totalorder %s9, 3
    %p48 = scmp.ne.s32.totalorder %s43, %s45
    %p49 = scmp.eq.s32.totalorder %s9, 0
    %p50 = por %p48, %p49
    %p51 = scmp.ne.s32.totalorder %s43, %s45
    %p52 = scmp.eq.s32.totalorder %s14, 3
    %p53 = por %p51, %p52
    %p54 = scmp.ne.s32.totalorder %s45, %s46
    %p55 = scmp.eq.s32.totalorder %s14, 0
    %p56 = por %p54, %p55
    %p57 = scmp.ne.s32.totalorder %s45, %s46
    %p58 = scmp.eq.s32.totalorder %s15, 3
    %p59 = por %p57, %p58
    %p61 = scmp.ne.s32.totalorder %s46, %s60
    %p62 = scmp.eq.s32.totalorder %s15, 0
    %p63 = por %p61, %p62
    %s65 = sadd.s32 %s64, 1
    %p68 = scmp.eq.s32.totalorder %s9, 3
    %p69 = scmp.ne.s32.totalorder %s64, %s66
    %p70 = scmp.eq.s32.totalorder %s9, 0
    %p71 = por %p69, %p70
    %p72 = scmp.ne.s32.totalorder %s64, %s66
    %p73 = scmp.eq.s32.totalorder %s14, 3
    %p74 = por %p72, %p73
    %p75 = scmp.ne.s32.totalorder %s66, %s67
    %p76 = scmp.eq.s32.totalorder %s14, 0
    %p77 = por %p75, %p76
    %p78 = scmp.ne.s32.totalorder %s66, %s67
    %p79 = scmp.eq.s32.totalorder %s15, 3
    %p80 = por %p78, %p79
    %p82 = scmp.ne.s32.totalorder %s67, %s81
    %p83 = scmp.eq.s32.totalorder %s15, 0
    %p84 = por %p82, %p83
    %s85 = ssub.s32 %s9, %s16
    %p86 = scmp.eq.s32.totalorder %s85, 0
    %s88 = sadd.s32 %s87, 1
    %s89 = scalar_select %p86, %s87, %s88
    %p92 = pneg %p86
    %p93 = scmp.eq.s32.totalorder %s9, 3
    %p94 = por %p92, %p93
    %p95 = scmp.ne.s32.totalorder %s87, %s90
    %p96 = scmp.eq.s32.totalorder %s9, 0
    %p97 = por %p95, %p96
    %p98 = scmp.ne.s32.totalorder %s87, %s90
    %p99 = scmp.eq.s32.totalorder %s14, 3
    %p100 = por %p98, %p99
    %p101 = scmp.ne.s32.totalorder %s90, %s91
    %p102 = scmp.eq.s32.totalorder %s14, 0
    %p103 = por %p101, %p102
    %p104 = scmp.ne.s32.totalorder %s90, %s91
    %p105 = scmp.eq.s32.totalorder %s15, 3
    %p106 = por %p104, %p105
    %p108 = scmp.ne.s32.totalorder %s91, %s107
    %p109 = scmp.eq.s32.totalorder %s15, 0
    %p110 = por %p108, %p109
    %p111 = scmp.le.s32.totalorder 1, %s9
    %p112 = scmp.lt.s32.totalorder %s9, 5
    %p113 = pnand %p111, %p112
    %p114 = pneg %p113
    // Predicated region
    $region9: #{_lambda_.17} parent=5 // pred_check
      _
    $region10: #{_lambda_.17} parent=5 // pred_check_branch
      %116 = sbr.rel (%p113) target = $region12
    $region11: #{_lambda_.17} parent=5 // pred_region
      %s117 = ssub.s32 %s9, 1
      // Predicated region
      $region13: #{_lambda_.17} parent=11 // pred_check
        %p118 = pneg %p56
      $region14: #{_lambda_.17} parent=11 // pred_check_branch
        %120 = sbr.rel (%p118) target = $region16
      $region15: #{_lambda_.17} parent=11 // pred_region
        _
      $region16: #{_lambda_.17} parent=11 // pred_fallthru
        _
      // Predicated region
      $region17: #{_lambda_.17} parent=11 // pred_check
        %p121 = pneg %p77
      $region18: #{_lambda_.17} parent=11 // pred_check_branch
        %123 = sbr.rel (%p121) target = $region20
      $region19: #{_lambda_.17} parent=11 // pred_region
        _
      $region20: #{_lambda_.17} parent=11 // pred_fallthru
        _
    $region12: #{_lambda_.17} parent=5 // pred_fallthru
      _
    %p124 = scmp.lt.s32.totalorder %s9, 4
    // Predicated region
    $region21: #{_lambda_.17} parent=5 // pred_check
      %p125 = pneg %p124
    $region22: #{_lambda_.17} parent=5 // pred_check_branch
      %127 = sbr.rel (%p125) target = $region24
    $region23: #{_lambda_.17} parent=5 // pred_region
      // Predicated region
      $region25: #{_lambda_.17} parent=23 // pred_check
        %p128 = pneg %p29
      $region26: #{_lambda_.17} parent=23 // pred_check_branch
        %130 = sbr.rel (%p128) target = $region28
      $region27: #{_lambda_.17} parent=23 // pred_region
        %s131 = smul.u32 64, %s9
        %p132 = scmp.lt.s32.totalorder %s131, 255
        %s133 = scalar_select %p132, %s131, 255
        %s134 = smul.addr %s133, 4
        %s135 = scalar_lea.vmem %s0, %s134
        %s136 = smul.u32 64, %s9
      $region28: #{_lambda_.17} parent=23 // pred_fallthru
        _
    $region24: #{_lambda_.17} parent=5 // pred_fallthru
      _
    %p137 = scmp.le.s32.totalorder 1, %s9
    %p138 = scmp.lt.s32.totalorder %s9, 5
    %p139 = pnand %p137, %p138
    %p140 = pneg %p139
    // Predicated region
    $region29: #{_lambda_.17} parent=5 // pred_check
      _
    $region30: #{_lambda_.17} parent=5 // pred_check_branch
      %142 = sbr.rel (%p139) target = $region32
    $region31: #{_lambda_.17} parent=5 // pred_region
      %s143 = ssub.s32 %s9, 1
      %s144 = smul.u32 64, %s14
      %p145 = scmp.lt.s32.totalorder %s144, 255
      %s146 = scalar_select %p145, %s144, 255
      %s147 = smul.addr %s146, 4
      %s148 = scalar_lea.vmem %s0, %s147
      %p149 = pneg %p35
      %p150 = pneg %p32
      %p151 = pneg %p56
      %p152 = pneg %p53
      %p153 = pneg %p77
      %p154 = pneg %p74
      %p155 = pneg %p103
      %p156 = pneg %p100
      %s157 = smul.u32 64, %s14
      %p158 = scmp.lt.s32.totalorder %s157, 255
      %s159 = scalar_select %p158, %s157, 255
      %s160 = smul.addr %s159, 4
      %s161 = scalar_lea.vmem %s3, %s160
      %s162 = smul.u32 64, %s14
      %p163 = scmp.lt.s32.totalorder %s162, 255
      %s164 = scalar_select %p163, %s162, 255
      %s165 = smul.addr %s164, 4
      %s166 = scalar_lea.vmem %s0, %s165
      %s167 = smul.u32 64, %s14
      %s168 = smul.u32 64, %s14
      %p169 = scmp.lt.s32.totalorder %s168, 255
      %s170 = scalar_select %p169, %s168, 255
      %s171 = smul.addr %s170, 4
      %s172 = scalar_lea.vmem %s3, %s171
      %s173 = smul.u32 64, %s14
      %v175 = vld [vmem:[%s166] sm:$0xf]
      %v176 = vld [vmem:[%s166 + $0x4] sm:$0xf]
      %v177 = vld [vmem:[%s166 + $0x8] sm:$0xf]
      %v178 = vld [vmem:[%s166 + $0xc] sm:$0xf]
      %v179 = vld [vmem:[%s166 + $0x10] sm:$0xf]
      %v180 = vld [vmem:[%s166 + $0x14] sm:$0xf]
      %v181 = vld [vmem:[%s166 + $0x18] sm:$0xf]
      %v182 = vld [vmem:[%s166 + $0x1c] sm:$0xf]
      %v183 = vld [vmem:[%s166 + $0x20] sm:$0xf]
      %v184 = vld [vmem:[%s166 + $0x24] sm:$0xf]
      %v185 = vld [vmem:[%s166 + $0x28] sm:$0xf]
      %v186 = vld [vmem:[%s166 + $0x2c] sm:$0xf]
      %v187 = vld [vmem:[%s166 + $0x30] sm:$0xf]
      %v188 = vld [vmem:[%s166 + $0x34] sm:$0xf]
      %v189 = vld [vmem:[%s166 + $0x38] sm:$0xf]
      %v190 = vld [vmem:[%s166 + $0x3c] sm:$0xf]
      %v191 = vld [vmem:[%s166 + $0x40] sm:$0xf]
      %v192 = vld [vmem:[%s166 + $0x44] sm:$0xf]
      %v193 = vld [vmem:[%s166 + $0x48] sm:$0xf]
      %v194 = vld [vmem:[%s166 + $0x4c] sm:$0xf]
      %v195 = vld [vmem:[%s166 + $0x50] sm:$0xf]
      %v196 = vld [vmem:[%s166 + $0x54] sm:$0xf]
      %v197 = vld [vmem:[%s166 + $0x58] sm:$0xf]
      %v198 = vld [vmem:[%s166 + $0x5c] sm:$0xf]
      %v199 = vld [vmem:[%s166 + $0x60] sm:$0xf]
      %v200 = vld [vmem:[%s166 + $0x64] sm:$0xf]
      %v201 = vld [vmem:[%s166 + $0x68] sm:$0xf]
      %v202 = vld [vmem:[%s166 + $0x6c] sm:$0xf]
      %v203 = vld [vmem:[%s166 + $0x70] sm:$0xf]
      %v204 = vld [vmem:[%s166 + $0x74] sm:$0xf]
      %v205 = vld [vmem:[%s166 + $0x78] sm:$0xf]
      %v206 = vld [vmem:[%s166 + $0x7c] sm:$0xf]
      %v207 = vld [vmem:[%s166 + $0x80] sm:$0xf]
      %v208 = vld [vmem:[%s166 + $0x84] sm:$0xf]
      %v209 = vld [vmem:[%s166 + $0x88] sm:$0xf]
      %v210 = vld [vmem:[%s166 + $0x8c] sm:$0xf]
      %v211 = vld [vmem:[%s166 + $0x90] sm:$0xf]
      %v212 = vld [vmem:[%s166 + $0x94] sm:$0xf]
      %v213 = vld [vmem:[%s166 + $0x98] sm:$0xf]
      %v214 = vld [vmem:[%s166 + $0x9c] sm:$0xf]
      %v215 = vld [vmem:[%s166 + $0xa0] sm:$0xf]
      %v216 = vld [vmem:[%s166 + $0xa4] sm:$0xf]
      %v217 = vld [vmem:[%s166 + $0xa8] sm:$0xf]
      %v218 = vld [vmem:[%s166 + $0xac] sm:$0xf]
      %v219 = vld [vmem:[%s166 + $0xb0] sm:$0xf]
      %v220 = vld [vmem:[%s166 + $0xb4] sm:$0xf]
      %v221 = vld [vmem:[%s166 + $0xb8] sm:$0xf]
      %v222 = vld [vmem:[%s166 + $0xbc] sm:$0xf]
      %v223 = vld [vmem:[%s166 + $0xc0] sm:$0xf]
      %v224 = vld [vmem:[%s166 + $0xc4] sm:$0xf]
      %v225 = vld [vmem:[%s166 + $0xc8] sm:$0xf]
      %v226 = vld [vmem:[%s166 + $0xcc] sm:$0xf]
      %v227 = vld [vmem:[%s166 + $0xd0] sm:$0xf]
      %v228 = vld [vmem:[%s166 + $0xd4] sm:$0xf]
      %v229 = vld [vmem:[%s166 + $0xd8] sm:$0xf]
      %v230 = vld [vmem:[%s166 + $0xdc] sm:$0xf]
      %v231 = vld [vmem:[%s166 + $0xe0] sm:$0xf]
      %v232 = vld [vmem:[%s166 + $0xe4] sm:$0xf]
      %v233 = vld [vmem:[%s166 + $0xe8] sm:$0xf]
      %v234 = vld [vmem:[%s166 + $0xec] sm:$0xf]
      %v235 = vld [vmem:[%s166 + $0xf0] sm:$0xf]
      %v236 = vld [vmem:[%s166 + $0xf4] sm:$0xf]
      %v237 = vld [vmem:[%s166 + $0xf8] sm:$0xf]
      %v238 = vld [vmem:[%s166 + $0xfc] sm:$0xf]
      %v239 = vld [vmem:[%s1] sm:$0xf]
      %v240 = vld [vmem:[%s1 + $0x4] sm:$0xf]
      %v241 = vld [vmem:[%s1 + $0x8] sm:$0xf]
      %v242 = vld [vmem:[%s1 + $0xc] sm:$0xf]
      %v243 = vld [vmem:[%s1 + $0x10] sm:$0xf]
      %v244 = vld [vmem:[%s1 + $0x14] sm:$0xf]
      %v245 = vld [vmem:[%s1 + $0x18] sm:$0xf]
      %v246 = vld [vmem:[%s1 + $0x1c] sm:$0xf]
      %v247 = vld [vmem:[%s1 + $0x20] sm:$0xf]
      %v248 = vld [vmem:[%s2] sm:$0x1]
      %v250 = vlaneseq
      %v251 = vshrl.u32 %v250, 7
      %v252 = vsub.s32 0, %v251
      %v253 = vrot.slane %v248, %v252
      %v319 = vunpack.c.l.b16 %v175
      %v320 = vunpack.c.l.b16 %v176
      %v321 = vunpack.c.l.b16 %v177
      %v322 = vunpack.c.l.b16 %v178
      %v323 = vunpack.c.l.b16 %v179
      %v324 = vunpack.c.l.b16 %v180
      %v325 = vunpack.c.l.b16 %v181
      %v326 = vunpack.c.l.b16 %v182
      %v327 = vunpack.c.l.b16 %v183
      %v328 = vunpack.c.l.b16 %v184
      %v329 = vunpack.c.l.b16 %v185
      %v330 = vunpack.c.l.b16 %v186
      %v331 = vunpack.c.l.b16 %v187
      %v332 = vunpack.c.l.b16 %v188
      %v333 = vunpack.c.l.b16 %v189
      %v334 = vunpack.c.l.b16 %v190
      %v335 = vunpack.c.l.b16 %v191
      %v336 = vunpack.c.l.b16 %v192
      %v337 = vunpack.c.l.b16 %v193
      %v338 = vunpack.c.l.b16 %v194
      %v339 = vunpack.c.l.b16 %v195
      %v340 = vunpack.c.l.b16 %v196
      %v341 = vunpack.c.l.b16 %v197
      %v342 = vunpack.c.l.b16 %v198
      %v343 = vunpack.c.l.b16 %v199
      %v344 = vunpack.c.l.b16 %v200
      %v345 = vunpack.c.l.b16 %v201
      %v346 = vunpack.c.l.b16 %v202
      %v347 = vunpack.c.l.b16 %v203
      %v348 = vunpack.c.l.b16 %v204
      %v349 = vunpack.c.l.b16 %v205
      %v350 = vunpack.c.l.b16 %v206
      %v351 = vunpack.c.l.b16 %v207
      %v352 = vunpack.c.l.b16 %v208
      %v353 = vunpack.c.l.b16 %v209
      %v354 = vunpack.c.l.b16 %v210
      %v355 = vunpack.c.l.b16 %v211
      %v356 = vunpack.c.l.b16 %v212
      %v357 = vunpack.c.l.b16 %v213
      %v358 = vunpack.c.l.b16 %v214
      %v359 = vunpack.c.l.b16 %v215
      %v360 = vunpack.c.l.b16 %v216
      %v361 = vunpack.c.l.b16 %v217
      %v362 = vunpack.c.l.b16 %v218
      %v363 = vunpack.c.l.b16 %v219
      %v364 = vunpack.c.l.b16 %v220
      %v365 = vunpack.c.l.b16 %v221
      %v366 = vunpack.c.l.b16 %v222
      %v367 = vunpack.c.l.b16 %v223
      %v368 = vunpack.c.l.b16 %v224
      %v369 = vunpack.c.l.b16 %v225
      %v370 = vunpack.c.l.b16 %v226
      %v371 = vunpack.c.l.b16 %v227
      %v372 = vunpack.c.l.b16 %v228
      %v373 = vunpack.c.l.b16 %v229
      %v374 = vunpack.c.l.b16 %v230
      %v375 = vunpack.c.l.b16 %v231
      %v376 = vunpack.c.l.b16 %v232
      %v377 = vunpack.c.l.b16 %v233
      %v378 = vunpack.c.l.b16 %v234
      %v379 = vunpack.c.l.b16 %v235
      %v380 = vunpack.c.l.b16 %v236
      %v381 = vunpack.c.l.b16 %v237
      %v382 = vunpack.c.l.b16 %v238
      %v383 = vpack.c.b16 %v320, %v319
      %v384 = vpack.c.b16 %v322, %v321
      %v385 = vpack.c.b16 %v324, %v323
      %v386 = vpack.c.b16 %v326, %v325
      %v387 = vpack.c.b16 %v328, %v327
      %v388 = vpack.c.b16 %v330, %v329
      %v389 = vpack.c.b16 %v332, %v331
      %v390 = vpack.c.b16 %v334, %v333
      %v391 = vpack.c.b16 %v336, %v335
      %v392 = vpack.c.b16 %v338, %v337
      %v393 = vpack.c.b16 %v340, %v339
      %v394 = vpack.c.b16 %v342, %v341
      %v395 = vpack.c.b16 %v344, %v343
      %v396 = vpack.c.b16 %v346, %v345
      %v397 = vpack.c.b16 %v348, %v347
      %v398 = vpack.c.b16 %v350, %v349
      %v399 = vpack.c.b16 %v352, %v351
      %v400 = vpack.c.b16 %v354, %v353
      %v401 = vpack.c.b16 %v356, %v355
      %v402 = vpack.c.b16 %v358, %v357
      %v403 = vpack.c.b16 %v360, %v359
      %v404 = vpack.c.b16 %v362, %v361
      %v405 = vpack.c.b16 %v364, %v363
      %v406 = vpack.c.b16 %v366, %v365
      %v407 = vpack.c.b16 %v368, %v367
      %v408 = vpack.c.b16 %v370, %v369
      %v409 = vpack.c.b16 %v372, %v371
      %v410 = vpack.c.b16 %v374, %v373
      %v411 = vpack.c.b16 %v376, %v375
      %v412 = vpack.c.b16 %v378, %v377
      %v413 = vpack.c.b16 %v380, %v379
      %v414 = vpack.c.b16 %v382, %v381
      %v424 = vunpack.c.l.b16 %v239
      %v425 = vunpack.c.l.b16 %v240
      %v426 = vunpack.c.l.b16 %v241
      %v427 = vunpack.c.l.b16 %v242
      %v428 = vunpack.c.l.b16 %v243
      %v429 = vunpack.c.l.b16 %v244
      %v430 = vunpack.c.l.b16 %v245
      %v431 = vunpack.c.l.b16 %v246
      %v432 = vunpack.c.l.b16 %v247
      %v433 = vpack.c.b16 %v425, %v424
      %v434 = vpack.c.b16 %v427, %v426
      %v435 = vpack.c.b16 %v429, %v428
      %v436 = vpack.c.b16 %v431, %v430
      %v437 = vpack.c.b16 %v432, %v432
      %vm442 = vcmask 588800
      %v444 = vsel %vm442, %v383, 0
      %v447 = vsel %vm442, %v384, 0
      %v450 = vsel %vm442, %v385, 0
      %v453 = vsel %vm442, %v386, 0
      %v456 = vsel %vm442, %v387, 0
      %v459 = vsel %vm442, %v388, 0
      %v462 = vsel %vm442, %v389, 0
      %v465 = vsel %vm442, %v390, 0
      %v468 = vsel %vm442, %v391, 0
      %v471 = vsel %vm442, %v392, 0
      %v474 = vsel %vm442, %v393, 0
      %v477 = vsel %vm442, %v394, 0
      %v480 = vsel %vm442, %v395, 0
      %v483 = vsel %vm442, %v396, 0
      %v486 = vsel %vm442, %v397, 0
      %v489 = vsel %vm442, %v398, 0
      %v492 = vsel %vm442, %v399, 0
      %v495 = vsel %vm442, %v400, 0
      %v498 = vsel %vm442, %v401, 0
      %v501 = vsel %vm442, %v402, 0
      %v504 = vsel %vm442, %v403, 0
      %v507 = vsel %vm442, %v404, 0
      %v510 = vsel %vm442, %v405, 0
      %v513 = vsel %vm442, %v406, 0
      %v516 = vsel %vm442, %v407, 0
      %v519 = vsel %vm442, %v408, 0
      %v522 = vsel %vm442, %v409, 0
      %v525 = vsel %vm442, %v410, 0
      %v528 = vsel %vm442, %v411, 0
      %v531 = vsel %vm442, %v412, 0
      %v534 = vsel %vm442, %v413, 0
      %v537 = vsel %vm442, %v414, 0
      %vm539 = vcmask 1043456
      %v541 = vsel %vm539, %v437, 0
      %543 = vmatprep.subr.bf16.mxu0 0
      %544 = vmatpush1.bf16.msra.mxu0 %v433
      %545 = vmatprep.subr.bf16.mxu0 0
      %546 = vmatpush1.bf16.msra.mxu0 %v434
      %547 = vmatprep.subr.bf16.mxu0 0
      %548 = vmatpush1.bf16.msra.mxu0 %v435
      %549 = vmatprep.subr.bf16.mxu0 0
      %550 = vmatpush1.bf16.msra.mxu0 %v436
      %551 = vmatprep.subr.bf16.mxu0 0
      %552 = vmatpush1.bf16.msra.mxu0 %v541
      %553 = vmatprep.subr.bf16.mxu0 0
      %554 = vmatpush1.bf16.msra.mxu0 0
      %555 = vmatprep.subr.bf16.mxu0 0
      %556 = vmatpush1.bf16.msra.mxu0 0
      %557 = vmatprep.subr.bf16.mxu0 0
      %558 = vmatpush1.bf16.msra.mxu0 0
      %559 = vmatprep.subr.bf16.mxu0 0
      %560 = vmatpush1.bf16.msra.mxu0 0
      %561 = vmatprep.subr.bf16.mxu0 0
      %562 = vmatpush1.bf16.msra.mxu0 0
      %563 = vmatprep.subr.bf16.mxu0 0
      %564 = vmatpush1.bf16.msra.mxu0 0
      %565 = vmatprep.subr.bf16.mxu0 0
      %566 = vmatpush1.bf16.msra.mxu0 0
      %567 = vmatprep.subr.bf16.mxu0 0
      %568 = vmatpush1.bf16.msra.mxu0 0
      %569 = vmatprep.subr.bf16.mxu0 0
      %570 = vmatpush1.bf16.msra.mxu0 0
      %571 = vmatprep.subr.bf16.mxu0 0
      %572 = vmatpush1.bf16.msra.mxu0 0
      %573 = vmatprep.subr.bf16.mxu0 0
      %574 = vmatpush1.bf16.msra.mxu0 0
      %575 = vmatprep.mubr.bf16.mxu0 0
      %576 = vmatmul.mubr.bf16.gmra.mrb[0].mxu0 %v444
      %v577 = vpop.f32.mrb[0].mxu0
      %v578 = vadd.f32 %v253, %v577
      %v579 = vpop.f32.mrb[0].mxu0
      %v580 = vpop.f32.mrb[0].mxu0
      %v581 = vadd.f32 %v253, %v580
      %v582 = vpop.f32.mrb[0].mxu0
      %583 = vmatprep.mubr.bf16.mxu0 0
      %584 = vmatmul.mubr.bf16.gmra.mrb[0].mxu0 %v447
      %v585 = vpop.f32.mrb[0].mxu0
      %v586 = vadd.f32 %v253, %v585
      %v587 = vpop.f32.mrb[0].mxu0
      %v588 = vpop.f32.mrb[0].mxu0
      %v589 = vadd.f32 %v253, %v588
      %v590 = vpop.f32.mrb[0].mxu0
      %591 = vmatprep.mubr.bf16.mxu0 0
      %592 = vmatmul.mubr.bf16.gmra.mrb[0].mxu0 %v450
      %v593 = vpop.f32.mrb[0].mxu0
      %v594 = vadd.f32 %v253, %v593
      %v595 = vpop.f32.mrb[0].mxu0
      %v596 = vpop.f32.mrb[0].mxu0
      %v597 = vadd.f32 %v253, %v596
      %v598 = vpop.f32.mrb[0].mxu0
      %599 = vmatprep.mubr.bf16.mxu0 0
      %600 = vmatmul.mubr.bf16.gmra.mrb[0].mxu0 %v453
      %v601 = vpop.f32.mrb[0].mxu0
      %v602 = vadd.f32 %v253, %v601
      %v603 = vpop.f32.mrb[0].mxu0
      %v604 = vpop.f32.mrb[0].mxu0
      %v605 = vadd.f32 %v253, %v604
      %v606 = vpop.f32.mrb[0].mxu0
      %607 = vmatprep.mubr.bf16.mxu0 0
      %608 = vmatmul.mubr.bf16.gmra.mrb[0].mxu0 %v456
      %v609 = vpop.f32.mrb[0].mxu0
      %v610 = vadd.f32 %v253, %v609
      %v611 = vpop.f32.mrb[0].mxu0
      %v612 = vpop.f32.mrb[0].mxu0
      %v613 = vadd.f32 %v253, %v612
      %v614 = vpop.f32.mrb[0].mxu0
      %615 = vmatprep.mubr.bf16.mxu0 0
      %616 = vmatmul.mubr.bf16.gmra.mrb[0].mxu0 %v459
      %v617 = vpop.f32.mrb[0].mxu0
      %v618 = vadd.f32 %v253, %v617
      %v619 = vpop.f32.mrb[0].mxu0
      %v620 = vpop.f32.mrb[0].mxu0
      %v621 = vadd.f32 %v253, %v620
      %v622 = vpop.f32.mrb[0].mxu0
      %623 = vmatprep.mubr.bf16.mxu0 0
      %624 = vmatmul.mubr.bf16.gmra.mrb[0].mxu0 %v462
      %v625 = vpop.f32.mrb[0].mxu0
      %v626 = vadd.f32 %v253, %v625
      %v627 = vpop.f32.mrb[0].mxu0
      %v628 = vpop.f32.mrb[0].mxu0
      %v629 = vadd.f32 %v253, %v628
      %v630 = vpop.f32.mrb[0].mxu0
      %631 = vmatprep.mubr.bf16.mxu0 0
      %632 = vmatmul.mubr.bf16.gmra.mrb[0].mxu0 %v465
      %v633 = vpop.f32.mrb[0].mxu0
      %v634 = vadd.f32 %v253, %v633
      %v635 = vpop.f32.mrb[0].mxu0
      %v636 = vpop.f32.mrb[0].mxu0
      %v637 = vadd.f32 %v253, %v636
      %v638 = vpop.f32.mrb[0].mxu0
      %639 = vmatprep.mubr.bf16.mxu0 0
      %640 = vmatmul.mubr.bf16.gmra.mrb[0].mxu0 %v468
      %v641 = vpop.f32.mrb[0].mxu0
      %v642 = vadd.f32 %v253, %v641
      %v643 = vpop.f32.mrb[0].mxu0
      %v644 = vpop.f32.mrb[0].mxu0
      %v645 = vadd.f32 %v253, %v644
      %v646 = vpop.f32.mrb[0].mxu0
      %647 = vmatprep.mubr.bf16.mxu0 0
      %648 = vmatmul.mubr.bf16.gmra.mrb[0].mxu0 %v471
      %v649 = vpop.f32.mrb[0].mxu0
      %v650 = vadd.f32 %v253, %v649
      %v651 = vpop.f32.mrb[0].mxu0
      %v652 = vpop.f32.mrb[0].mxu0
      %v653 = vadd.f32 %v253, %v652
      %v654 = vpop.f32.mrb[0].mxu0
      %655 = vmatprep.mubr.bf16.mxu0 0
      %656 = vmatmul.mubr.bf16.gmra.mrb[0].mxu0 %v474
      %v657 = vpop.f32.mrb[0].mxu0
      %v658 = vadd.f32 %v253, %v657
      %v659 = vpop.f32.mrb[0].mxu0
      %v660 = vpop.f32.mrb[0].mxu0
      %v661 = vadd.f32 %v253, %v660
      %v662 = vpop.f32.mrb[0].mxu0
      %663 = vmatprep.mubr.bf16.mxu0 0
      %664 = vmatmul.mubr.bf16.gmra.mrb[0].mxu0 %v477
      %v665 = vpop.f32.mrb[0].mxu0
      %v666 = vadd.f32 %v253, %v665
      %v667 = vpop.f32.mrb[0].mxu0
      %v668 = vpop.f32.mrb[0].mxu0
      %v669 = vadd.f32 %v253, %v668
      %v670 = vpop.f32.mrb[0].mxu0
      %671 = vmatprep.mubr.bf16.mxu0 0
      %672 = vmatmul.mubr.bf16.gmra.mrb[0].mxu0 %v480
      %v673 = vpop.f32.mrb[0].mxu0
      %v674 = vadd.f32 %v253, %v673
      %v675 = vpop.f32.mrb[0].mxu0
      %v676 = vpop.f32.mrb[0].mxu0
      %v677 = vadd.f32 %v253, %v676
      %v678 = vpop.f32.mrb[0].mxu0
      %679 = vmatprep.mubr.bf16.mxu0 0
      %680 = vmatmul.mubr.bf16.gmra.mrb[0].mxu0 %v483
      %v681 = vpop.f32.mrb[0].mxu0
      %v682 = vadd.f32 %v253, %v681
      %v683 = vpop.f32.mrb[0].mxu0
      %v684 = vpop.f32.mrb[0].mxu0
      %v685 = vadd.f32 %v253, %v684
      %v686 = vpop.f32.mrb[0].mxu0
      %687 = vmatprep.mubr.bf16.mxu0 0
      %688 = vmatmul.mubr.bf16.gmra.mrb[0].mxu0 %v486
      %v689 = vpop.f32.mrb[0].mxu0
      %v690 = vadd.f32 %v253, %v689
      %v691 = vpop.f32.mrb[0].mxu0
      %v692 = vpop.f32.mrb[0].mxu0
      %v693 = vadd.f32 %v253, %v692
      %v694 = vpop.f32.mrb[0].mxu0
      %695 = vmatprep.mubr.bf16.mxu0 0
      %696 = vmatmul.mubr.bf16.gmra.mrb[0].mxu0 %v489
      %v697 = vpop.f32.mrb[0].mxu0
      %v698 = vadd.f32 %v253, %v697
      %v699 = vpop.f32.mrb[0].mxu0
      %v700 = vpop.f32.mrb[0].mxu0
      %v701 = vadd.f32 %v253, %v700
      %v702 = vpop.f32.mrb[0].mxu0
      %703 = vmatprep.mubr.bf16.mxu0 0
      %704 = vmatmul.mubr.bf16.gmra.mrb[0].mxu0 %v492
      %v705 = vpop.f32.mrb[0].mxu0
      %v706 = vadd.f32 %v253, %v705
      %v707 = vpop.f32.mrb[0].mxu0
      %v708 = vpop.f32.mrb[0].mxu0
      %v709 = vadd.f32 %v253, %v708
      %v710 = vpop.f32.mrb[0].mxu0
      %711 = vmatprep.mubr.bf16.mxu0 0
      %712 = vmatmul.mubr.bf16.gmra.mrb[0].mxu0 %v495
      %v713 = vpop.f32.mrb[0].mxu0
      %v714 = vadd.f32 %v253, %v713
      %v715 = vpop.f32.mrb[0].mxu0
      %v716 = vpop.f32.mrb[0].mxu0
      %v717 = vadd.f32 %v253, %v716
      %v718 = vpop.f32.mrb[0].mxu0
      %719 = vmatprep.mubr.bf16.mxu0 0
      %720 = vmatmul.mubr.bf16.gmra.mrb[0].mxu0 %v498
      %v721 = vpop.f32.mrb[0].mxu0
      %v722 = vadd.f32 %v253, %v721
      %v723 = vpop.f32.mrb[0].mxu0
      %v724 = vpop.f32.mrb[0].mxu0
      %v725 = vadd.f32 %v253, %v724
      %v726 = vpop.f32.mrb[0].mxu0
      %727 = vmatprep.mubr.bf16.mxu0 0
      %728 = vmatmul.mubr.bf16.gmra.mrb[0].mxu0 %v501
      %v729 = vpop.f32.mrb[0].mxu0
      %v730 = vadd.f32 %v253, %v729
      %v731 = vpop.f32.mrb[0].mxu0
      %v732 = vpop.f32.mrb[0].mxu0
      %v733 = vadd.f32 %v253, %v732
      %v734 = vpop.f32.mrb[0].mxu0
      %735 = vmatprep.mubr.bf16.mxu0 0
      %736 = vmatmul.mubr.bf16.gmra.mrb[0].mxu0 %v504
      %v737 = vpop.f32.mrb[0].mxu0
      %v738 = vadd.f32 %v253, %v737
      %v739 = vpop.f32.mrb[0].mxu0
      %v740 = vpop.f32.mrb[0].mxu0
      %v741 = vadd.f32 %v253, %v740
      %v742 = vpop.f32.mrb[0].mxu0
      %743 = vmatprep.mubr.bf16.mxu0 0
      %744 = vmatmul.mubr.bf16.gmra.mrb[0].mxu0 %v507
      %v745 = vpop.f32.mrb[0].mxu0
      %v746 = vadd.f32 %v253, %v745
      %v747 = vpop.f32.mrb[0].mxu0
      %v748 = vpop.f32.mrb[0].mxu0
      %v749 = vadd.f32 %v253, %v748
      %v750 = vpop.f32.mrb[0].mxu0
      %751 = vmatprep.mubr.bf16.mxu0 0
      %752 = vmatmul.mubr.bf16.gmra.mrb[0].mxu0 %v510
      %v753 = vpop.f32.mrb[0].mxu0
      %v754 = vadd.f32 %v253, %v753
      %v755 = vpop.f32.mrb[0].mxu0
      %v756 = vpop.f32.mrb[0].mxu0
      %v757 = vadd.f32 %v253, %v756
      %v758 = vpop.f32.mrb[0].mxu0
      %759 = vmatprep.mubr.bf16.mxu0 0
      %760 = vmatmul.mubr.bf16.gmra.mrb[0].mxu0 %v513
      %v761 = vpop.f32.mrb[0].mxu0
      %v762 = vadd.f32 %v253, %v761
      %v763 = vpop.f32.mrb[0].mxu0
      %v764 = vpop.f32.mrb[0].mxu0
      %v765 = vadd.f32 %v253, %v764
      %v766 = vpop.f32.mrb[0].mxu0
      %767 = vmatprep.mubr.bf16.mxu0 0
      %768 = vmatmul.mubr.bf16.gmra.mrb[0].mxu0 %v516
      %v769 = vpop.f32.mrb[0].mxu0
      %v770 = vadd.f32 %v253, %v769
      %v771 = vpop.f32.mrb[0].mxu0
      %v772 = vpop.f32.mrb[0].mxu0
      %v773 = vadd.f32 %v253, %v772
      %v774 = vpop.f32.mrb[0].mxu0
      %775 = vmatprep.mubr.bf16.mxu0 0
      %776 = vmatmul.mubr.bf16.gmra.mrb[0].mxu0 %v519
      %v777 = vpop.f32.mrb[0].mxu0
      %v778 = vadd.f32 %v253, %v777
      %v779 = vpop.f32.mrb[0].mxu0
      %v780 = vpop.f32.mrb[0].mxu0
      %v781 = vadd.f32 %v253, %v780
      %v782 = vpop.f32.mrb[0].mxu0
      %783 = vmatprep.mubr.bf16.mxu0 0
      %784 = vmatmul.mubr.bf16.gmra.mrb[0].mxu0 %v522
      %v785 = vpop.f32.mrb[0].mxu0
      %v786 = vadd.f32 %v253, %v785
      %v787 = vpop.f32.mrb[0].mxu0
      %v788 = vpop.f32.mrb[0].mxu0
      %v789 = vadd.f32 %v253, %v788
      %v790 = vpop.f32.mrb[0].mxu0
      %791 = vmatprep.mubr.bf16.mxu0 0
      %792 = vmatmul.mubr.bf16.gmra.mrb[0].mxu0 %v525
      %v793 = vpop.f32.mrb[0].mxu0
      %v794 = vadd.f32 %v253, %v793
      %v795 = vpop.f32.mrb[0].mxu0
      %v796 = vpop.f32.mrb[0].mxu0
      %v797 = vadd.f32 %v253, %v796
      %v798 = vpop.f32.mrb[0].mxu0
      %799 = vmatprep.mubr.bf16.mxu0 0
      %800 = vmatmul.mubr.bf16.gmra.mrb[0].mxu0 %v528
      %v801 = vpop.f32.mrb[0].mxu0
      %v802 = vadd.f32 %v253, %v801
      %v803 = vpop.f32.mrb[0].mxu0
      %v804 = vpop.f32.mrb[0].mxu0
      %v805 = vadd.f32 %v253, %v804
      %v806 = vpop.f32.mrb[0].mxu0
      %807 = vmatprep.mubr.bf16.mxu0 0
      %808 = vmatmul.mubr.bf16.gmra.mrb[0].mxu0 %v531
      %v809 = vpop.f32.mrb[0].mxu0
      %v810 = vadd.f32 %v253, %v809
      %v811 = vpop.f32.mrb[0].mxu0
      %v812 = vpop.f32.mrb[0].mxu0
      %v813 = vadd.f32 %v253, %v812
      %v814 = vpop.f32.mrb[0].mxu0
      %815 = vmatprep.mubr.bf16.mxu0 0
      %816 = vmatmul.mubr.bf16.gmra.mrb[0].mxu0 %v534
      %v817 = vpop.f32.mrb[0].mxu0
      %v818 = vadd.f32 %v253, %v817
      %v819 = vpop.f32.mrb[0].mxu0
      %v820 = vpop.f32.mrb[0].mxu0
      %v821 = vadd.f32 %v253, %v820
      %v822 = vpop.f32.mrb[0].mxu0
      %823 = vmatprep.mubr.bf16.mxu0 0
      %824 = vmatmul.mubr.bf16.gmra.mrb[0].mxu0 %v537
      %v825 = vpop.f32.mrb[0].mxu0
      %v826 = vadd.f32 %v253, %v825
      %v827 = vpop.f32.mrb[0].mxu0
      %v828 = vpop.f32.mrb[0].mxu0
      %v829 = vadd.f32 %v253, %v828
      %v830 = vpop.f32.mrb[0].mxu0
      %831 = vdwg.mxu0
      %v832 = vmax.f32 %v578, 0.0
      %v833 = vmax.f32 %v581, 0.0
      %v834 = vmax.f32 %v586, 0.0
      %v835 = vmax.f32 %v589, 0.0
      %v836 = vmax.f32 %v594, 0.0
      %v837 = vmax.f32 %v597, 0.0
      %v838 = vmax.f32 %v602, 0.0
      %v839 = vmax.f32 %v605, 0.0
      %v840 = vmax.f32 %v610, 0.0
      %v841 = vmax.f32 %v613, 0.0
      %v842 = vmax.f32 %v618, 0.0
      %v843 = vmax.f32 %v621, 0.0
      %v844 = vmax.f32 %v626, 0.0
      %v845 = vmax.f32 %v629, 0.0
      %v846 = vmax.f32 %v634, 0.0
      %v847 = vmax.f32 %v637, 0.0
      %v848 = vmax.f32 %v642, 0.0
      %v849 = vmax.f32 %v645, 0.0
      %v850 = vmax.f32 %v650, 0.0
      %v851 = vmax.f32 %v653, 0.0
      %v852 = vmax.f32 %v658, 0.0
      %v853 = vmax.f32 %v661, 0.0
      %v854 = vmax.f32 %v666, 0.0
      %v855 = vmax.f32 %v669, 0.0
      %v856 = vmax.f32 %v674, 0.0
      %v857 = vmax.f32 %v677, 0.0
      %v858 = vmax.f32 %v682, 0.0
      %v859 = vmax.f32 %v685, 0.0
      %v860 = vmax.f32 %v690, 0.0
      %v861 = vmax.f32 %v693, 0.0
      %v862 = vmax.f32 %v698, 0.0
      %v863 = vmax.f32 %v701, 0.0
      %v864 = vmax.f32 %v706, 0.0
      %v865 = vmax.f32 %v709, 0.0
      %v866 = vmax.f32 %v714, 0.0
      %v867 = vmax.f32 %v717, 0.0
      %v868 = vmax.f32 %v722, 0.0
      %v869 = vmax.f32 %v725, 0.0
      %v870 = vmax.f32 %v730, 0.0
      %v871 = vmax.f32 %v733, 0.0
      %v872 = vmax.f32 %v738, 0.0
      %v873 = vmax.f32 %v741, 0.0
      %v874 = vmax.f32 %v746, 0.0
      %v875 = vmax.f32 %v749, 0.0
      %v876 = vmax.f32 %v754, 0.0
      %v877 = vmax.f32 %v757, 0.0
      %v878 = vmax.f32 %v762, 0.0
      %v879 = vmax.f32 %v765, 0.0
      %v880 = vmax.f32 %v770, 0.0
      %v881 = vmax.f32 %v773, 0.0
      %v882 = vmax.f32 %v778, 0.0
      %v883 = vmax.f32 %v781, 0.0
      %v884 = vmax.f32 %v786, 0.0
      %v885 = vmax.f32 %v789, 0.0
      %v886 = vmax.f32 %v794, 0.0
      %v887 = vmax.f32 %v797, 0.0
      %v888 = vmax.f32 %v802, 0.0
      %v889 = vmax.f32 %v805, 0.0
      %v890 = vmax.f32 %v810, 0.0
      %v891 = vmax.f32 %v813, 0.0
      %v892 = vmax.f32 %v818, 0.0
      %v893 = vmax.f32 %v821, 0.0
      %v894 = vmax.f32 %v826, 0.0
      %v895 = vmax.f32 %v829, 0.0
      %v896 = vpack.c.bf16 %v833, %v832
      %v897 = vpack.c.bf16 %v835, %v834
      %v898 = vpack.c.bf16 %v837, %v836
      %v899 = vpack.c.bf16 %v839, %v838
      %v900 = vpack.c.bf16 %v841, %v840
      %v901 = vpack.c.bf16 %v843, %v842
      %v902 = vpack.c.bf16 %v845, %v844
      %v903 = vpack.c.bf16 %v847, %v846
      %v904 = vpack.c.bf16 %v849, %v848
      %v905 = vpack.c.bf16 %v851, %v850
      %v906 = vpack.c.bf16 %v853, %v852
      %v907 = vpack.c.bf16 %v855, %v854
      %v908 = vpack.c.bf16 %v857, %v856
      %v909 = vpack.c.bf16 %v859, %v858
      %v910 = vpack.c.bf16 %v861, %v860
      %v911 = vpack.c.bf16 %v863, %v862
      %v912 = vpack.c.bf16 %v865, %v864
      %v913 = vpack.c.bf16 %v867, %v866
      %v914 = vpack.c.bf16 %v869, %v868
      %v915 = vpack.c.bf16 %v871, %v870
      %v916 = vpack.c.bf16 %v873, %v872
      %v917 = vpack.c.bf16 %v875, %v874
      %v918 = vpack.c.bf16 %v877, %v876
      %v919 = vpack.c.bf16 %v879, %v878
      %v920 = vpack.c.bf16 %v881, %v880
      %v921 = vpack.c.bf16 %v883, %v882
      %v922 = vpack.c.bf16 %v885, %v884
      %v923 = vpack.c.bf16 %v887, %v886
      %v924 = vpack.c.bf16 %v889, %v888
      %v925 = vpack.c.bf16 %v891, %v890
      %v926 = vpack.c.bf16 %v893, %v892
      %v927 = vpack.c.bf16 %v895, %v894
      %v960 = vunpack.c.l.b16 %v896
      %v961 = vunpack.c.h.b16 %v896
      %v962 = vunpack.c.l.b16 %v897
      %v963 = vunpack.c.h.b16 %v897
      %v964 = vunpack.c.l.b16 %v898
      %v965 = vunpack.c.h.b16 %v898
      %v966 = vunpack.c.l.b16 %v899
      %v967 = vunpack.c.h.b16 %v899
      %v968 = vunpack.c.l.b16 %v900
      %v969 = vunpack.c.h.b16 %v900
      %v970 = vunpack.c.l.b16 %v901
      %v971 = vunpack.c.h.b16 %v901
      %v972 = vunpack.c.l.b16 %v902
      %v973 = vunpack.c.h.b16 %v902
      %v974 = vunpack.c.l.b16 %v903
      %v975 = vunpack.c.h.b16 %v903
      %v976 = vunpack.c.l.b16 %v904
      %v977 = vunpack.c.h.b16 %v904
      %v978 = vunpack.c.l.b16 %v905
      %v979 = vunpack.c.h.b16 %v905
      %v980 = vunpack.c.l.b16 %v906
      %v981 = vunpack.c.h.b16 %v906
      %v982 = vunpack.c.l.b16 %v907
      %v983 = vunpack.c.h.b16 %v907
      %v984 = vunpack.c.l.b16 %v908
      %v985 = vunpack.c.h.b16 %v908
      %v986 = vunpack.c.l.b16 %v909
      %v987 = vunpack.c.h.b16 %v909
      %v988 = vunpack.c.l.b16 %v910
      %v989 = vunpack.c.h.b16 %v910
      %v990 = vunpack.c.l.b16 %v911
      %v991 = vunpack.c.h.b16 %v911
      %v992 = vunpack.c.l.b16 %v912
      %v993 = vunpack.c.h.b16 %v912
      %v994 = vunpack.c.l.b16 %v913
      %v995 = vunpack.c.h.b16 %v913
      %v996 = vunpack.c.l.b16 %v914
      %v997 = vunpack.c.h.b16 %v914
      %v998 = vunpack.c.l.b16 %v915
      %v999 = vunpack.c.h.b16 %v915
      %v1000 = vunpack.c.l.b16 %v916
      %v1001 = vunpack.c.h.b16 %v916
      %v1002 = vunpack.c.l.b16 %v917
      %v1003 = vunpack.c.h.b16 %v917
      %v1004 = vunpack.c.l.b16 %v918
      %v1005 = vunpack.c.h.b16 %v918
      %v1006 = vunpack.c.l.b16 %v919
      %v1007 = vunpack.c.h.b16 %v919
      %v1008 = vunpack.c.l.b16 %v920
      %v1009 = vunpack.c.h.b16 %v920
      %v1010 = vunpack.c.l.b16 %v921
      %v1011 = vunpack.c.h.b16 %v921
      %v1012 = vunpack.c.l.b16 %v922
      %v1013 = vunpack.c.h.b16 %v922
      %v1014 = vunpack.c.l.b16 %v923
      %v1015 = vunpack.c.h.b16 %v923
      %v1016 = vunpack.c.l.b16 %v924
      %v1017 = vunpack.c.h.b16 %v924
      %v1018 = vunpack.c.l.b16 %v925
      %v1019 = vunpack.c.h.b16 %v925
      %v1020 = vunpack.c.l.b16 %v926
      %v1021 = vunpack.c.h.b16 %v926
      %v1022 = vunpack.c.l.b16 %v927
      %v1023 = vunpack.c.h.b16 %v927
      %v1024 = vpack.c.b16 %v960, %v960
      %v1025 = vpack.c.b16 %v961, %v961
      %v1026 = vpack.c.b16 %v962, %v962
      %v1027 = vpack.c.b16 %v963, %v963
      %v1028 = vpack.c.b16 %v964, %v964
      %v1029 = vpack.c.b16 %v965, %v965
      %v1030 = vpack.c.b16 %v966, %v966
      %v1031 = vpack.c.b16 %v967, %v967
      %v1032 = vpack.c.b16 %v968, %v968
      %v1033 = vpack.c.b16 %v969, %v969
      %v1034 = vpack.c.b16 %v970, %v970
      %v1035 = vpack.c.b16 %v971, %v971
      %v1036 = vpack.c.b16 %v972, %v972
      %v1037 = vpack.c.b16 %v973, %v973
      %v1038 = vpack.c.b16 %v974, %v974
      %v1039 = vpack.c.b16 %v975, %v975
      %v1040 = vpack.c.b16 %v976, %v976
      %v1041 = vpack.c.b16 %v977, %v977
      %v1042 = vpack.c.b16 %v978, %v978
      %v1043 = vpack.c.b16 %v979, %v979
      %v1044 = vpack.c.b16 %v980, %v980
      %v1045 = vpack.c.b16 %v981, %v981
      %v1046 = vpack.c.b16 %v982, %v982
      %v1047 = vpack.c.b16 %v983, %v983
      %v1048 = vpack.c.b16 %v984, %v984
      %v1049 = vpack.c.b16 %v985, %v985
      %v1050 = vpack.c.b16 %v986, %v986
      %v1051 = vpack.c.b16 %v987, %v987
      %v1052 = vpack.c.b16 %v988, %v988
      %v1053 = vpack.c.b16 %v989, %v989
      %v1054 = vpack.c.b16 %v990, %v990
      %v1055 = vpack.c.b16 %v991, %v991
      %v1056 = vpack.c.b16 %v992, %v992
      %v1057 = vpack.c.b16 %v993, %v993
      %v1058 = vpack.c.b16 %v994, %v994
      %v1059 = vpack.c.b16 %v995, %v995
      %v1060 = vpack.c.b16 %v996, %v996
      %v1061 = vpack.c.b16 %v997, %v997
      %v1062 = vpack.c.b16 %v998, %v998
      %v1063 = vpack.c.b16 %v999, %v999
      %v1064 = vpack.c.b16 %v1000, %v1000
      %v1065 = vpack.c.b16 %v1001, %v1001
      %v1066 = vpack.c.b16 %v1002, %v1002
      %v1067 = vpack.c.b16 %v1003, %v1003
      %v1068 = vpack.c.b16 %v1004, %v1004
      %v1069 = vpack.c.b16 %v1005, %v1005
      %v1070 = vpack.c.b16 %v1006, %v1006
      %v1071 = vpack.c.b16 %v1007, %v1007
      %v1072 = vpack.c.b16 %v1008, %v1008
      %v1073 = vpack.c.b16 %v1009, %v1009
      %v1074 = vpack.c.b16 %v1010, %v1010
      %v1075 = vpack.c.b16 %v1011, %v1011
      %v1076 = vpack.c.b16 %v1012, %v1012
      %v1077 = vpack.c.b16 %v1013, %v1013
      %v1078 = vpack.c.b16 %v1014, %v1014
      %v1079 = vpack.c.b16 %v1015, %v1015
      %v1080 = vpack.c.b16 %v1016, %v1016
      %v1081 = vpack.c.b16 %v1017, %v1017
      %v1082 = vpack.c.b16 %v1018, %v1018
      %v1083 = vpack.c.b16 %v1019, %v1019
      %v1084 = vpack.c.b16 %v1020, %v1020
      %v1085 = vpack.c.b16 %v1021, %v1021
      %v1086 = vpack.c.b16 %v1022, %v1022
      %v1087 = vpack.c.b16 %v1023, %v1023
      %vm1152 = vcmask 60416
      %1153 = vst.msk [vmem:[%s172] sm:$0xf] %vm1152, %v1024
      %1154 = vst.msk [vmem:[%s172 + $0x4] sm:$0xf] %vm1152, %v1025
      %1155 = vst.msk [vmem:[%s172 + $0x8] sm:$0xf] %vm1152, %v1026
      %1156 = vst.msk [vmem:[%s172 + $0xc] sm:$0xf] %vm1152, %v1027
      %1157 = vst.msk [vmem:[%s172 + $0x10] sm:$0xf] %vm1152, %v1028
      %1158 = vst.msk [vmem:[%s172 + $0x14] sm:$0xf] %vm1152, %v1029
      %1159 = vst.msk [vmem:[%s172 + $0x18] sm:$0xf] %vm1152, %v1030
      %1160 = vst.msk [vmem:[%s172 + $0x1c] sm:$0xf] %vm1152, %v1031
      %1161 = vst.msk [vmem:[%s172 + $0x20] sm:$0xf] %vm1152, %v1032
      %1162 = vst.msk [vmem:[%s172 + $0x24] sm:$0xf] %vm1152, %v1033
      %1163 = vst.msk [vmem:[%s172 + $0x28] sm:$0xf] %vm1152, %v1034
      %1164 = vst.msk [vmem:[%s172 + $0x2c] sm:$0xf] %vm1152, %v1035
      %1165 = vst.msk [vmem:[%s172 + $0x30] sm:$0xf] %vm1152, %v1036
      %1166 = vst.msk [vmem:[%s172 + $0x34] sm:$0xf] %vm1152, %v1037
      %1167 = vst.msk [vmem:[%s172 + $0x38] sm:$0xf] %vm1152, %v1038
      %1168 = vst.msk [vmem:[%s172 + $0x3c] sm:$0xf] %vm1152, %v1039
      %1169 = vst.msk [vmem:[%s172 + $0x40] sm:$0xf] %vm1152, %v1040
      %1170 = vst.msk [vmem:[%s172 + $0x44] sm:$0xf] %vm1152, %v1041
      %1171 = vst.msk [vmem:[%s172 + $0x48] sm:$0xf] %vm1152, %v1042
      %1172 = vst.msk [vmem:[%s172 + $0x4c] sm:$0xf] %vm1152, %v1043
      %1173 = vst.msk [vmem:[%s172 + $0x50] sm:$0xf] %vm1152, %v1044
      %1174 = vst.msk [vmem:[%s172 + $0x54] sm:$0xf] %vm1152, %v1045
      %1175 = vst.msk [vmem:[%s172 + $0x58] sm:$0xf] %vm1152, %v1046
      %1176 = vst.msk [vmem:[%s172 + $0x5c] sm:$0xf] %vm1152, %v1047
      %1177 = vst.msk [vmem:[%s172 + $0x60] sm:$0xf] %vm1152, %v1048
      %1178 = vst.msk [vmem:[%s172 + $0x64] sm:$0xf] %vm1152, %v1049
      %1179 = vst.msk [vmem:[%s172 + $0x68] sm:$0xf] %vm1152, %v1050
      %1180 = vst.msk [vmem:[%s172 + $0x6c] sm:$0xf] %vm1152, %v1051
      %1181 = vst.msk [vmem:[%s172 + $0x70] sm:$0xf] %vm1152, %v1052
      %1182 = vst.msk [vmem:[%s172 + $0x74] sm:$0xf] %vm1152, %v1053
      %1183 = vst.msk [vmem:[%s172 + $0x78] sm:$0xf] %vm1152, %v1054
      %1184 = vst.msk [vmem:[%s172 + $0x7c] sm:$0xf] %vm1152, %v1055
      %1185 = vst.msk [vmem:[%s172 + $0x80] sm:$0xf] %vm1152, %v1056
      %1186 = vst.msk [vmem:[%s172 + $0x84] sm:$0xf] %vm1152, %v1057
      %1187 = vst.msk [vmem:[%s172 + $0x88] sm:$0xf] %vm1152, %v1058
      %1188 = vst.msk [vmem:[%s172 + $0x8c] sm:$0xf] %vm1152, %v1059
      %1189 = vst.msk [vmem:[%s172 + $0x90] sm:$0xf] %vm1152, %v1060
      %1190 = vst.msk [vmem:[%s172 + $0x94] sm:$0xf] %vm1152, %v1061
      %1191 = vst.msk [vmem:[%s172 + $0x98] sm:$0xf] %vm1152, %v1062
      %1192 = vst.msk [vmem:[%s172 + $0x9c] sm:$0xf] %vm1152, %v1063
      %1193 = vst.msk [vmem:[%s172 + $0xa0] sm:$0xf] %vm1152, %v1064
      %1194 = vst.msk [vmem:[%s172 + $0xa4] sm:$0xf] %vm1152, %v1065
      %1195 = vst.msk [vmem:[%s172 + $0xa8] sm:$0xf] %vm1152, %v1066
      %1196 = vst.msk [vmem:[%s172 + $0xac] sm:$0xf] %vm1152, %v1067
      %1197 = vst.msk [vmem:[%s172 + $0xb0] sm:$0xf] %vm1152, %v1068
      %1198 = vst.msk [vmem:[%s172 + $0xb4] sm:$0xf] %vm1152, %v1069
      %1199 = vst.msk [vmem:[%s172 + $0xb8] sm:$0xf] %vm1152, %v1070
      %1200 = vst.msk [vmem:[%s172 + $0xbc] sm:$0xf] %vm1152, %v1071
      %1201 = vst.msk [vmem:[%s172 + $0xc0] sm:$0xf] %vm1152, %v1072
      %1202 = vst.msk [vmem:[%s172 + $0xc4] sm:$0xf] %vm1152, %v1073
      %1203 = vst.msk [vmem:[%s172 + $0xc8] sm:$0xf] %vm1152, %v1074
      %1204 = vst.msk [vmem:[%s172 + $0xcc] sm:$0xf] %vm1152, %v1075
      %1205 = vst.msk [vmem:[%s172 + $0xd0] sm:$0xf] %vm1152, %v1076
      %1206 = vst.msk [vmem:[%s172 + $0xd4] sm:$0xf] %vm1152, %v1077
      %1207 = vst.msk [vmem:[%s172 + $0xd8] sm:$0xf] %vm1152, %v1078
      %1208 = vst.msk [vmem:[%s172 + $0xdc] sm:$0xf] %vm1152, %v1079
      %1209 = vst.msk [vmem:[%s172 + $0xe0] sm:$0xf] %vm1152, %v1080
      %1210 = vst.msk [vmem:[%s172 + $0xe4] sm:$0xf] %vm1152, %v1081
      %1211 = vst.msk [vmem:[%s172 + $0xe8] sm:$0xf] %vm1152, %v1082
      %1212 = vst.msk [vmem:[%s172 + $0xec] sm:$0xf] %vm1152, %v1083
      %1213 = vst.msk [vmem:[%s172 + $0xf0] sm:$0xf] %vm1152, %v1084
      %1214 = vst.msk [vmem:[%s172 + $0xf4] sm:$0xf] %vm1152, %v1085
      %1215 = vst.msk [vmem:[%s172 + $0xf8] sm:$0xf] %vm1152, %v1086
      %1216 = vst.msk [vmem:[%s172 + $0xfc] sm:$0xf] %vm1152, %v1087
      %s1217 = smul.u32 64, %s14
      %p1218 = scmp.lt.s32.totalorder %s1217, 255
      %s1219 = scalar_select %p1218, %s1217, 255
      %s1220 = smul.addr %s1219, 4
      %s1221 = scalar_lea.vmem %s3, %s1220
      // Predicated region
      $region33: #{_lambda_.17} parent=31 // pred_check
        %p1222 = pneg %p100
      $region34: #{_lambda_.17} parent=31 // pred_check_branch
        %1224 = sbr.rel (%p1222) target = $region36
      $region35: #{_lambda_.17} parent=31 // pred_region
        %s1225 = smul.u32 64, %s14
      $region36: #{_lambda_.17} parent=31 // pred_fallthru
        _
    $region32: #{_lambda_.17} parent=5 // pred_fallthru
      _
    %p1226 = scmp.le.s32.totalorder 2, %s9
    // Predicated region
    $region37: #{_lambda_.17} parent=5 // pred_check
      %p1227 = pneg %p1226
    $region38: #{_lambda_.17} parent=5 // pred_check_branch
      %1229 = sbr.rel (%p1227) target = $region40
    $region39: #{_lambda_.17} parent=5 // pred_region
      %s1230 = ssub.s32 %s9, 2
      // Predicated region
      $region41: #{_lambda_.17} parent=39 // pred_check
        %p1231 = pneg %p106
      $region42: #{_lambda_.17} parent=39 // pred_check_branch
        %1233 = sbr.rel (%p1231) target = $region44
      $region43: #{_lambda_.17} parent=39 // pred_region
        %s1234 = smul.u32 64, %s15
        %p1235 = scmp.lt.s32.totalorder %s1234, 255
        %s1236 = scalar_select %p1235, %s1234, 255
        %s1237 = smul.addr %s1236, 4
        %s1238 = scalar_lea.vmem %s3, %s1237
      $region44: #{_lambda_.17} parent=39 // pred_fallthru
        _
    $region40: #{_lambda_.17} parent=5 // pred_fallthru
      _
  $region6: #{_lambda_.17} parent=0 // loop_footer
    %s13 = sadd.s32 1, %s9
  $region7: #{_lambda_.17} parent=0 // loop_footer_branch
    %8 = sbr.rel target = $region3
  $region8: #{_lambda_.17} parent=0 // loop_exit
    _

// kernel: _lambda_.18
$region0: #{_lambda_.18}
  #allocation0 [shape = 'u32[]', space=smem, size = 0x4, offset = 0x4, fixed_abs, tag = 'smem constant byte address 0x4 - core index']
  #allocation1 [shape = 'u32[144,128]{1,0:T(1,128)}', space=vmem, size = 0x12000, scoped, tag = 'internal scratch']
  %s0 = inlined_call_operand.vmem [shape: bf16[2048,72], index: 0, kind: input, shape index: {}]
  %s1 = inlined_call_operand.vmem [shape: bf16[72,16], index: 1, kind: input, shape index: {}]
  %s2 = inlined_call_operand.vmem [shape: f32[1,16], index: 2, kind: input, shape index: {}]
  %s3 = inlined_call_operand.vmem [shape: bf16[2048,16], index: 3, kind: output, shape index: {}]
  %s4 = sld [smem:[#allocation0]]
  $region45: #{_lambda_.18} parent=0
    _
  %s6 = ssub.s32 1, %s4
  %s7 = scalar_select 0, %s6, %s4
  loop: start=0, step=1, limit=6
  $region2: #{_lambda_.18} parent=0 // loop_pre_header
    _
  $region3: #{_lambda_.18} parent=0 // loop_header
    %s9 = sphi 0, %s13
    %p10 = scmp.ge.s32.totalorder %s9, 6
    %s19 = sphi 0, %s21
    %s22 = sphi 0, %s19
    %s23 = sphi 0, %s22
    %s39 = sphi 0, %s23
    %s43 = sphi 0, %s43
    %s45 = sphi 0, %s43
    %s46 = sphi 0, %s45
    %s60 = sphi 0, %s46
    %s64 = sphi 0, %s64
    %s66 = sphi 0, %s64
    %s67 = sphi 0, %s66
    %s81 = sphi 0, %s67
    %s87 = sphi 0, %s89
    %s90 = sphi 0, %s87
    %s91 = sphi 0, %s90
    %s107 = sphi 0, %s91
  $region4: #{_lambda_.18} parent=0 // loop_header_branch
    %12 = sbr.rel (%p10) target = $region8
  $region5: #{_lambda_.18} parent=0 // loop_body
    %s14 = ssub.s32 %s9, 1
    %s15 = ssub.s32 %s9, 2
    %s16 = sadd.s32 %s9, 1
    %s17 = ssub.s32 %s9, %s16
    %p18 = scmp.eq.s32.totalorder %s17, 0
    %s20 = sadd.s32 %s19, 1
    %s21 = scalar_select %p18, %s19, %s20
    %p24 = pneg %p18
    %p25 = scmp.eq.s32.totalorder %s9, 3
    %p26 = por %p24, %p25
    %p27 = scmp.ne.s32.totalorder %s19, %s22
    %p28 = scmp.eq.s32.totalorder %s9, 0
    %p29 = por %p27, %p28
    %p30 = scmp.ne.s32.totalorder %s19, %s22
    %p31 = scmp.eq.s32.totalorder %s14, 3
    %p32 = por %p30, %p31
    %p33 = scmp.ne.s32.totalorder %s22, %s23
    %p34 = scmp.eq.s32.totalorder %s14, 0
    %p35 = por %p33, %p34
    %p36 = scmp.ne.s32.totalorder %s22, %s23
    %p37 = scmp.eq.s32.totalorder %s15, 3
    %p38 = por %p36, %p37
    %p40 = scmp.ne.s32.totalorder %s23, %s39
    %p41 = scmp.eq.s32.totalorder %s15, 0
    %p42 = por %p40, %p41
    %s44 = sadd.s32 %s43, 1
    %p47 = scmp.eq.s32.totalorder %s9, 3
    %p48 = scmp.ne.s32.totalorder %s43, %s45
    %p49 = scmp.eq.s32.totalorder %s9, 0
    %p50 = por %p48, %p49
    %p51 = scmp.ne.s32.totalorder %s43, %s45
    %p52 = scmp.eq.s32.totalorder %s14, 3
    %p53 = por %p51, %p52
    %p54 = scmp.ne.s32.totalorder %s45, %s46
    %p55 = scmp.eq.s32.totalorder %s14, 0
    %p56 = por %p54, %p55
    %p57 = scmp.ne.s32.totalorder %s45, %s46
    %p58 = scmp.eq.s32.totalorder %s15, 3
    %p59 = por %p57, %p58
    %p61 = scmp.ne.s32.totalorder %s46, %s60
    %p62 = scmp.eq.s32.totalorder %s15, 0
    %p63 = por %p61, %p62
    %s65 = sadd.s32 %s64, 1
    %p68 = scmp.eq.s32.totalorder %s9, 3
    %p69 = scmp.ne.s32.totalorder %s64, %s66
    %p70 = scmp.eq.s32.totalorder %s9, 0
    %p71 = por %p69, %p70
    %p72 = scmp.ne.s32.totalorder %s64, %s66
    %p73 = scmp.eq.s32.totalorder %s14, 3
    %p74 = por %p72, %p73
    %p75 = scmp.ne.s32.totalorder %s66, %s67
    %p76 = scmp.eq.s32.totalorder %s14, 0
    %p77 = por %p75, %p76
    %p78 = scmp.ne.s32.totalorder %s66, %s67
    %p79 = scmp.eq.s32.totalorder %s15, 3
    %p80 = por %p78, %p79
    %p82 = scmp.ne.s32.totalorder %s67, %s81
    %p83 = scmp.eq.s32.totalorder %s15, 0
    %p84 = por %p82, %p83
    %s85 = ssub.s32 %s9, %s16
    %p86 = scmp.eq.s32.totalorder %s85, 0
    %s88 = sadd.s32 %s87, 1
    %s89 = scalar_select %p86, %s87, %s88
    %p92 = pneg %p86
    %p93 = scmp.eq.s32.totalorder %s9, 3
    %p94 = por %p92, %p93
    %p95 = scmp.ne.s32.totalorder %s87, %s90
    %p96 = scmp.eq.s32.totalorder %s9, 0
    %p97 = por %p95, %p96
    %p98 = scmp.ne.s32.totalorder %s87, %s90
    %p99 = scmp.eq.s32.totalorder %s14, 3
    %p100 = por %p98, %p99
    %p101 = scmp.ne.s32.totalorder %s90, %s91
    %p102 = scmp.eq.s32.totalorder %s14, 0
    %p103 = por %p101, %p102
    %p104 = scmp.ne.s32.totalorder %s90, %s91
    %p105 = scmp.eq.s32.totalorder %s15, 3
    %p106 = por %p104, %p105
    %p108 = scmp.ne.s32.totalorder %s91, %s107
    %p109 = scmp.eq.s32.totalorder %s15, 0
    %p110 = por %p108, %p109
    %p111 = scmp.le.s32.totalorder 1, %s9
    %p112 = scmp.lt.s32.totalorder %s9, 5
    %p113 = pnand %p111, %p112
    %p114 = pneg %p113
    // Predicated region
    $region9: #{_lambda_.18} parent=5 // pred_check
      _
    $region10: #{_lambda_.18} parent=5 // pred_check_branch
      %116 = sbr.rel (%p113) target = $region12
    $region11: #{_lambda_.18} parent=5 // pred_region
      %s117 = ssub.s32 %s9, 1
      // Predicated region
      $region13: #{_lambda_.18} parent=11 // pred_check
        %p118 = pneg %p56
      $region14: #{_lambda_.18} parent=11 // pred_check_branch
        %120 = sbr.rel (%p118) target = $region16
      $region15: #{_lambda_.18} parent=11 // pred_region
        _
      $region16: #{_lambda_.18} parent=11 // pred_fallthru
        _
      // Predicated region
      $region17: #{_lambda_.18} parent=11 // pred_check
        %p121 = pneg %p77
      $region18: #{_lambda_.18} parent=11 // pred_check_branch
        %123 = sbr.rel (%p121) target = $region20
      $region19: #{_lambda_.18} parent=11 // pred_region
        _
      $region20: #{_lambda_.18} parent=11 // pred_fallthru
        _
    $region12: #{_lambda_.18} parent=5 // pred_fallthru
      _
    %p124 = scmp.lt.s32.totalorder %s9, 4
    // Predicated region
    $region21: #{_lambda_.18} parent=5 // pred_check
      %p125 = pneg %p124
    $region22: #{_lambda_.18} parent=5 // pred_check_branch
      %127 = sbr.rel (%p125) target = $region24
    $region23: #{_lambda_.18} parent=5 // pred_region
      // Predicated region
      $region25: #{_lambda_.18} parent=23 // pred_check
        %p128 = pneg %p29
      $region26: #{_lambda_.18} parent=23 // pred_check_branch
        %130 = sbr.rel (%p128) target = $region28
      $region27: #{_lambda_.18} parent=23 // pred_region
        %s131 = smul.u32 64, %s9
        %p132 = scmp.lt.s32.totalorder %s131, 255
        %s133 = scalar_select %p132, %s131, 255
        %s134 = smul.addr %s133, 4
        %s135 = scalar_lea.vmem %s0, %s134
        %s136 = smul.u32 64, %s9
      $region28: #{_lambda_.18} parent=23 // pred_fallthru
        _
    $region24: #{_lambda_.18} parent=5 // pred_fallthru
      _
    %p137 = scmp.le.s32.totalorder 1, %s9
    %p138 = scmp.lt.s32.totalorder %s9, 5
    %p139 = pnand %p137, %p138
    %p140 = pneg %p139
    // Predicated region
    $region29: #{_lambda_.18} parent=5 // pred_check
      _
    $region30: #{_lambda_.18} parent=5 // pred_check_branch
      %142 = sbr.rel (%p139) target = $region32
    $region31: #{_lambda_.18} parent=5 // pred_region
      %s143 = ssub.s32 %s9, 1
      %s144 = smul.u32 64, %s14
      %p145 = scmp.lt.s32.totalorder %s144, 255
      %s146 = scalar_select %p145, %s144, 255
      %s147 = smul.addr %s146, 4
      %s148 = scalar_lea.vmem %s0, %s147
      %p149 = pneg %p35
      %p150 = pneg %p32
      %p151 = pneg %p56
      %p152 = pneg %p53
      %p153 = pneg %p77
      %p154 = pneg %p74
      %p155 = pneg %p103
      %p156 = pneg %p100
      %s157 = smul.u32 64, %s14
      %p158 = scmp.lt.s32.totalorder %s157, 255
      %s159 = scalar_select %p158, %s157, 255
      %s160 = smul.addr %s159, 4
      %s161 = scalar_lea.vmem %s3, %s160
      %s162 = smul.u32 64, %s14
      %p163 = scmp.lt.s32.totalorder %s162, 255
      %s164 = scalar_select %p163, %s162, 255
      %s165 = smul.addr %s164, 4
      %s166 = scalar_lea.vmem %s0, %s165
      %s167 = smul.u32 64, %s14
      %s168 = smul.u32 64, %s14
      %p169 = scmp.lt.s32.totalorder %s168, 255
      %s170 = scalar_select %p169, %s168, 255
      %s171 = smul.addr %s170, 4
      %s172 = scalar_lea.vmem %s3, %s171
      %s173 = smul.u32 64, %s14
      %v175 = vld [vmem:[%s166] sm:$0xf]
      %v176 = vld [vmem:[%s166 + $0x4] sm:$0xf]
      %v177 = vld [vmem:[%s166 + $0x8] sm:$0xf]
      %v178 = vld [vmem:[%s166 + $0xc] sm:$0xf]
      %v179 = vld [vmem:[%s166 + $0x10] sm:$0xf]
      %v180 = vld [vmem:[%s166 + $0x14] sm:$0xf]
      %v181 = vld [vmem:[%s166 + $0x18] sm:$0xf]
      %v182 = vld [vmem:[%s166 + $0x1c] sm:$0xf]
      %v183 = vld [vmem:[%s166 + $0x20] sm:$0xf]
      %v184 = vld [vmem:[%s166 + $0x24] sm:$0xf]
      %v185 = vld [vmem:[%s166 + $0x28] sm:$0xf]
      %v186 = vld [vmem:[%s166 + $0x2c] sm:$0xf]
      %v187 = vld [vmem:[%s166 + $0x30] sm:$0xf]
      %v188 = vld [vmem:[%s166 + $0x34] sm:$0xf]
      %v189 = vld [vmem:[%s166 + $0x38] sm:$0xf]
      %v190 = vld [vmem:[%s166 + $0x3c] sm:$0xf]
      %v191 = vld [vmem:[%s166 + $0x40] sm:$0xf]
      %v192 = vld [vmem:[%s166 + $0x44] sm:$0xf]
      %v193 = vld [vmem:[%s166 + $0x48] sm:$0xf]
      %v194 = vld [vmem:[%s166 + $0x4c] sm:$0xf]
      %v195 = vld [vmem:[%s166 + $0x50] sm:$0xf]
      %v196 = vld [vmem:[%s166 + $0x54] sm:$0xf]
      %v197 = vld [vmem:[%s166 + $0x58] sm:$0xf]
      %v198 = vld [vmem:[%s166 + $0x5c] sm:$0xf]
      %v199 = vld [vmem:[%s166 + $0x60] sm:$0xf]
      %v200 = vld [vmem:[%s166 + $0x64] sm:$0xf]
      %v201 = vld [vmem:[%s166 + $0x68] sm:$0xf]
      %v202 = vld [vmem:[%s166 + $0x6c] sm:$0xf]
      %v203 = vld [vmem:[%s166 + $0x70] sm:$0xf]
      %v204 = vld [vmem:[%s166 + $0x74] sm:$0xf]
      %v205 = vld [vmem:[%s166 + $0x78] sm:$0xf]
      %v206 = vld [vmem:[%s166 + $0x7c] sm:$0xf]
      %v207 = vld [vmem:[%s166 + $0x80] sm:$0xf]
      %v208 = vld [vmem:[%s166 + $0x84] sm:$0xf]
      %v209 = vld [vmem:[%s166 + $0x88] sm:$0xf]
      %v210 = vld [vmem:[%s166 + $0x8c] sm:$0xf]
      %v211 = vld [vmem:[%s166 + $0x90] sm:$0xf]
      %v212 = vld [vmem:[%s166 + $0x94] sm:$0xf]
      %v213 = vld [vmem:[%s166 + $0x98] sm:$0xf]
      %v214 = vld [vmem:[%s166 + $0x9c] sm:$0xf]
      %v215 = vld [vmem:[%s166 + $0xa0] sm:$0xf]
      %v216 = vld [vmem:[%s166 + $0xa4] sm:$0xf]
      %v217 = vld [vmem:[%s166 + $0xa8] sm:$0xf]
      %v218 = vld [vmem:[%s166 + $0xac] sm:$0xf]
      %v219 = vld [vmem:[%s166 + $0xb0] sm:$0xf]
      %v220 = vld [vmem:[%s166 + $0xb4] sm:$0xf]
      %v221 = vld [vmem:[%s166 + $0xb8] sm:$0xf]
      %v222 = vld [vmem:[%s166 + $0xbc] sm:$0xf]
      %v223 = vld [vmem:[%s166 + $0xc0] sm:$0xf]
      %v224 = vld [vmem:[%s166 + $0xc4] sm:$0xf]
      %v225 = vld [vmem:[%s166 + $0xc8] sm:$0xf]
      %v226 = vld [vmem:[%s166 + $0xcc] sm:$0xf]
      %v227 = vld [vmem:[%s166 + $0xd0] sm:$0xf]
      %v228 = vld [vmem:[%s166 + $0xd4] sm:$0xf]
      %v229 = vld [vmem:[%s166 + $0xd8] sm:$0xf]
      %v230 = vld [vmem:[%s166 + $0xdc] sm:$0xf]
      %v231 = vld [vmem:[%s166 + $0xe0] sm:$0xf]
      %v232 = vld [vmem:[%s166 + $0xe4] sm:$0xf]
      %v233 = vld [vmem:[%s166 + $0xe8] sm:$0xf]
      %v234 = vld [vmem:[%s166 + $0xec] sm:$0xf]
      %v235 = vld [vmem:[%s166 + $0xf0] sm:$0xf]
      %v236 = vld [vmem:[%s166 + $0xf4] sm:$0xf]
      %v237 = vld [vmem:[%s166 + $0xf8] sm:$0xf]
      %v238 = vld [vmem:[%s166 + $0xfc] sm:$0xf]
      %v239 = vld [vmem:[%s1] sm:$0xf]
      %v240 = vld [vmem:[%s1 + $0x4] sm:$0xf]
      %v241 = vld [vmem:[%s1 + $0x8] sm:$0xf]
      %v242 = vld [vmem:[%s1 + $0xc] sm:$0xf]
      %v243 = vld [vmem:[%s1 + $0x10] sm:$0xf]
      %v244 = vld [vmem:[%s1 + $0x14] sm:$0xf]
      %v245 = vld [vmem:[%s1 + $0x18] sm:$0xf]
      %v246 = vld [vmem:[%s1 + $0x1c] sm:$0xf]
      %v247 = vld [vmem:[%s1 + $0x20] sm:$0xf]
      %v248 = vld [vmem:[%s2] sm:$0x1]
      %v250 = vlaneseq
      %v251 = vshrl.u32 %v250, 7
      %v252 = vsub.s32 0, %v251
      %v253 = vrot.slane %v248, %v252
      %v319 = vunpack.c.l.b16 %v175
      %v320 = vunpack.c.l.b16 %v176
      %v321 = vunpack.c.l.b16 %v177
      %v322 = vunpack.c.l.b16 %v178
      %v323 = vunpack.c.l.b16 %v179
      %v324 = vunpack.c.l.b16 %v180
      %v325 = vunpack.c.l.b16 %v181
      %v326 = vunpack.c.l.b16 %v182
      %v327 = vunpack.c.l.b16 %v183
      %v328 = vunpack.c.l.b16 %v184
      %v329 = vunpack.c.l.b16 %v185
      %v330 = vunpack.c.l.b16 %v186
      %v331 = vunpack.c.l.b16 %v187
      %v332 = vunpack.c.l.b16 %v188
      %v333 = vunpack.c.l.b16 %v189
      %v334 = vunpack.c.l.b16 %v190
      %v335 = vunpack.c.l.b16 %v191
      %v336 = vunpack.c.l.b16 %v192
      %v337 = vunpack.c.l.b16 %v193
      %v338 = vunpack.c.l.b16 %v194
      %v339 = vunpack.c.l.b16 %v195
      %v340 = vunpack.c.l.b16 %v196
      %v341 = vunpack.c.l.b16 %v197
      %v342 = vunpack.c.l.b16 %v198
      %v343 = vunpack.c.l.b16 %v199
      %v344 = vunpack.c.l.b16 %v200
      %v345 = vunpack.c.l.b16 %v201
      %v346 = vunpack.c.l.b16 %v202
      %v347 = vunpack.c.l.b16 %v203
      %v348 = vunpack.c.l.b16 %v204
      %v349 = vunpack.c.l.b16 %v205
      %v350 = vunpack.c.l.b16 %v206
      %v351 = vunpack.c.l.b16 %v207
      %v352 = vunpack.c.l.b16 %v208
      %v353 = vunpack.c.l.b16 %v209
      %v354 = vunpack.c.l.b16 %v210
      %v355 = vunpack.c.l.b16 %v211
      %v356 = vunpack.c.l.b16 %v212
      %v357 = vunpack.c.l.b16 %v213
      %v358 = vunpack.c.l.b16 %v214
      %v359 = vunpack.c.l.b16 %v215
      %v360 = vunpack.c.l.b16 %v216
      %v361 = vunpack.c.l.b16 %v217
      %v362 = vunpack.c.l.b16 %v218
      %v363 = vunpack.c.l.b16 %v219
      %v364 = vunpack.c.l.b16 %v220
      %v365 = vunpack.c.l.b16 %v221
      %v366 = vunpack.c.l.b16 %v222
      %v367 = vunpack.c.l.b16 %v223
      %v368 = vunpack.c.l.b16 %v224
      %v369 = vunpack.c.l.b16 %v225
      %v370 = vunpack.c.l.b16 %v226
      %v371 = vunpack.c.l.b16 %v227
      %v372 = vunpack.c.l.b16 %v228
      %v373 = vunpack.c.l.b16 %v229
      %v374 = vunpack.c.l.b16 %v230
      %v375 = vunpack.c.l.b16 %v231
      %v376 = vunpack.c.l.b16 %v232
      %v377 = vunpack.c.l.b16 %v233
      %v378 = vunpack.c.l.b16 %v234
      %v379 = vunpack.c.l.b16 %v235
      %v380 = vunpack.c.l.b16 %v236
      %v381 = vunpack.c.l.b16 %v237
      %v382 = vunpack.c.l.b16 %v238
      %v383 = vpack.c.b16 %v320, %v319
      %v384 = vpack.c.b16 %v322, %v321
      %v385 = vpack.c.b16 %v324, %v323
      %v386 = vpack.c.b16 %v326, %v325
      %v387 = vpack.c.b16 %v328, %v327
      %v388 = vpack.c.b16 %v330, %v329
      %v389 = vpack.c.b16 %v332, %v331
      %v390 = vpack.c.b16 %v334, %v333
      %v391 = vpack.c.b16 %v336, %v335
      %v392 = vpack.c.b16 %v338, %v337
      %v393 = vpack.c.b16 %v340, %v339
      %v394 = vpack.c.b16 %v342, %v341
      %v395 = vpack.c.b16 %v344, %v343
      %v396 = vpack.c.b16 %v346, %v345
      %v397 = vpack.c.b16 %v348, %v347
      %v398 = vpack.c.b16 %v350, %v349
      %v399 = vpack.c.b16 %v352, %v351
      %v400 = vpack.c.b16 %v354, %v353
      %v401 = vpack.c.b16 %v356, %v355
      %v402 = vpack.c.b16 %v358, %v357
      %v403 = vpack.c.b16 %v360, %v359
      %v404 = vpack.c.b16 %v362, %v361
      %v405 = vpack.c.b16 %v364, %v363
      %v406 = vpack.c.b16 %v366, %v365
      %v407 = vpack.c.b16 %v368, %v367
      %v408 = vpack.c.b16 %v370, %v369
      %v409 = vpack.c.b16 %v372, %v371
      %v410 = vpack.c.b16 %v374, %v373
      %v411 = vpack.c.b16 %v376, %v375
      %v412 = vpack.c.b16 %v378, %v377
      %v413 = vpack.c.b16 %v380, %v379
      %v414 = vpack.c.b16 %v382, %v381
      %v424 = vunpack.c.l.b16 %v239
      %v425 = vunpack.c.l.b16 %v240
      %v426 = vunpack.c.l.b16 %v241
      %v427 = vunpack.c.l.b16 %v242
      %v428 = vunpack.c.l.b16 %v243
      %v429 = vunpack.c.l.b16 %v244
      %v430 = vunpack.c.l.b16 %v245
      %v431 = vunpack.c.l.b16 %v246
      %v432 = vunpack.c.l.b16 %v247
      %v433 = vpack.c.b16 %v425, %v424
      %v434 = vpack.c.b16 %v427, %v426
      %v435 = vpack.c.b16 %v429, %v428
      %v436 = vpack.c.b16 %v431, %v430
      %v437 = vpack.c.b16 %v432, %v432
      %vm442 = vcmask 588800
      %v444 = vsel %vm442, %v383, 0
      %v447 = vsel %vm442, %v384, 0
      %v450 = vsel %vm442, %v385, 0
      %v453 = vsel %vm442, %v386, 0
      %v456 = vsel %vm442, %v387, 0
      %v459 = vsel %vm442, %v388, 0
      %v462 = vsel %vm442, %v389, 0
      %v465 = vsel %vm442, %v390, 0
      %v468 = vsel %vm442, %v391, 0
      %v471 = vsel %vm442, %v392, 0
      %v474 = vsel %vm442, %v393, 0
      %v477 = vsel %vm442, %v394, 0
      %v480 = vsel %vm442, %v395, 0
      %v483 = vsel %vm442, %v396, 0
      %v486 = vsel %vm442, %v397, 0
      %v489 = vsel %vm442, %v398, 0
      %v492 = vsel %vm442, %v399, 0
      %v495 = vsel %vm442, %v400, 0
      %v498 = vsel %vm442, %v401, 0
      %v501 = vsel %vm442, %v402, 0
      %v504 = vsel %vm442, %v403, 0
      %v507 = vsel %vm442, %v404, 0
      %v510 = vsel %vm442, %v405, 0
      %v513 = vsel %vm442, %v406, 0
      %v516 = vsel %vm442, %v407, 0
      %v519 = vsel %vm442, %v408, 0
      %v522 = vsel %vm442, %v409, 0
      %v525 = vsel %vm442, %v410, 0
      %v528 = vsel %vm442, %v411, 0
      %v531 = vsel %vm442, %v412, 0
      %v534 = vsel %vm442, %v413, 0
      %v537 = vsel %vm442, %v414, 0
      %vm539 = vcmask 1043456
      %v541 = vsel %vm539, %v437, 0
      %543 = vmatprep.subr.bf16.mxu0 0
      %544 = vmatpush1.bf16.msra.mxu0 %v433
      %545 = vmatprep.subr.bf16.mxu0 0
      %546 = vmatpush1.bf16.msra.mxu0 %v434
      %547 = vmatprep.subr.bf16.mxu0 0
      %548 = vmatpush1.bf16.msra.mxu0 %v435
      %549 = vmatprep.subr.bf16.mxu0 0
      %550 = vmatpush1.bf16.msra.mxu0 %v436
      %551 = vmatprep.subr.bf16.mxu0 0
      %552 = vmatpush1.bf16.msra.mxu0 %v541
      %553 = vmatprep.subr.bf16.mxu0 0
      %554 = vmatpush1.bf16.msra.mxu0 0
      %555 = vmatprep.subr.bf16.mxu0 0
      %556 = vmatpush1.bf16.msra.mxu0 0
      %557 = vmatprep.subr.bf16.mxu0 0
      %558 = vmatpush1.bf16.msra.mxu0 0
      %559 = vmatprep.subr.bf16.mxu0 0
      %560 = vmatpush1.bf16.msra.mxu0 0
      %561 = vmatprep.subr.bf16.mxu0 0
      %562 = vmatpush1.bf16.msra.mxu0 0
      %563 = vmatprep.subr.bf16.mxu0 0
      %564 = vmatpush1.bf16.msra.mxu0 0
      %565 = vmatprep.subr.bf16.mxu0 0
      %566 = vmatpush1.bf16.msra.mxu0 0
      %567 = vmatprep.subr.bf16.mxu0 0
      %568 = vmatpush1.bf16.msra.mxu0 0
      %569 = vmatprep.subr.bf16.mxu0 0
      %570 = vmatpush1.bf16.msra.mxu0 0
      %571 = vmatprep.subr.bf16.mxu0 0
      %572 = vmatpush1.bf16.msra.mxu0 0
      %573 = vmatprep.subr.bf16.mxu0 0
      %574 = vmatpush1.bf16.msra.mxu0 0
      %575 = vmatprep.mubr.bf16.mxu0 0
      %576 = vmatmul.mubr.bf16.gmra.mrb[0].mxu0 %v444
      %v577 = vpop.f32.mrb[0].mxu0
      %v578 = vadd.f32 %v253, %v577
      %v579 = vpop.f32.mrb[0].mxu0
      %v580 = vpop.f32.mrb[0].mxu0
      %v581 = vadd.f32 %v253, %v580
      %v582 = vpop.f32.mrb[0].mxu0
      %583 = vmatprep.mubr.bf16.mxu0 0
      %584 = vmatmul.mubr.bf16.gmra.mrb[0].mxu0 %v447
      %v585 = vpop.f32.mrb[0].mxu0
      %v586 = vadd.f32 %v253, %v585
      %v587 = vpop.f32.mrb[0].mxu0
      %v588 = vpop.f32.mrb[0].mxu0
      %v589 = vadd.f32 %v253, %v588
      %v590 = vpop.f32.mrb[0].mxu0
      %591 = vmatprep.mubr.bf16.mxu0 0
      %592 = vmatmul.mubr.bf16.gmra.mrb[0].mxu0 %v450
      %v593 = vpop.f32.mrb[0].mxu0
      %v594 = vadd.f32 %v253, %v593
      %v595 = vpop.f32.mrb[0].mxu0
      %v596 = vpop.f32.mrb[0].mxu0
      %v597 = vadd.f32 %v253, %v596
      %v598 = vpop.f32.mrb[0].mxu0
      %599 = vmatprep.mubr.bf16.mxu0 0
      %600 = vmatmul.mubr.bf16.gmra.mrb[0].mxu0 %v453
      %v601 = vpop.f32.mrb[0].mxu0
      %v602 = vadd.f32 %v253, %v601
      %v603 = vpop.f32.mrb[0].mxu0
      %v604 = vpop.f32.mrb[0].mxu0
      %v605 = vadd.f32 %v253, %v604
      %v606 = vpop.f32.mrb[0].mxu0
      %607 = vmatprep.mubr.bf16.mxu0 0
      %608 = vmatmul.mubr.bf16.gmra.mrb[0].mxu0 %v456
      %v609 = vpop.f32.mrb[0].mxu0
      %v610 = vadd.f32 %v253, %v609
      %v611 = vpop.f32.mrb[0].mxu0
      %v612 = vpop.f32.mrb[0].mxu0
      %v613 = vadd.f32 %v253, %v612
      %v614 = vpop.f32.mrb[0].mxu0
      %615 = vmatprep.mubr.bf16.mxu0 0
      %616 = vmatmul.mubr.bf16.gmra.mrb[0].mxu0 %v459
      %v617 = vpop.f32.mrb[0].mxu0
      %v618 = vadd.f32 %v253, %v617
      %v619 = vpop.f32.mrb[0].mxu0
      %v620 = vpop.f32.mrb[0].mxu0
      %v621 = vadd.f32 %v253, %v620
      %v622 = vpop.f32.mrb[0].mxu0
      %623 = vmatprep.mubr.bf16.mxu0 0
      %624 = vmatmul.mubr.bf16.gmra.mrb[0].mxu0 %v462
      %v625 = vpop.f32.mrb[0].mxu0
      %v626 = vadd.f32 %v253, %v625
      %v627 = vpop.f32.mrb[0].mxu0
      %v628 = vpop.f32.mrb[0].mxu0
      %v629 = vadd.f32 %v253, %v628
      %v630 = vpop.f32.mrb[0].mxu0
      %631 = vmatprep.mubr.bf16.mxu0 0
      %632 = vmatmul.mubr.bf16.gmra.mrb[0].mxu0 %v465
      %v633 = vpop.f32.mrb[0].mxu0
      %v634 = vadd.f32 %v253, %v633
      %v635 = vpop.f32.mrb[0].mxu0
      %v636 = vpop.f32.mrb[0].mxu0
      %v637 = vadd.f32 %v253, %v636
      %v638 = vpop.f32.mrb[0].mxu0
      %639 = vmatprep.mubr.bf16.mxu0 0
      %640 = vmatmul.mubr.bf16.gmra.mrb[0].mxu0 %v468
      %v641 = vpop.f32.mrb[0].mxu0
      %v642 = vadd.f32 %v253, %v641
      %v643 = vpop.f32.mrb[0].mxu0
      %v644 = vpop.f32.mrb[0].mxu0
      %v645 = vadd.f32 %v253, %v644
      %v646 = vpop.f32.mrb[0].mxu0
      %647 = vmatprep.mubr.bf16.mxu0 0
      %648 = vmatmul.mubr.bf16.gmra.mrb[0].mxu0 %v471
      %v649 = vpop.f32.mrb[0].mxu0
      %v650 = vadd.f32 %v253, %v649
      %v651 = vpop.f32.mrb[0].mxu0
      %v652 = vpop.f32.mrb[0].mxu0
      %v653 = vadd.f32 %v253, %v652
      %v654 = vpop.f32.mrb[0].mxu0
      %655 = vmatprep.mubr.bf16.mxu0 0
      %656 = vmatmul.mubr.bf16.gmra.mrb[0].mxu0 %v474
      %v657 = vpop.f32.mrb[0].mxu0
      %v658 = vadd.f32 %v253, %v657
      %v659 = vpop.f32.mrb[0].mxu0
      %v660 = vpop.f32.mrb[0].mxu0
      %v661 = vadd.f32 %v253, %v660
      %v662 = vpop.f32.mrb[0].mxu0
      %663 = vmatprep.mubr.bf16.mxu0 0
      %664 = vmatmul.mubr.bf16.gmra.mrb[0].mxu0 %v477
      %v665 = vpop.f32.mrb[0].mxu0
      %v666 = vadd.f32 %v253, %v665
      %v667 = vpop.f32.mrb[0].mxu0
      %v668 = vpop.f32.mrb[0].mxu0
      %v669 = vadd.f32 %v253, %v668
      %v670 = vpop.f32.mrb[0].mxu0
      %671 = vmatprep.mubr.bf16.mxu0 0
      %672 = vmatmul.mubr.bf16.gmra.mrb[0].mxu0 %v480
      %v673 = vpop.f32.mrb[0].mxu0
      %v674 = vadd.f32 %v253, %v673
      %v675 = vpop.f32.mrb[0].mxu0
      %v676 = vpop.f32.mrb[0].mxu0
      %v677 = vadd.f32 %v253, %v676
      %v678 = vpop.f32.mrb[0].mxu0
      %679 = vmatprep.mubr.bf16.mxu0 0
      %680 = vmatmul.mubr.bf16.gmra.mrb[0].mxu0 %v483
      %v681 = vpop.f32.mrb[0].mxu0
      %v682 = vadd.f32 %v253, %v681
      %v683 = vpop.f32.mrb[0].mxu0
      %v684 = vpop.f32.mrb[0].mxu0
      %v685 = vadd.f32 %v253, %v684
      %v686 = vpop.f32.mrb[0].mxu0
      %687 = vmatprep.mubr.bf16.mxu0 0
      %688 = vmatmul.mubr.bf16.gmra.mrb[0].mxu0 %v486
      %v689 = vpop.f32.mrb[0].mxu0
      %v690 = vadd.f32 %v253, %v689
      %v691 = vpop.f32.mrb[0].mxu0
      %v692 = vpop.f32.mrb[0].mxu0
      %v693 = vadd.f32 %v253, %v692
      %v694 = vpop.f32.mrb[0].mxu0
      %695 = vmatprep.mubr.bf16.mxu0 0
      %696 = vmatmul.mubr.bf16.gmra.mrb[0].mxu0 %v489
      %v697 = vpop.f32.mrb[0].mxu0
      %v698 = vadd.f32 %v253, %v697
      %v699 = vpop.f32.mrb[0].mxu0
      %v700 = vpop.f32.mrb[0].mxu0
      %v701 = vadd.f32 %v253, %v700
      %v702 = vpop.f32.mrb[0].mxu0
      %703 = vmatprep.mubr.bf16.mxu0 0
      %704 = vmatmul.mubr.bf16.gmra.mrb[0].mxu0 %v492
      %v705 = vpop.f32.mrb[0].mxu0
      %v706 = vadd.f32 %v253, %v705
      %v707 = vpop.f32.mrb[0].mxu0
      %v708 = vpop.f32.mrb[0].mxu0
      %v709 = vadd.f32 %v253, %v708
      %v710 = vpop.f32.mrb[0].mxu0
      %711 = vmatprep.mubr.bf16.mxu0 0
      %712 = vmatmul.mubr.bf16.gmra.mrb[0].mxu0 %v495
      %v713 = vpop.f32.mrb[0].mxu0
      %v714 = vadd.f32 %v253, %v713
      %v715 = vpop.f32.mrb[0].mxu0
      %v716 = vpop.f32.mrb[0].mxu0
      %v717 = vadd.f32 %v253, %v716
      %v718 = vpop.f32.mrb[0].mxu0
      %719 = vmatprep.mubr.bf16.mxu0 0
      %720 = vmatmul.mubr.bf16.gmra.mrb[0].mxu0 %v498
      %v721 = vpop.f32.mrb[0].mxu0
      %v722 = vadd.f32 %v253, %v721
      %v723 = vpop.f32.mrb[0].mxu0
      %v724 = vpop.f32.mrb[0].mxu0
      %v725 = vadd.f32 %v253, %v724
      %v726 = vpop.f32.mrb[0].mxu0
      %727 = vmatprep.mubr.bf16.mxu0 0
      %728 = vmatmul.mubr.bf16.gmra.mrb[0].mxu0 %v501
      %v729 = vpop.f32.mrb[0].mxu0
      %v730 = vadd.f32 %v253, %v729
      %v731 = vpop.f32.mrb[0].mxu0
      %v732 = vpop.f32.mrb[0].mxu0
      %v733 = vadd.f32 %v253, %v732
      %v734 = vpop.f32.mrb[0].mxu0
      %735 = vmatprep.mubr.bf16.mxu0 0
      %736 = vmatmul.mubr.bf16.gmra.mrb[0].mxu0 %v504
      %v737 = vpop.f32.mrb[0].mxu0
      %v738 = vadd.f32 %v253, %v737
      %v739 = vpop.f32.mrb[0].mxu0
      %v740 = vpop.f32.mrb[0].mxu0
      %v741 = vadd.f32 %v253, %v740
      %v742 = vpop.f32.mrb[0].mxu0
      %743 = vmatprep.mubr.bf16.mxu0 0
      %744 = vmatmul.mubr.bf16.gmra.mrb[0].mxu0 %v507
      %v745 = vpop.f32.mrb[0].mxu0
      %v746 = vadd.f32 %v253, %v745
      %v747 = vpop.f32.mrb[0].mxu0
      %v748 = vpop.f32.mrb[0].mxu0
      %v749 = vadd.f32 %v253, %v748
      %v750 = vpop.f32.mrb[0].mxu0
      %751 = vmatprep.mubr.bf16.mxu0 0
      %752 = vmatmul.mubr.bf16.gmra.mrb[0].mxu0 %v510
      %v753 = vpop.f32.mrb[0].mxu0
      %v754 = vadd.f32 %v253, %v753
      %v755 = vpop.f32.mrb[0].mxu0
      %v756 = vpop.f32.mrb[0].mxu0
      %v757 = vadd.f32 %v253, %v756
      %v758 = vpop.f32.mrb[0].mxu0
      %759 = vmatprep.mubr.bf16.mxu0 0
      %760 = vmatmul.mubr.bf16.gmra.mrb[0].mxu0 %v513
      %v761 = vpop.f32.mrb[0].mxu0
      %v762 = vadd.f32 %v253, %v761
      %v763 = vpop.f32.mrb[0].mxu0
      %v764 = vpop.f32.mrb[0].mxu0
      %v765 = vadd.f32 %v253, %v764
      %v766 = vpop.f32.mrb[0].mxu0
      %767 = vmatprep.mubr.bf16.mxu0 0
      %768 = vmatmul.mubr.bf16.gmra.mrb[0].mxu0 %v516
      %v769 = vpop.f32.mrb[0].mxu0
      %v770 = vadd.f32 %v253, %v769
      %v771 = vpop.f32.mrb[0].mxu0
      %v772 = vpop.f32.mrb[0].mxu0
      %v773 = vadd.f32 %v253, %v772
      %v774 = vpop.f32.mrb[0].mxu0
      %775 = vmatprep.mubr.bf16.mxu0 0
      %776 = vmatmul.mubr.bf16.gmra.mrb[0].mxu0 %v519
      %v777 = vpop.f32.mrb[0].mxu0
      %v778 = vadd.f32 %v253, %v777
      %v779 = vpop.f32.mrb[0].mxu0
      %v780 = vpop.f32.mrb[0].mxu0
      %v781 = vadd.f32 %v253, %v780
      %v782 = vpop.f32.mrb[0].mxu0
      %783 = vmatprep.mubr.bf16.mxu0 0
      %784 = vmatmul.mubr.bf16.gmra.mrb[0].mxu0 %v522
      %v785 = vpop.f32.mrb[0].mxu0
      %v786 = vadd.f32 %v253, %v785
      %v787 = vpop.f32.mrb[0].mxu0
      %v788 = vpop.f32.mrb[0].mxu0
      %v789 = vadd.f32 %v253, %v788
      %v790 = vpop.f32.mrb[0].mxu0
      %791 = vmatprep.mubr.bf16.mxu0 0
      %792 = vmatmul.mubr.bf16.gmra.mrb[0].mxu0 %v525
      %v793 = vpop.f32.mrb[0].mxu0
      %v794 = vadd.f32 %v253, %v793
      %v795 = vpop.f32.mrb[0].mxu0
      %v796 = vpop.f32.mrb[0].mxu0
      %v797 = vadd.f32 %v253, %v796
      %v798 = vpop.f32.mrb[0].mxu0
      %799 = vmatprep.mubr.bf16.mxu0 0
      %800 = vmatmul.mubr.bf16.gmra.mrb[0].mxu0 %v528
      %v801 = vpop.f32.mrb[0].mxu0
      %v802 = vadd.f32 %v253, %v801
      %v803 = vpop.f32.mrb[0].mxu0
      %v804 = vpop.f32.mrb[0].mxu0
      %v805 = vadd.f32 %v253, %v804
      %v806 = vpop.f32.mrb[0].mxu0
      %807 = vmatprep.mubr.bf16.mxu0 0
      %808 = vmatmul.mubr.bf16.gmra.mrb[0].mxu0 %v531
      %v809 = vpop.f32.mrb[0].mxu0
      %v810 = vadd.f32 %v253, %v809
      %v811 = vpop.f32.mrb[0].mxu0
      %v812 = vpop.f32.mrb[0].mxu0
      %v813 = vadd.f32 %v253, %v812
      %v814 = vpop.f32.mrb[0].mxu0
      %815 = vmatprep.mubr.bf16.mxu0 0
      %816 = vmatmul.mubr.bf16.gmra.mrb[0].mxu0 %v534
      %v817 = vpop.f32.mrb[0].mxu0
      %v818 = vadd.f32 %v253, %v817
      %v819 = vpop.f32.mrb[0].mxu0
      %v820 = vpop.f32.mrb[0].mxu0
      %v821 = vadd.f32 %v253, %v820
      %v822 = vpop.f32.mrb[0].mxu0
      %823 = vmatprep.mubr.bf16.mxu0 0
      %824 = vmatmul.mubr.bf16.gmra.mrb[0].mxu0 %v537
      %v825 = vpop.f32.mrb[0].mxu0
      %v826 = vadd.f32 %v253, %v825
      %v827 = vpop.f32.mrb[0].mxu0
      %v828 = vpop.f32.mrb[0].mxu0
      %v829 = vadd.f32 %v253, %v828
      %v830 = vpop.f32.mrb[0].mxu0
      %831 = vdwg.mxu0
      %v832 = vmax.f32 %v578, 0.0
      %v833 = vmax.f32 %v581, 0.0
      %v834 = vmax.f32 %v586, 0.0
      %v835 = vmax.f32 %v589, 0.0
      %v836 = vmax.f32 %v594, 0.0
      %v837 = vmax.f32 %v597, 0.0
      %v838 = vmax.f32 %v602, 0.0
      %v839 = vmax.f32 %v605, 0.0
      %v840 = vmax.f32 %v610, 0.0
      %v841 = vmax.f32 %v613, 0.0
      %v842 = vmax.f32 %v618, 0.0
      %v843 = vmax.f32 %v621, 0.0
      %v844 = vmax.f32 %v626, 0.0
      %v845 = vmax.f32 %v629, 0.0
      %v846 = vmax.f32 %v634, 0.0
      %v847 = vmax.f32 %v637, 0.0
      %v848 = vmax.f32 %v642, 0.0
      %v849 = vmax.f32 %v645, 0.0
      %v850 = vmax.f32 %v650, 0.0
      %v851 = vmax.f32 %v653, 0.0
      %v852 = vmax.f32 %v658, 0.0
      %v853 = vmax.f32 %v661, 0.0
      %v854 = vmax.f32 %v666, 0.0
      %v855 = vmax.f32 %v669, 0.0
      %v856 = vmax.f32 %v674, 0.0
      %v857 = vmax.f32 %v677, 0.0
      %v858 = vmax.f32 %v682, 0.0
      %v859 = vmax.f32 %v685, 0.0
      %v860 = vmax.f32 %v690, 0.0
      %v861 = vmax.f32 %v693, 0.0
      %v862 = vmax.f32 %v698, 0.0
      %v863 = vmax.f32 %v701, 0.0
      %v864 = vmax.f32 %v706, 0.0
      %v865 = vmax.f32 %v709, 0.0
      %v866 = vmax.f32 %v714, 0.0
      %v867 = vmax.f32 %v717, 0.0
      %v868 = vmax.f32 %v722, 0.0
      %v869 = vmax.f32 %v725, 0.0
      %v870 = vmax.f32 %v730, 0.0
      %v871 = vmax.f32 %v733, 0.0
      %v872 = vmax.f32 %v738, 0.0
      %v873 = vmax.f32 %v741, 0.0
      %v874 = vmax.f32 %v746, 0.0
      %v875 = vmax.f32 %v749, 0.0
      %v876 = vmax.f32 %v754, 0.0
      %v877 = vmax.f32 %v757, 0.0
      %v878 = vmax.f32 %v762, 0.0
      %v879 = vmax.f32 %v765, 0.0
      %v880 = vmax.f32 %v770, 0.0
      %v881 = vmax.f32 %v773, 0.0
      %v882 = vmax.f32 %v778, 0.0
      %v883 = vmax.f32 %v781, 0.0
      %v884 = vmax.f32 %v786, 0.0
      %v885 = vmax.f32 %v789, 0.0
      %v886 = vmax.f32 %v794, 0.0
      %v887 = vmax.f32 %v797, 0.0
      %v888 = vmax.f32 %v802, 0.0
      %v889 = vmax.f32 %v805, 0.0
      %v890 = vmax.f32 %v810, 0.0
      %v891 = vmax.f32 %v813, 0.0
      %v892 = vmax.f32 %v818, 0.0
      %v893 = vmax.f32 %v821, 0.0
      %v894 = vmax.f32 %v826, 0.0
      %v895 = vmax.f32 %v829, 0.0
      %v896 = vpack.c.bf16 %v833, %v832
      %v897 = vpack.c.bf16 %v835, %v834
      %v898 = vpack.c.bf16 %v837, %v836
      %v899 = vpack.c.bf16 %v839, %v838
      %v900 = vpack.c.bf16 %v841, %v840
      %v901 = vpack.c.bf16 %v843, %v842
      %v902 = vpack.c.bf16 %v845, %v844
      %v903 = vpack.c.bf16 %v847, %v846
      %v904 = vpack.c.bf16 %v849, %v848
      %v905 = vpack.c.bf16 %v851, %v850
      %v906 = vpack.c.bf16 %v853, %v852
      %v907 = vpack.c.bf16 %v855, %v854
      %v908 = vpack.c.bf16 %v857, %v856
      %v909 = vpack.c.bf16 %v859, %v858
      %v910 = vpack.c.bf16 %v861, %v860
      %v911 = vpack.c.bf16 %v863, %v862
      %v912 = vpack.c.bf16 %v865, %v864
      %v913 = vpack.c.bf16 %v867, %v866
      %v914 = vpack.c.bf16 %v869, %v868
      %v915 = vpack.c.bf16 %v871, %v870
      %v916 = vpack.c.bf16 %v873, %v872
      %v917 = vpack.c.bf16 %v875, %v874
      %v918 = vpack.c.bf16 %v877, %v876
      %v919 = vpack.c.bf16 %v879, %v878
      %v920 = vpack.c.bf16 %v881, %v880
      %v921 = vpack.c.bf16 %v883, %v882
      %v922 = vpack.c.bf16 %v885, %v884
      %v923 = vpack.c.bf16 %v887, %v886
      %v924 = vpack.c.bf16 %v889, %v888
      %v925 = vpack.c.bf16 %v891, %v890
      %v926 = vpack.c.bf16 %v893, %v892
      %v927 = vpack.c.bf16 %v895, %v894
      %v960 = vunpack.c.l.b16 %v896
      %v961 = vunpack.c.h.b16 %v896
      %v962 = vunpack.c.l.b16 %v897
      %v963 = vunpack.c.h.b16 %v897
      %v964 = vunpack.c.l.b16 %v898
      %v965 = vunpack.c.h.b16 %v898
      %v966 = vunpack.c.l.b16 %v899
      %v967 = vunpack.c.h.b16 %v899
      %v968 = vunpack.c.l.b16 %v900
      %v969 = vunpack.c.h.b16 %v900
      %v970 = vunpack.c.l.b16 %v901
      %v971 = vunpack.c.h.b16 %v901
      %v972 = vunpack.c.l.b16 %v902
      %v973 = vunpack.c.h.b16 %v902
      %v974 = vunpack.c.l.b16 %v903
      %v975 = vunpack.c.h.b16 %v903
      %v976 = vunpack.c.l.b16 %v904
      %v977 = vunpack.c.h.b16 %v904
      %v978 = vunpack.c.l.b16 %v905
      %v979 = vunpack.c.h.b16 %v905
      %v980 = vunpack.c.l.b16 %v906
      %v981 = vunpack.c.h.b16 %v906
      %v982 = vunpack.c.l.b16 %v907
      %v983 = vunpack.c.h.b16 %v907
      %v984 = vunpack.c.l.b16 %v908
      %v985 = vunpack.c.h.b16 %v908
      %v986 = vunpack.c.l.b16 %v909
      %v987 = vunpack.c.h.b16 %v909
      %v988 = vunpack.c.l.b16 %v910
      %v989 = vunpack.c.h.b16 %v910
      %v990 = vunpack.c.l.b16 %v911
      %v991 = vunpack.c.h.b16 %v911
      %v992 = vunpack.c.l.b16 %v912
      %v993 = vunpack.c.h.b16 %v912
      %v994 = vunpack.c.l.b16 %v913
      %v995 = vunpack.c.h.b16 %v913
      %v996 = vunpack.c.l.b16 %v914
      %v997 = vunpack.c.h.b16 %v914
      %v998 = vunpack.c.l.b16 %v915
      %v999 = vunpack.c.h.b16 %v915
      %v1000 = vunpack.c.l.b16 %v916
      %v1001 = vunpack.c.h.b16 %v916
      %v1002 = vunpack.c.l.b16 %v917
      %v1003 = vunpack.c.h.b16 %v917
      %v1004 = vunpack.c.l.b16 %v918
      %v1005 = vunpack.c.h.b16 %v918
      %v1006 = vunpack.c.l.b16 %v919
      %v1007 = vunpack.c.h.b16 %v919
      %v1008 = vunpack.c.l.b16 %v920
      %v1009 = vunpack.c.h.b16 %v920
      %v1010 = vunpack.c.l.b16 %v921
      %v1011 = vunpack.c.h.b16 %v921
      %v1012 = vunpack.c.l.b16 %v922
      %v1013 = vunpack.c.h.b16 %v922
      %v1014 = vunpack.c.l.b16 %v923
      %v1015 = vunpack.c.h.b16 %v923
      %v1016 = vunpack.c.l.b16 %v924
      %v1017 = vunpack.c.h.b16 %v924
      %v1018 = vunpack.c.l.b16 %v925
      %v1019 = vunpack.c.h.b16 %v925
      %v1020 = vunpack.c.l.b16 %v926
      %v1021 = vunpack.c.h.b16 %v926
      %v1022 = vunpack.c.l.b16 %v927
      %v1023 = vunpack.c.h.b16 %v927
      %v1024 = vpack.c.b16 %v960, %v960
      %v1025 = vpack.c.b16 %v961, %v961
      %v1026 = vpack.c.b16 %v962, %v962
      %v1027 = vpack.c.b16 %v963, %v963
      %v1028 = vpack.c.b16 %v964, %v964
      %v1029 = vpack.c.b16 %v965, %v965
      %v1030 = vpack.c.b16 %v966, %v966
      %v1031 = vpack.c.b16 %v967, %v967
      %v1032 = vpack.c.b16 %v968, %v968
      %v1033 = vpack.c.b16 %v969, %v969
      %v1034 = vpack.c.b16 %v970, %v970
      %v1035 = vpack.c.b16 %v971, %v971
      %v1036 = vpack.c.b16 %v972, %v972
      %v1037 = vpack.c.b16 %v973, %v973
      %v1038 = vpack.c.b16 %v974, %v974
      %v1039 = vpack.c.b16 %v975, %v975
      %v1040 = vpack.c.b16 %v976, %v976
      %v1041 = vpack.c.b16 %v977, %v977
      %v1042 = vpack.c.b16 %v978, %v978
      %v1043 = vpack.c.b16 %v979, %v979
      %v1044 = vpack.c.b16 %v980, %v980
      %v1045 = vpack.c.b16 %v981, %v981
      %v1046 = vpack.c.b16 %v982, %v982
      %v1047 = vpack.c.b16 %v983, %v983
      %v1048 = vpack.c.b16 %v984, %v984
      %v1049 = vpack.c.b16 %v985, %v985
      %v1050 = vpack.c.b16 %v986, %v986
      %v1051 = vpack.c.b16 %v987, %v987
      %v1052 = vpack.c.b16 %v988, %v988
      %v1053 = vpack.c.b16 %v989, %v989
      %v1054 = vpack.c.b16 %v990, %v990
      %v1055 = vpack.c.b16 %v991, %v991
      %v1056 = vpack.c.b16 %v992, %v992
      %v1057 = vpack.c.b16 %v993, %v993
      %v1058 = vpack.c.b16 %v994, %v994
      %v1059 = vpack.c.b16 %v995, %v995
      %v1060 = vpack.c.b16 %v996, %v996
      %v1061 = vpack.c.b16 %v997, %v997
      %v1062 = vpack.c.b16 %v998, %v998
      %v1063 = vpack.c.b16 %v999, %v999
      %v1064 = vpack.c.b16 %v1000, %v1000
      %v1065 = vpack.c.b16 %v1001, %v1001
      %v1066 = vpack.c.b16 %v1002, %v1002
      %v1067 = vpack.c.b16 %v1003, %v1003
      %v1068 = vpack.c.b16 %v1004, %v1004
      %v1069 = vpack.c.b16 %v1005, %v1005
      %v1070 = vpack.c.b16 %v1006, %v1006
      %v1071 = vpack.c.b16 %v1007, %v1007
      %v1072 = vpack.c.b16 %v1008, %v1008
      %v1073 = vpack.c.b16 %v1009, %v1009
      %v1074 = vpack.c.b16 %v1010, %v1010
      %v1075 = vpack.c.b16 %v1011, %v1011
      %v1076 = vpack.c.b16 %v1012, %v1012
      %v1077 = vpack.c.b16 %v1013, %v1013
      %v1078 = vpack.c.b16 %v1014, %v1014
      %v1079 = vpack.c.b16 %v1015, %v1015
      %v1080 = vpack.c.b16 %v1016, %v1016
      %v1081 = vpack.c.b16 %v1017, %v1017
      %v1082 = vpack.c.b16 %v1018, %v1018
      %v1083 = vpack.c.b16 %v1019, %v1019
      %v1084 = vpack.c.b16 %v1020, %v1020
      %v1085 = vpack.c.b16 %v1021, %v1021
      %v1086 = vpack.c.b16 %v1022, %v1022
      %v1087 = vpack.c.b16 %v1023, %v1023
      %vm1152 = vcmask 125952
      %1153 = vst.msk [vmem:[%s172] sm:$0xf] %vm1152, %v1024
      %1154 = vst.msk [vmem:[%s172 + $0x4] sm:$0xf] %vm1152, %v1025
      %1155 = vst.msk [vmem:[%s172 + $0x8] sm:$0xf] %vm1152, %v1026
      %1156 = vst.msk [vmem:[%s172 + $0xc] sm:$0xf] %vm1152, %v1027
      %1157 = vst.msk [vmem:[%s172 + $0x10] sm:$0xf] %vm1152, %v1028
      %1158 = vst.msk [vmem:[%s172 + $0x14] sm:$0xf] %vm1152, %v1029
      %1159 = vst.msk [vmem:[%s172 + $0x18] sm:$0xf] %vm1152, %v1030
      %1160 = vst.msk [vmem:[%s172 + $0x1c] sm:$0xf] %vm1152, %v1031
      %1161 = vst.msk [vmem:[%s172 + $0x20] sm:$0xf] %vm1152, %v1032
      %1162 = vst.msk [vmem:[%s172 + $0x24] sm:$0xf] %vm1152, %v1033
      %1163 = vst.msk [vmem:[%s172 + $0x28] sm:$0xf] %vm1152, %v1034
      %1164 = vst.msk [vmem:[%s172 + $0x2c] sm:$0xf] %vm1152, %v1035
      %1165 = vst.msk [vmem:[%s172 + $0x30] sm:$0xf] %vm1152, %v1036
      %1166 = vst.msk [vmem:[%s172 + $0x34] sm:$0xf] %vm1152, %v1037
      %1167 = vst.msk [vmem:[%s172 + $0x38] sm:$0xf] %vm1152, %v1038
      %1168 = vst.msk [vmem:[%s172 + $0x3c] sm:$0xf] %vm1152, %v1039
      %1169 = vst.msk [vmem:[%s172 + $0x40] sm:$0xf] %vm1152, %v1040
      %1170 = vst.msk [vmem:[%s172 + $0x44] sm:$0xf] %vm1152, %v1041
      %1171 = vst.msk [vmem:[%s172 + $0x48] sm:$0xf] %vm1152, %v1042
      %1172 = vst.msk [vmem:[%s172 + $0x4c] sm:$0xf] %vm1152, %v1043
      %1173 = vst.msk [vmem:[%s172 + $0x50] sm:$0xf] %vm1152, %v1044
      %1174 = vst.msk [vmem:[%s172 + $0x54] sm:$0xf] %vm1152, %v1045
      %1175 = vst.msk [vmem:[%s172 + $0x58] sm:$0xf] %vm1152, %v1046
      %1176 = vst.msk [vmem:[%s172 + $0x5c] sm:$0xf] %vm1152, %v1047
      %1177 = vst.msk [vmem:[%s172 + $0x60] sm:$0xf] %vm1152, %v1048
      %1178 = vst.msk [vmem:[%s172 + $0x64] sm:$0xf] %vm1152, %v1049
      %1179 = vst.msk [vmem:[%s172 + $0x68] sm:$0xf] %vm1152, %v1050
      %1180 = vst.msk [vmem:[%s172 + $0x6c] sm:$0xf] %vm1152, %v1051
      %1181 = vst.msk [vmem:[%s172 + $0x70] sm:$0xf] %vm1152, %v1052
      %1182 = vst.msk [vmem:[%s172 + $0x74] sm:$0xf] %vm1152, %v1053
      %1183 = vst.msk [vmem:[%s172 + $0x78] sm:$0xf] %vm1152, %v1054
      %1184 = vst.msk [vmem:[%s172 + $0x7c] sm:$0xf] %vm1152, %v1055
      %1185 = vst.msk [vmem:[%s172 + $0x80] sm:$0xf] %vm1152, %v1056
      %1186 = vst.msk [vmem:[%s172 + $0x84] sm:$0xf] %vm1152, %v1057
      %1187 = vst.msk [vmem:[%s172 + $0x88] sm:$0xf] %vm1152, %v1058
      %1188 = vst.msk [vmem:[%s172 + $0x8c] sm:$0xf] %vm1152, %v1059
      %1189 = vst.msk [vmem:[%s172 + $0x90] sm:$0xf] %vm1152, %v1060
      %1190 = vst.msk [vmem:[%s172 + $0x94] sm:$0xf] %vm1152, %v1061
      %1191 = vst.msk [vmem:[%s172 + $0x98] sm:$0xf] %vm1152, %v1062
      %1192 = vst.msk [vmem:[%s172 + $0x9c] sm:$0xf] %vm1152, %v1063
      %1193 = vst.msk [vmem:[%s172 + $0xa0] sm:$0xf] %vm1152, %v1064
      %1194 = vst.msk [vmem:[%s172 + $0xa4] sm:$0xf] %vm1152, %v1065
      %1195 = vst.msk [vmem:[%s172 + $0xa8] sm:$0xf] %vm1152, %v1066
      %1196 = vst.msk [vmem:[%s172 + $0xac] sm:$0xf] %vm1152, %v1067
      %1197 = vst.msk [vmem:[%s172 + $0xb0] sm:$0xf] %vm1152, %v1068
      %1198 = vst.msk [vmem:[%s172 + $0xb4] sm:$0xf] %vm1152, %v1069
      %1199 = vst.msk [vmem:[%s172 + $0xb8] sm:$0xf] %vm1152, %v1070
      %1200 = vst.msk [vmem:[%s172 + $0xbc] sm:$0xf] %vm1152, %v1071
      %1201 = vst.msk [vmem:[%s172 + $0xc0] sm:$0xf] %vm1152, %v1072
      %1202 = vst.msk [vmem:[%s172 + $0xc4] sm:$0xf] %vm1152, %v1073
      %1203 = vst.msk [vmem:[%s172 + $0xc8] sm:$0xf] %vm1152, %v1074
      %1204 = vst.msk [vmem:[%s172 + $0xcc] sm:$0xf] %vm1152, %v1075
      %1205 = vst.msk [vmem:[%s172 + $0xd0] sm:$0xf] %vm1152, %v1076
      %1206 = vst.msk [vmem:[%s172 + $0xd4] sm:$0xf] %vm1152, %v1077
      %1207 = vst.msk [vmem:[%s172 + $0xd8] sm:$0xf] %vm1152, %v1078
      %1208 = vst.msk [vmem:[%s172 + $0xdc] sm:$0xf] %vm1152, %v1079
      %1209 = vst.msk [vmem:[%s172 + $0xe0] sm:$0xf] %vm1152, %v1080
      %1210 = vst.msk [vmem:[%s172 + $0xe4] sm:$0xf] %vm1152, %v1081
      %1211 = vst.msk [vmem:[%s172 + $0xe8] sm:$0xf] %vm1152, %v1082
      %1212 = vst.msk [vmem:[%s172 + $0xec] sm:$0xf] %vm1152, %v1083
      %1213 = vst.msk [vmem:[%s172 + $0xf0] sm:$0xf] %vm1152, %v1084
      %1214 = vst.msk [vmem:[%s172 + $0xf4] sm:$0xf] %vm1152, %v1085
      %1215 = vst.msk [vmem:[%s172 + $0xf8] sm:$0xf] %vm1152, %v1086
      %1216 = vst.msk [vmem:[%s172 + $0xfc] sm:$0xf] %vm1152, %v1087
      %s1217 = smul.u32 64, %s14
      %p1218 = scmp.lt.s32.totalorder %s1217, 255
      %s1219 = scalar_select %p1218, %s1217, 255
      %s1220 = smul.addr %s1219, 4
      %s1221 = scalar_lea.vmem %s3, %s1220
      // Predicated region
      $region33: #{_lambda_.18} parent=31 // pred_check
        %p1222 = pneg %p100
      $region34: #{_lambda_.18} parent=31 // pred_check_branch
        %1224 = sbr.rel (%p1222) target = $region36
      $region35: #{_lambda_.18} parent=31 // pred_region
        %s1225 = smul.u32 64, %s14
      $region36: #{_lambda_.18} parent=31 // pred_fallthru
        _
    $region32: #{_lambda_.18} parent=5 // pred_fallthru
      _
    %p1226 = scmp.le.s32.totalorder 2, %s9
    // Predicated region
    $region37: #{_lambda_.18} parent=5 // pred_check
      %p1227 = pneg %p1226
    $region38: #{_lambda_.18} parent=5 // pred_check_branch
      %1229 = sbr.rel (%p1227) target = $region40
    $region39: #{_lambda_.18} parent=5 // pred_region
      %s1230 = ssub.s32 %s9, 2
      // Predicated region
      $region41: #{_lambda_.18} parent=39 // pred_check
        %p1231 = pneg %p106
      $region42: #{_lambda_.18} parent=39 // pred_check_branch
        %1233 = sbr.rel (%p1231) target = $region44
      $region43: #{_lambda_.18} parent=39 // pred_region
        %s1234 = smul.u32 64, %s15
        %p1235 = scmp.lt.s32.totalorder %s1234, 255
        %s1236 = scalar_select %p1235, %s1234, 255
        %s1237 = smul.addr %s1236, 4
        %s1238 = scalar_lea.vmem %s3, %s1237
      $region44: #{_lambda_.18} parent=39 // pred_fallthru
        _
    $region40: #{_lambda_.18} parent=5 // pred_fallthru
      _
  $region6: #{_lambda_.18} parent=0 // loop_footer
    %s13 = sadd.s32 1, %s9
  $region7: #{_lambda_.18} parent=0 // loop_footer_branch
    %8 = sbr.rel target = $region3
  $region8: #{_lambda_.18} parent=0 // loop_exit
    _

// kernel: _lambda_.19
$region0: #{_lambda_.19}
  #allocation0 [shape = 'u32[]', space=smem, size = 0x4, offset = 0x4, fixed_abs, tag = 'smem constant byte address 0x4 - core index']
  #allocation1 [shape = 'u32[144,128]{1,0:T(1,128)}', space=vmem, size = 0x12000, scoped, tag = 'internal scratch']
  %s0 = inlined_call_operand.vmem [shape: bf16[64,128], index: 0, kind: input, shape index: {}]
  %s1 = inlined_call_operand.vmem [shape: bf16[64,128], index: 1, kind: input, shape index: {}]
  %s2 = inlined_call_operand.vmem [shape: bf16[64,128], index: 2, kind: input, shape index: {}]
  %s3 = inlined_call_operand.vmem [shape: bf16[64,128], index: 3, kind: input, shape index: {}]
  %s4 = inlined_call_operand.vmem [shape: bf16[64,128], index: 4, kind: input, shape index: {}]
  %s5 = inlined_call_operand.vmem [shape: bf16[64,128], index: 5, kind: input, shape index: {}]
  %s6 = inlined_call_operand.vmem [shape: bf16[64,128], index: 6, kind: input, shape index: {}]
  %s7 = inlined_call_operand.vmem [shape: bf16[64,128], index: 7, kind: input, shape index: {}]
  %s8 = inlined_call_operand.vmem [shape: bf16[64,128], index: 8, kind: input, shape index: {}]
  %s9 = inlined_call_operand.vmem [shape: bf16[64,128], index: 9, kind: output, shape index: {}]
  %s10 = sld [smem:[#allocation0]]
  $region46: #{_lambda_.19} parent=0
    _
  %s12 = ssub.s32 1, %s10
  %s13 = scalar_select 0, %s12, %s10
  // Predicated region
  $region2: #{_lambda_.19} parent=0 // pred_check
    _
  $region3: #{_lambda_.19} parent=0 // pred_check_branch
    %15 = sbr.rel (0) target = $region5
  $region4: #{_lambda_.19} parent=0 // pred_region
    _
  $region5: #{_lambda_.19} parent=0 // pred_fallthru
    _
  // Predicated region
  $region6: #{_lambda_.19} parent=0 // pred_check
    _
  $region7: #{_lambda_.19} parent=0 // pred_check_branch
    %17 = sbr.rel (0) target = $region9
  $region8: #{_lambda_.19} parent=0 // pred_region
    _
  $region9: #{_lambda_.19} parent=0 // pred_fallthru
    _
  // Predicated region
  $region10: #{_lambda_.19} parent=0 // pred_check
    _
  $region11: #{_lambda_.19} parent=0 // pred_check_branch
    %19 = sbr.rel (0) target = $region13
  $region12: #{_lambda_.19} parent=0 // pred_region
    _
  $region13: #{_lambda_.19} parent=0 // pred_fallthru
    _
  // Predicated region
  $region14: #{_lambda_.19} parent=0 // pred_check
    _
  $region15: #{_lambda_.19} parent=0 // pred_check_branch
    %21 = sbr.rel (0) target = $region17
  $region16: #{_lambda_.19} parent=0 // pred_region
    _
  $region17: #{_lambda_.19} parent=0 // pred_fallthru
    _
  // Predicated region
  $region18: #{_lambda_.19} parent=0 // pred_check
    _
  $region19: #{_lambda_.19} parent=0 // pred_check_branch
    %23 = sbr.rel (0) target = $region21
  $region20: #{_lambda_.19} parent=0 // pred_region
    _
  $region21: #{_lambda_.19} parent=0 // pred_fallthru
    _
  // Predicated region
  $region22: #{_lambda_.19} parent=0 // pred_check
    _
  $region23: #{_lambda_.19} parent=0 // pred_check_branch
    %25 = sbr.rel (0) target = $region25
  $region24: #{_lambda_.19} parent=0 // pred_region
    _
  $region25: #{_lambda_.19} parent=0 // pred_fallthru
    _
  // Predicated region
  $region26: #{_lambda_.19} parent=0 // pred_check
    _
  $region27: #{_lambda_.19} parent=0 // pred_check_branch
    %27 = sbr.rel (0) target = $region29
  $region28: #{_lambda_.19} parent=0 // pred_region
    _
  $region29: #{_lambda_.19} parent=0 // pred_fallthru
    _
  // Predicated region
  $region30: #{_lambda_.19} parent=0 // pred_check
    _
  $region31: #{_lambda_.19} parent=0 // pred_check_branch
    %29 = sbr.rel (0) target = $region33
  $region32: #{_lambda_.19} parent=0 // pred_region
    _
  $region33: #{_lambda_.19} parent=0 // pred_fallthru
    _
  // Predicated region
  $region34: #{_lambda_.19} parent=0 // pred_check
    _
  $region35: #{_lambda_.19} parent=0 // pred_check_branch
    %31 = sbr.rel (0) target = $region37
  $region36: #{_lambda_.19} parent=0 // pred_region
    _
  $region37: #{_lambda_.19} parent=0 // pred_fallthru
    _
  %v32 = vld [vmem:[%s0] sm:$0xf]
  %v33 = vld [vmem:[%s0 + $0x4] sm:$0xf]
  %v34 = vld [vmem:[%s0 + $0x8] sm:$0xf]
  %v35 = vld [vmem:[%s0 + $0xc] sm:$0xf]
  %v36 = vld [vmem:[%s0 + $0x10] sm:$0xf]
  %v37 = vld [vmem:[%s0 + $0x14] sm:$0xf]
  %v38 = vld [vmem:[%s0 + $0x18] sm:$0xf]
  %v39 = vld [vmem:[%s0 + $0x1c] sm:$0xf]
  %v40 = vld [vmem:[%s1] sm:$0xf]
  %v41 = vld [vmem:[%s1 + $0x4] sm:$0xf]
  %v42 = vld [vmem:[%s1 + $0x8] sm:$0xf]
  %v43 = vld [vmem:[%s1 + $0xc] sm:$0xf]
  %v44 = vld [vmem:[%s1 + $0x10] sm:$0xf]
  %v45 = vld [vmem:[%s1 + $0x14] sm:$0xf]
  %v46 = vld [vmem:[%s1 + $0x18] sm:$0xf]
  %v47 = vld [vmem:[%s1 + $0x1c] sm:$0xf]
  %v48 = vmax.bf16 %v32, %v40
  %v49 = vmax.bf16 %v33, %v41
  %v50 = vmax.bf16 %v34, %v42
  %v51 = vmax.bf16 %v35, %v43
  %v52 = vmax.bf16 %v36, %v44
  %v53 = vmax.bf16 %v37, %v45
  %v54 = vmax.bf16 %v38, %v46
  %v55 = vmax.bf16 %v39, %v47
  %v56 = vld [vmem:[%s2] sm:$0xf]
  %v57 = vld [vmem:[%s2 + $0x4] sm:$0xf]
  %v58 = vld [vmem:[%s2 + $0x8] sm:$0xf]
  %v59 = vld [vmem:[%s2 + $0xc] sm:$0xf]
  %v60 = vld [vmem:[%s2 + $0x10] sm:$0xf]
  %v61 = vld [vmem:[%s2 + $0x14] sm:$0xf]
  %v62 = vld [vmem:[%s2 + $0x18] sm:$0xf]
  %v63 = vld [vmem:[%s2 + $0x1c] sm:$0xf]
  %v64 = vmax.bf16 %v48, %v56
  %v65 = vmax.bf16 %v49, %v57
  %v66 = vmax.bf16 %v50, %v58
  %v67 = vmax.bf16 %v51, %v59
  %v68 = vmax.bf16 %v52, %v60
  %v69 = vmax.bf16 %v53, %v61
  %v70 = vmax.bf16 %v54, %v62
  %v71 = vmax.bf16 %v55, %v63
  %v72 = vld [vmem:[%s3] sm:$0xf]
  %v73 = vld [vmem:[%s3 + $0x4] sm:$0xf]
  %v74 = vld [vmem:[%s3 + $0x8] sm:$0xf]
  %v75 = vld [vmem:[%s3 + $0xc] sm:$0xf]
  %v76 = vld [vmem:[%s3 + $0x10] sm:$0xf]
  %v77 = vld [vmem:[%s3 + $0x14] sm:$0xf]
  %v78 = vld [vmem:[%s3 + $0x18] sm:$0xf]
  %v79 = vld [vmem:[%s3 + $0x1c] sm:$0xf]
  %v80 = vmax.bf16 %v64, %v72
  %v81 = vmax.bf16 %v65, %v73
  %v82 = vmax.bf16 %v66, %v74
  %v83 = vmax.bf16 %v67, %v75
  %v84 = vmax.bf16 %v68, %v76
  %v85 = vmax.bf16 %v69, %v77
  %v86 = vmax.bf16 %v70, %v78
  %v87 = vmax.bf16 %v71, %v79
  %v88 = vld [vmem:[%s4] sm:$0xf]
  %v89 = vld [vmem:[%s4 + $0x4] sm:$0xf]
  %v90 = vld [vmem:[%s4 + $0x8] sm:$0xf]
  %v91 = vld [vmem:[%s4 + $0xc] sm:$0xf]
  %v92 = vld [vmem:[%s4 + $0x10] sm:$0xf]
  %v93 = vld [vmem:[%s4 + $0x14] sm:$0xf]
  %v94 = vld [vmem:[%s4 + $0x18] sm:$0xf]
  %v95 = vld [vmem:[%s4 + $0x1c] sm:$0xf]
  %v96 = vmax.bf16 %v80, %v88
  %v97 = vmax.bf16 %v81, %v89
  %v98 = vmax.bf16 %v82, %v90
  %v99 = vmax.bf16 %v83, %v91
  %v100 = vmax.bf16 %v84, %v92
  %v101 = vmax.bf16 %v85, %v93
  %v102 = vmax.bf16 %v86, %v94
  %v103 = vmax.bf16 %v87, %v95
  %v104 = vld [vmem:[%s5] sm:$0xf]
  %v105 = vld [vmem:[%s5 + $0x4] sm:$0xf]
  %v106 = vld [vmem:[%s5 + $0x8] sm:$0xf]
  %v107 = vld [vmem:[%s5 + $0xc] sm:$0xf]
  %v108 = vld [vmem:[%s5 + $0x10] sm:$0xf]
  %v109 = vld [vmem:[%s5 + $0x14] sm:$0xf]
  %v110 = vld [vmem:[%s5 + $0x18] sm:$0xf]
  %v111 = vld [vmem:[%s5 + $0x1c] sm:$0xf]
  %v112 = vmax.bf16 %v96, %v104
  %v113 = vmax.bf16 %v97, %v105
  %v114 = vmax.bf16 %v98, %v106
  %v115 = vmax.bf16 %v99, %v107
  %v116 = vmax.bf16 %v100, %v108
  %v117 = vmax.bf16 %v101, %v109
  %v118 = vmax.bf16 %v102, %v110
  %v119 = vmax.bf16 %v103, %v111
  %v120 = vld [vmem:[%s6] sm:$0xf]
  %v121 = vld [vmem:[%s6 + $0x4] sm:$0xf]
  %v122 = vld [vmem:[%s6 + $0x8] sm:$0xf]
  %v123 = vld [vmem:[%s6 + $0xc] sm:$0xf]
  %v124 = vld [vmem:[%s6 + $0x10] sm:$0xf]
  %v125 = vld [vmem:[%s6 + $0x14] sm:$0xf]
  %v126 = vld [vmem:[%s6 + $0x18] sm:$0xf]
  %v127 = vld [vmem:[%s6 + $0x1c] sm:$0xf]
  %v128 = vmax.bf16 %v112, %v120
  %v129 = vmax.bf16 %v113, %v121
  %v130 = vmax.bf16 %v114, %v122
  %v131 = vmax.bf16 %v115, %v123
  %v132 = vmax.bf16 %v116, %v124
  %v133 = vmax.bf16 %v117, %v125
  %v134 = vmax.bf16 %v118, %v126
  %v135 = vmax.bf16 %v119, %v127
  %v136 = vld [vmem:[%s7] sm:$0xf]
  %v137 = vld [vmem:[%s7 + $0x4] sm:$0xf]
  %v138 = vld [vmem:[%s7 + $0x8] sm:$0xf]
  %v139 = vld [vmem:[%s7 + $0xc] sm:$0xf]
  %v140 = vld [vmem:[%s7 + $0x10] sm:$0xf]
  %v141 = vld [vmem:[%s7 + $0x14] sm:$0xf]
  %v142 = vld [vmem:[%s7 + $0x18] sm:$0xf]
  %v143 = vld [vmem:[%s7 + $0x1c] sm:$0xf]
  %v144 = vmax.bf16 %v128, %v136
  %v145 = vmax.bf16 %v129, %v137
  %v146 = vmax.bf16 %v130, %v138
  %v147 = vmax.bf16 %v131, %v139
  %v148 = vmax.bf16 %v132, %v140
  %v149 = vmax.bf16 %v133, %v141
  %v150 = vmax.bf16 %v134, %v142
  %v151 = vmax.bf16 %v135, %v143
  %v152 = vld [vmem:[%s8] sm:$0xf]
  %v153 = vld [vmem:[%s8 + $0x4] sm:$0xf]
  %v154 = vld [vmem:[%s8 + $0x8] sm:$0xf]
  %v155 = vld [vmem:[%s8 + $0xc] sm:$0xf]
  %v156 = vld [vmem:[%s8 + $0x10] sm:$0xf]
  %v157 = vld [vmem:[%s8 + $0x14] sm:$0xf]
  %v158 = vld [vmem:[%s8 + $0x18] sm:$0xf]
  %v159 = vld [vmem:[%s8 + $0x1c] sm:$0xf]
  %v160 = vmax.bf16 %v144, %v152
  %v161 = vmax.bf16 %v145, %v153
  %v162 = vmax.bf16 %v146, %v154
  %v163 = vmax.bf16 %v147, %v155
  %v164 = vmax.bf16 %v148, %v156
  %v165 = vmax.bf16 %v149, %v157
  %v166 = vmax.bf16 %v150, %v158
  %v167 = vmax.bf16 %v151, %v159
  %168 = vst [vmem:[%s9] sm:$0xf] %v160
  %169 = vst [vmem:[%s9 + $0x4] sm:$0xf] %v161
  %170 = vst [vmem:[%s9 + $0x8] sm:$0xf] %v162
  %171 = vst [vmem:[%s9 + $0xc] sm:$0xf] %v163
  %172 = vst [vmem:[%s9 + $0x10] sm:$0xf] %v164
  %173 = vst [vmem:[%s9 + $0x14] sm:$0xf] %v165
  %174 = vst [vmem:[%s9 + $0x18] sm:$0xf] %v166
  %175 = vst [vmem:[%s9 + $0x1c] sm:$0xf] %v167
  // Predicated region
  $region38: #{_lambda_.19} parent=0 // pred_check
    _
  $region39: #{_lambda_.19} parent=0 // pred_check_branch
    %177 = sbr.rel (0) target = $region41
  $region40: #{_lambda_.19} parent=0 // pred_region
    _
  $region41: #{_lambda_.19} parent=0 // pred_fallthru
    _
  // Predicated region
  $region42: #{_lambda_.19} parent=0 // pred_check
    _
  $region43: #{_lambda_.19} parent=0 // pred_check_branch
    %179 = sbr.rel (0) target = $region45
  $region44: #{_lambda_.19} parent=0 // pred_region
    _
  $region45: #{_lambda_.19} parent=0 // pred_fallthru
    _

// kernel: _lambda_.20
$region0: #{_lambda_.20}
  #allocation0 [shape = 'u32[]', space=smem, size = 0x4, offset = 0x4, fixed_abs, tag = 'smem constant byte address 0x4 - core index']
  #allocation1 [shape = 'u32[144,128]{1,0:T(1,128)}', space=vmem, size = 0x12000, scoped, tag = 'internal scratch']
  %s0 = inlined_call_operand.vmem [shape: bf16[512,16], index: 0, kind: input, shape index: {}]
  %s1 = inlined_call_operand.vmem [shape: bf16[16,16], index: 1, kind: input, shape index: {}]
  %s2 = inlined_call_operand.vmem [shape: f32[1,16], index: 2, kind: input, shape index: {}]
  %s3 = inlined_call_operand.vmem [shape: bf16[512,16], index: 3, kind: output, shape index: {}]
  %s4 = sld [smem:[#allocation0]]
  $region45: #{_lambda_.20} parent=0
    _
  %s6 = ssub.s32 1, %s4
  %s7 = scalar_select 0, %s6, %s4
  loop: start=0, step=1, limit=4
  $region2: #{_lambda_.20} parent=0 // loop_pre_header
    _
  $region3: #{_lambda_.20} parent=0 // loop_header
    %s9 = sphi 0, %s13
    %p10 = scmp.ge.s32.totalorder %s9, 4
    %s19 = sphi 0, %s21
    %s22 = sphi 0, %s19
    %s23 = sphi 0, %s22
    %s39 = sphi 0, %s23
    %s43 = sphi 0, %s43
    %s45 = sphi 0, %s43
    %s46 = sphi 0, %s45
    %s60 = sphi 0, %s46
    %s64 = sphi 0, %s64
    %s66 = sphi 0, %s64
    %s67 = sphi 0, %s66
    %s81 = sphi 0, %s67
    %s87 = sphi 0, %s89
    %s90 = sphi 0, %s87
    %s91 = sphi 0, %s90
    %s107 = sphi 0, %s91
  $region4: #{_lambda_.20} parent=0 // loop_header_branch
    %12 = sbr.rel (%p10) target = $region8
  $region5: #{_lambda_.20} parent=0 // loop_body
    %s14 = ssub.s32 %s9, 1
    %s15 = ssub.s32 %s9, 2
    %s16 = sadd.s32 %s9, 1
    %s17 = ssub.s32 %s9, %s16
    %p18 = scmp.eq.s32.totalorder %s17, 0
    %s20 = sadd.s32 %s19, 1
    %s21 = scalar_select %p18, %s19, %s20
    %p24 = pneg %p18
    %p25 = scmp.eq.s32.totalorder %s9, 1
    %p26 = por %p24, %p25
    %p27 = scmp.ne.s32.totalorder %s19, %s22
    %p28 = scmp.eq.s32.totalorder %s9, 0
    %p29 = por %p27, %p28
    %p30 = scmp.ne.s32.totalorder %s19, %s22
    %p31 = scmp.eq.s32.totalorder %s14, 1
    %p32 = por %p30, %p31
    %p33 = scmp.ne.s32.totalorder %s22, %s23
    %p34 = scmp.eq.s32.totalorder %s14, 0
    %p35 = por %p33, %p34
    %p36 = scmp.ne.s32.totalorder %s22, %s23
    %p37 = scmp.eq.s32.totalorder %s15, 1
    %p38 = por %p36, %p37
    %p40 = scmp.ne.s32.totalorder %s23, %s39
    %p41 = scmp.eq.s32.totalorder %s15, 0
    %p42 = por %p40, %p41
    %s44 = sadd.s32 %s43, 1
    %p47 = scmp.eq.s32.totalorder %s9, 1
    %p48 = scmp.ne.s32.totalorder %s43, %s45
    %p49 = scmp.eq.s32.totalorder %s9, 0
    %p50 = por %p48, %p49
    %p51 = scmp.ne.s32.totalorder %s43, %s45
    %p52 = scmp.eq.s32.totalorder %s14, 1
    %p53 = por %p51, %p52
    %p54 = scmp.ne.s32.totalorder %s45, %s46
    %p55 = scmp.eq.s32.totalorder %s14, 0
    %p56 = por %p54, %p55
    %p57 = scmp.ne.s32.totalorder %s45, %s46
    %p58 = scmp.eq.s32.totalorder %s15, 1
    %p59 = por %p57, %p58
    %p61 = scmp.ne.s32.totalorder %s46, %s60
    %p62 = scmp.eq.s32.totalorder %s15, 0
    %p63 = por %p61, %p62
    %s65 = sadd.s32 %s64, 1
    %p68 = scmp.eq.s32.totalorder %s9, 1
    %p69 = scmp.ne.s32.totalorder %s64, %s66
    %p70 = scmp.eq.s32.totalorder %s9, 0
    %p71 = por %p69, %p70
    %p72 = scmp.ne.s32.totalorder %s64, %s66
    %p73 = scmp.eq.s32.totalorder %s14, 1
    %p74 = por %p72, %p73
    %p75 = scmp.ne.s32.totalorder %s66, %s67
    %p76 = scmp.eq.s32.totalorder %s14, 0
    %p77 = por %p75, %p76
    %p78 = scmp.ne.s32.totalorder %s66, %s67
    %p79 = scmp.eq.s32.totalorder %s15, 1
    %p80 = por %p78, %p79
    %p82 = scmp.ne.s32.totalorder %s67, %s81
    %p83 = scmp.eq.s32.totalorder %s15, 0
    %p84 = por %p82, %p83
    %s85 = ssub.s32 %s9, %s16
    %p86 = scmp.eq.s32.totalorder %s85, 0
    %s88 = sadd.s32 %s87, 1
    %s89 = scalar_select %p86, %s87, %s88
    %p92 = pneg %p86
    %p93 = scmp.eq.s32.totalorder %s9, 1
    %p94 = por %p92, %p93
    %p95 = scmp.ne.s32.totalorder %s87, %s90
    %p96 = scmp.eq.s32.totalorder %s9, 0
    %p97 = por %p95, %p96
    %p98 = scmp.ne.s32.totalorder %s87, %s90
    %p99 = scmp.eq.s32.totalorder %s14, 1
    %p100 = por %p98, %p99
    %p101 = scmp.ne.s32.totalorder %s90, %s91
    %p102 = scmp.eq.s32.totalorder %s14, 0
    %p103 = por %p101, %p102
    %p104 = scmp.ne.s32.totalorder %s90, %s91
    %p105 = scmp.eq.s32.totalorder %s15, 1
    %p106 = por %p104, %p105
    %p108 = scmp.ne.s32.totalorder %s91, %s107
    %p109 = scmp.eq.s32.totalorder %s15, 0
    %p110 = por %p108, %p109
    %p111 = scmp.le.s32.totalorder 1, %s9
    %p112 = scmp.lt.s32.totalorder %s9, 3
    %p113 = pnand %p111, %p112
    %p114 = pneg %p113
    // Predicated region
    $region9: #{_lambda_.20} parent=5 // pred_check
      _
    $region10: #{_lambda_.20} parent=5 // pred_check_branch
      %116 = sbr.rel (%p113) target = $region12
    $region11: #{_lambda_.20} parent=5 // pred_region
      %s117 = ssub.s32 %s9, 1
      // Predicated region
      $region13: #{_lambda_.20} parent=11 // pred_check
        %p118 = pneg %p56
      $region14: #{_lambda_.20} parent=11 // pred_check_branch
        %120 = sbr.rel (%p118) target = $region16
      $region15: #{_lambda_.20} parent=11 // pred_region
        _
      $region16: #{_lambda_.20} parent=11 // pred_fallthru
        _
      // Predicated region
      $region17: #{_lambda_.20} parent=11 // pred_check
        %p121 = pneg %p77
      $region18: #{_lambda_.20} parent=11 // pred_check_branch
        %123 = sbr.rel (%p121) target = $region20
      $region19: #{_lambda_.20} parent=11 // pred_region
        _
      $region20: #{_lambda_.20} parent=11 // pred_fallthru
        _
    $region12: #{_lambda_.20} parent=5 // pred_fallthru
      _
    %p124 = scmp.lt.s32.totalorder %s9, 2
    // Predicated region
    $region21: #{_lambda_.20} parent=5 // pred_check
      %p125 = pneg %p124
    $region22: #{_lambda_.20} parent=5 // pred_check_branch
      %127 = sbr.rel (%p125) target = $region24
    $region23: #{_lambda_.20} parent=5 // pred_region
      // Predicated region
      $region25: #{_lambda_.20} parent=23 // pred_check
        %p128 = pneg %p29
      $region26: #{_lambda_.20} parent=23 // pred_check_branch
        %130 = sbr.rel (%p128) target = $region28
      $region27: #{_lambda_.20} parent=23 // pred_region
        %s131 = smul.u32 32, %s9
        %p132 = scmp.lt.s32.totalorder %s131, 63
        %s133 = scalar_select %p132, %s131, 63
        %s134 = smul.addr %s133, 4
        %s135 = scalar_lea.vmem %s0, %s134
        %s136 = smul.u32 32, %s9
      $region28: #{_lambda_.20} parent=23 // pred_fallthru
        _
    $region24: #{_lambda_.20} parent=5 // pred_fallthru
      _
    %p137 = scmp.le.s32.totalorder 1, %s9
    %p138 = scmp.lt.s32.totalorder %s9, 3
    %p139 = pnand %p137, %p138
    %p140 = pneg %p139
    // Predicated region
    $region29: #{_lambda_.20} parent=5 // pred_check
      _
    $region30: #{_lambda_.20} parent=5 // pred_check_branch
      %142 = sbr.rel (%p139) target = $region32
    $region31: #{_lambda_.20} parent=5 // pred_region
      %s143 = ssub.s32 %s9, 1
      %s144 = smul.u32 32, %s14
      %p145 = scmp.lt.s32.totalorder %s144, 63
      %s146 = scalar_select %p145, %s144, 63
      %s147 = smul.addr %s146, 4
      %s148 = scalar_lea.vmem %s0, %s147
      %p149 = pneg %p35
      %p150 = pneg %p32
      %p151 = pneg %p56
      %p152 = pneg %p53
      %p153 = pneg %p77
      %p154 = pneg %p74
      %p155 = pneg %p103
      %p156 = pneg %p100
      %s157 = smul.u32 32, %s14
      %p158 = scmp.lt.s32.totalorder %s157, 63
      %s159 = scalar_select %p158, %s157, 63
      %s160 = smul.addr %s159, 4
      %s161 = scalar_lea.vmem %s3, %s160
      %s162 = smul.u32 32, %s14
      %p163 = scmp.lt.s32.totalorder %s162, 63
      %s164 = scalar_select %p163, %s162, 63
      %s165 = smul.addr %s164, 4
      %s166 = scalar_lea.vmem %s0, %s165
      %s167 = smul.u32 32, %s14
      %s168 = smul.u32 32, %s14
      %p169 = scmp.lt.s32.totalorder %s168, 63
      %s170 = scalar_select %p169, %s168, 63
      %s171 = smul.addr %s170, 4
      %s172 = scalar_lea.vmem %s3, %s171
      %s173 = smul.u32 32, %s14
      %v175 = vld [vmem:[%s166] sm:$0xf]
      %v176 = vld [vmem:[%s166 + $0x4] sm:$0xf]
      %v177 = vld [vmem:[%s166 + $0x8] sm:$0xf]
      %v178 = vld [vmem:[%s166 + $0xc] sm:$0xf]
      %v179 = vld [vmem:[%s166 + $0x10] sm:$0xf]
      %v180 = vld [vmem:[%s166 + $0x14] sm:$0xf]
      %v181 = vld [vmem:[%s166 + $0x18] sm:$0xf]
      %v182 = vld [vmem:[%s166 + $0x1c] sm:$0xf]
      %v183 = vld [vmem:[%s166 + $0x20] sm:$0xf]
      %v184 = vld [vmem:[%s166 + $0x24] sm:$0xf]
      %v185 = vld [vmem:[%s166 + $0x28] sm:$0xf]
      %v186 = vld [vmem:[%s166 + $0x2c] sm:$0xf]
      %v187 = vld [vmem:[%s166 + $0x30] sm:$0xf]
      %v188 = vld [vmem:[%s166 + $0x34] sm:$0xf]
      %v189 = vld [vmem:[%s166 + $0x38] sm:$0xf]
      %v190 = vld [vmem:[%s166 + $0x3c] sm:$0xf]
      %v191 = vld [vmem:[%s166 + $0x40] sm:$0xf]
      %v192 = vld [vmem:[%s166 + $0x44] sm:$0xf]
      %v193 = vld [vmem:[%s166 + $0x48] sm:$0xf]
      %v194 = vld [vmem:[%s166 + $0x4c] sm:$0xf]
      %v195 = vld [vmem:[%s166 + $0x50] sm:$0xf]
      %v196 = vld [vmem:[%s166 + $0x54] sm:$0xf]
      %v197 = vld [vmem:[%s166 + $0x58] sm:$0xf]
      %v198 = vld [vmem:[%s166 + $0x5c] sm:$0xf]
      %v199 = vld [vmem:[%s166 + $0x60] sm:$0xf]
      %v200 = vld [vmem:[%s166 + $0x64] sm:$0xf]
      %v201 = vld [vmem:[%s166 + $0x68] sm:$0xf]
      %v202 = vld [vmem:[%s166 + $0x6c] sm:$0xf]
      %v203 = vld [vmem:[%s166 + $0x70] sm:$0xf]
      %v204 = vld [vmem:[%s166 + $0x74] sm:$0xf]
      %v205 = vld [vmem:[%s166 + $0x78] sm:$0xf]
      %v206 = vld [vmem:[%s166 + $0x7c] sm:$0xf]
      %v207 = vld [vmem:[%s1] sm:$0xf]
      %v208 = vld [vmem:[%s1 + $0x4] sm:$0xf]
      %v209 = vld [vmem:[%s2] sm:$0x1]
      %v211 = vlaneseq
      %v212 = vshrl.u32 %v211, 7
      %v213 = vsub.s32 0, %v212
      %v214 = vrot.slane %v209, %v213
      %v248 = vunpack.c.l.b16 %v175
      %v249 = vunpack.c.l.b16 %v176
      %v250 = vunpack.c.l.b16 %v177
      %v251 = vunpack.c.l.b16 %v178
      %v252 = vunpack.c.l.b16 %v179
      %v253 = vunpack.c.l.b16 %v180
      %v254 = vunpack.c.l.b16 %v181
      %v255 = vunpack.c.l.b16 %v182
      %v256 = vunpack.c.l.b16 %v183
      %v257 = vunpack.c.l.b16 %v184
      %v258 = vunpack.c.l.b16 %v185
      %v259 = vunpack.c.l.b16 %v186
      %v260 = vunpack.c.l.b16 %v187
      %v261 = vunpack.c.l.b16 %v188
      %v262 = vunpack.c.l.b16 %v189
      %v263 = vunpack.c.l.b16 %v190
      %v264 = vunpack.c.l.b16 %v191
      %v265 = vunpack.c.l.b16 %v192
      %v266 = vunpack.c.l.b16 %v193
      %v267 = vunpack.c.l.b16 %v194
      %v268 = vunpack.c.l.b16 %v195
      %v269 = vunpack.c.l.b16 %v196
      %v270 = vunpack.c.l.b16 %v197
      %v271 = vunpack.c.l.b16 %v198
      %v272 = vunpack.c.l.b16 %v199
      %v273 = vunpack.c.l.b16 %v200
      %v274 = vunpack.c.l.b16 %v201
      %v275 = vunpack.c.l.b16 %v202
      %v276 = vunpack.c.l.b16 %v203
      %v277 = vunpack.c.l.b16 %v204
      %v278 = vunpack.c.l.b16 %v205
      %v279 = vunpack.c.l.b16 %v206
      %v280 = vpack.c.b16 %v249, %v248
      %v281 = vpack.c.b16 %v251, %v250
      %v282 = vpack.c.b16 %v253, %v252
      %v283 = vpack.c.b16 %v255, %v254
      %v284 = vpack.c.b16 %v257, %v256
      %v285 = vpack.c.b16 %v259, %v258
      %v286 = vpack.c.b16 %v261, %v260
      %v287 = vpack.c.b16 %v263, %v262
      %v288 = vpack.c.b16 %v265, %v264
      %v289 = vpack.c.b16 %v267, %v266
      %v290 = vpack.c.b16 %v269, %v268
      %v291 = vpack.c.b16 %v271, %v270
      %v292 = vpack.c.b16 %v273, %v272
      %v293 = vpack.c.b16 %v275, %v274
      %v294 = vpack.c.b16 %v277, %v276
      %v295 = vpack.c.b16 %v279, %v278
      %v298 = vunpack.c.l.b16 %v207
      %v299 = vunpack.c.l.b16 %v208
      %v300 = vpack.c.b16 %v299, %v298
      %vm302 = vcmask 130048
      %v304 = vsel %vm302, %v280, 0
      %v307 = vsel %vm302, %v281, 0
      %v310 = vsel %vm302, %v282, 0
      %v313 = vsel %vm302, %v283, 0
      %v316 = vsel %vm302, %v284, 0
      %v319 = vsel %vm302, %v285, 0
      %v322 = vsel %vm302, %v286, 0
      %v325 = vsel %vm302, %v287, 0
      %v328 = vsel %vm302, %v288, 0
      %v331 = vsel %vm302, %v289, 0
      %v334 = vsel %vm302, %v290, 0
      %v337 = vsel %vm302, %v291, 0
      %v340 = vsel %vm302, %v292, 0
      %v343 = vsel %vm302, %v293, 0
      %v346 = vsel %vm302, %v294, 0
      %v349 = vsel %vm302, %v295, 0
      %351 = vmatprep.subr.bf16.mxu0 0
      %352 = vmatpush1.bf16.msra.mxu0 %v300
      %353 = vmatprep.subr.bf16.mxu0 0
      %354 = vmatpush1.bf16.msra.mxu0 0
      %355 = vmatprep.subr.bf16.mxu0 0
      %356 = vmatpush1.bf16.msra.mxu0 0
      %357 = vmatprep.subr.bf16.mxu0 0
      %358 = vmatpush1.bf16.msra.mxu0 0
      %359 = vmatprep.subr.bf16.mxu0 0
      %360 = vmatpush1.bf16.msra.mxu0 0
      %361 = vmatprep.subr.bf16.mxu0 0
      %362 = vmatpush1.bf16.msra.mxu0 0
      %363 = vmatprep.subr.bf16.mxu0 0
      %364 = vmatpush1.bf16.msra.mxu0 0
      %365 = vmatprep.subr.bf16.mxu0 0
      %366 = vmatpush1.bf16.msra.mxu0 0
      %367 = vmatprep.subr.bf16.mxu0 0
      %368 = vmatpush1.bf16.msra.mxu0 0
      %369 = vmatprep.subr.bf16.mxu0 0
      %370 = vmatpush1.bf16.msra.mxu0 0
      %371 = vmatprep.subr.bf16.mxu0 0
      %372 = vmatpush1.bf16.msra.mxu0 0
      %373 = vmatprep.subr.bf16.mxu0 0
      %374 = vmatpush1.bf16.msra.mxu0 0
      %375 = vmatprep.subr.bf16.mxu0 0
      %376 = vmatpush1.bf16.msra.mxu0 0
      %377 = vmatprep.subr.bf16.mxu0 0
      %378 = vmatpush1.bf16.msra.mxu0 0
      %379 = vmatprep.subr.bf16.mxu0 0
      %380 = vmatpush1.bf16.msra.mxu0 0
      %381 = vmatprep.subr.bf16.mxu0 0
      %382 = vmatpush1.bf16.msra.mxu0 0
      %383 = vmatprep.mubr.bf16.mxu0 0
      %384 = vmatmul.mubr.bf16.gmra.mrb[0].mxu0 %v304
      %v385 = vpop.f32.mrb[0].mxu0
      %v386 = vadd.f32 %v214, %v385
      %v387 = vpop.f32.mrb[0].mxu0
      %v388 = vpop.f32.mrb[0].mxu0
      %v389 = vadd.f32 %v214, %v388
      %v390 = vpop.f32.mrb[0].mxu0
      %391 = vmatprep.mubr.bf16.mxu0 0
      %392 = vmatmul.mubr.bf16.gmra.mrb[0].mxu0 %v307
      %v393 = vpop.f32.mrb[0].mxu0
      %v394 = vadd.f32 %v214, %v393
      %v395 = vpop.f32.mrb[0].mxu0
      %v396 = vpop.f32.mrb[0].mxu0
      %v397 = vadd.f32 %v214, %v396
      %v398 = vpop.f32.mrb[0].mxu0
      %399 = vmatprep.mubr.bf16.mxu0 0
      %400 = vmatmul.mubr.bf16.gmra.mrb[0].mxu0 %v310
      %v401 = vpop.f32.mrb[0].mxu0
      %v402 = vadd.f32 %v214, %v401
      %v403 = vpop.f32.mrb[0].mxu0
      %v404 = vpop.f32.mrb[0].mxu0
      %v405 = vadd.f32 %v214, %v404
      %v406 = vpop.f32.mrb[0].mxu0
      %407 = vmatprep.mubr.bf16.mxu0 0
      %408 = vmatmul.mubr.bf16.gmra.mrb[0].mxu0 %v313
      %v409 = vpop.f32.mrb[0].mxu0
      %v410 = vadd.f32 %v214, %v409
      %v411 = vpop.f32.mrb[0].mxu0
      %v412 = vpop.f32.mrb[0].mxu0
      %v413 = vadd.f32 %v214, %v412
      %v414 = vpop.f32.mrb[0].mxu0
      %415 = vmatprep.mubr.bf16.mxu0 0
      %416 = vmatmul.mubr.bf16.gmra.mrb[0].mxu0 %v316
      %v417 = vpop.f32.mrb[0].mxu0
      %v418 = vadd.f32 %v214, %v417
      %v419 = vpop.f32.mrb[0].mxu0
      %v420 = vpop.f32.mrb[0].mxu0
      %v421 = vadd.f32 %v214, %v420
      %v422 = vpop.f32.mrb[0].mxu0
      %423 = vmatprep.mubr.bf16.mxu0 0
      %424 = vmatmul.mubr.bf16.gmra.mrb[0].mxu0 %v319
      %v425 = vpop.f32.mrb[0].mxu0
      %v426 = vadd.f32 %v214, %v425
      %v427 = vpop.f32.mrb[0].mxu0
      %v428 = vpop.f32.mrb[0].mxu0
      %v429 = vadd.f32 %v214, %v428
      %v430 = vpop.f32.mrb[0].mxu0
      %431 = vmatprep.mubr.bf16.mxu0 0
      %432 = vmatmul.mubr.bf16.gmra.mrb[0].mxu0 %v322
      %v433 = vpop.f32.mrb[0].mxu0
      %v434 = vadd.f32 %v214, %v433
      %v435 = vpop.f32.mrb[0].mxu0
      %v436 = vpop.f32.mrb[0].mxu0
      %v437 = vadd.f32 %v214, %v436
      %v438 = vpop.f32.mrb[0].mxu0
      %439 = vmatprep.mubr.bf16.mxu0 0
      %440 = vmatmul.mubr.bf16.gmra.mrb[0].mxu0 %v325
      %v441 = vpop.f32.mrb[0].mxu0
      %v442 = vadd.f32 %v214, %v441
      %v443 = vpop.f32.mrb[0].mxu0
      %v444 = vpop.f32.mrb[0].mxu0
      %v445 = vadd.f32 %v214, %v444
      %v446 = vpop.f32.mrb[0].mxu0
      %447 = vmatprep.mubr.bf16.mxu0 0
      %448 = vmatmul.mubr.bf16.gmra.mrb[0].mxu0 %v328
      %v449 = vpop.f32.mrb[0].mxu0
      %v450 = vadd.f32 %v214, %v449
      %v451 = vpop.f32.mrb[0].mxu0
      %v452 = vpop.f32.mrb[0].mxu0
      %v453 = vadd.f32 %v214, %v452
      %v454 = vpop.f32.mrb[0].mxu0
      %455 = vmatprep.mubr.bf16.mxu0 0
      %456 = vmatmul.mubr.bf16.gmra.mrb[0].mxu0 %v331
      %v457 = vpop.f32.mrb[0].mxu0
      %v458 = vadd.f32 %v214, %v457
      %v459 = vpop.f32.mrb[0].mxu0
      %v460 = vpop.f32.mrb[0].mxu0
      %v461 = vadd.f32 %v214, %v460
      %v462 = vpop.f32.mrb[0].mxu0
      %463 = vmatprep.mubr.bf16.mxu0 0
      %464 = vmatmul.mubr.bf16.gmra.mrb[0].mxu0 %v334
      %v465 = vpop.f32.mrb[0].mxu0
      %v466 = vadd.f32 %v214, %v465
      %v467 = vpop.f32.mrb[0].mxu0
      %v468 = vpop.f32.mrb[0].mxu0
      %v469 = vadd.f32 %v214, %v468
      %v470 = vpop.f32.mrb[0].mxu0
      %471 = vmatprep.mubr.bf16.mxu0 0
      %472 = vmatmul.mubr.bf16.gmra.mrb[0].mxu0 %v337
      %v473 = vpop.f32.mrb[0].mxu0
      %v474 = vadd.f32 %v214, %v473
      %v475 = vpop.f32.mrb[0].mxu0
      %v476 = vpop.f32.mrb[0].mxu0
      %v477 = vadd.f32 %v214, %v476
      %v478 = vpop.f32.mrb[0].mxu0
      %479 = vmatprep.mubr.bf16.mxu0 0
      %480 = vmatmul.mubr.bf16.gmra.mrb[0].mxu0 %v340
      %v481 = vpop.f32.mrb[0].mxu0
      %v482 = vadd.f32 %v214, %v481
      %v483 = vpop.f32.mrb[0].mxu0
      %v484 = vpop.f32.mrb[0].mxu0
      %v485 = vadd.f32 %v214, %v484
      %v486 = vpop.f32.mrb[0].mxu0
      %487 = vmatprep.mubr.bf16.mxu0 0
      %488 = vmatmul.mubr.bf16.gmra.mrb[0].mxu0 %v343
      %v489 = vpop.f32.mrb[0].mxu0
      %v490 = vadd.f32 %v214, %v489
      %v491 = vpop.f32.mrb[0].mxu0
      %v492 = vpop.f32.mrb[0].mxu0
      %v493 = vadd.f32 %v214, %v492
      %v494 = vpop.f32.mrb[0].mxu0
      %495 = vmatprep.mubr.bf16.mxu0 0
      %496 = vmatmul.mubr.bf16.gmra.mrb[0].mxu0 %v346
      %v497 = vpop.f32.mrb[0].mxu0
      %v498 = vadd.f32 %v214, %v497
      %v499 = vpop.f32.mrb[0].mxu0
      %v500 = vpop.f32.mrb[0].mxu0
      %v501 = vadd.f32 %v214, %v500
      %v502 = vpop.f32.mrb[0].mxu0
      %503 = vmatprep.mubr.bf16.mxu0 0
      %504 = vmatmul.mubr.bf16.gmra.mrb[0].mxu0 %v349
      %v505 = vpop.f32.mrb[0].mxu0
      %v506 = vadd.f32 %v214, %v505
      %v507 = vpop.f32.mrb[0].mxu0
      %v508 = vpop.f32.mrb[0].mxu0
      %v509 = vadd.f32 %v214, %v508
      %v510 = vpop.f32.mrb[0].mxu0
      %511 = vdwg.mxu0
      %v512 = vmax.f32 %v386, 0.0
      %v513 = vmax.f32 %v389, 0.0
      %v514 = vmax.f32 %v394, 0.0
      %v515 = vmax.f32 %v397, 0.0
      %v516 = vmax.f32 %v402, 0.0
      %v517 = vmax.f32 %v405, 0.0
      %v518 = vmax.f32 %v410, 0.0
      %v519 = vmax.f32 %v413, 0.0
      %v520 = vmax.f32 %v418, 0.0
      %v521 = vmax.f32 %v421, 0.0
      %v522 = vmax.f32 %v426, 0.0
      %v523 = vmax.f32 %v429, 0.0
      %v524 = vmax.f32 %v434, 0.0
      %v525 = vmax.f32 %v437, 0.0
      %v526 = vmax.f32 %v442, 0.0
      %v527 = vmax.f32 %v445, 0.0
      %v528 = vmax.f32 %v450, 0.0
      %v529 = vmax.f32 %v453, 0.0
      %v530 = vmax.f32 %v458, 0.0
      %v531 = vmax.f32 %v461, 0.0
      %v532 = vmax.f32 %v466, 0.0
      %v533 = vmax.f32 %v469, 0.0
      %v534 = vmax.f32 %v474, 0.0
      %v535 = vmax.f32 %v477, 0.0
      %v536 = vmax.f32 %v482, 0.0
      %v537 = vmax.f32 %v485, 0.0
      %v538 = vmax.f32 %v490, 0.0
      %v539 = vmax.f32 %v493, 0.0
      %v540 = vmax.f32 %v498, 0.0
      %v541 = vmax.f32 %v501, 0.0
      %v542 = vmax.f32 %v506, 0.0
      %v543 = vmax.f32 %v509, 0.0
      %v544 = vpack.c.bf16 %v513, %v512
      %v545 = vpack.c.bf16 %v515, %v514
      %v546 = vpack.c.bf16 %v517, %v516
      %v547 = vpack.c.bf16 %v519, %v518
      %v548 = vpack.c.bf16 %v521, %v520
      %v549 = vpack.c.bf16 %v523, %v522
      %v550 = vpack.c.bf16 %v525, %v524
      %v551 = vpack.c.bf16 %v527, %v526
      %v552 = vpack.c.bf16 %v529, %v528
      %v553 = vpack.c.bf16 %v531, %v530
      %v554 = vpack.c.bf16 %v533, %v532
      %v555 = vpack.c.bf16 %v535, %v534
      %v556 = vpack.c.bf16 %v537, %v536
      %v557 = vpack.c.bf16 %v539, %v538
      %v558 = vpack.c.bf16 %v541, %v540
      %v559 = vpack.c.bf16 %v543, %v542
      %v576 = vunpack.c.l.b16 %v544
      %v577 = vunpack.c.h.b16 %v544
      %v578 = vunpack.c.l.b16 %v545
      %v579 = vunpack.c.h.b16 %v545
      %v580 = vunpack.c.l.b16 %v546
      %v581 = vunpack.c.h.b16 %v546
      %v582 = vunpack.c.l.b16 %v547
      %v583 = vunpack.c.h.b16 %v547
      %v584 = vunpack.c.l.b16 %v548
      %v585 = vunpack.c.h.b16 %v548
      %v586 = vunpack.c.l.b16 %v549
      %v587 = vunpack.c.h.b16 %v549
      %v588 = vunpack.c.l.b16 %v550
      %v589 = vunpack.c.h.b16 %v550
      %v590 = vunpack.c.l.b16 %v551
      %v591 = vunpack.c.h.b16 %v551
      %v592 = vunpack.c.l.b16 %v552
      %v593 = vunpack.c.h.b16 %v552
      %v594 = vunpack.c.l.b16 %v553
      %v595 = vunpack.c.h.b16 %v553
      %v596 = vunpack.c.l.b16 %v554
      %v597 = vunpack.c.h.b16 %v554
      %v598 = vunpack.c.l.b16 %v555
      %v599 = vunpack.c.h.b16 %v555
      %v600 = vunpack.c.l.b16 %v556
      %v601 = vunpack.c.h.b16 %v556
      %v602 = vunpack.c.l.b16 %v557
      %v603 = vunpack.c.h.b16 %v557
      %v604 = vunpack.c.l.b16 %v558
      %v605 = vunpack.c.h.b16 %v558
      %v606 = vunpack.c.l.b16 %v559
      %v607 = vunpack.c.h.b16 %v559
      %v608 = vpack.c.b16 %v576, %v576
      %v609 = vpack.c.b16 %v577, %v577
      %v610 = vpack.c.b16 %v578, %v578
      %v611 = vpack.c.b16 %v579, %v579
      %v612 = vpack.c.b16 %v580, %v580
      %v613 = vpack.c.b16 %v581, %v581
      %v614 = vpack.c.b16 %v582, %v582
      %v615 = vpack.c.b16 %v583, %v583
      %v616 = vpack.c.b16 %v584, %v584
      %v617 = vpack.c.b16 %v585, %v585
      %v618 = vpack.c.b16 %v586, %v586
      %v619 = vpack.c.b16 %v587, %v587
      %v620 = vpack.c.b16 %v588, %v588
      %v621 = vpack.c.b16 %v589, %v589
      %v622 = vpack.c.b16 %v590, %v590
      %v623 = vpack.c.b16 %v591, %v591
      %v624 = vpack.c.b16 %v592, %v592
      %v625 = vpack.c.b16 %v593, %v593
      %v626 = vpack.c.b16 %v594, %v594
      %v627 = vpack.c.b16 %v595, %v595
      %v628 = vpack.c.b16 %v596, %v596
      %v629 = vpack.c.b16 %v597, %v597
      %v630 = vpack.c.b16 %v598, %v598
      %v631 = vpack.c.b16 %v599, %v599
      %v632 = vpack.c.b16 %v600, %v600
      %v633 = vpack.c.b16 %v601, %v601
      %v634 = vpack.c.b16 %v602, %v602
      %v635 = vpack.c.b16 %v603, %v603
      %v636 = vpack.c.b16 %v604, %v604
      %v637 = vpack.c.b16 %v605, %v605
      %v638 = vpack.c.b16 %v606, %v606
      %v639 = vpack.c.b16 %v607, %v607
      %vm672 = vcmask 125952
      %673 = vst.msk [vmem:[%s172] sm:$0xf] %vm672, %v608
      %674 = vst.msk [vmem:[%s172 + $0x4] sm:$0xf] %vm672, %v609
      %675 = vst.msk [vmem:[%s172 + $0x8] sm:$0xf] %vm672, %v610
      %676 = vst.msk [vmem:[%s172 + $0xc] sm:$0xf] %vm672, %v611
      %677 = vst.msk [vmem:[%s172 + $0x10] sm:$0xf] %vm672, %v612
      %678 = vst.msk [vmem:[%s172 + $0x14] sm:$0xf] %vm672, %v613
      %679 = vst.msk [vmem:[%s172 + $0x18] sm:$0xf] %vm672, %v614
      %680 = vst.msk [vmem:[%s172 + $0x1c] sm:$0xf] %vm672, %v615
      %681 = vst.msk [vmem:[%s172 + $0x20] sm:$0xf] %vm672, %v616
      %682 = vst.msk [vmem:[%s172 + $0x24] sm:$0xf] %vm672, %v617
      %683 = vst.msk [vmem:[%s172 + $0x28] sm:$0xf] %vm672, %v618
      %684 = vst.msk [vmem:[%s172 + $0x2c] sm:$0xf] %vm672, %v619
      %685 = vst.msk [vmem:[%s172 + $0x30] sm:$0xf] %vm672, %v620
      %686 = vst.msk [vmem:[%s172 + $0x34] sm:$0xf] %vm672, %v621
      %687 = vst.msk [vmem:[%s172 + $0x38] sm:$0xf] %vm672, %v622
      %688 = vst.msk [vmem:[%s172 + $0x3c] sm:$0xf] %vm672, %v623
      %689 = vst.msk [vmem:[%s172 + $0x40] sm:$0xf] %vm672, %v624
      %690 = vst.msk [vmem:[%s172 + $0x44] sm:$0xf] %vm672, %v625
      %691 = vst.msk [vmem:[%s172 + $0x48] sm:$0xf] %vm672, %v626
      %692 = vst.msk [vmem:[%s172 + $0x4c] sm:$0xf] %vm672, %v627
      %693 = vst.msk [vmem:[%s172 + $0x50] sm:$0xf] %vm672, %v628
      %694 = vst.msk [vmem:[%s172 + $0x54] sm:$0xf] %vm672, %v629
      %695 = vst.msk [vmem:[%s172 + $0x58] sm:$0xf] %vm672, %v630
      %696 = vst.msk [vmem:[%s172 + $0x5c] sm:$0xf] %vm672, %v631
      %697 = vst.msk [vmem:[%s172 + $0x60] sm:$0xf] %vm672, %v632
      %698 = vst.msk [vmem:[%s172 + $0x64] sm:$0xf] %vm672, %v633
      %699 = vst.msk [vmem:[%s172 + $0x68] sm:$0xf] %vm672, %v634
      %700 = vst.msk [vmem:[%s172 + $0x6c] sm:$0xf] %vm672, %v635
      %701 = vst.msk [vmem:[%s172 + $0x70] sm:$0xf] %vm672, %v636
      %702 = vst.msk [vmem:[%s172 + $0x74] sm:$0xf] %vm672, %v637
      %703 = vst.msk [vmem:[%s172 + $0x78] sm:$0xf] %vm672, %v638
      %704 = vst.msk [vmem:[%s172 + $0x7c] sm:$0xf] %vm672, %v639
      %s705 = smul.u32 32, %s14
      %p706 = scmp.lt.s32.totalorder %s705, 63
      %s707 = scalar_select %p706, %s705, 63
      %s708 = smul.addr %s707, 4
      %s709 = scalar_lea.vmem %s3, %s708
      // Predicated region
      $region33: #{_lambda_.20} parent=31 // pred_check
        %p710 = pneg %p100
      $region34: #{_lambda_.20} parent=31 // pred_check_branch
        %712 = sbr.rel (%p710) target = $region36
      $region35: #{_lambda_.20} parent=31 // pred_region
        %s713 = smul.u32 32, %s14
      $region36: #{_lambda_.20} parent=31 // pred_fallthru
        _
    $region32: #{_lambda_.20} parent=5 // pred_fallthru
      _
    %p714 = scmp.le.s32.totalorder 2, %s9
    // Predicated region
    $region37: #{_lambda_.20} parent=5 // pred_check
      %p715 = pneg %p714
    $region38: #{_lambda_.20} parent=5 // pred_check_branch
      %717 = sbr.rel (%p715) target = $region40
    $region39: #{_lambda_.20} parent=5 // pred_region
      %s718 = ssub.s32 %s9, 2
      // Predicated region
      $region41: #{_lambda_.20} parent=39 // pred_check
        %p719 = pneg %p106
      $region42: #{_lambda_.20} parent=39 // pred_check_branch
        %721 = sbr.rel (%p719) target = $region44
      $region43: #{_lambda_.20} parent=39 // pred_region
        %s722 = smul.u32 32, %s15
        %p723 = scmp.lt.s32.totalorder %s722, 63
        %s724 = scalar_select %p723, %s722, 63
        %s725 = smul.addr %s724, 4
        %s726 = scalar_lea.vmem %s3, %s725
      $region44: #{_lambda_.20} parent=39 // pred_fallthru
        _
    $region40: #{_lambda_.20} parent=5 // pred_fallthru
      _
  $region6: #{_lambda_.20} parent=0 // loop_footer
    %s13 = sadd.s32 1, %s9
  $region7: #{_lambda_.20} parent=0 // loop_footer_branch
    %8 = sbr.rel target = $region3
  $region8: #{_lambda_.20} parent=0 // loop_exit
    _

// kernel: _lambda_.21
$region0: #{_lambda_.21}
  #allocation0 [shape = 'u32[]', space=smem, size = 0x4, offset = 0x4, fixed_abs, tag = 'smem constant byte address 0x4 - core index']
  #allocation1 [shape = 'u32[144,128]{1,0:T(1,128)}', space=vmem, size = 0x12000, scoped, tag = 'internal scratch']
  %s0 = inlined_call_operand.vmem [shape: bf16[512,144], index: 0, kind: input, shape index: {}]
  %s1 = inlined_call_operand.vmem [shape: bf16[144,16], index: 1, kind: input, shape index: {}]
  %s2 = inlined_call_operand.vmem [shape: f32[1,16], index: 2, kind: input, shape index: {}]
  %s3 = inlined_call_operand.vmem [shape: bf16[512,16], index: 3, kind: output, shape index: {}]
  %s4 = sld [smem:[#allocation0]]
  $region45: #{_lambda_.21} parent=0
    _
  %s6 = ssub.s32 1, %s4
  %s7 = scalar_select 0, %s6, %s4
  loop: start=0, step=1, limit=4
  $region2: #{_lambda_.21} parent=0 // loop_pre_header
    _
  $region3: #{_lambda_.21} parent=0 // loop_header
    %s9 = sphi 0, %s13
    %p10 = scmp.ge.s32.totalorder %s9, 4
    %s19 = sphi 0, %s21
    %s22 = sphi 0, %s19
    %s23 = sphi 0, %s22
    %s39 = sphi 0, %s23
    %s43 = sphi 0, %s43
    %s45 = sphi 0, %s43
    %s46 = sphi 0, %s45
    %s60 = sphi 0, %s46
    %s64 = sphi 0, %s64
    %s66 = sphi 0, %s64
    %s67 = sphi 0, %s66
    %s81 = sphi 0, %s67
    %s87 = sphi 0, %s89
    %s90 = sphi 0, %s87
    %s91 = sphi 0, %s90
    %s107 = sphi 0, %s91
  $region4: #{_lambda_.21} parent=0 // loop_header_branch
    %12 = sbr.rel (%p10) target = $region8
  $region5: #{_lambda_.21} parent=0 // loop_body
    %s14 = ssub.s32 %s9, 1
    %s15 = ssub.s32 %s9, 2
    %s16 = sadd.s32 %s9, 1
    %s17 = ssub.s32 %s9, %s16
    %p18 = scmp.eq.s32.totalorder %s17, 0
    %s20 = sadd.s32 %s19, 1
    %s21 = scalar_select %p18, %s19, %s20
    %p24 = pneg %p18
    %p25 = scmp.eq.s32.totalorder %s9, 1
    %p26 = por %p24, %p25
    %p27 = scmp.ne.s32.totalorder %s19, %s22
    %p28 = scmp.eq.s32.totalorder %s9, 0
    %p29 = por %p27, %p28
    %p30 = scmp.ne.s32.totalorder %s19, %s22
    %p31 = scmp.eq.s32.totalorder %s14, 1
    %p32 = por %p30, %p31
    %p33 = scmp.ne.s32.totalorder %s22, %s23
    %p34 = scmp.eq.s32.totalorder %s14, 0
    %p35 = por %p33, %p34
    %p36 = scmp.ne.s32.totalorder %s22, %s23
    %p37 = scmp.eq.s32.totalorder %s15, 1
    %p38 = por %p36, %p37
    %p40 = scmp.ne.s32.totalorder %s23, %s39
    %p41 = scmp.eq.s32.totalorder %s15, 0
    %p42 = por %p40, %p41
    %s44 = sadd.s32 %s43, 1
    %p47 = scmp.eq.s32.totalorder %s9, 1
    %p48 = scmp.ne.s32.totalorder %s43, %s45
    %p49 = scmp.eq.s32.totalorder %s9, 0
    %p50 = por %p48, %p49
    %p51 = scmp.ne.s32.totalorder %s43, %s45
    %p52 = scmp.eq.s32.totalorder %s14, 1
    %p53 = por %p51, %p52
    %p54 = scmp.ne.s32.totalorder %s45, %s46
    %p55 = scmp.eq.s32.totalorder %s14, 0
    %p56 = por %p54, %p55
    %p57 = scmp.ne.s32.totalorder %s45, %s46
    %p58 = scmp.eq.s32.totalorder %s15, 1
    %p59 = por %p57, %p58
    %p61 = scmp.ne.s32.totalorder %s46, %s60
    %p62 = scmp.eq.s32.totalorder %s15, 0
    %p63 = por %p61, %p62
    %s65 = sadd.s32 %s64, 1
    %p68 = scmp.eq.s32.totalorder %s9, 1
    %p69 = scmp.ne.s32.totalorder %s64, %s66
    %p70 = scmp.eq.s32.totalorder %s9, 0
    %p71 = por %p69, %p70
    %p72 = scmp.ne.s32.totalorder %s64, %s66
    %p73 = scmp.eq.s32.totalorder %s14, 1
    %p74 = por %p72, %p73
    %p75 = scmp.ne.s32.totalorder %s66, %s67
    %p76 = scmp.eq.s32.totalorder %s14, 0
    %p77 = por %p75, %p76
    %p78 = scmp.ne.s32.totalorder %s66, %s67
    %p79 = scmp.eq.s32.totalorder %s15, 1
    %p80 = por %p78, %p79
    %p82 = scmp.ne.s32.totalorder %s67, %s81
    %p83 = scmp.eq.s32.totalorder %s15, 0
    %p84 = por %p82, %p83
    %s85 = ssub.s32 %s9, %s16
    %p86 = scmp.eq.s32.totalorder %s85, 0
    %s88 = sadd.s32 %s87, 1
    %s89 = scalar_select %p86, %s87, %s88
    %p92 = pneg %p86
    %p93 = scmp.eq.s32.totalorder %s9, 1
    %p94 = por %p92, %p93
    %p95 = scmp.ne.s32.totalorder %s87, %s90
    %p96 = scmp.eq.s32.totalorder %s9, 0
    %p97 = por %p95, %p96
    %p98 = scmp.ne.s32.totalorder %s87, %s90
    %p99 = scmp.eq.s32.totalorder %s14, 1
    %p100 = por %p98, %p99
    %p101 = scmp.ne.s32.totalorder %s90, %s91
    %p102 = scmp.eq.s32.totalorder %s14, 0
    %p103 = por %p101, %p102
    %p104 = scmp.ne.s32.totalorder %s90, %s91
    %p105 = scmp.eq.s32.totalorder %s15, 1
    %p106 = por %p104, %p105
    %p108 = scmp.ne.s32.totalorder %s91, %s107
    %p109 = scmp.eq.s32.totalorder %s15, 0
    %p110 = por %p108, %p109
    %p111 = scmp.le.s32.totalorder 1, %s9
    %p112 = scmp.lt.s32.totalorder %s9, 3
    %p113 = pnand %p111, %p112
    %p114 = pneg %p113
    // Predicated region
    $region9: #{_lambda_.21} parent=5 // pred_check
      _
    $region10: #{_lambda_.21} parent=5 // pred_check_branch
      %116 = sbr.rel (%p113) target = $region12
    $region11: #{_lambda_.21} parent=5 // pred_region
      %s117 = ssub.s32 %s9, 1
      // Predicated region
      $region13: #{_lambda_.21} parent=11 // pred_check
        %p118 = pneg %p56
      $region14: #{_lambda_.21} parent=11 // pred_check_branch
        %120 = sbr.rel (%p118) target = $region16
      $region15: #{_lambda_.21} parent=11 // pred_region
        _
      $region16: #{_lambda_.21} parent=11 // pred_fallthru
        _
      // Predicated region
      $region17: #{_lambda_.21} parent=11 // pred_check
        %p121 = pneg %p77
      $region18: #{_lambda_.21} parent=11 // pred_check_branch
        %123 = sbr.rel (%p121) target = $region20
      $region19: #{_lambda_.21} parent=11 // pred_region
        _
      $region20: #{_lambda_.21} parent=11 // pred_fallthru
        _
    $region12: #{_lambda_.21} parent=5 // pred_fallthru
      _
    %p124 = scmp.lt.s32.totalorder %s9, 2
    // Predicated region
    $region21: #{_lambda_.21} parent=5 // pred_check
      %p125 = pneg %p124
    $region22: #{_lambda_.21} parent=5 // pred_check_branch
      %127 = sbr.rel (%p125) target = $region24
    $region23: #{_lambda_.21} parent=5 // pred_region
      // Predicated region
      $region25: #{_lambda_.21} parent=23 // pred_check
        %p128 = pneg %p29
      $region26: #{_lambda_.21} parent=23 // pred_check_branch
        %130 = sbr.rel (%p128) target = $region28
      $region27: #{_lambda_.21} parent=23 // pred_region
        %s131 = smul.u32 32, %s9
        %p132 = scmp.lt.s32.totalorder %s131, 63
        %s133 = scalar_select %p132, %s131, 63
        %s134 = smul.addr %s133, 2
        %s135 = smul.addr %s134, 4
        %s136 = scalar_lea.vmem %s0, %s135
        %s137 = smul.u32 32, %s9
      $region28: #{_lambda_.21} parent=23 // pred_fallthru
        _
    $region24: #{_lambda_.21} parent=5 // pred_fallthru
      _
    %p138 = scmp.le.s32.totalorder 1, %s9
    %p139 = scmp.lt.s32.totalorder %s9, 3
    %p140 = pnand %p138, %p139
    %p141 = pneg %p140
    // Predicated region
    $region29: #{_lambda_.21} parent=5 // pred_check
      _
    $region30: #{_lambda_.21} parent=5 // pred_check_branch
      %143 = sbr.rel (%p140) target = $region32
    $region31: #{_lambda_.21} parent=5 // pred_region
      %s144 = ssub.s32 %s9, 1
      %s145 = smul.u32 32, %s14
      %p146 = scmp.lt.s32.totalorder %s145, 63
      %s147 = scalar_select %p146, %s145, 63
      %s148 = smul.addr %s147, 2
      %s149 = smul.addr %s148, 4
      %s150 = scalar_lea.vmem %s0, %s149
      %p151 = pneg %p35
      %p152 = pneg %p32
      %p153 = pneg %p56
      %p154 = pneg %p53
      %p155 = pneg %p77
      %p156 = pneg %p74
      %p157 = pneg %p103
      %p158 = pneg %p100
      %s159 = smul.u32 32, %s14
      %p160 = scmp.lt.s32.totalorder %s159, 63
      %s161 = scalar_select %p160, %s159, 63
      %s162 = smul.addr %s161, 4
      %s163 = scalar_lea.vmem %s3, %s162
      %s164 = smul.u32 32, %s14
      %p165 = scmp.lt.s32.totalorder %s164, 63
      %s166 = scalar_select %p165, %s164, 63
      %s167 = smul.addr %s166, 2
      %s168 = smul.addr %s167, 4
      %s169 = scalar_lea.vmem %s0, %s168
      %s170 = smul.u32 32, %s14
      %s171 = smul.u32 32, %s14
      %p172 = scmp.lt.s32.totalorder %s171, 63
      %s173 = scalar_select %p172, %s171, 63
      %s174 = smul.addr %s173, 4
      %s175 = scalar_lea.vmem %s3, %s174
      %s176 = smul.u32 32, %s14
      %v178 = vld [vmem:[%s169] sm:$0xff]
      %v179 = vld [vmem:[%s169 + $0x8] sm:$0xff]
      %v180 = vld [vmem:[%s169 + $0x10] sm:$0xff]
      %v181 = vld [vmem:[%s169 + $0x18] sm:$0xff]
      %v182 = vld [vmem:[%s169 + $0x20] sm:$0xff]
      %v183 = vld [vmem:[%s169 + $0x28] sm:$0xff]
      %v184 = vld [vmem:[%s169 + $0x30] sm:$0xff]
      %v185 = vld [vmem:[%s169 + $0x38] sm:$0xff]
      %v186 = vld [vmem:[%s169 + $0x40] sm:$0xff]
      %v187 = vld [vmem:[%s169 + $0x48] sm:$0xff]
      %v188 = vld [vmem:[%s169 + $0x50] sm:$0xff]
      %v189 = vld [vmem:[%s169 + $0x58] sm:$0xff]
      %v190 = vld [vmem:[%s169 + $0x60] sm:$0xff]
      %v191 = vld [vmem:[%s169 + $0x68] sm:$0xff]
      %v192 = vld [vmem:[%s169 + $0x70] sm:$0xff]
      %v193 = vld [vmem:[%s169 + $0x78] sm:$0xff]
      %v194 = vld [vmem:[%s169 + $0x80] sm:$0xff]
      %v195 = vld [vmem:[%s169 + $0x88] sm:$0xff]
      %v196 = vld [vmem:[%s169 + $0x90] sm:$0xff]
      %v197 = vld [vmem:[%s169 + $0x98] sm:$0xff]
      %v198 = vld [vmem:[%s169 + $0xa0] sm:$0xff]
      %v199 = vld [vmem:[%s169 + $0xa8] sm:$0xff]
      %v200 = vld [vmem:[%s169 + $0xb0] sm:$0xff]
      %v201 = vld [vmem:[%s169 + $0xb8] sm:$0xff]
      %v202 = vld [vmem:[%s169 + $0xc0] sm:$0xff]
      %v203 = vld [vmem:[%s169 + $0xc8] sm:$0xff]
      %v204 = vld [vmem:[%s169 + $0xd0] sm:$0xff]
      %v205 = vld [vmem:[%s169 + $0xd8] sm:$0xff]
      %v206 = vld [vmem:[%s169 + $0xe0] sm:$0xff]
      %v207 = vld [vmem:[%s169 + $0xe8] sm:$0xff]
      %v208 = vld [vmem:[%s169 + $0xf0] sm:$0xff]
      %v209 = vld [vmem:[%s169 + $0xf8] sm:$0xff]
      %v210 = vld [vmem:[%s1] sm:$0xf]
      %v211 = vld [vmem:[%s1 + $0x4] sm:$0xf]
      %v212 = vld [vmem:[%s1 + $0x8] sm:$0xf]
      %v213 = vld [vmem:[%s1 + $0xc] sm:$0xf]
      %v214 = vld [vmem:[%s1 + $0x10] sm:$0xf]
      %v215 = vld [vmem:[%s1 + $0x14] sm:$0xf]
      %v216 = vld [vmem:[%s1 + $0x18] sm:$0xf]
      %v217 = vld [vmem:[%s1 + $0x1c] sm:$0xf]
      %v218 = vld [vmem:[%s1 + $0x20] sm:$0xf]
      %v219 = vld [vmem:[%s1 + $0x24] sm:$0xf]
      %v220 = vld [vmem:[%s1 + $0x28] sm:$0xf]
      %v221 = vld [vmem:[%s1 + $0x2c] sm:$0xf]
      %v222 = vld [vmem:[%s1 + $0x30] sm:$0xf]
      %v223 = vld [vmem:[%s1 + $0x34] sm:$0xf]
      %v224 = vld [vmem:[%s1 + $0x38] sm:$0xf]
      %v225 = vld [vmem:[%s1 + $0x3c] sm:$0xf]
      %v226 = vld [vmem:[%s1 + $0x40] sm:$0xf]
      %v227 = vld [vmem:[%s1 + $0x44] sm:$0xf]
      %v228 = vld [vmem:[%s2] sm:$0x1]
      %v230 = vlaneseq
      %v231 = vshrl.u32 %v230, 7
      %v232 = vsub.s32 0, %v231
      %v233 = vrot.slane %v228, %v232
      %v267 = vunpack.c.l.b16 %v178
      %v268 = vunpack.c.h.b16 %v178
      %v269 = vunpack.c.l.b16 %v179
      %v270 = vunpack.c.h.b16 %v179
      %v271 = vunpack.c.l.b16 %v180
      %v272 = vunpack.c.h.b16 %v180
      %v273 = vunpack.c.l.b16 %v181
      %v274 = vunpack.c.h.b16 %v181
      %v275 = vunpack.c.l.b16 %v182
      %v276 = vunpack.c.h.b16 %v182
      %v277 = vunpack.c.l.b16 %v183
      %v278 = vunpack.c.h.b16 %v183
      %v279 = vunpack.c.l.b16 %v184
      %v280 = vunpack.c.h.b16 %v184
      %v281 = vunpack.c.l.b16 %v185
      %v282 = vunpack.c.h.b16 %v185
      %v283 = vunpack.c.l.b16 %v186
      %v284 = vunpack.c.h.b16 %v186
      %v285 = vunpack.c.l.b16 %v187
      %v286 = vunpack.c.h.b16 %v187
      %v287 = vunpack.c.l.b16 %v188
      %v288 = vunpack.c.h.b16 %v188
      %v289 = vunpack.c.l.b16 %v189
      %v290 = vunpack.c.h.b16 %v189
      %v291 = vunpack.c.l.b16 %v190
      %v292 = vunpack.c.h.b16 %v190
      %v293 = vunpack.c.l.b16 %v191
      %v294 = vunpack.c.h.b16 %v191
      %v295 = vunpack.c.l.b16 %v192
      %v296 = vunpack.c.h.b16 %v192
      %v297 = vunpack.c.l.b16 %v193
      %v298 = vunpack.c.h.b16 %v193
      %v299 = vunpack.c.l.b16 %v194
      %v300 = vunpack.c.h.b16 %v194
      %v301 = vunpack.c.l.b16 %v195
      %v302 = vunpack.c.h.b16 %v195
      %v303 = vunpack.c.l.b16 %v196
      %v304 = vunpack.c.h.b16 %v196
      %v305 = vunpack.c.l.b16 %v197
      %v306 = vunpack.c.h.b16 %v197
      %v307 = vunpack.c.l.b16 %v198
      %v308 = vunpack.c.h.b16 %v198
      %v309 = vunpack.c.l.b16 %v199
      %v310 = vunpack.c.h.b16 %v199
      %v311 = vunpack.c.l.b16 %v200
      %v312 = vunpack.c.h.b16 %v200
      %v313 = vunpack.c.l.b16 %v201
      %v314 = vunpack.c.h.b16 %v201
      %v315 = vunpack.c.l.b16 %v202
      %v316 = vunpack.c.h.b16 %v202
      %v317 = vunpack.c.l.b16 %v203
      %v318 = vunpack.c.h.b16 %v203
      %v319 = vunpack.c.l.b16 %v204
      %v320 = vunpack.c.h.b16 %v204
      %v321 = vunpack.c.l.b16 %v205
      %v322 = vunpack.c.h.b16 %v205
      %v323 = vunpack.c.l.b16 %v206
      %v324 = vunpack.c.h.b16 %v206
      %v325 = vunpack.c.l.b16 %v207
      %v326 = vunpack.c.h.b16 %v207
      %v327 = vunpack.c.l.b16 %v208
      %v328 = vunpack.c.h.b16 %v208
      %v329 = vunpack.c.l.b16 %v209
      %v330 = vunpack.c.h.b16 %v209
      %v331 = vpack.c.b16 %v269, %v267
      %v332 = vpack.c.b16 %v270, %v268
      %v333 = vpack.c.b16 %v273, %v271
      %v334 = vpack.c.b16 %v274, %v272
      %v335 = vpack.c.b16 %v277, %v275
      %v336 = vpack.c.b16 %v278, %v276
      %v337 = vpack.c.b16 %v281, %v279
      %v338 = vpack.c.b16 %v282, %v280
      %v339 = vpack.c.b16 %v285, %v283
      %v340 = vpack.c.b16 %v286, %v284
      %v341 = vpack.c.b16 %v289, %v287
      %v342 = vpack.c.b16 %v290, %v288
      %v343 = vpack.c.b16 %v293, %v291
      %v344 = vpack.c.b16 %v294, %v292
      %v345 = vpack.c.b16 %v297, %v295
      %v346 = vpack.c.b16 %v298, %v296
      %v347 = vpack.c.b16 %v301, %v299
      %v348 = vpack.c.b16 %v302, %v300
      %v349 = vpack.c.b16 %v305, %v303
      %v350 = vpack.c.b16 %v306, %v304
      %v351 = vpack.c.b16 %v309, %v307
      %v352 = vpack.c.b16 %v310, %v308
      %v353 = vpack.c.b16 %v313, %v311
      %v354 = vpack.c.b16 %v314, %v312
      %v355 = vpack.c.b16 %v317, %v315
      %v356 = vpack.c.b16 %v318, %v316
      %v357 = vpack.c.b16 %v321, %v319
      %v358 = vpack.c.b16 %v322, %v320
      %v359 = vpack.c.b16 %v325, %v323
      %v360 = vpack.c.b16 %v326, %v324
      %v361 = vpack.c.b16 %v329, %v327
      %v362 = vpack.c.b16 %v330, %v328
      %v397 = vunpack.c.l.b16 %v210
      %v398 = vunpack.c.l.b16 %v211
      %v399 = vunpack.c.l.b16 %v212
      %v400 = vunpack.c.l.b16 %v213
      %v401 = vunpack.c.l.b16 %v214
      %v402 = vunpack.c.l.b16 %v215
      %v403 = vunpack.c.l.b16 %v216
      %v404 = vunpack.c.l.b16 %v217
      %v405 = vunpack.c.l.b16 %v218
      %v406 = vunpack.c.l.b16 %v219
      %v407 = vunpack.c.l.b16 %v220
      %v408 = vunpack.c.l.b16 %v221
      %v409 = vunpack.c.l.b16 %v222
      %v410 = vunpack.c.l.b16 %v223
      %v411 = vunpack.c.l.b16 %v224
      %v412 = vunpack.c.l.b16 %v225
      %v413 = vunpack.c.l.b16 %v226
      %v414 = vunpack.c.l.b16 %v227
      %v415 = vpack.c.b16 %v398, %v397
      %v416 = vpack.c.b16 %v400, %v399
      %v417 = vpack.c.b16 %v402, %v401
      %v418 = vpack.c.b16 %v404, %v403
      %v419 = vpack.c.b16 %v406, %v405
      %v420 = vpack.c.b16 %v408, %v407
      %v421 = vpack.c.b16 %v410, %v409
      %v422 = vpack.c.b16 %v412, %v411
      %v423 = vpack.c.b16 %v414, %v413
      %vm433 = vcmask 130048
      %v435 = vsel %vm433, %v332, 0
      %v438 = vsel %vm433, %v334, 0
      %v441 = vsel %vm433, %v336, 0
      %v444 = vsel %vm433, %v338, 0
      %v447 = vsel %vm433, %v340, 0
      %v450 = vsel %vm433, %v342, 0
      %v453 = vsel %vm433, %v344, 0
      %v456 = vsel %vm433, %v346, 0
      %v459 = vsel %vm433, %v348, 0
      %v462 = vsel %vm433, %v350, 0
      %v465 = vsel %vm433, %v352, 0
      %v468 = vsel %vm433, %v354, 0
      %v471 = vsel %vm433, %v356, 0
      %v474 = vsel %vm433, %v358, 0
      %v477 = vsel %vm433, %v360, 0
      %v480 = vsel %vm433, %v362, 0
      %482 = vmatprep.subr.bf16.mxu0 0
      %483 = vmatpush1.bf16.msra.mxu0 %v415
      %484 = vmatprep.subr.bf16.mxu0 0
      %485 = vmatpush1.bf16.msra.mxu0 %v416
      %486 = vmatprep.subr.bf16.mxu0 0
      %487 = vmatpush1.bf16.msra.mxu0 %v417
      %488 = vmatprep.subr.bf16.mxu0 0
      %489 = vmatpush1.bf16.msra.mxu0 %v418
      %490 = vmatprep.subr.bf16.mxu0 0
      %491 = vmatpush1.bf16.msra.mxu0 %v419
      %492 = vmatprep.subr.bf16.mxu0 0
      %493 = vmatpush1.bf16.msra.mxu0 %v420
      %494 = vmatprep.subr.bf16.mxu0 0
      %495 = vmatpush1.bf16.msra.mxu0 %v421
      %496 = vmatprep.subr.bf16.mxu0 0
      %497 = vmatpush1.bf16.msra.mxu0 %v422
      %498 = vmatprep.subr.bf16.mxu0 0
      %499 = vmatpush1.bf16.msra.mxu0 %v423
      %500 = vmatprep.subr.bf16.mxu0 0
      %501 = vmatpush1.bf16.msra.mxu0 0
      %502 = vmatprep.subr.bf16.mxu0 0
      %503 = vmatpush1.bf16.msra.mxu0 0
      %504 = vmatprep.subr.bf16.mxu0 0
      %505 = vmatpush1.bf16.msra.mxu0 0
      %506 = vmatprep.subr.bf16.mxu0 0
      %507 = vmatpush1.bf16.msra.mxu0 0
      %508 = vmatprep.subr.bf16.mxu0 0
      %509 = vmatpush1.bf16.msra.mxu0 0
      %510 = vmatprep.subr.bf16.mxu0 0
      %511 = vmatpush1.bf16.msra.mxu0 0
      %512 = vmatprep.subr.bf16.mxu0 0
      %513 = vmatpush1.bf16.msra.mxu0 0
      %514 = vmatprep.mubr.bf16.mxu0 %v435
      %515 = vmatmul.mubr.bf16.gmra.mrb[0].mxu0 %v331
      %v516 = vpop.f32.mrb[0].mxu0
      %v517 = vadd.f32 %v233, %v516
      %v518 = vpop.f32.mrb[0].mxu0
      %v519 = vpop.f32.mrb[0].mxu0
      %v520 = vadd.f32 %v233, %v519
      %v521 = vpop.f32.mrb[0].mxu0
      %522 = vmatprep.mubr.bf16.mxu0 %v438
      %523 = vmatmul.mubr.bf16.gmra.mrb[0].mxu0 %v333
      %v524 = vpop.f32.mrb[0].mxu0
      %v525 = vadd.f32 %v233, %v524
      %v526 = vpop.f32.mrb[0].mxu0
      %v527 = vpop.f32.mrb[0].mxu0
      %v528 = vadd.f32 %v233, %v527
      %v529 = vpop.f32.mrb[0].mxu0
      %530 = vmatprep.mubr.bf16.mxu0 %v441
      %531 = vmatmul.mubr.bf16.gmra.mrb[0].mxu0 %v335
      %v532 = vpop.f32.mrb[0].mxu0
      %v533 = vadd.f32 %v233, %v532
      %v534 = vpop.f32.mrb[0].mxu0
      %v535 = vpop.f32.mrb[0].mxu0
      %v536 = vadd.f32 %v233, %v535
      %v537 = vpop.f32.mrb[0].mxu0
      %538 = vmatprep.mubr.bf16.mxu0 %v444
      %539 = vmatmul.mubr.bf16.gmra.mrb[0].mxu0 %v337
      %v540 = vpop.f32.mrb[0].mxu0
      %v541 = vadd.f32 %v233, %v540
      %v542 = vpop.f32.mrb[0].mxu0
      %v543 = vpop.f32.mrb[0].mxu0
      %v544 = vadd.f32 %v233, %v543
      %v545 = vpop.f32.mrb[0].mxu0
      %546 = vmatprep.mubr.bf16.mxu0 %v447
      %547 = vmatmul.mubr.bf16.gmra.mrb[0].mxu0 %v339
      %v548 = vpop.f32.mrb[0].mxu0
      %v549 = vadd.f32 %v233, %v548
      %v550 = vpop.f32.mrb[0].mxu0
      %v551 = vpop.f32.mrb[0].mxu0
      %v552 = vadd.f32 %v233, %v551
      %v553 = vpop.f32.mrb[0].mxu0
      %554 = vmatprep.mubr.bf16.mxu0 %v450
      %555 = vmatmul.mubr.bf16.gmra.mrb[0].mxu0 %v341
      %v556 = vpop.f32.mrb[0].mxu0
      %v557 = vadd.f32 %v233, %v556
      %v558 = vpop.f32.mrb[0].mxu0
      %v559 = vpop.f32.mrb[0].mxu0
      %v560 = vadd.f32 %v233, %v559
      %v561 = vpop.f32.mrb[0].mxu0
      %562 = vmatprep.mubr.bf16.mxu0 %v453
      %563 = vmatmul.mubr.bf16.gmra.mrb[0].mxu0 %v343
      %v564 = vpop.f32.mrb[0].mxu0
      %v565 = vadd.f32 %v233, %v564
      %v566 = vpop.f32.mrb[0].mxu0
      %v567 = vpop.f32.mrb[0].mxu0
      %v568 = vadd.f32 %v233, %v567
      %v569 = vpop.f32.mrb[0].mxu0
      %570 = vmatprep.mubr.bf16.mxu0 %v456
      %571 = vmatmul.mubr.bf16.gmra.mrb[0].mxu0 %v345
      %v572 = vpop.f32.mrb[0].mxu0
      %v573 = vadd.f32 %v233, %v572
      %v574 = vpop.f32.mrb[0].mxu0
      %v575 = vpop.f32.mrb[0].mxu0
      %v576 = vadd.f32 %v233, %v575
      %v577 = vpop.f32.mrb[0].mxu0
      %578 = vmatprep.mubr.bf16.mxu0 %v459
      %579 = vmatmul.mubr.bf16.gmra.mrb[0].mxu0 %v347
      %v580 = vpop.f32.mrb[0].mxu0
      %v581 = vadd.f32 %v233, %v580
      %v582 = vpop.f32.mrb[0].mxu0
      %v583 = vpop.f32.mrb[0].mxu0
      %v584 = vadd.f32 %v233, %v583
      %v585 = vpop.f32.mrb[0].mxu0
      %586 = vmatprep.mubr.bf16.mxu0 %v462
      %587 = vmatmul.mubr.bf16.gmra.mrb[0].mxu0 %v349
      %v588 = vpop.f32.mrb[0].mxu0
      %v589 = vadd.f32 %v233, %v588
      %v590 = vpop.f32.mrb[0].mxu0
      %v591 = vpop.f32.mrb[0].mxu0
      %v592 = vadd.f32 %v233, %v591
      %v593 = vpop.f32.mrb[0].mxu0
      %594 = vmatprep.mubr.bf16.mxu0 %v465
      %595 = vmatmul.mubr.bf16.gmra.mrb[0].mxu0 %v351
      %v596 = vpop.f32.mrb[0].mxu0
      %v597 = vadd.f32 %v233, %v596
      %v598 = vpop.f32.mrb[0].mxu0
      %v599 = vpop.f32.mrb[0].mxu0
      %v600 = vadd.f32 %v233, %v599
      %v601 = vpop.f32.mrb[0].mxu0
      %602 = vmatprep.mubr.bf16.mxu0 %v468
      %603 = vmatmul.mubr.bf16.gmra.mrb[0].mxu0 %v353
      %v604 = vpop.f32.mrb[0].mxu0
      %v605 = vadd.f32 %v233, %v604
      %v606 = vpop.f32.mrb[0].mxu0
      %v607 = vpop.f32.mrb[0].mxu0
      %v608 = vadd.f32 %v233, %v607
      %v609 = vpop.f32.mrb[0].mxu0
      %610 = vmatprep.mubr.bf16.mxu0 %v471
      %611 = vmatmul.mubr.bf16.gmra.mrb[0].mxu0 %v355
      %v612 = vpop.f32.mrb[0].mxu0
      %v613 = vadd.f32 %v233, %v612
      %v614 = vpop.f32.mrb[0].mxu0
      %v615 = vpop.f32.mrb[0].mxu0
      %v616 = vadd.f32 %v233, %v615
      %v617 = vpop.f32.mrb[0].mxu0
      %618 = vmatprep.mubr.bf16.mxu0 %v474
      %619 = vmatmul.mubr.bf16.gmra.mrb[0].mxu0 %v357
      %v620 = vpop.f32.mrb[0].mxu0
      %v621 = vadd.f32 %v233, %v620
      %v622 = vpop.f32.mrb[0].mxu0
      %v623 = vpop.f32.mrb[0].mxu0
      %v624 = vadd.f32 %v233, %v623
      %v625 = vpop.f32.mrb[0].mxu0
      %626 = vmatprep.mubr.bf16.mxu0 %v477
      %627 = vmatmul.mubr.bf16.gmra.mrb[0].mxu0 %v359
      %v628 = vpop.f32.mrb[0].mxu0
      %v629 = vadd.f32 %v233, %v628
      %v630 = vpop.f32.mrb[0].mxu0
      %v631 = vpop.f32.mrb[0].mxu0
      %v632 = vadd.f32 %v233, %v631
      %v633 = vpop.f32.mrb[0].mxu0
      %634 = vmatprep.mubr.bf16.mxu0 %v480
      %635 = vmatmul.mubr.bf16.gmra.mrb[0].mxu0 %v361
      %v636 = vpop.f32.mrb[0].mxu0
      %v637 = vadd.f32 %v233, %v636
      %v638 = vpop.f32.mrb[0].mxu0
      %v639 = vpop.f32.mrb[0].mxu0
      %v640 = vadd.f32 %v233, %v639
      %v641 = vpop.f32.mrb[0].mxu0
      %642 = vdwg.mxu0
      %v643 = vmax.f32 %v517, 0.0
      %v644 = vmax.f32 %v520, 0.0
      %v645 = vmax.f32 %v525, 0.0
      %v646 = vmax.f32 %v528, 0.0
      %v647 = vmax.f32 %v533, 0.0
      %v648 = vmax.f32 %v536, 0.0
      %v649 = vmax.f32 %v541, 0.0
      %v650 = vmax.f32 %v544, 0.0
      %v651 = vmax.f32 %v549, 0.0
      %v652 = vmax.f32 %v552, 0.0
      %v653 = vmax.f32 %v557, 0.0
      %v654 = vmax.f32 %v560, 0.0
      %v655 = vmax.f32 %v565, 0.0
      %v656 = vmax.f32 %v568, 0.0
      %v657 = vmax.f32 %v573, 0.0
      %v658 = vmax.f32 %v576, 0.0
      %v659 = vmax.f32 %v581, 0.0
      %v660 = vmax.f32 %v584, 0.0
      %v661 = vmax.f32 %v589, 0.0
      %v662 = vmax.f32 %v592, 0.0
      %v663 = vmax.f32 %v597, 0.0
      %v664 = vmax.f32 %v600, 0.0
      %v665 = vmax.f32 %v605, 0.0
      %v666 = vmax.f32 %v608, 0.0
      %v667 = vmax.f32 %v613, 0.0
      %v668 = vmax.f32 %v616, 0.0
      %v669 = vmax.f32 %v621, 0.0
      %v670 = vmax.f32 %v624, 0.0
      %v671 = vmax.f32 %v629, 0.0
      %v672 = vmax.f32 %v632, 0.0
      %v673 = vmax.f32 %v637, 0.0
      %v674 = vmax.f32 %v640, 0.0
      %v675 = vpack.c.bf16 %v644, %v643
      %v676 = vpack.c.bf16 %v646, %v645
      %v677 = vpack.c.bf16 %v648, %v647
      %v678 = vpack.c.bf16 %v650, %v649
      %v679 = vpack.c.bf16 %v652, %v651
      %v680 = vpack.c.bf16 %v654, %v653
      %v681 = vpack.c.bf16 %v656, %v655
      %v682 = vpack.c.bf16 %v658, %v657
      %v683 = vpack.c.bf16 %v660, %v659
      %v684 = vpack.c.bf16 %v662, %v661
      %v685 = vpack.c.bf16 %v664, %v663
      %v686 = vpack.c.bf16 %v666, %v665
      %v687 = vpack.c.bf16 %v668, %v667
      %v688 = vpack.c.bf16 %v670, %v669
      %v689 = vpack.c.bf16 %v672, %v671
      %v690 = vpack.c.bf16 %v674, %v673
      %v707 = vunpack.c.l.b16 %v675
      %v708 = vunpack.c.h.b16 %v675
      %v709 = vunpack.c.l.b16 %v676
      %v710 = vunpack.c.h.b16 %v676
      %v711 = vunpack.c.l.b16 %v677
      %v712 = vunpack.c.h.b16 %v677
      %v713 = vunpack.c.l.b16 %v678
      %v714 = vunpack.c.h.b16 %v678
      %v715 = vunpack.c.l.b16 %v679
      %v716 = vunpack.c.h.b16 %v679
      %v717 = vunpack.c.l.b16 %v680
      %v718 = vunpack.c.h.b16 %v680
      %v719 = vunpack.c.l.b16 %v681
      %v720 = vunpack.c.h.b16 %v681
      %v721 = vunpack.c.l.b16 %v682
      %v722 = vunpack.c.h.b16 %v682
      %v723 = vunpack.c.l.b16 %v683
      %v724 = vunpack.c.h.b16 %v683
      %v725 = vunpack.c.l.b16 %v684
      %v726 = vunpack.c.h.b16 %v684
      %v727 = vunpack.c.l.b16 %v685
      %v728 = vunpack.c.h.b16 %v685
      %v729 = vunpack.c.l.b16 %v686
      %v730 = vunpack.c.h.b16 %v686
      %v731 = vunpack.c.l.b16 %v687
      %v732 = vunpack.c.h.b16 %v687
      %v733 = vunpack.c.l.b16 %v688
      %v734 = vunpack.c.h.b16 %v688
      %v735 = vunpack.c.l.b16 %v689
      %v736 = vunpack.c.h.b16 %v689
      %v737 = vunpack.c.l.b16 %v690
      %v738 = vunpack.c.h.b16 %v690
      %v739 = vpack.c.b16 %v707, %v707
      %v740 = vpack.c.b16 %v708, %v708
      %v741 = vpack.c.b16 %v709, %v709
      %v742 = vpack.c.b16 %v710, %v710
      %v743 = vpack.c.b16 %v711, %v711
      %v744 = vpack.c.b16 %v712, %v712
      %v745 = vpack.c.b16 %v713, %v713
      %v746 = vpack.c.b16 %v714, %v714
      %v747 = vpack.c.b16 %v715, %v715
      %v748 = vpack.c.b16 %v716, %v716
      %v749 = vpack.c.b16 %v717, %v717
      %v750 = vpack.c.b16 %v718, %v718
      %v751 = vpack.c.b16 %v719, %v719
      %v752 = vpack.c.b16 %v720, %v720
      %v753 = vpack.c.b16 %v721, %v721
      %v754 = vpack.c.b16 %v722, %v722
      %v755 = vpack.c.b16 %v723, %v723
      %v756 = vpack.c.b16 %v724, %v724
      %v757 = vpack.c.b16 %v725, %v725
      %v758 = vpack.c.b16 %v726, %v726
      %v759 = vpack.c.b16 %v727, %v727
      %v760 = vpack.c.b16 %v728, %v728
      %v761 = vpack.c.b16 %v729, %v729
      %v762 = vpack.c.b16 %v730, %v730
      %v763 = vpack.c.b16 %v731, %v731
      %v764 = vpack.c.b16 %v732, %v732
      %v765 = vpack.c.b16 %v733, %v733
      %v766 = vpack.c.b16 %v734, %v734
      %v767 = vpack.c.b16 %v735, %v735
      %v768 = vpack.c.b16 %v736, %v736
      %v769 = vpack.c.b16 %v737, %v737
      %v770 = vpack.c.b16 %v738, %v738
      %vm803 = vcmask 125952
      %804 = vst.msk [vmem:[%s175] sm:$0xf] %vm803, %v739
      %805 = vst.msk [vmem:[%s175 + $0x4] sm:$0xf] %vm803, %v740
      %806 = vst.msk [vmem:[%s175 + $0x8] sm:$0xf] %vm803, %v741
      %807 = vst.msk [vmem:[%s175 + $0xc] sm:$0xf] %vm803, %v742
      %808 = vst.msk [vmem:[%s175 + $0x10] sm:$0xf] %vm803, %v743
      %809 = vst.msk [vmem:[%s175 + $0x14] sm:$0xf] %vm803, %v744
      %810 = vst.msk [vmem:[%s175 + $0x18] sm:$0xf] %vm803, %v745
      %811 = vst.msk [vmem:[%s175 + $0x1c] sm:$0xf] %vm803, %v746
      %812 = vst.msk [vmem:[%s175 + $0x20] sm:$0xf] %vm803, %v747
      %813 = vst.msk [vmem:[%s175 + $0x24] sm:$0xf] %vm803, %v748
      %814 = vst.msk [vmem:[%s175 + $0x28] sm:$0xf] %vm803, %v749
      %815 = vst.msk [vmem:[%s175 + $0x2c] sm:$0xf] %vm803, %v750
      %816 = vst.msk [vmem:[%s175 + $0x30] sm:$0xf] %vm803, %v751
      %817 = vst.msk [vmem:[%s175 + $0x34] sm:$0xf] %vm803, %v752
      %818 = vst.msk [vmem:[%s175 + $0x38] sm:$0xf] %vm803, %v753
      %819 = vst.msk [vmem:[%s175 + $0x3c] sm:$0xf] %vm803, %v754
      %820 = vst.msk [vmem:[%s175 + $0x40] sm:$0xf] %vm803, %v755
      %821 = vst.msk [vmem:[%s175 + $0x44] sm:$0xf] %vm803, %v756
      %822 = vst.msk [vmem:[%s175 + $0x48] sm:$0xf] %vm803, %v757
      %823 = vst.msk [vmem:[%s175 + $0x4c] sm:$0xf] %vm803, %v758
      %824 = vst.msk [vmem:[%s175 + $0x50] sm:$0xf] %vm803, %v759
      %825 = vst.msk [vmem:[%s175 + $0x54] sm:$0xf] %vm803, %v760
      %826 = vst.msk [vmem:[%s175 + $0x58] sm:$0xf] %vm803, %v761
      %827 = vst.msk [vmem:[%s175 + $0x5c] sm:$0xf] %vm803, %v762
      %828 = vst.msk [vmem:[%s175 + $0x60] sm:$0xf] %vm803, %v763
      %829 = vst.msk [vmem:[%s175 + $0x64] sm:$0xf] %vm803, %v764
      %830 = vst.msk [vmem:[%s175 + $0x68] sm:$0xf] %vm803, %v765
      %831 = vst.msk [vmem:[%s175 + $0x6c] sm:$0xf] %vm803, %v766
      %832 = vst.msk [vmem:[%s175 + $0x70] sm:$0xf] %vm803, %v767
      %833 = vst.msk [vmem:[%s175 + $0x74] sm:$0xf] %vm803, %v768
      %834 = vst.msk [vmem:[%s175 + $0x78] sm:$0xf] %vm803, %v769
      %835 = vst.msk [vmem:[%s175 + $0x7c] sm:$0xf] %vm803, %v770
      %s836 = smul.u32 32, %s14
      %p837 = scmp.lt.s32.totalorder %s836, 63
      %s838 = scalar_select %p837, %s836, 63
      %s839 = smul.addr %s838, 4
      %s840 = scalar_lea.vmem %s3, %s839
      // Predicated region
      $region33: #{_lambda_.21} parent=31 // pred_check
        %p841 = pneg %p100
      $region34: #{_lambda_.21} parent=31 // pred_check_branch
        %843 = sbr.rel (%p841) target = $region36
      $region35: #{_lambda_.21} parent=31 // pred_region
        %s844 = smul.u32 32, %s14
      $region36: #{_lambda_.21} parent=31 // pred_fallthru
        _
    $region32: #{_lambda_.21} parent=5 // pred_fallthru
      _
    %p845 = scmp.le.s32.totalorder 2, %s9
    // Predicated region
    $region37: #{_lambda_.21} parent=5 // pred_check
      %p846 = pneg %p845
    $region38: #{_lambda_.21} parent=5 // pred_check_branch
      %848 = sbr.rel (%p846) target = $region40
    $region39: #{_lambda_.21} parent=5 // pred_region
      %s849 = ssub.s32 %s9, 2
      // Predicated region
      $region41: #{_lambda_.21} parent=39 // pred_check
        %p850 = pneg %p106
      $region42: #{_lambda_.21} parent=39 // pred_check_branch
        %852 = sbr.rel (%p850) target = $region44
      $region43: #{_lambda_.21} parent=39 // pred_region
        %s853 = smul.u32 32, %s15
        %p854 = scmp.lt.s32.totalorder %s853, 63
        %s855 = scalar_select %p854, %s853, 63
        %s856 = smul.addr %s855, 4
        %s857 = scalar_lea.vmem %s3, %s856
      $region44: #{_lambda_.21} parent=39 // pred_fallthru
        _
    $region40: #{_lambda_.21} parent=5 // pred_fallthru
      _
  $region6: #{_lambda_.21} parent=0 // loop_footer
    %s13 = sadd.s32 1, %s9
  $region7: #{_lambda_.21} parent=0 // loop_footer_branch
    %8 = sbr.rel target = $region3
  $region8: #{_lambda_.21} parent=0 // loop_exit
    _

// kernel: _lambda_.22
$region0: #{_lambda_.22}
  #allocation0 [shape = 'u32[]', space=smem, size = 0x4, offset = 0x4, fixed_abs, tag = 'smem constant byte address 0x4 - core index']
  #allocation1 [shape = 'u32[144,128]{1,0:T(1,128)}', space=vmem, size = 0x12000, scoped, tag = 'internal scratch']
  %s0 = inlined_call_operand.vmem [shape: bf16[512,16], index: 0, kind: input, shape index: {}]
  %s1 = inlined_call_operand.vmem [shape: bf16[16,32], index: 1, kind: input, shape index: {}]
  %s2 = inlined_call_operand.vmem [shape: bf16[512,16], index: 2, kind: input, shape index: {}]
  %s3 = inlined_call_operand.vmem [shape: bf16[16,32], index: 3, kind: input, shape index: {}]
  %s4 = inlined_call_operand.vmem [shape: f32[1,32], index: 4, kind: input, shape index: {}]
  %s5 = inlined_call_operand.vmem [shape: bf16[512,32], index: 5, kind: output, shape index: {}]
  %s6 = sld [smem:[#allocation0]]
  $region53: #{_lambda_.22} parent=0
    _
  %s8 = ssub.s32 1, %s6
  %s9 = scalar_select 0, %s8, %s6
  loop: start=0, step=1, limit=4
  $region2: #{_lambda_.22} parent=0 // loop_pre_header
    _
  $region3: #{_lambda_.22} parent=0 // loop_header
    %s11 = sphi 0, %s15
    %p12 = scmp.ge.s32.totalorder %s11, 4
    %s21 = sphi 0, %s23
    %s24 = sphi 0, %s21
    %s25 = sphi 0, %s24
    %s41 = sphi 0, %s25
    %s45 = sphi 0, %s45
    %s47 = sphi 0, %s45
    %s48 = sphi 0, %s47
    %s62 = sphi 0, %s48
    %s68 = sphi 0, %s70
    %s71 = sphi 0, %s68
    %s72 = sphi 0, %s71
    %s88 = sphi 0, %s72
    %s92 = sphi 0, %s92
    %s94 = sphi 0, %s92
    %s95 = sphi 0, %s94
    %s109 = sphi 0, %s95
    %s113 = sphi 0, %s113
    %s115 = sphi 0, %s113
    %s116 = sphi 0, %s115
    %s130 = sphi 0, %s116
    %s136 = sphi 0, %s138
    %s139 = sphi 0, %s136
    %s140 = sphi 0, %s139
    %s156 = sphi 0, %s140
  $region4: #{_lambda_.22} parent=0 // loop_header_branch
    %14 = sbr.rel (%p12) target = $region8
  $region5: #{_lambda_.22} parent=0 // loop_body
    %s16 = ssub.s32 %s11, 1
    %s17 = ssub.s32 %s11, 2
    %s18 = sadd.s32 %s11, 1
    %s19 = ssub.s32 %s11, %s18
    %p20 = scmp.eq.s32.totalorder %s19, 0
    %s22 = sadd.s32 %s21, 1
    %s23 = scalar_select %p20, %s21, %s22
    %p26 = pneg %p20
    %p27 = scmp.eq.s32.totalorder %s11, 1
    %p28 = por %p26, %p27
    %p29 = scmp.ne.s32.totalorder %s21, %s24
    %p30 = scmp.eq.s32.totalorder %s11, 0
    %p31 = por %p29, %p30
    %p32 = scmp.ne.s32.totalorder %s21, %s24
    %p33 = scmp.eq.s32.totalorder %s16, 1
    %p34 = por %p32, %p33
    %p35 = scmp.ne.s32.totalorder %s24, %s25
    %p36 = scmp.eq.s32.totalorder %s16, 0
    %p37 = por %p35, %p36
    %p38 = scmp.ne.s32.totalorder %s24, %s25
    %p39 = scmp.eq.s32.totalorder %s17, 1
    %p40 = por %p38, %p39
    %p42 = scmp.ne.s32.totalorder %s25, %s41
    %p43 = scmp.eq.s32.totalorder %s17, 0
    %p44 = por %p42, %p43
    %s46 = sadd.s32 %s45, 1
    %p49 = scmp.eq.s32.totalorder %s11, 1
    %p50 = scmp.ne.s32.totalorder %s45, %s47
    %p51 = scmp.eq.s32.totalorder %s11, 0
    %p52 = por %p50, %p51
    %p53 = scmp.ne.s32.totalorder %s45, %s47
    %p54 = scmp.eq.s32.totalorder %s16, 1
    %p55 = por %p53, %p54
    %p56 = scmp.ne.s32.totalorder %s47, %s48
    %p57 = scmp.eq.s32.totalorder %s16, 0
    %p58 = por %p56, %p57
    %p59 = scmp.ne.s32.totalorder %s47, %s48
    %p60 = scmp.eq.s32.totalorder %s17, 1
    %p61 = por %p59, %p60
    %p63 = scmp.ne.s32.totalorder %s48, %s62
    %p64 = scmp.eq.s32.totalorder %s17, 0
    %p65 = por %p63, %p64
    %s66 = ssub.s32 %s11, %s18
    %p67 = scmp.eq.s32.totalorder %s66, 0
    %s69 = sadd.s32 %s68, 1
    %s70 = scalar_select %p67, %s68, %s69
    %p73 = pneg %p67
    %p74 = scmp.eq.s32.totalorder %s11, 1
    %p75 = por %p73, %p74
    %p76 = scmp.ne.s32.totalorder %s68, %s71
    %p77 = scmp.eq.s32.totalorder %s11, 0
    %p78 = por %p76, %p77
    %p79 = scmp.ne.s32.totalorder %s68, %s71
    %p80 = scmp.eq.s32.totalorder %s16, 1
    %p81 = por %p79, %p80
    %p82 = scmp.ne.s32.totalorder %s71, %s72
    %p83 = scmp.eq.s32.totalorder %s16, 0
    %p84 = por %p82, %p83
    %p85 = scmp.ne.s32.totalorder %s71, %s72
    %p86 = scmp.eq.s32.totalorder %s17, 1
    %p87 = por %p85, %p86
    %p89 = scmp.ne.s32.totalorder %s72, %s88
    %p90 = scmp.eq.s32.totalorder %s17, 0
    %p91 = por %p89, %p90
    %s93 = sadd.s32 %s92, 1
    %p96 = scmp.eq.s32.totalorder %s11, 1
    %p97 = scmp.ne.s32.totalorder %s92, %s94
    %p98 = scmp.eq.s32.totalorder %s11, 0
    %p99 = por %p97, %p98
    %p100 = scmp.ne.s32.totalorder %s92, %s94
    %p101 = scmp.eq.s32.totalorder %s16, 1
    %p102 = por %p100, %p101
    %p103 = scmp.ne.s32.totalorder %s94, %s95
    %p104 = scmp.eq.s32.totalorder %s16, 0
    %p105 = por %p103, %p104
    %p106 = scmp.ne.s32.totalorder %s94, %s95
    %p107 = scmp.eq.s32.totalorder %s17, 1
    %p108 = por %p106, %p107
    %p110 = scmp.ne.s32.totalorder %s95, %s109
    %p111 = scmp.eq.s32.totalorder %s17, 0
    %p112 = por %p110, %p111
    %s114 = sadd.s32 %s113, 1
    %p117 = scmp.eq.s32.totalorder %s11, 1
    %p118 = scmp.ne.s32.totalorder %s113, %s115
    %p119 = scmp.eq.s32.totalorder %s11, 0
    %p120 = por %p118, %p119
    %p121 = scmp.ne.s32.totalorder %s113, %s115
    %p122 = scmp.eq.s32.totalorder %s16, 1
    %p123 = por %p121, %p122
    %p124 = scmp.ne.s32.totalorder %s115, %s116
    %p125 = scmp.eq.s32.totalorder %s16, 0
    %p126 = por %p124, %p125
    %p127 = scmp.ne.s32.totalorder %s115, %s116
    %p128 = scmp.eq.s32.totalorder %s17, 1
    %p129 = por %p127, %p128
    %p131 = scmp.ne.s32.totalorder %s116, %s130
    %p132 = scmp.eq.s32.totalorder %s17, 0
    %p133 = por %p131, %p132
    %s134 = ssub.s32 %s11, %s18
    %p135 = scmp.eq.s32.totalorder %s134, 0
    %s137 = sadd.s32 %s136, 1
    %s138 = scalar_select %p135, %s136, %s137
    %p141 = pneg %p135
    %p142 = scmp.eq.s32.totalorder %s11, 1
    %p143 = por %p141, %p142
    %p144 = scmp.ne.s32.totalorder %s136, %s139
    %p145 = scmp.eq.s32.totalorder %s11, 0
    %p146 = por %p144, %p145
    %p147 = scmp.ne.s32.totalorder %s136, %s139
    %p148 = scmp.eq.s32.totalorder %s16, 1
    %p149 = por %p147, %p148
    %p150 = scmp.ne.s32.totalorder %s139, %s140
    %p151 = scmp.eq.s32.totalorder %s16, 0
    %p152 = por %p150, %p151
    %p153 = scmp.ne.s32.totalorder %s139, %s140
    %p154 = scmp.eq.s32.totalorder %s17, 1
    %p155 = por %p153, %p154
    %p157 = scmp.ne.s32.totalorder %s140, %s156
    %p158 = scmp.eq.s32.totalorder %s17, 0
    %p159 = por %p157, %p158
    %p160 = scmp.le.s32.totalorder 1, %s11
    %p161 = scmp.lt.s32.totalorder %s11, 3
    %p162 = pnand %p160, %p161
    %p163 = pneg %p162
    // Predicated region
    $region9: #{_lambda_.22} parent=5 // pred_check
      _
    $region10: #{_lambda_.22} parent=5 // pred_check_branch
      %165 = sbr.rel (%p162) target = $region12
    $region11: #{_lambda_.22} parent=5 // pred_region
      %s166 = ssub.s32 %s11, 1
      // Predicated region
      $region13: #{_lambda_.22} parent=11 // pred_check
        %p167 = pneg %p58
      $region14: #{_lambda_.22} parent=11 // pred_check_branch
        %169 = sbr.rel (%p167) target = $region16
      $region15: #{_lambda_.22} parent=11 // pred_region
        _
      $region16: #{_lambda_.22} parent=11 // pred_fallthru
        _
      // Predicated region
      $region17: #{_lambda_.22} parent=11 // pred_check
        %p170 = pneg %p105
      $region18: #{_lambda_.22} parent=11 // pred_check_branch
        %172 = sbr.rel (%p170) target = $region20
      $region19: #{_lambda_.22} parent=11 // pred_region
        _
      $region20: #{_lambda_.22} parent=11 // pred_fallthru
        _
      // Predicated region
      $region21: #{_lambda_.22} parent=11 // pred_check
        %p173 = pneg %p126
      $region22: #{_lambda_.22} parent=11 // pred_check_branch
        %175 = sbr.rel (%p173) target = $region24
      $region23: #{_lambda_.22} parent=11 // pred_region
        _
      $region24: #{_lambda_.22} parent=11 // pred_fallthru
        _
    $region12: #{_lambda_.22} parent=5 // pred_fallthru
      _
    %p176 = scmp.lt.s32.totalorder %s11, 2
    // Predicated region
    $region25: #{_lambda_.22} parent=5 // pred_check
      %p177 = pneg %p176
    $region26: #{_lambda_.22} parent=5 // pred_check_branch
      %179 = sbr.rel (%p177) target = $region28
    $region27: #{_lambda_.22} parent=5 // pred_region
      // Predicated region
      $region29: #{_lambda_.22} parent=27 // pred_check
        %p180 = pneg %p31
      $region30: #{_lambda_.22} parent=27 // pred_check_branch
        %182 = sbr.rel (%p180) target = $region32
      $region31: #{_lambda_.22} parent=27 // pred_region
        %s183 = smul.u32 32, %s11
        %p184 = scmp.lt.s32.totalorder %s183, 63
        %s185 = scalar_select %p184, %s183, 63
        %s186 = smul.addr %s185, 4
        %s187 = scalar_lea.vmem %s0, %s186
        %s188 = smul.u32 32, %s11
      $region32: #{_lambda_.22} parent=27 // pred_fallthru
        _
      // Predicated region
      $region33: #{_lambda_.22} parent=27 // pred_check
        %p189 = pneg %p78
      $region34: #{_lambda_.22} parent=27 // pred_check_branch
        %191 = sbr.rel (%p189) target = $region36
      $region35: #{_lambda_.22} parent=27 // pred_region
        %s192 = smul.u32 32, %s11
        %p193 = scmp.lt.s32.totalorder %s192, 63
        %s194 = scalar_select %p193, %s192, 63
        %s195 = smul.addr %s194, 4
        %s196 = scalar_lea.vmem %s2, %s195
        %s197 = smul.u32 32, %s11
      $region36: #{_lambda_.22} parent=27 // pred_fallthru
        _
    $region28: #{_lambda_.22} parent=5 // pred_fallthru
      _
    %p198 = scmp.le.s32.totalorder 1, %s11
    %p199 = scmp.lt.s32.totalorder %s11, 3
    %p200 = pnand %p198, %p199
    %p201 = pneg %p200
    // Predicated region
    $region37: #{_lambda_.22} parent=5 // pred_check
      _
    $region38: #{_lambda_.22} parent=5 // pred_check_branch
      %203 = sbr.rel (%p200) target = $region40
    $region39: #{_lambda_.22} parent=5 // pred_region
      %s204 = ssub.s32 %s11, 1
      %s205 = smul.u32 32, %s16
      %p206 = scmp.lt.s32.totalorder %s205, 63
      %s207 = scalar_select %p206, %s205, 63
      %s208 = smul.addr %s207, 4
      %s209 = scalar_lea.vmem %s0, %s208
      %p210 = pneg %p37
      %p211 = pneg %p34
      %p212 = pneg %p58
      %p213 = pneg %p55
      %s214 = smul.u32 32, %s16
      %p215 = scmp.lt.s32.totalorder %s214, 63
      %s216 = scalar_select %p215, %s214, 63
      %s217 = smul.addr %s216, 4
      %s218 = scalar_lea.vmem %s2, %s217
      %p219 = pneg %p84
      %p220 = pneg %p81
      %p221 = pneg %p105
      %p222 = pneg %p102
      %p223 = pneg %p126
      %p224 = pneg %p123
      %p225 = pneg %p152
      %p226 = pneg %p149
      %s227 = smul.u32 32, %s16
      %p228 = scmp.lt.s32.totalorder %s227, 63
      %s229 = scalar_select %p228, %s227, 63
      %s230 = smul.addr %s229, 4
      %s231 = scalar_lea.vmem %s5, %s230
      %s232 = smul.u32 32, %s16
      %p233 = scmp.lt.s32.totalorder %s232, 63
      %s234 = scalar_select %p233, %s232, 63
      %s235 = smul.addr %s234, 4
      %s236 = scalar_lea.vmem %s0, %s235
      %s237 = smul.u32 32, %s16
      %s238 = smul.u32 32, %s16
      %p239 = scmp.lt.s32.totalorder %s238, 63
      %s240 = scalar_select %p239, %s238, 63
      %s241 = smul.addr %s240, 4
      %s242 = scalar_lea.vmem %s2, %s241
      %s243 = smul.u32 32, %s16
      %s244 = smul.u32 32, %s16
      %p245 = scmp.lt.s32.totalorder %s244, 63
      %s246 = scalar_select %p245, %s244, 63
      %s247 = smul.addr %s246, 4
      %s248 = scalar_lea.vmem %s5, %s247
      %s249 = smul.u32 32, %s16
      %v251 = vld [vmem:[%s236] sm:$0xf]
      %v252 = vld [vmem:[%s236 + $0x4] sm:$0xf]
      %v253 = vld [vmem:[%s236 + $0x8] sm:$0xf]
      %v254 = vld [vmem:[%s236 + $0xc] sm:$0xf]
      %v255 = vld [vmem:[%s236 + $0x10] sm:$0xf]
      %v256 = vld [vmem:[%s236 + $0x14] sm:$0xf]
      %v257 = vld [vmem:[%s236 + $0x18] sm:$0xf]
      %v258 = vld [vmem:[%s236 + $0x1c] sm:$0xf]
      %v259 = vld [vmem:[%s236 + $0x20] sm:$0xf]
      %v260 = vld [vmem:[%s236 + $0x24] sm:$0xf]
      %v261 = vld [vmem:[%s236 + $0x28] sm:$0xf]
      %v262 = vld [vmem:[%s236 + $0x2c] sm:$0xf]
      %v263 = vld [vmem:[%s236 + $0x30] sm:$0xf]
      %v264 = vld [vmem:[%s236 + $0x34] sm:$0xf]
      %v265 = vld [vmem:[%s236 + $0x38] sm:$0xf]
      %v266 = vld [vmem:[%s236 + $0x3c] sm:$0xf]
      %v267 = vld [vmem:[%s236 + $0x40] sm:$0xf]
      %v268 = vld [vmem:[%s236 + $0x44] sm:$0xf]
      %v269 = vld [vmem:[%s236 + $0x48] sm:$0xf]
      %v270 = vld [vmem:[%s236 + $0x4c] sm:$0xf]
      %v271 = vld [vmem:[%s236 + $0x50] sm:$0xf]
      %v272 = vld [vmem:[%s236 + $0x54] sm:$0xf]
      %v273 = vld [vmem:[%s236 + $0x58] sm:$0xf]
      %v274 = vld [vmem:[%s236 + $0x5c] sm:$0xf]
      %v275 = vld [vmem:[%s236 + $0x60] sm:$0xf]
      %v276 = vld [vmem:[%s236 + $0x64] sm:$0xf]
      %v277 = vld [vmem:[%s236 + $0x68] sm:$0xf]
      %v278 = vld [vmem:[%s236 + $0x6c] sm:$0xf]
      %v279 = vld [vmem:[%s236 + $0x70] sm:$0xf]
      %v280 = vld [vmem:[%s236 + $0x74] sm:$0xf]
      %v281 = vld [vmem:[%s236 + $0x78] sm:$0xf]
      %v282 = vld [vmem:[%s236 + $0x7c] sm:$0xf]
      %v283 = vld [vmem:[%s1] sm:$0xf]
      %v284 = vld [vmem:[%s1 + $0x4] sm:$0xf]
      %v285 = vld [vmem:[%s242] sm:$0xf]
      %v286 = vld [vmem:[%s242 + $0x4] sm:$0xf]
      %v287 = vld [vmem:[%s242 + $0x8] sm:$0xf]
      %v288 = vld [vmem:[%s242 + $0xc] sm:$0xf]
      %v289 = vld [vmem:[%s242 + $0x10] sm:$0xf]
      %v290 = vld [vmem:[%s242 + $0x14] sm:$0xf]
      %v291 = vld [vmem:[%s242 + $0x18] sm:$0xf]
      %v292 = vld [vmem:[%s242 + $0x1c] sm:$0xf]
      %v293 = vld [vmem:[%s242 + $0x20] sm:$0xf]
      %v294 = vld [vmem:[%s242 + $0x24] sm:$0xf]
      %v295 = vld [vmem:[%s242 + $0x28] sm:$0xf]
      %v296 = vld [vmem:[%s242 + $0x2c] sm:$0xf]
      %v297 = vld [vmem:[%s242 + $0x30] sm:$0xf]
      %v298 = vld [vmem:[%s242 + $0x34] sm:$0xf]
      %v299 = vld [vmem:[%s242 + $0x38] sm:$0xf]
      %v300 = vld [vmem:[%s242 + $0x3c] sm:$0xf]
      %v301 = vld [vmem:[%s242 + $0x40] sm:$0xf]
      %v302 = vld [vmem:[%s242 + $0x44] sm:$0xf]
      %v303 = vld [vmem:[%s242 + $0x48] sm:$0xf]
      %v304 = vld [vmem:[%s242 + $0x4c] sm:$0xf]
      %v305 = vld [vmem:[%s242 + $0x50] sm:$0xf]
      %v306 = vld [vmem:[%s242 + $0x54] sm:$0xf]
      %v307 = vld [vmem:[%s242 + $0x58] sm:$0xf]
      %v308 = vld [vmem:[%s242 + $0x5c] sm:$0xf]
      %v309 = vld [vmem:[%s242 + $0x60] sm:$0xf]
      %v310 = vld [vmem:[%s242 + $0x64] sm:$0xf]
      %v311 = vld [vmem:[%s242 + $0x68] sm:$0xf]
      %v312 = vld [vmem:[%s242 + $0x6c] sm:$0xf]
      %v313 = vld [vmem:[%s242 + $0x70] sm:$0xf]
      %v314 = vld [vmem:[%s242 + $0x74] sm:$0xf]
      %v315 = vld [vmem:[%s242 + $0x78] sm:$0xf]
      %v316 = vld [vmem:[%s242 + $0x7c] sm:$0xf]
      %v317 = vld [vmem:[%s3] sm:$0xf]
      %v318 = vld [vmem:[%s3 + $0x4] sm:$0xf]
      %v351 = vunpack.c.l.b16 %v285
      %v352 = vunpack.c.l.b16 %v286
      %v353 = vunpack.c.l.b16 %v287
      %v354 = vunpack.c.l.b16 %v288
      %v355 = vunpack.c.l.b16 %v289
      %v356 = vunpack.c.l.b16 %v290
      %v357 = vunpack.c.l.b16 %v291
      %v358 = vunpack.c.l.b16 %v292
      %v359 = vunpack.c.l.b16 %v293
      %v360 = vunpack.c.l.b16 %v294
      %v361 = vunpack.c.l.b16 %v295
      %v362 = vunpack.c.l.b16 %v296
      %v363 = vunpack.c.l.b16 %v297
      %v364 = vunpack.c.l.b16 %v298
      %v365 = vunpack.c.l.b16 %v299
      %v366 = vunpack.c.l.b16 %v300
      %v367 = vunpack.c.l.b16 %v301
      %v368 = vunpack.c.l.b16 %v302
      %v369 = vunpack.c.l.b16 %v303
      %v370 = vunpack.c.l.b16 %v304
      %v371 = vunpack.c.l.b16 %v305
      %v372 = vunpack.c.l.b16 %v306
      %v373 = vunpack.c.l.b16 %v307
      %v374 = vunpack.c.l.b16 %v308
      %v375 = vunpack.c.l.b16 %v309
      %v376 = vunpack.c.l.b16 %v310
      %v377 = vunpack.c.l.b16 %v311
      %v378 = vunpack.c.l.b16 %v312
      %v379 = vunpack.c.l.b16 %v313
      %v380 = vunpack.c.l.b16 %v314
      %v381 = vunpack.c.l.b16 %v315
      %v382 = vunpack.c.l.b16 %v316
      %v383 = vpack.c.b16 %v352, %v351
      %v384 = vpack.c.b16 %v354, %v353
      %v385 = vpack.c.b16 %v356, %v355
      %v386 = vpack.c.b16 %v358, %v357
      %v387 = vpack.c.b16 %v360, %v359
      %v388 = vpack.c.b16 %v362, %v361
      %v389 = vpack.c.b16 %v364, %v363
      %v390 = vpack.c.b16 %v366, %v365
      %v391 = vpack.c.b16 %v368, %v367
      %v392 = vpack.c.b16 %v370, %v369
      %v393 = vpack.c.b16 %v372, %v371
      %v394 = vpack.c.b16 %v374, %v373
      %v395 = vpack.c.b16 %v376, %v375
      %v396 = vpack.c.b16 %v378, %v377
      %v397 = vpack.c.b16 %v380, %v379
      %v398 = vpack.c.b16 %v382, %v381
      %v401 = vunpack.c.l.b16 %v317
      %v402 = vunpack.c.l.b16 %v318
      %v403 = vpack.c.b16 %v402, %v401
      %vm405 = vcmask 130048
      %v407 = vsel %vm405, %v383, 0
      %v410 = vsel %vm405, %v384, 0
      %v413 = vsel %vm405, %v385, 0
      %v416 = vsel %vm405, %v386, 0
      %v419 = vsel %vm405, %v387, 0
      %v422 = vsel %vm405, %v388, 0
      %v425 = vsel %vm405, %v389, 0
      %v428 = vsel %vm405, %v390, 0
      %v431 = vsel %vm405, %v391, 0
      %v434 = vsel %vm405, %v392, 0
      %v437 = vsel %vm405, %v393, 0
      %v440 = vsel %vm405, %v394, 0
      %v443 = vsel %vm405, %v395, 0
      %v446 = vsel %vm405, %v396, 0
      %v449 = vsel %vm405, %v397, 0
      %v452 = vsel %vm405, %v398, 0
      %454 = vmatprep.subr.bf16.mxu0 0
      %455 = vmatpush1.bf16.msra.mxu0 %v403
      %456 = vmatprep.subr.bf16.mxu0 0
      %457 = vmatpush1.bf16.msra.mxu0 0
      %458 = vmatprep.subr.bf16.mxu0 0
      %459 = vmatpush1.bf16.msra.mxu0 0
      %460 = vmatprep.subr.bf16.mxu0 0
      %461 = vmatpush1.bf16.msra.mxu0 0
      %462 = vmatprep.subr.bf16.mxu0 0
      %463 = vmatpush1.bf16.msra.mxu0 0
      %464 = vmatprep.subr.bf16.mxu0 0
      %465 = vmatpush1.bf16.msra.mxu0 0
      %466 = vmatprep.subr.bf16.mxu0 0
      %467 = vmatpush1.bf16.msra.mxu0 0
      %468 = vmatprep.subr.bf16.mxu0 0
      %469 = vmatpush1.bf16.msra.mxu0 0
      %470 = vmatprep.subr.bf16.mxu0 0
      %471 = vmatpush1.bf16.msra.mxu0 0
      %472 = vmatprep.subr.bf16.mxu0 0
      %473 = vmatpush1.bf16.msra.mxu0 0
      %474 = vmatprep.subr.bf16.mxu0 0
      %475 = vmatpush1.bf16.msra.mxu0 0
      %476 = vmatprep.subr.bf16.mxu0 0
      %477 = vmatpush1.bf16.msra.mxu0 0
      %478 = vmatprep.subr.bf16.mxu0 0
      %479 = vmatpush1.bf16.msra.mxu0 0
      %480 = vmatprep.subr.bf16.mxu0 0
      %481 = vmatpush1.bf16.msra.mxu0 0
      %482 = vmatprep.subr.bf16.mxu0 0
      %483 = vmatpush1.bf16.msra.mxu0 0
      %484 = vmatprep.subr.bf16.mxu0 0
      %485 = vmatpush1.bf16.msra.mxu0 0
      %486 = vmatprep.mubr.bf16.mxu0 0
      %487 = vmatmul.mubr.bf16.gmra.mrb[0].mxu0 %v407
      %v488 = vpop.f32.mrb[0].mxu0
      %v489 = vadd.f32 0.0, %v488
      %v490 = vpop.f32.mrb[0].mxu0
      %v491 = vpop.f32.mrb[0].mxu0
      %v492 = vadd.f32 0.0, %v491
      %v493 = vpop.f32.mrb[0].mxu0
      %494 = vmatprep.mubr.bf16.mxu0 0
      %495 = vmatmul.mubr.bf16.gmra.mrb[0].mxu0 %v410
      %v496 = vpop.f32.mrb[0].mxu0
      %v497 = vadd.f32 0.0, %v496
      %v498 = vpop.f32.mrb[0].mxu0
      %v499 = vpop.f32.mrb[0].mxu0
      %v500 = vadd.f32 0.0, %v499
      %v501 = vpop.f32.mrb[0].mxu0
      %502 = vmatprep.mubr.bf16.mxu0 0
      %503 = vmatmul.mubr.bf16.gmra.mrb[0].mxu0 %v413
      %v504 = vpop.f32.mrb[0].mxu0
      %v505 = vadd.f32 0.0, %v504
      %v506 = vpop.f32.mrb[0].mxu0
      %v507 = vpop.f32.mrb[0].mxu0
      %v508 = vadd.f32 0.0, %v507
      %v509 = vpop.f32.mrb[0].mxu0
      %510 = vmatprep.mubr.bf16.mxu0 0
      %511 = vmatmul.mubr.bf16.gmra.mrb[0].mxu0 %v416
      %v512 = vpop.f32.mrb[0].mxu0
      %v513 = vadd.f32 0.0, %v512
      %v514 = vpop.f32.mrb[0].mxu0
      %v515 = vpop.f32.mrb[0].mxu0
      %v516 = vadd.f32 0.0, %v515
      %v517 = vpop.f32.mrb[0].mxu0
      %518 = vmatprep.mubr.bf16.mxu0 0
      %519 = vmatmul.mubr.bf16.gmra.mrb[0].mxu0 %v419
      %v520 = vpop.f32.mrb[0].mxu0
      %v521 = vadd.f32 0.0, %v520
      %v522 = vpop.f32.mrb[0].mxu0
      %v523 = vpop.f32.mrb[0].mxu0
      %v524 = vadd.f32 0.0, %v523
      %v525 = vpop.f32.mrb[0].mxu0
      %526 = vmatprep.mubr.bf16.mxu0 0
      %527 = vmatmul.mubr.bf16.gmra.mrb[0].mxu0 %v422
      %v528 = vpop.f32.mrb[0].mxu0
      %v529 = vadd.f32 0.0, %v528
      %v530 = vpop.f32.mrb[0].mxu0
      %v531 = vpop.f32.mrb[0].mxu0
      %v532 = vadd.f32 0.0, %v531
      %v533 = vpop.f32.mrb[0].mxu0
      %534 = vmatprep.mubr.bf16.mxu0 0
      %535 = vmatmul.mubr.bf16.gmra.mrb[0].mxu0 %v425
      %v536 = vpop.f32.mrb[0].mxu0
      %v537 = vadd.f32 0.0, %v536
      %v538 = vpop.f32.mrb[0].mxu0
      %v539 = vpop.f32.mrb[0].mxu0
      %v540 = vadd.f32 0.0, %v539
      %v541 = vpop.f32.mrb[0].mxu0
      %542 = vmatprep.mubr.bf16.mxu0 0
      %543 = vmatmul.mubr.bf16.gmra.mrb[0].mxu0 %v428
      %v544 = vpop.f32.mrb[0].mxu0
      %v545 = vadd.f32 0.0, %v544
      %v546 = vpop.f32.mrb[0].mxu0
      %v547 = vpop.f32.mrb[0].mxu0
      %v548 = vadd.f32 0.0, %v547
      %v549 = vpop.f32.mrb[0].mxu0
      %550 = vmatprep.mubr.bf16.mxu0 0
      %551 = vmatmul.mubr.bf16.gmra.mrb[0].mxu0 %v431
      %v552 = vpop.f32.mrb[0].mxu0
      %v553 = vadd.f32 0.0, %v552
      %v554 = vpop.f32.mrb[0].mxu0
      %v555 = vpop.f32.mrb[0].mxu0
      %v556 = vadd.f32 0.0, %v555
      %v557 = vpop.f32.mrb[0].mxu0
      %558 = vmatprep.mubr.bf16.mxu0 0
      %559 = vmatmul.mubr.bf16.gmra.mrb[0].mxu0 %v434
      %v560 = vpop.f32.mrb[0].mxu0
      %v561 = vadd.f32 0.0, %v560
      %v562 = vpop.f32.mrb[0].mxu0
      %v563 = vpop.f32.mrb[0].mxu0
      %v564 = vadd.f32 0.0, %v563
      %v565 = vpop.f32.mrb[0].mxu0
      %566 = vmatprep.mubr.bf16.mxu0 0
      %567 = vmatmul.mubr.bf16.gmra.mrb[0].mxu0 %v437
      %v568 = vpop.f32.mrb[0].mxu0
      %v569 = vadd.f32 0.0, %v568
      %v570 = vpop.f32.mrb[0].mxu0
      %v571 = vpop.f32.mrb[0].mxu0
      %v572 = vadd.f32 0.0, %v571
      %v573 = vpop.f32.mrb[0].mxu0
      %574 = vmatprep.mubr.bf16.mxu0 0
      %575 = vmatmul.mubr.bf16.gmra.mrb[0].mxu0 %v440
      %v576 = vpop.f32.mrb[0].mxu0
      %v577 = vadd.f32 0.0, %v576
      %v578 = vpop.f32.mrb[0].mxu0
      %v579 = vpop.f32.mrb[0].mxu0
      %v580 = vadd.f32 0.0, %v579
      %v581 = vpop.f32.mrb[0].mxu0
      %582 = vmatprep.mubr.bf16.mxu0 0
      %583 = vmatmul.mubr.bf16.gmra.mrb[0].mxu0 %v443
      %v584 = vpop.f32.mrb[0].mxu0
      %v585 = vadd.f32 0.0, %v584
      %v586 = vpop.f32.mrb[0].mxu0
      %v587 = vpop.f32.mrb[0].mxu0
      %v588 = vadd.f32 0.0, %v587
      %v589 = vpop.f32.mrb[0].mxu0
      %590 = vmatprep.mubr.bf16.mxu0 0
      %591 = vmatmul.mubr.bf16.gmra.mrb[0].mxu0 %v446
      %v592 = vpop.f32.mrb[0].mxu0
      %v593 = vadd.f32 0.0, %v592
      %v594 = vpop.f32.mrb[0].mxu0
      %v595 = vpop.f32.mrb[0].mxu0
      %v596 = vadd.f32 0.0, %v595
      %v597 = vpop.f32.mrb[0].mxu0
      %598 = vmatprep.mubr.bf16.mxu0 0
      %599 = vmatmul.mubr.bf16.gmra.mrb[0].mxu0 %v449
      %v600 = vpop.f32.mrb[0].mxu0
      %v601 = vadd.f32 0.0, %v600
      %v602 = vpop.f32.mrb[0].mxu0
      %v603 = vpop.f32.mrb[0].mxu0
      %v604 = vadd.f32 0.0, %v603
      %v605 = vpop.f32.mrb[0].mxu0
      %606 = vmatprep.mubr.bf16.mxu0 0
      %607 = vmatmul.mubr.bf16.gmra.mrb[0].mxu0 %v452
      %v608 = vpop.f32.mrb[0].mxu0
      %v609 = vadd.f32 0.0, %v608
      %v610 = vpop.f32.mrb[0].mxu0
      %v611 = vpop.f32.mrb[0].mxu0
      %v612 = vadd.f32 0.0, %v611
      %v613 = vpop.f32.mrb[0].mxu0
      %614 = vdwg.mxu0
      %v647 = vunpack.c.l.b16 %v251
      %v648 = vunpack.c.l.b16 %v252
      %v649 = vunpack.c.l.b16 %v253
      %v650 = vunpack.c.l.b16 %v254
      %v651 = vunpack.c.l.b16 %v255
      %v652 = vunpack.c.l.b16 %v256
      %v653 = vunpack.c.l.b16 %v257
      %v654 = vunpack.c.l.b16 %v258
      %v655 = vunpack.c.l.b16 %v259
      %v656 = vunpack.c.l.b16 %v260
      %v657 = vunpack.c.l.b16 %v261
      %v658 = vunpack.c.l.b16 %v262
      %v659 = vunpack.c.l.b16 %v263
      %v660 = vunpack.c.l.b16 %v264
      %v661 = vunpack.c.l.b16 %v265
      %v662 = vunpack.c.l.b16 %v266
      %v663 = vunpack.c.l.b16 %v267
      %v664 = vunpack.c.l.b16 %v268
      %v665 = vunpack.c.l.b16 %v269
      %v666 = vunpack.c.l.b16 %v270
      %v667 = vunpack.c.l.b16 %v271
      %v668 = vunpack.c.l.b16 %v272
      %v669 = vunpack.c.l.b16 %v273
      %v670 = vunpack.c.l.b16 %v274
      %v671 = vunpack.c.l.b16 %v275
      %v672 = vunpack.c.l.b16 %v276
      %v673 = vunpack.c.l.b16 %v277
      %v674 = vunpack.c.l.b16 %v278
      %v675 = vunpack.c.l.b16 %v279
      %v676 = vunpack.c.l.b16 %v280
      %v677 = vunpack.c.l.b16 %v281
      %v678 = vunpack.c.l.b16 %v282
      %v679 = vpack.c.b16 %v648, %v647
      %v680 = vpack.c.b16 %v650, %v649
      %v681 = vpack.c.b16 %v652, %v651
      %v682 = vpack.c.b16 %v654, %v653
      %v683 = vpack.c.b16 %v656, %v655
      %v684 = vpack.c.b16 %v658, %v657
      %v685 = vpack.c.b16 %v660, %v659
      %v686 = vpack.c.b16 %v662, %v661
      %v687 = vpack.c.b16 %v664, %v663
      %v688 = vpack.c.b16 %v666, %v665
      %v689 = vpack.c.b16 %v668, %v667
      %v690 = vpack.c.b16 %v670, %v669
      %v691 = vpack.c.b16 %v672, %v671
      %v692 = vpack.c.b16 %v674, %v673
      %v693 = vpack.c.b16 %v676, %v675
      %v694 = vpack.c.b16 %v678, %v677
      %v697 = vunpack.c.l.b16 %v283
      %v698 = vunpack.c.l.b16 %v284
      %v699 = vpack.c.b16 %v698, %v697
      %v702 = vsel %vm405, %v679, 0
      %v705 = vsel %vm405, %v680, 0
      %v708 = vsel %vm405, %v681, 0
      %v711 = vsel %vm405, %v682, 0
      %v714 = vsel %vm405, %v683, 0
      %v717 = vsel %vm405, %v684, 0
      %v720 = vsel %vm405, %v685, 0
      %v723 = vsel %vm405, %v686, 0
      %v726 = vsel %vm405, %v687, 0
      %v729 = vsel %vm405, %v688, 0
      %v732 = vsel %vm405, %v689, 0
      %v735 = vsel %vm405, %v690, 0
      %v738 = vsel %vm405, %v691, 0
      %v741 = vsel %vm405, %v692, 0
      %v744 = vsel %vm405, %v693, 0
      %v747 = vsel %vm405, %v694, 0
      %749 = vmatprep.subr.bf16.mxu0 0
      %750 = vmatpush1.bf16.msra.mxu0 %v699
      %751 = vmatprep.subr.bf16.mxu0 0
      %752 = vmatpush1.bf16.msra.mxu0 0
      %753 = vmatprep.subr.bf16.mxu0 0
      %754 = vmatpush1.bf16.msra.mxu0 0
      %755 = vmatprep.subr.bf16.mxu0 0
      %756 = vmatpush1.bf16.msra.mxu0 0
      %757 = vmatprep.subr.bf16.mxu0 0
      %758 = vmatpush1.bf16.msra.mxu0 0
      %759 = vmatprep.subr.bf16.mxu0 0
      %760 = vmatpush1.bf16.msra.mxu0 0
      %761 = vmatprep.subr.bf16.mxu0 0
      %762 = vmatpush1.bf16.msra.mxu0 0
      %763 = vmatprep.subr.bf16.mxu0 0
      %764 = vmatpush1.bf16.msra.mxu0 0
      %765 = vmatprep.subr.bf16.mxu0 0
      %766 = vmatpush1.bf16.msra.mxu0 0
      %767 = vmatprep.subr.bf16.mxu0 0
      %768 = vmatpush1.bf16.msra.mxu0 0
      %769 = vmatprep.subr.bf16.mxu0 0
      %770 = vmatpush1.bf16.msra.mxu0 0
      %771 = vmatprep.subr.bf16.mxu0 0
      %772 = vmatpush1.bf16.msra.mxu0 0
      %773 = vmatprep.subr.bf16.mxu0 0
      %774 = vmatpush1.bf16.msra.mxu0 0
      %775 = vmatprep.subr.bf16.mxu0 0
      %776 = vmatpush1.bf16.msra.mxu0 0
      %777 = vmatprep.subr.bf16.mxu0 0
      %778 = vmatpush1.bf16.msra.mxu0 0
      %779 = vmatprep.subr.bf16.mxu0 0
      %780 = vmatpush1.bf16.msra.mxu0 0
      %781 = vmatprep.mubr.bf16.mxu0 0
      %782 = vmatmul.mubr.bf16.gmra.mrb[0].mxu0 %v702
      %v783 = vpop.f32.mrb[0].mxu0
      %v784 = vadd.f32 %v489, %v783
      %v785 = vpop.f32.mrb[0].mxu0
      %v786 = vpop.f32.mrb[0].mxu0
      %v787 = vadd.f32 %v492, %v786
      %v788 = vpop.f32.mrb[0].mxu0
      %789 = vmatprep.mubr.bf16.mxu0 0
      %790 = vmatmul.mubr.bf16.gmra.mrb[0].mxu0 %v705
      %v791 = vpop.f32.mrb[0].mxu0
      %v792 = vadd.f32 %v497, %v791
      %v793 = vpop.f32.mrb[0].mxu0
      %v794 = vpop.f32.mrb[0].mxu0
      %v795 = vadd.f32 %v500, %v794
      %v796 = vpop.f32.mrb[0].mxu0
      %797 = vmatprep.mubr.bf16.mxu0 0
      %798 = vmatmul.mubr.bf16.gmra.mrb[0].mxu0 %v708
      %v799 = vpop.f32.mrb[0].mxu0
      %v800 = vadd.f32 %v505, %v799
      %v801 = vpop.f32.mrb[0].mxu0
      %v802 = vpop.f32.mrb[0].mxu0
      %v803 = vadd.f32 %v508, %v802
      %v804 = vpop.f32.mrb[0].mxu0
      %805 = vmatprep.mubr.bf16.mxu0 0
      %806 = vmatmul.mubr.bf16.gmra.mrb[0].mxu0 %v711
      %v807 = vpop.f32.mrb[0].mxu0
      %v808 = vadd.f32 %v513, %v807
      %v809 = vpop.f32.mrb[0].mxu0
      %v810 = vpop.f32.mrb[0].mxu0
      %v811 = vadd.f32 %v516, %v810
      %v812 = vpop.f32.mrb[0].mxu0
      %813 = vmatprep.mubr.bf16.mxu0 0
      %814 = vmatmul.mubr.bf16.gmra.mrb[0].mxu0 %v714
      %v815 = vpop.f32.mrb[0].mxu0
      %v816 = vadd.f32 %v521, %v815
      %v817 = vpop.f32.mrb[0].mxu0
      %v818 = vpop.f32.mrb[0].mxu0
      %v819 = vadd.f32 %v524, %v818
      %v820 = vpop.f32.mrb[0].mxu0
      %821 = vmatprep.mubr.bf16.mxu0 0
      %822 = vmatmul.mubr.bf16.gmra.mrb[0].mxu0 %v717
      %v823 = vpop.f32.mrb[0].mxu0
      %v824 = vadd.f32 %v529, %v823
      %v825 = vpop.f32.mrb[0].mxu0
      %v826 = vpop.f32.mrb[0].mxu0
      %v827 = vadd.f32 %v532, %v826
      %v828 = vpop.f32.mrb[0].mxu0
      %829 = vmatprep.mubr.bf16.mxu0 0
      %830 = vmatmul.mubr.bf16.gmra.mrb[0].mxu0 %v720
      %v831 = vpop.f32.mrb[0].mxu0
      %v832 = vadd.f32 %v537, %v831
      %v833 = vpop.f32.mrb[0].mxu0
      %v834 = vpop.f32.mrb[0].mxu0
      %v835 = vadd.f32 %v540, %v834
      %v836 = vpop.f32.mrb[0].mxu0
      %837 = vmatprep.mubr.bf16.mxu0 0
      %838 = vmatmul.mubr.bf16.gmra.mrb[0].mxu0 %v723
      %v839 = vpop.f32.mrb[0].mxu0
      %v840 = vadd.f32 %v545, %v839
      %v841 = vpop.f32.mrb[0].mxu0
      %v842 = vpop.f32.mrb[0].mxu0
      %v843 = vadd.f32 %v548, %v842
      %v844 = vpop.f32.mrb[0].mxu0
      %845 = vmatprep.mubr.bf16.mxu0 0
      %846 = vmatmul.mubr.bf16.gmra.mrb[0].mxu0 %v726
      %v847 = vpop.f32.mrb[0].mxu0
      %v848 = vadd.f32 %v553, %v847
      %v849 = vpop.f32.mrb[0].mxu0
      %v850 = vpop.f32.mrb[0].mxu0
      %v851 = vadd.f32 %v556, %v850
      %v852 = vpop.f32.mrb[0].mxu0
      %853 = vmatprep.mubr.bf16.mxu0 0
      %854 = vmatmul.mubr.bf16.gmra.mrb[0].mxu0 %v729
      %v855 = vpop.f32.mrb[0].mxu0
      %v856 = vadd.f32 %v561, %v855
      %v857 = vpop.f32.mrb[0].mxu0
      %v858 = vpop.f32.mrb[0].mxu0
      %v859 = vadd.f32 %v564, %v858
      %v860 = vpop.f32.mrb[0].mxu0
      %861 = vmatprep.mubr.bf16.mxu0 0
      %862 = vmatmul.mubr.bf16.gmra.mrb[0].mxu0 %v732
      %v863 = vpop.f32.mrb[0].mxu0
      %v864 = vadd.f32 %v569, %v863
      %v865 = vpop.f32.mrb[0].mxu0
      %v866 = vpop.f32.mrb[0].mxu0
      %v867 = vadd.f32 %v572, %v866
      %v868 = vpop.f32.mrb[0].mxu0
      %869 = vmatprep.mubr.bf16.mxu0 0
      %870 = vmatmul.mubr.bf16.gmra.mrb[0].mxu0 %v735
      %v871 = vpop.f32.mrb[0].mxu0
      %v872 = vadd.f32 %v577, %v871
      %v873 = vpop.f32.mrb[0].mxu0
      %v874 = vpop.f32.mrb[0].mxu0
      %v875 = vadd.f32 %v580, %v874
      %v876 = vpop.f32.mrb[0].mxu0
      %877 = vmatprep.mubr.bf16.mxu0 0
      %878 = vmatmul.mubr.bf16.gmra.mrb[0].mxu0 %v738
      %v879 = vpop.f32.mrb[0].mxu0
      %v880 = vadd.f32 %v585, %v879
      %v881 = vpop.f32.mrb[0].mxu0
      %v882 = vpop.f32.mrb[0].mxu0
      %v883 = vadd.f32 %v588, %v882
      %v884 = vpop.f32.mrb[0].mxu0
      %885 = vmatprep.mubr.bf16.mxu0 0
      %886 = vmatmul.mubr.bf16.gmra.mrb[0].mxu0 %v741
      %v887 = vpop.f32.mrb[0].mxu0
      %v888 = vadd.f32 %v593, %v887
      %v889 = vpop.f32.mrb[0].mxu0
      %v890 = vpop.f32.mrb[0].mxu0
      %v891 = vadd.f32 %v596, %v890
      %v892 = vpop.f32.mrb[0].mxu0
      %893 = vmatprep.mubr.bf16.mxu0 0
      %894 = vmatmul.mubr.bf16.gmra.mrb[0].mxu0 %v744
      %v895 = vpop.f32.mrb[0].mxu0
      %v896 = vadd.f32 %v601, %v895
      %v897 = vpop.f32.mrb[0].mxu0
      %v898 = vpop.f32.mrb[0].mxu0
      %v899 = vadd.f32 %v604, %v898
      %v900 = vpop.f32.mrb[0].mxu0
      %901 = vmatprep.mubr.bf16.mxu0 0
      %902 = vmatmul.mubr.bf16.gmra.mrb[0].mxu0 %v747
      %v903 = vpop.f32.mrb[0].mxu0
      %v904 = vadd.f32 %v609, %v903
      %v905 = vpop.f32.mrb[0].mxu0
      %v906 = vpop.f32.mrb[0].mxu0
      %v907 = vadd.f32 %v612, %v906
      %v908 = vpop.f32.mrb[0].mxu0
      %909 = vdwg.mxu0
      %v910 = vld [vmem:[%s4] sm:$0x1]
      %v912 = vlaneseq
      %v913 = vshrl.u32 %v912, 7
      %v914 = vsub.s32 0, %v913
      %v915 = vrot.slane %v910, %v914
      %v917 = vadd.f32 %v784, %v915
      %v918 = vadd.f32 %v787, %v915
      %v919 = vadd.f32 %v792, %v915
      %v920 = vadd.f32 %v795, %v915
      %v921 = vadd.f32 %v800, %v915
      %v922 = vadd.f32 %v803, %v915
      %v923 = vadd.f32 %v808, %v915
      %v924 = vadd.f32 %v811, %v915
      %v925 = vadd.f32 %v816, %v915
      %v926 = vadd.f32 %v819, %v915
      %v927 = vadd.f32 %v824, %v915
      %v928 = vadd.f32 %v827, %v915
      %v929 = vadd.f32 %v832, %v915
      %v930 = vadd.f32 %v835, %v915
      %v931 = vadd.f32 %v840, %v915
      %v932 = vadd.f32 %v843, %v915
      %v933 = vadd.f32 %v848, %v915
      %v934 = vadd.f32 %v851, %v915
      %v935 = vadd.f32 %v856, %v915
      %v936 = vadd.f32 %v859, %v915
      %v937 = vadd.f32 %v864, %v915
      %v938 = vadd.f32 %v867, %v915
      %v939 = vadd.f32 %v872, %v915
      %v940 = vadd.f32 %v875, %v915
      %v941 = vadd.f32 %v880, %v915
      %v942 = vadd.f32 %v883, %v915
      %v943 = vadd.f32 %v888, %v915
      %v944 = vadd.f32 %v891, %v915
      %v945 = vadd.f32 %v896, %v915
      %v946 = vadd.f32 %v899, %v915
      %v947 = vadd.f32 %v904, %v915
      %v948 = vadd.f32 %v907, %v915
      %v949 = vmax.f32 %v917, 0.0
      %v950 = vmax.f32 %v918, 0.0
      %v951 = vmax.f32 %v919, 0.0
      %v952 = vmax.f32 %v920, 0.0
      %v953 = vmax.f32 %v921, 0.0
      %v954 = vmax.f32 %v922, 0.0
      %v955 = vmax.f32 %v923, 0.0
      %v956 = vmax.f32 %v924, 0.0
      %v957 = vmax.f32 %v925, 0.0
      %v958 = vmax.f32 %v926, 0.0
      %v959 = vmax.f32 %v927, 0.0
      %v960 = vmax.f32 %v928, 0.0
      %v961 = vmax.f32 %v929, 0.0
      %v962 = vmax.f32 %v930, 0.0
      %v963 = vmax.f32 %v931, 0.0
      %v964 = vmax.f32 %v932, 0.0
      %v965 = vmax.f32 %v933, 0.0
      %v966 = vmax.f32 %v934, 0.0
      %v967 = vmax.f32 %v935, 0.0
      %v968 = vmax.f32 %v936, 0.0
      %v969 = vmax.f32 %v937, 0.0
      %v970 = vmax.f32 %v938, 0.0
      %v971 = vmax.f32 %v939, 0.0
      %v972 = vmax.f32 %v940, 0.0
      %v973 = vmax.f32 %v941, 0.0
      %v974 = vmax.f32 %v942, 0.0
      %v975 = vmax.f32 %v943, 0.0
      %v976 = vmax.f32 %v944, 0.0
      %v977 = vmax.f32 %v945, 0.0
      %v978 = vmax.f32 %v946, 0.0
      %v979 = vmax.f32 %v947, 0.0
      %v980 = vmax.f32 %v948, 0.0
      %v981 = vpack.c.bf16 %v950, %v949
      %v982 = vpack.c.bf16 %v952, %v951
      %v983 = vpack.c.bf16 %v954, %v953
      %v984 = vpack.c.bf16 %v956, %v955
      %v985 = vpack.c.bf16 %v958, %v957
      %v986 = vpack.c.bf16 %v960, %v959
      %v987 = vpack.c.bf16 %v962, %v961
      %v988 = vpack.c.bf16 %v964, %v963
      %v989 = vpack.c.bf16 %v966, %v965
      %v990 = vpack.c.bf16 %v968, %v967
      %v991 = vpack.c.bf16 %v970, %v969
      %v992 = vpack.c.bf16 %v972, %v971
      %v993 = vpack.c.bf16 %v974, %v973
      %v994 = vpack.c.bf16 %v976, %v975
      %v995 = vpack.c.bf16 %v978, %v977
      %v996 = vpack.c.bf16 %v980, %v979
      %v1013 = vunpack.c.l.b16 %v981
      %v1014 = vunpack.c.h.b16 %v981
      %v1015 = vunpack.c.l.b16 %v982
      %v1016 = vunpack.c.h.b16 %v982
      %v1017 = vunpack.c.l.b16 %v983
      %v1018 = vunpack.c.h.b16 %v983
      %v1019 = vunpack.c.l.b16 %v984
      %v1020 = vunpack.c.h.b16 %v984
      %v1021 = vunpack.c.l.b16 %v985
      %v1022 = vunpack.c.h.b16 %v985
      %v1023 = vunpack.c.l.b16 %v986
      %v1024 = vunpack.c.h.b16 %v986
      %v1025 = vunpack.c.l.b16 %v987
      %v1026 = vunpack.c.h.b16 %v987
      %v1027 = vunpack.c.l.b16 %v988
      %v1028 = vunpack.c.h.b16 %v988
      %v1029 = vunpack.c.l.b16 %v989
      %v1030 = vunpack.c.h.b16 %v989
      %v1031 = vunpack.c.l.b16 %v990
      %v1032 = vunpack.c.h.b16 %v990
      %v1033 = vunpack.c.l.b16 %v991
      %v1034 = vunpack.c.h.b16 %v991
      %v1035 = vunpack.c.l.b16 %v992
      %v1036 = vunpack.c.h.b16 %v992
      %v1037 = vunpack.c.l.b16 %v993
      %v1038 = vunpack.c.h.b16 %v993
      %v1039 = vunpack.c.l.b16 %v994
      %v1040 = vunpack.c.h.b16 %v994
      %v1041 = vunpack.c.l.b16 %v995
      %v1042 = vunpack.c.h.b16 %v995
      %v1043 = vunpack.c.l.b16 %v996
      %v1044 = vunpack.c.h.b16 %v996
      %v1045 = vpack.c.b16 %v1013, %v1013
      %v1046 = vpack.c.b16 %v1014, %v1014
      %v1047 = vpack.c.b16 %v1015, %v1015
      %v1048 = vpack.c.b16 %v1016, %v1016
      %v1049 = vpack.c.b16 %v1017, %v1017
      %v1050 = vpack.c.b16 %v1018, %v1018
      %v1051 = vpack.c.b16 %v1019, %v1019
      %v1052 = vpack.c.b16 %v1020, %v1020
      %v1053 = vpack.c.b16 %v1021, %v1021
      %v1054 = vpack.c.b16 %v1022, %v1022
      %v1055 = vpack.c.b16 %v1023, %v1023
      %v1056 = vpack.c.b16 %v1024, %v1024
      %v1057 = vpack.c.b16 %v1025, %v1025
      %v1058 = vpack.c.b16 %v1026, %v1026
      %v1059 = vpack.c.b16 %v1027, %v1027
      %v1060 = vpack.c.b16 %v1028, %v1028
      %v1061 = vpack.c.b16 %v1029, %v1029
      %v1062 = vpack.c.b16 %v1030, %v1030
      %v1063 = vpack.c.b16 %v1031, %v1031
      %v1064 = vpack.c.b16 %v1032, %v1032
      %v1065 = vpack.c.b16 %v1033, %v1033
      %v1066 = vpack.c.b16 %v1034, %v1034
      %v1067 = vpack.c.b16 %v1035, %v1035
      %v1068 = vpack.c.b16 %v1036, %v1036
      %v1069 = vpack.c.b16 %v1037, %v1037
      %v1070 = vpack.c.b16 %v1038, %v1038
      %v1071 = vpack.c.b16 %v1039, %v1039
      %v1072 = vpack.c.b16 %v1040, %v1040
      %v1073 = vpack.c.b16 %v1041, %v1041
      %v1074 = vpack.c.b16 %v1042, %v1042
      %v1075 = vpack.c.b16 %v1043, %v1043
      %v1076 = vpack.c.b16 %v1044, %v1044
      %vm1109 = vcmask 257024
      %1110 = vst.msk [vmem:[%s248] sm:$0xf] %vm1109, %v1045
      %1111 = vst.msk [vmem:[%s248 + $0x4] sm:$0xf] %vm1109, %v1046
      %1112 = vst.msk [vmem:[%s248 + $0x8] sm:$0xf] %vm1109, %v1047
      %1113 = vst.msk [vmem:[%s248 + $0xc] sm:$0xf] %vm1109, %v1048
      %1114 = vst.msk [vmem:[%s248 + $0x10] sm:$0xf] %vm1109, %v1049
      %1115 = vst.msk [vmem:[%s248 + $0x14] sm:$0xf] %vm1109, %v1050
      %1116 = vst.msk [vmem:[%s248 + $0x18] sm:$0xf] %vm1109, %v1051
      %1117 = vst.msk [vmem:[%s248 + $0x1c] sm:$0xf] %vm1109, %v1052
      %1118 = vst.msk [vmem:[%s248 + $0x20] sm:$0xf] %vm1109, %v1053
      %1119 = vst.msk [vmem:[%s248 + $0x24] sm:$0xf] %vm1109, %v1054
      %1120 = vst.msk [vmem:[%s248 + $0x28] sm:$0xf] %vm1109, %v1055
      %1121 = vst.msk [vmem:[%s248 + $0x2c] sm:$0xf] %vm1109, %v1056
      %1122 = vst.msk [vmem:[%s248 + $0x30] sm:$0xf] %vm1109, %v1057
      %1123 = vst.msk [vmem:[%s248 + $0x34] sm:$0xf] %vm1109, %v1058
      %1124 = vst.msk [vmem:[%s248 + $0x38] sm:$0xf] %vm1109, %v1059
      %1125 = vst.msk [vmem:[%s248 + $0x3c] sm:$0xf] %vm1109, %v1060
      %1126 = vst.msk [vmem:[%s248 + $0x40] sm:$0xf] %vm1109, %v1061
      %1127 = vst.msk [vmem:[%s248 + $0x44] sm:$0xf] %vm1109, %v1062
      %1128 = vst.msk [vmem:[%s248 + $0x48] sm:$0xf] %vm1109, %v1063
      %1129 = vst.msk [vmem:[%s248 + $0x4c] sm:$0xf] %vm1109, %v1064
      %1130 = vst.msk [vmem:[%s248 + $0x50] sm:$0xf] %vm1109, %v1065
      %1131 = vst.msk [vmem:[%s248 + $0x54] sm:$0xf] %vm1109, %v1066
      %1132 = vst.msk [vmem:[%s248 + $0x58] sm:$0xf] %vm1109, %v1067
      %1133 = vst.msk [vmem:[%s248 + $0x5c] sm:$0xf] %vm1109, %v1068
      %1134 = vst.msk [vmem:[%s248 + $0x60] sm:$0xf] %vm1109, %v1069
      %1135 = vst.msk [vmem:[%s248 + $0x64] sm:$0xf] %vm1109, %v1070
      %1136 = vst.msk [vmem:[%s248 + $0x68] sm:$0xf] %vm1109, %v1071
      %1137 = vst.msk [vmem:[%s248 + $0x6c] sm:$0xf] %vm1109, %v1072
      %1138 = vst.msk [vmem:[%s248 + $0x70] sm:$0xf] %vm1109, %v1073
      %1139 = vst.msk [vmem:[%s248 + $0x74] sm:$0xf] %vm1109, %v1074
      %1140 = vst.msk [vmem:[%s248 + $0x78] sm:$0xf] %vm1109, %v1075
      %1141 = vst.msk [vmem:[%s248 + $0x7c] sm:$0xf] %vm1109, %v1076
      %s1142 = smul.u32 32, %s16
      %p1143 = scmp.lt.s32.totalorder %s1142, 63
      %s1144 = scalar_select %p1143, %s1142, 63
      %s1145 = smul.addr %s1144, 4
      %s1146 = scalar_lea.vmem %s5, %s1145
      // Predicated region
      $region41: #{_lambda_.22} parent=39 // pred_check
        %p1147 = pneg %p149
      $region42: #{_lambda_.22} parent=39 // pred_check_branch
        %1149 = sbr.rel (%p1147) target = $region44
      $region43: #{_lambda_.22} parent=39 // pred_region
        %s1150 = smul.u32 32, %s16
      $region44: #{_lambda_.22} parent=39 // pred_fallthru
        _
    $region40: #{_lambda_.22} parent=5 // pred_fallthru
      _
    %p1151 = scmp.le.s32.totalorder 2, %s11
    // Predicated region
    $region45: #{_lambda_.22} parent=5 // pred_check
      %p1152 = pneg %p1151
    $region46: #{_lambda_.22} parent=5 // pred_check_branch
      %1154 = sbr.rel (%p1152) target = $region48
    $region47: #{_lambda_.22} parent=5 // pred_region
      %s1155 = ssub.s32 %s11, 2
      // Predicated region
      $region49: #{_lambda_.22} parent=47 // pred_check
        %p1156 = pneg %p155
      $region50: #{_lambda_.22} parent=47 // pred_check_branch
        %1158 = sbr.rel (%p1156) target = $region52
      $region51: #{_lambda_.22} parent=47 // pred_region
        %s1159 = smul.u32 32, %s17
        %p1160 = scmp.lt.s32.totalorder %s1159, 63
        %s1161 = scalar_select %p1160, %s1159, 63
        %s1162 = smul.addr %s1161, 4
        %s1163 = scalar_lea.vmem %s5, %s1162
      $region52: #{_lambda_.22} parent=47 // pred_fallthru
        _
    $region48: #{_lambda_.22} parent=5 // pred_fallthru
      _
  $region6: #{_lambda_.22} parent=0 // loop_footer
    %s15 = sadd.s32 1, %s11
  $region7: #{_lambda_.22} parent=0 // loop_footer_branch
    %10 = sbr.rel target = $region3
  $region8: #{_lambda_.22} parent=0 // loop_exit
    _

// kernel: _lambda_.23
$region0: #{_lambda_.23}
  #allocation0 [shape = 'u32[]', space=smem, size = 0x4, offset = 0x4, fixed_abs, tag = 'smem constant byte address 0x4 - core index']
  #allocation1 [shape = 'u32[144,128]{1,0:T(1,128)}', space=vmem, size = 0x12000, scoped, tag = 'internal scratch']
  %s0 = inlined_call_operand.vmem [shape: bf16[512,32], index: 0, kind: input, shape index: {}]
  %s1 = inlined_call_operand.vmem [shape: bf16[32,32], index: 1, kind: input, shape index: {}]
  %s2 = inlined_call_operand.vmem [shape: f32[1,32], index: 2, kind: input, shape index: {}]
  %s3 = inlined_call_operand.vmem [shape: bf16[512,32], index: 3, kind: output, shape index: {}]
  %s4 = sld [smem:[#allocation0]]
  $region45: #{_lambda_.23} parent=0
    _
  %s6 = ssub.s32 1, %s4
  %s7 = scalar_select 0, %s6, %s4
  loop: start=0, step=1, limit=4
  $region2: #{_lambda_.23} parent=0 // loop_pre_header
    _
  $region3: #{_lambda_.23} parent=0 // loop_header
    %s9 = sphi 0, %s13
    %p10 = scmp.ge.s32.totalorder %s9, 4
    %s19 = sphi 0, %s21
    %s22 = sphi 0, %s19
    %s23 = sphi 0, %s22
    %s39 = sphi 0, %s23
    %s43 = sphi 0, %s43
    %s45 = sphi 0, %s43
    %s46 = sphi 0, %s45
    %s60 = sphi 0, %s46
    %s64 = sphi 0, %s64
    %s66 = sphi 0, %s64
    %s67 = sphi 0, %s66
    %s81 = sphi 0, %s67
    %s87 = sphi 0, %s89
    %s90 = sphi 0, %s87
    %s91 = sphi 0, %s90
    %s107 = sphi 0, %s91
  $region4: #{_lambda_.23} parent=0 // loop_header_branch
    %12 = sbr.rel (%p10) target = $region8
  $region5: #{_lambda_.23} parent=0 // loop_body
    %s14 = ssub.s32 %s9, 1
    %s15 = ssub.s32 %s9, 2
    %s16 = sadd.s32 %s9, 1
    %s17 = ssub.s32 %s9, %s16
    %p18 = scmp.eq.s32.totalorder %s17, 0
    %s20 = sadd.s32 %s19, 1
    %s21 = scalar_select %p18, %s19, %s20
    %p24 = pneg %p18
    %p25 = scmp.eq.s32.totalorder %s9, 1
    %p26 = por %p24, %p25
    %p27 = scmp.ne.s32.totalorder %s19, %s22
    %p28 = scmp.eq.s32.totalorder %s9, 0
    %p29 = por %p27, %p28
    %p30 = scmp.ne.s32.totalorder %s19, %s22
    %p31 = scmp.eq.s32.totalorder %s14, 1
    %p32 = por %p30, %p31
    %p33 = scmp.ne.s32.totalorder %s22, %s23
    %p34 = scmp.eq.s32.totalorder %s14, 0
    %p35 = por %p33, %p34
    %p36 = scmp.ne.s32.totalorder %s22, %s23
    %p37 = scmp.eq.s32.totalorder %s15, 1
    %p38 = por %p36, %p37
    %p40 = scmp.ne.s32.totalorder %s23, %s39
    %p41 = scmp.eq.s32.totalorder %s15, 0
    %p42 = por %p40, %p41
    %s44 = sadd.s32 %s43, 1
    %p47 = scmp.eq.s32.totalorder %s9, 1
    %p48 = scmp.ne.s32.totalorder %s43, %s45
    %p49 = scmp.eq.s32.totalorder %s9, 0
    %p50 = por %p48, %p49
    %p51 = scmp.ne.s32.totalorder %s43, %s45
    %p52 = scmp.eq.s32.totalorder %s14, 1
    %p53 = por %p51, %p52
    %p54 = scmp.ne.s32.totalorder %s45, %s46
    %p55 = scmp.eq.s32.totalorder %s14, 0
    %p56 = por %p54, %p55
    %p57 = scmp.ne.s32.totalorder %s45, %s46
    %p58 = scmp.eq.s32.totalorder %s15, 1
    %p59 = por %p57, %p58
    %p61 = scmp.ne.s32.totalorder %s46, %s60
    %p62 = scmp.eq.s32.totalorder %s15, 0
    %p63 = por %p61, %p62
    %s65 = sadd.s32 %s64, 1
    %p68 = scmp.eq.s32.totalorder %s9, 1
    %p69 = scmp.ne.s32.totalorder %s64, %s66
    %p70 = scmp.eq.s32.totalorder %s9, 0
    %p71 = por %p69, %p70
    %p72 = scmp.ne.s32.totalorder %s64, %s66
    %p73 = scmp.eq.s32.totalorder %s14, 1
    %p74 = por %p72, %p73
    %p75 = scmp.ne.s32.totalorder %s66, %s67
    %p76 = scmp.eq.s32.totalorder %s14, 0
    %p77 = por %p75, %p76
    %p78 = scmp.ne.s32.totalorder %s66, %s67
    %p79 = scmp.eq.s32.totalorder %s15, 1
    %p80 = por %p78, %p79
    %p82 = scmp.ne.s32.totalorder %s67, %s81
    %p83 = scmp.eq.s32.totalorder %s15, 0
    %p84 = por %p82, %p83
    %s85 = ssub.s32 %s9, %s16
    %p86 = scmp.eq.s32.totalorder %s85, 0
    %s88 = sadd.s32 %s87, 1
    %s89 = scalar_select %p86, %s87, %s88
    %p92 = pneg %p86
    %p93 = scmp.eq.s32.totalorder %s9, 1
    %p94 = por %p92, %p93
    %p95 = scmp.ne.s32.totalorder %s87, %s90
    %p96 = scmp.eq.s32.totalorder %s9, 0
    %p97 = por %p95, %p96
    %p98 = scmp.ne.s32.totalorder %s87, %s90
    %p99 = scmp.eq.s32.totalorder %s14, 1
    %p100 = por %p98, %p99
    %p101 = scmp.ne.s32.totalorder %s90, %s91
    %p102 = scmp.eq.s32.totalorder %s14, 0
    %p103 = por %p101, %p102
    %p104 = scmp.ne.s32.totalorder %s90, %s91
    %p105 = scmp.eq.s32.totalorder %s15, 1
    %p106 = por %p104, %p105
    %p108 = scmp.ne.s32.totalorder %s91, %s107
    %p109 = scmp.eq.s32.totalorder %s15, 0
    %p110 = por %p108, %p109
    %p111 = scmp.le.s32.totalorder 1, %s9
    %p112 = scmp.lt.s32.totalorder %s9, 3
    %p113 = pnand %p111, %p112
    %p114 = pneg %p113
    // Predicated region
    $region9: #{_lambda_.23} parent=5 // pred_check
      _
    $region10: #{_lambda_.23} parent=5 // pred_check_branch
      %116 = sbr.rel (%p113) target = $region12
    $region11: #{_lambda_.23} parent=5 // pred_region
      %s117 = ssub.s32 %s9, 1
      // Predicated region
      $region13: #{_lambda_.23} parent=11 // pred_check
        %p118 = pneg %p56
      $region14: #{_lambda_.23} parent=11 // pred_check_branch
        %120 = sbr.rel (%p118) target = $region16
      $region15: #{_lambda_.23} parent=11 // pred_region
        _
      $region16: #{_lambda_.23} parent=11 // pred_fallthru
        _
      // Predicated region
      $region17: #{_lambda_.23} parent=11 // pred_check
        %p121 = pneg %p77
      $region18: #{_lambda_.23} parent=11 // pred_check_branch
        %123 = sbr.rel (%p121) target = $region20
      $region19: #{_lambda_.23} parent=11 // pred_region
        _
      $region20: #{_lambda_.23} parent=11 // pred_fallthru
        _
    $region12: #{_lambda_.23} parent=5 // pred_fallthru
      _
    %p124 = scmp.lt.s32.totalorder %s9, 2
    // Predicated region
    $region21: #{_lambda_.23} parent=5 // pred_check
      %p125 = pneg %p124
    $region22: #{_lambda_.23} parent=5 // pred_check_branch
      %127 = sbr.rel (%p125) target = $region24
    $region23: #{_lambda_.23} parent=5 // pred_region
      // Predicated region
      $region25: #{_lambda_.23} parent=23 // pred_check
        %p128 = pneg %p29
      $region26: #{_lambda_.23} parent=23 // pred_check_branch
        %130 = sbr.rel (%p128) target = $region28
      $region27: #{_lambda_.23} parent=23 // pred_region
        %s131 = smul.u32 32, %s9
        %p132 = scmp.lt.s32.totalorder %s131, 63
        %s133 = scalar_select %p132, %s131, 63
        %s134 = smul.addr %s133, 4
        %s135 = scalar_lea.vmem %s0, %s134
        %s136 = smul.u32 32, %s9
      $region28: #{_lambda_.23} parent=23 // pred_fallthru
        _
    $region24: #{_lambda_.23} parent=5 // pred_fallthru
      _
    %p137 = scmp.le.s32.totalorder 1, %s9
    %p138 = scmp.lt.s32.totalorder %s9, 3
    %p139 = pnand %p137, %p138
    %p140 = pneg %p139
    // Predicated region
    $region29: #{_lambda_.23} parent=5 // pred_check
      _
    $region30: #{_lambda_.23} parent=5 // pred_check_branch
      %142 = sbr.rel (%p139) target = $region32
    $region31: #{_lambda_.23} parent=5 // pred_region
      %s143 = ssub.s32 %s9, 1
      %s144 = smul.u32 32, %s14
      %p145 = scmp.lt.s32.totalorder %s144, 63
      %s146 = scalar_select %p145, %s144, 63
      %s147 = smul.addr %s146, 4
      %s148 = scalar_lea.vmem %s0, %s147
      %p149 = pneg %p35
      %p150 = pneg %p32
      %p151 = pneg %p56
      %p152 = pneg %p53
      %p153 = pneg %p77
      %p154 = pneg %p74
      %p155 = pneg %p103
      %p156 = pneg %p100
      %s157 = smul.u32 32, %s14
      %p158 = scmp.lt.s32.totalorder %s157, 63
      %s159 = scalar_select %p158, %s157, 63
      %s160 = smul.addr %s159, 4
      %s161 = scalar_lea.vmem %s3, %s160
      %s162 = smul.u32 32, %s14
      %p163 = scmp.lt.s32.totalorder %s162, 63
      %s164 = scalar_select %p163, %s162, 63
      %s165 = smul.addr %s164, 4
      %s166 = scalar_lea.vmem %s0, %s165
      %s167 = smul.u32 32, %s14
      %s168 = smul.u32 32, %s14
      %p169 = scmp.lt.s32.totalorder %s168, 63
      %s170 = scalar_select %p169, %s168, 63
      %s171 = smul.addr %s170, 4
      %s172 = scalar_lea.vmem %s3, %s171
      %s173 = smul.u32 32, %s14
      %v175 = vld [vmem:[%s166] sm:$0xf]
      %v176 = vld [vmem:[%s166 + $0x4] sm:$0xf]
      %v177 = vld [vmem:[%s166 + $0x8] sm:$0xf]
      %v178 = vld [vmem:[%s166 + $0xc] sm:$0xf]
      %v179 = vld [vmem:[%s166 + $0x10] sm:$0xf]
      %v180 = vld [vmem:[%s166 + $0x14] sm:$0xf]
      %v181 = vld [vmem:[%s166 + $0x18] sm:$0xf]
      %v182 = vld [vmem:[%s166 + $0x1c] sm:$0xf]
      %v183 = vld [vmem:[%s166 + $0x20] sm:$0xf]
      %v184 = vld [vmem:[%s166 + $0x24] sm:$0xf]
      %v185 = vld [vmem:[%s166 + $0x28] sm:$0xf]
      %v186 = vld [vmem:[%s166 + $0x2c] sm:$0xf]
      %v187 = vld [vmem:[%s166 + $0x30] sm:$0xf]
      %v188 = vld [vmem:[%s166 + $0x34] sm:$0xf]
      %v189 = vld [vmem:[%s166 + $0x38] sm:$0xf]
      %v190 = vld [vmem:[%s166 + $0x3c] sm:$0xf]
      %v191 = vld [vmem:[%s166 + $0x40] sm:$0xf]
      %v192 = vld [vmem:[%s166 + $0x44] sm:$0xf]
      %v193 = vld [vmem:[%s166 + $0x48] sm:$0xf]
      %v194 = vld [vmem:[%s166 + $0x4c] sm:$0xf]
      %v195 = vld [vmem:[%s166 + $0x50] sm:$0xf]
      %v196 = vld [vmem:[%s166 + $0x54] sm:$0xf]
      %v197 = vld [vmem:[%s166 + $0x58] sm:$0xf]
      %v198 = vld [vmem:[%s166 + $0x5c] sm:$0xf]
      %v199 = vld [vmem:[%s166 + $0x60] sm:$0xf]
      %v200 = vld [vmem:[%s166 + $0x64] sm:$0xf]
      %v201 = vld [vmem:[%s166 + $0x68] sm:$0xf]
      %v202 = vld [vmem:[%s166 + $0x6c] sm:$0xf]
      %v203 = vld [vmem:[%s166 + $0x70] sm:$0xf]
      %v204 = vld [vmem:[%s166 + $0x74] sm:$0xf]
      %v205 = vld [vmem:[%s166 + $0x78] sm:$0xf]
      %v206 = vld [vmem:[%s166 + $0x7c] sm:$0xf]
      %v207 = vld [vmem:[%s1] sm:$0xf]
      %v208 = vld [vmem:[%s1 + $0x4] sm:$0xf]
      %v209 = vld [vmem:[%s1 + $0x8] sm:$0xf]
      %v210 = vld [vmem:[%s1 + $0xc] sm:$0xf]
      %v211 = vld [vmem:[%s2] sm:$0x1]
      %v213 = vlaneseq
      %v214 = vshrl.u32 %v213, 7
      %v215 = vsub.s32 0, %v214
      %v216 = vrot.slane %v211, %v215
      %v250 = vunpack.c.l.b16 %v175
      %v251 = vunpack.c.l.b16 %v176
      %v252 = vunpack.c.l.b16 %v177
      %v253 = vunpack.c.l.b16 %v178
      %v254 = vunpack.c.l.b16 %v179
      %v255 = vunpack.c.l.b16 %v180
      %v256 = vunpack.c.l.b16 %v181
      %v257 = vunpack.c.l.b16 %v182
      %v258 = vunpack.c.l.b16 %v183
      %v259 = vunpack.c.l.b16 %v184
      %v260 = vunpack.c.l.b16 %v185
      %v261 = vunpack.c.l.b16 %v186
      %v262 = vunpack.c.l.b16 %v187
      %v263 = vunpack.c.l.b16 %v188
      %v264 = vunpack.c.l.b16 %v189
      %v265 = vunpack.c.l.b16 %v190
      %v266 = vunpack.c.l.b16 %v191
      %v267 = vunpack.c.l.b16 %v192
      %v268 = vunpack.c.l.b16 %v193
      %v269 = vunpack.c.l.b16 %v194
      %v270 = vunpack.c.l.b16 %v195
      %v271 = vunpack.c.l.b16 %v196
      %v272 = vunpack.c.l.b16 %v197
      %v273 = vunpack.c.l.b16 %v198
      %v274 = vunpack.c.l.b16 %v199
      %v275 = vunpack.c.l.b16 %v200
      %v276 = vunpack.c.l.b16 %v201
      %v277 = vunpack.c.l.b16 %v202
      %v278 = vunpack.c.l.b16 %v203
      %v279 = vunpack.c.l.b16 %v204
      %v280 = vunpack.c.l.b16 %v205
      %v281 = vunpack.c.l.b16 %v206
      %v282 = vpack.c.b16 %v251, %v250
      %v283 = vpack.c.b16 %v253, %v252
      %v284 = vpack.c.b16 %v255, %v254
      %v285 = vpack.c.b16 %v257, %v256
      %v286 = vpack.c.b16 %v259, %v258
      %v287 = vpack.c.b16 %v261, %v260
      %v288 = vpack.c.b16 %v263, %v262
      %v289 = vpack.c.b16 %v265, %v264
      %v290 = vpack.c.b16 %v267, %v266
      %v291 = vpack.c.b16 %v269, %v268
      %v292 = vpack.c.b16 %v271, %v270
      %v293 = vpack.c.b16 %v273, %v272
      %v294 = vpack.c.b16 %v275, %v274
      %v295 = vpack.c.b16 %v277, %v276
      %v296 = vpack.c.b16 %v279, %v278
      %v297 = vpack.c.b16 %v281, %v280
      %v302 = vunpack.c.l.b16 %v207
      %v303 = vunpack.c.l.b16 %v208
      %v304 = vunpack.c.l.b16 %v209
      %v305 = vunpack.c.l.b16 %v210
      %v306 = vpack.c.b16 %v303, %v302
      %v307 = vpack.c.b16 %v305, %v304
      %vm310 = vcmask 261120
      %v312 = vsel %vm310, %v282, 0
      %v315 = vsel %vm310, %v283, 0
      %v318 = vsel %vm310, %v284, 0
      %v321 = vsel %vm310, %v285, 0
      %v324 = vsel %vm310, %v286, 0
      %v327 = vsel %vm310, %v287, 0
      %v330 = vsel %vm310, %v288, 0
      %v333 = vsel %vm310, %v289, 0
      %v336 = vsel %vm310, %v290, 0
      %v339 = vsel %vm310, %v291, 0
      %v342 = vsel %vm310, %v292, 0
      %v345 = vsel %vm310, %v293, 0
      %v348 = vsel %vm310, %v294, 0
      %v351 = vsel %vm310, %v295, 0
      %v354 = vsel %vm310, %v296, 0
      %v357 = vsel %vm310, %v297, 0
      %359 = vmatprep.subr.bf16.mxu0 0
      %360 = vmatpush1.bf16.msra.mxu0 %v306
      %361 = vmatprep.subr.bf16.mxu0 0
      %362 = vmatpush1.bf16.msra.mxu0 %v307
      %363 = vmatprep.subr.bf16.mxu0 0
      %364 = vmatpush1.bf16.msra.mxu0 0
      %365 = vmatprep.subr.bf16.mxu0 0
      %366 = vmatpush1.bf16.msra.mxu0 0
      %367 = vmatprep.subr.bf16.mxu0 0
      %368 = vmatpush1.bf16.msra.mxu0 0
      %369 = vmatprep.subr.bf16.mxu0 0
      %370 = vmatpush1.bf16.msra.mxu0 0
      %371 = vmatprep.subr.bf16.mxu0 0
      %372 = vmatpush1.bf16.msra.mxu0 0
      %373 = vmatprep.subr.bf16.mxu0 0
      %374 = vmatpush1.bf16.msra.mxu0 0
      %375 = vmatprep.subr.bf16.mxu0 0
      %376 = vmatpush1.bf16.msra.mxu0 0
      %377 = vmatprep.subr.bf16.mxu0 0
      %378 = vmatpush1.bf16.msra.mxu0 0
      %379 = vmatprep.subr.bf16.mxu0 0
      %380 = vmatpush1.bf16.msra.mxu0 0
      %381 = vmatprep.subr.bf16.mxu0 0
      %382 = vmatpush1.bf16.msra.mxu0 0
      %383 = vmatprep.subr.bf16.mxu0 0
      %384 = vmatpush1.bf16.msra.mxu0 0
      %385 = vmatprep.subr.bf16.mxu0 0
      %386 = vmatpush1.bf16.msra.mxu0 0
      %387 = vmatprep.subr.bf16.mxu0 0
      %388 = vmatpush1.bf16.msra.mxu0 0
      %389 = vmatprep.subr.bf16.mxu0 0
      %390 = vmatpush1.bf16.msra.mxu0 0
      %391 = vmatprep.mubr.bf16.mxu0 0
      %392 = vmatmul.mubr.bf16.gmra.mrb[0].mxu0 %v312
      %v393 = vpop.f32.mrb[0].mxu0
      %v394 = vadd.f32 %v216, %v393
      %v395 = vpop.f32.mrb[0].mxu0
      %v396 = vpop.f32.mrb[0].mxu0
      %v397 = vadd.f32 %v216, %v396
      %v398 = vpop.f32.mrb[0].mxu0
      %399 = vmatprep.mubr.bf16.mxu0 0
      %400 = vmatmul.mubr.bf16.gmra.mrb[0].mxu0 %v315
      %v401 = vpop.f32.mrb[0].mxu0
      %v402 = vadd.f32 %v216, %v401
      %v403 = vpop.f32.mrb[0].mxu0
      %v404 = vpop.f32.mrb[0].mxu0
      %v405 = vadd.f32 %v216, %v404
      %v406 = vpop.f32.mrb[0].mxu0
      %407 = vmatprep.mubr.bf16.mxu0 0
      %408 = vmatmul.mubr.bf16.gmra.mrb[0].mxu0 %v318
      %v409 = vpop.f32.mrb[0].mxu0
      %v410 = vadd.f32 %v216, %v409
      %v411 = vpop.f32.mrb[0].mxu0
      %v412 = vpop.f32.mrb[0].mxu0
      %v413 = vadd.f32 %v216, %v412
      %v414 = vpop.f32.mrb[0].mxu0
      %415 = vmatprep.mubr.bf16.mxu0 0
      %416 = vmatmul.mubr.bf16.gmra.mrb[0].mxu0 %v321
      %v417 = vpop.f32.mrb[0].mxu0
      %v418 = vadd.f32 %v216, %v417
      %v419 = vpop.f32.mrb[0].mxu0
      %v420 = vpop.f32.mrb[0].mxu0
      %v421 = vadd.f32 %v216, %v420
      %v422 = vpop.f32.mrb[0].mxu0
      %423 = vmatprep.mubr.bf16.mxu0 0
      %424 = vmatmul.mubr.bf16.gmra.mrb[0].mxu0 %v324
      %v425 = vpop.f32.mrb[0].mxu0
      %v426 = vadd.f32 %v216, %v425
      %v427 = vpop.f32.mrb[0].mxu0
      %v428 = vpop.f32.mrb[0].mxu0
      %v429 = vadd.f32 %v216, %v428
      %v430 = vpop.f32.mrb[0].mxu0
      %431 = vmatprep.mubr.bf16.mxu0 0
      %432 = vmatmul.mubr.bf16.gmra.mrb[0].mxu0 %v327
      %v433 = vpop.f32.mrb[0].mxu0
      %v434 = vadd.f32 %v216, %v433
      %v435 = vpop.f32.mrb[0].mxu0
      %v436 = vpop.f32.mrb[0].mxu0
      %v437 = vadd.f32 %v216, %v436
      %v438 = vpop.f32.mrb[0].mxu0
      %439 = vmatprep.mubr.bf16.mxu0 0
      %440 = vmatmul.mubr.bf16.gmra.mrb[0].mxu0 %v330
      %v441 = vpop.f32.mrb[0].mxu0
      %v442 = vadd.f32 %v216, %v441
      %v443 = vpop.f32.mrb[0].mxu0
      %v444 = vpop.f32.mrb[0].mxu0
      %v445 = vadd.f32 %v216, %v444
      %v446 = vpop.f32.mrb[0].mxu0
      %447 = vmatprep.mubr.bf16.mxu0 0
      %448 = vmatmul.mubr.bf16.gmra.mrb[0].mxu0 %v333
      %v449 = vpop.f32.mrb[0].mxu0
      %v450 = vadd.f32 %v216, %v449
      %v451 = vpop.f32.mrb[0].mxu0
      %v452 = vpop.f32.mrb[0].mxu0
      %v453 = vadd.f32 %v216, %v452
      %v454 = vpop.f32.mrb[0].mxu0
      %455 = vmatprep.mubr.bf16.mxu0 0
      %456 = vmatmul.mubr.bf16.gmra.mrb[0].mxu0 %v336
      %v457 = vpop.f32.mrb[0].mxu0
      %v458 = vadd.f32 %v216, %v457
      %v459 = vpop.f32.mrb[0].mxu0
      %v460 = vpop.f32.mrb[0].mxu0
      %v461 = vadd.f32 %v216, %v460
      %v462 = vpop.f32.mrb[0].mxu0
      %463 = vmatprep.mubr.bf16.mxu0 0
      %464 = vmatmul.mubr.bf16.gmra.mrb[0].mxu0 %v339
      %v465 = vpop.f32.mrb[0].mxu0
      %v466 = vadd.f32 %v216, %v465
      %v467 = vpop.f32.mrb[0].mxu0
      %v468 = vpop.f32.mrb[0].mxu0
      %v469 = vadd.f32 %v216, %v468
      %v470 = vpop.f32.mrb[0].mxu0
      %471 = vmatprep.mubr.bf16.mxu0 0
      %472 = vmatmul.mubr.bf16.gmra.mrb[0].mxu0 %v342
      %v473 = vpop.f32.mrb[0].mxu0
      %v474 = vadd.f32 %v216, %v473
      %v475 = vpop.f32.mrb[0].mxu0
      %v476 = vpop.f32.mrb[0].mxu0
      %v477 = vadd.f32 %v216, %v476
      %v478 = vpop.f32.mrb[0].mxu0
      %479 = vmatprep.mubr.bf16.mxu0 0
      %480 = vmatmul.mubr.bf16.gmra.mrb[0].mxu0 %v345
      %v481 = vpop.f32.mrb[0].mxu0
      %v482 = vadd.f32 %v216, %v481
      %v483 = vpop.f32.mrb[0].mxu0
      %v484 = vpop.f32.mrb[0].mxu0
      %v485 = vadd.f32 %v216, %v484
      %v486 = vpop.f32.mrb[0].mxu0
      %487 = vmatprep.mubr.bf16.mxu0 0
      %488 = vmatmul.mubr.bf16.gmra.mrb[0].mxu0 %v348
      %v489 = vpop.f32.mrb[0].mxu0
      %v490 = vadd.f32 %v216, %v489
      %v491 = vpop.f32.mrb[0].mxu0
      %v492 = vpop.f32.mrb[0].mxu0
      %v493 = vadd.f32 %v216, %v492
      %v494 = vpop.f32.mrb[0].mxu0
      %495 = vmatprep.mubr.bf16.mxu0 0
      %496 = vmatmul.mubr.bf16.gmra.mrb[0].mxu0 %v351
      %v497 = vpop.f32.mrb[0].mxu0
      %v498 = vadd.f32 %v216, %v497
      %v499 = vpop.f32.mrb[0].mxu0
      %v500 = vpop.f32.mrb[0].mxu0
      %v501 = vadd.f32 %v216, %v500
      %v502 = vpop.f32.mrb[0].mxu0
      %503 = vmatprep.mubr.bf16.mxu0 0
      %504 = vmatmul.mubr.bf16.gmra.mrb[0].mxu0 %v354
      %v505 = vpop.f32.mrb[0].mxu0
      %v506 = vadd.f32 %v216, %v505
      %v507 = vpop.f32.mrb[0].mxu0
      %v508 = vpop.f32.mrb[0].mxu0
      %v509 = vadd.f32 %v216, %v508
      %v510 = vpop.f32.mrb[0].mxu0
      %511 = vmatprep.mubr.bf16.mxu0 0
      %512 = vmatmul.mubr.bf16.gmra.mrb[0].mxu0 %v357
      %v513 = vpop.f32.mrb[0].mxu0
      %v514 = vadd.f32 %v216, %v513
      %v515 = vpop.f32.mrb[0].mxu0
      %v516 = vpop.f32.mrb[0].mxu0
      %v517 = vadd.f32 %v216, %v516
      %v518 = vpop.f32.mrb[0].mxu0
      %519 = vdwg.mxu0
      %v520 = vmax.f32 %v394, 0.0
      %v521 = vmax.f32 %v397, 0.0
      %v522 = vmax.f32 %v402, 0.0
      %v523 = vmax.f32 %v405, 0.0
      %v524 = vmax.f32 %v410, 0.0
      %v525 = vmax.f32 %v413, 0.0
      %v526 = vmax.f32 %v418, 0.0
      %v527 = vmax.f32 %v421, 0.0
      %v528 = vmax.f32 %v426, 0.0
      %v529 = vmax.f32 %v429, 0.0
      %v530 = vmax.f32 %v434, 0.0
      %v531 = vmax.f32 %v437, 0.0
      %v532 = vmax.f32 %v442, 0.0
      %v533 = vmax.f32 %v445, 0.0
      %v534 = vmax.f32 %v450, 0.0
      %v535 = vmax.f32 %v453, 0.0
      %v536 = vmax.f32 %v458, 0.0
      %v537 = vmax.f32 %v461, 0.0
      %v538 = vmax.f32 %v466, 0.0
      %v539 = vmax.f32 %v469, 0.0
      %v540 = vmax.f32 %v474, 0.0
      %v541 = vmax.f32 %v477, 0.0
      %v542 = vmax.f32 %v482, 0.0
      %v543 = vmax.f32 %v485, 0.0
      %v544 = vmax.f32 %v490, 0.0
      %v545 = vmax.f32 %v493, 0.0
      %v546 = vmax.f32 %v498, 0.0
      %v547 = vmax.f32 %v501, 0.0
      %v548 = vmax.f32 %v506, 0.0
      %v549 = vmax.f32 %v509, 0.0
      %v550 = vmax.f32 %v514, 0.0
      %v551 = vmax.f32 %v517, 0.0
      %v552 = vpack.c.bf16 %v521, %v520
      %v553 = vpack.c.bf16 %v523, %v522
      %v554 = vpack.c.bf16 %v525, %v524
      %v555 = vpack.c.bf16 %v527, %v526
      %v556 = vpack.c.bf16 %v529, %v528
      %v557 = vpack.c.bf16 %v531, %v530
      %v558 = vpack.c.bf16 %v533, %v532
      %v559 = vpack.c.bf16 %v535, %v534
      %v560 = vpack.c.bf16 %v537, %v536
      %v561 = vpack.c.bf16 %v539, %v538
      %v562 = vpack.c.bf16 %v541, %v540
      %v563 = vpack.c.bf16 %v543, %v542
      %v564 = vpack.c.bf16 %v545, %v544
      %v565 = vpack.c.bf16 %v547, %v546
      %v566 = vpack.c.bf16 %v549, %v548
      %v567 = vpack.c.bf16 %v551, %v550
      %v584 = vunpack.c.l.b16 %v552
      %v585 = vunpack.c.h.b16 %v552
      %v586 = vunpack.c.l.b16 %v553
      %v587 = vunpack.c.h.b16 %v553
      %v588 = vunpack.c.l.b16 %v554
      %v589 = vunpack.c.h.b16 %v554
      %v590 = vunpack.c.l.b16 %v555
      %v591 = vunpack.c.h.b16 %v555
      %v592 = vunpack.c.l.b16 %v556
      %v593 = vunpack.c.h.b16 %v556
      %v594 = vunpack.c.l.b16 %v557
      %v595 = vunpack.c.h.b16 %v557
      %v596 = vunpack.c.l.b16 %v558
      %v597 = vunpack.c.h.b16 %v558
      %v598 = vunpack.c.l.b16 %v559
      %v599 = vunpack.c.h.b16 %v559
      %v600 = vunpack.c.l.b16 %v560
      %v601 = vunpack.c.h.b16 %v560
      %v602 = vunpack.c.l.b16 %v561
      %v603 = vunpack.c.h.b16 %v561
      %v604 = vunpack.c.l.b16 %v562
      %v605 = vunpack.c.h.b16 %v562
      %v606 = vunpack.c.l.b16 %v563
      %v607 = vunpack.c.h.b16 %v563
      %v608 = vunpack.c.l.b16 %v564
      %v609 = vunpack.c.h.b16 %v564
      %v610 = vunpack.c.l.b16 %v565
      %v611 = vunpack.c.h.b16 %v565
      %v612 = vunpack.c.l.b16 %v566
      %v613 = vunpack.c.h.b16 %v566
      %v614 = vunpack.c.l.b16 %v567
      %v615 = vunpack.c.h.b16 %v567
      %v616 = vpack.c.b16 %v584, %v584
      %v617 = vpack.c.b16 %v585, %v585
      %v618 = vpack.c.b16 %v586, %v586
      %v619 = vpack.c.b16 %v587, %v587
      %v620 = vpack.c.b16 %v588, %v588
      %v621 = vpack.c.b16 %v589, %v589
      %v622 = vpack.c.b16 %v590, %v590
      %v623 = vpack.c.b16 %v591, %v591
      %v624 = vpack.c.b16 %v592, %v592
      %v625 = vpack.c.b16 %v593, %v593
      %v626 = vpack.c.b16 %v594, %v594
      %v627 = vpack.c.b16 %v595, %v595
      %v628 = vpack.c.b16 %v596, %v596
      %v629 = vpack.c.b16 %v597, %v597
      %v630 = vpack.c.b16 %v598, %v598
      %v631 = vpack.c.b16 %v599, %v599
      %v632 = vpack.c.b16 %v600, %v600
      %v633 = vpack.c.b16 %v601, %v601
      %v634 = vpack.c.b16 %v602, %v602
      %v635 = vpack.c.b16 %v603, %v603
      %v636 = vpack.c.b16 %v604, %v604
      %v637 = vpack.c.b16 %v605, %v605
      %v638 = vpack.c.b16 %v606, %v606
      %v639 = vpack.c.b16 %v607, %v607
      %v640 = vpack.c.b16 %v608, %v608
      %v641 = vpack.c.b16 %v609, %v609
      %v642 = vpack.c.b16 %v610, %v610
      %v643 = vpack.c.b16 %v611, %v611
      %v644 = vpack.c.b16 %v612, %v612
      %v645 = vpack.c.b16 %v613, %v613
      %v646 = vpack.c.b16 %v614, %v614
      %v647 = vpack.c.b16 %v615, %v615
      %vm680 = vcmask 257024
      %681 = vst.msk [vmem:[%s172] sm:$0xf] %vm680, %v616
      %682 = vst.msk [vmem:[%s172 + $0x4] sm:$0xf] %vm680, %v617
      %683 = vst.msk [vmem:[%s172 + $0x8] sm:$0xf] %vm680, %v618
      %684 = vst.msk [vmem:[%s172 + $0xc] sm:$0xf] %vm680, %v619
      %685 = vst.msk [vmem:[%s172 + $0x10] sm:$0xf] %vm680, %v620
      %686 = vst.msk [vmem:[%s172 + $0x14] sm:$0xf] %vm680, %v621
      %687 = vst.msk [vmem:[%s172 + $0x18] sm:$0xf] %vm680, %v622
      %688 = vst.msk [vmem:[%s172 + $0x1c] sm:$0xf] %vm680, %v623
      %689 = vst.msk [vmem:[%s172 + $0x20] sm:$0xf] %vm680, %v624
      %690 = vst.msk [vmem:[%s172 + $0x24] sm:$0xf] %vm680, %v625
      %691 = vst.msk [vmem:[%s172 + $0x28] sm:$0xf] %vm680, %v626
      %692 = vst.msk [vmem:[%s172 + $0x2c] sm:$0xf] %vm680, %v627
      %693 = vst.msk [vmem:[%s172 + $0x30] sm:$0xf] %vm680, %v628
      %694 = vst.msk [vmem:[%s172 + $0x34] sm:$0xf] %vm680, %v629
      %695 = vst.msk [vmem:[%s172 + $0x38] sm:$0xf] %vm680, %v630
      %696 = vst.msk [vmem:[%s172 + $0x3c] sm:$0xf] %vm680, %v631
      %697 = vst.msk [vmem:[%s172 + $0x40] sm:$0xf] %vm680, %v632
      %698 = vst.msk [vmem:[%s172 + $0x44] sm:$0xf] %vm680, %v633
      %699 = vst.msk [vmem:[%s172 + $0x48] sm:$0xf] %vm680, %v634
      %700 = vst.msk [vmem:[%s172 + $0x4c] sm:$0xf] %vm680, %v635
      %701 = vst.msk [vmem:[%s172 + $0x50] sm:$0xf] %vm680, %v636
      %702 = vst.msk [vmem:[%s172 + $0x54] sm:$0xf] %vm680, %v637
      %703 = vst.msk [vmem:[%s172 + $0x58] sm:$0xf] %vm680, %v638
      %704 = vst.msk [vmem:[%s172 + $0x5c] sm:$0xf] %vm680, %v639
      %705 = vst.msk [vmem:[%s172 + $0x60] sm:$0xf] %vm680, %v640
      %706 = vst.msk [vmem:[%s172 + $0x64] sm:$0xf] %vm680, %v641
      %707 = vst.msk [vmem:[%s172 + $0x68] sm:$0xf] %vm680, %v642
      %708 = vst.msk [vmem:[%s172 + $0x6c] sm:$0xf] %vm680, %v643
      %709 = vst.msk [vmem:[%s172 + $0x70] sm:$0xf] %vm680, %v644
      %710 = vst.msk [vmem:[%s172 + $0x74] sm:$0xf] %vm680, %v645
      %711 = vst.msk [vmem:[%s172 + $0x78] sm:$0xf] %vm680, %v646
      %712 = vst.msk [vmem:[%s172 + $0x7c] sm:$0xf] %vm680, %v647
      %s713 = smul.u32 32, %s14
      %p714 = scmp.lt.s32.totalorder %s713, 63
      %s715 = scalar_select %p714, %s713, 63
      %s716 = smul.addr %s715, 4
      %s717 = scalar_lea.vmem %s3, %s716
      // Predicated region
      $region33: #{_lambda_.23} parent=31 // pred_check
        %p718 = pneg %p100
      $region34: #{_lambda_.23} parent=31 // pred_check_branch
        %720 = sbr.rel (%p718) target = $region36
      $region35: #{_lambda_.23} parent=31 // pred_region
        %s721 = smul.u32 32, %s14
      $region36: #{_lambda_.23} parent=31 // pred_fallthru
        _
    $region32: #{_lambda_.23} parent=5 // pred_fallthru
      _
    %p722 = scmp.le.s32.totalorder 2, %s9
    // Predicated region
    $region37: #{_lambda_.23} parent=5 // pred_check
      %p723 = pneg %p722
    $region38: #{_lambda_.23} parent=5 // pred_check_branch
      %725 = sbr.rel (%p723) target = $region40
    $region39: #{_lambda_.23} parent=5 // pred_region
      %s726 = ssub.s32 %s9, 2
      // Predicated region
      $region41: #{_lambda_.23} parent=39 // pred_check
        %p727 = pneg %p106
      $region42: #{_lambda_.23} parent=39 // pred_check_branch
        %729 = sbr.rel (%p727) target = $region44
      $region43: #{_lambda_.23} parent=39 // pred_region
        %s730 = smul.u32 32, %s15
        %p731 = scmp.lt.s32.totalorder %s730, 63
        %s732 = scalar_select %p731, %s730, 63
        %s733 = smul.addr %s732, 4
        %s734 = scalar_lea.vmem %s3, %s733
      $region44: #{_lambda_.23} parent=39 // pred_fallthru
        _
    $region40: #{_lambda_.23} parent=5 // pred_fallthru
      _
  $region6: #{_lambda_.23} parent=0 // loop_footer
    %s13 = sadd.s32 1, %s9
  $region7: #{_lambda_.23} parent=0 // loop_footer_branch
    %8 = sbr.rel target = $region3
  $region8: #{_lambda_.23} parent=0 // loop_exit
    _

// kernel: _lambda_.25
$region0: #{_lambda_.25}
  #allocation0 [shape = 'u32[]', space=smem, size = 0x4, offset = 0x4, fixed_abs, tag = 'smem constant byte address 0x4 - core index']
  #allocation1 [shape = 'u32[144,128]{1,0:T(1,128)}', space=vmem, size = 0x12000, scoped, tag = 'internal scratch']
  %s0 = inlined_call_operand.vmem [shape: bf16[128,32], index: 0, kind: input, shape index: {}]
  %s1 = inlined_call_operand.vmem [shape: bf16[32,64], index: 1, kind: input, shape index: {}]
  %s2 = inlined_call_operand.vmem [shape: bf16[128,128], index: 2, kind: input, shape index: {}]
  %s3 = inlined_call_operand.vmem [shape: bf16[128,64], index: 3, kind: input, shape index: {}]
  %s4 = inlined_call_operand.vmem [shape: f32[1,64], index: 4, kind: input, shape index: {}]
  %s5 = inlined_call_operand.vmem [shape: bf16[128,64], index: 5, kind: output, shape index: {}]
  %s6 = sld [smem:[#allocation0]]
  $region30: #{_lambda_.25} parent=0
    _
  %s8 = ssub.s32 1, %s6
  %s9 = scalar_select 0, %s8, %s6
  // Predicated region
  $region2: #{_lambda_.25} parent=0 // pred_check
    _
  $region3: #{_lambda_.25} parent=0 // pred_check_branch
    %11 = sbr.rel (0) target = $region5
  $region4: #{_lambda_.25} parent=0 // pred_region
    _
  $region5: #{_lambda_.25} parent=0 // pred_fallthru
    _
  // Predicated region
  $region6: #{_lambda_.25} parent=0 // pred_check
    _
  $region7: #{_lambda_.25} parent=0 // pred_check_branch
    %13 = sbr.rel (0) target = $region9
  $region8: #{_lambda_.25} parent=0 // pred_region
    _
  $region9: #{_lambda_.25} parent=0 // pred_fallthru
    _
  // Predicated region
  $region10: #{_lambda_.25} parent=0 // pred_check
    _
  $region11: #{_lambda_.25} parent=0 // pred_check_branch
    %15 = sbr.rel (0) target = $region13
  $region12: #{_lambda_.25} parent=0 // pred_region
    _
  $region13: #{_lambda_.25} parent=0 // pred_fallthru
    _
  // Predicated region
  $region14: #{_lambda_.25} parent=0 // pred_check
    _
  $region15: #{_lambda_.25} parent=0 // pred_check_branch
    %17 = sbr.rel (0) target = $region17
  $region16: #{_lambda_.25} parent=0 // pred_region
    _
  $region17: #{_lambda_.25} parent=0 // pred_fallthru
    _
  // Predicated region
  $region18: #{_lambda_.25} parent=0 // pred_check
    _
  $region19: #{_lambda_.25} parent=0 // pred_check_branch
    %19 = sbr.rel (0) target = $region21
  $region20: #{_lambda_.25} parent=0 // pred_region
    _
  $region21: #{_lambda_.25} parent=0 // pred_fallthru
    _
  %v21 = vld [vmem:[%s0] sm:$0xf]
  %v22 = vld [vmem:[%s0 + $0x4] sm:$0xf]
  %v23 = vld [vmem:[%s0 + $0x8] sm:$0xf]
  %v24 = vld [vmem:[%s0 + $0xc] sm:$0xf]
  %v25 = vld [vmem:[%s0 + $0x10] sm:$0xf]
  %v26 = vld [vmem:[%s0 + $0x14] sm:$0xf]
  %v27 = vld [vmem:[%s0 + $0x18] sm:$0xf]
  %v28 = vld [vmem:[%s0 + $0x1c] sm:$0xf]
  %v29 = vld [vmem:[%s0 + $0x20] sm:$0xf]
  %v30 = vld [vmem:[%s0 + $0x24] sm:$0xf]
  %v31 = vld [vmem:[%s0 + $0x28] sm:$0xf]
  %v32 = vld [vmem:[%s0 + $0x2c] sm:$0xf]
  %v33 = vld [vmem:[%s0 + $0x30] sm:$0xf]
  %v34 = vld [vmem:[%s0 + $0x34] sm:$0xf]
  %v35 = vld [vmem:[%s0 + $0x38] sm:$0xf]
  %v36 = vld [vmem:[%s0 + $0x3c] sm:$0xf]
  %v37 = vld [vmem:[%s1] sm:$0xf]
  %v38 = vld [vmem:[%s1 + $0x4] sm:$0xf]
  %v39 = vld [vmem:[%s1 + $0x8] sm:$0xf]
  %v40 = vld [vmem:[%s1 + $0xc] sm:$0xf]
  %v41 = vld [vmem:[%s2] sm:$0xf]
  %v42 = vld [vmem:[%s2 + $0x4] sm:$0xf]
  %v43 = vld [vmem:[%s2 + $0x8] sm:$0xf]
  %v44 = vld [vmem:[%s2 + $0xc] sm:$0xf]
  %v45 = vld [vmem:[%s2 + $0x10] sm:$0xf]
  %v46 = vld [vmem:[%s2 + $0x14] sm:$0xf]
  %v47 = vld [vmem:[%s2 + $0x18] sm:$0xf]
  %v48 = vld [vmem:[%s2 + $0x1c] sm:$0xf]
  %v49 = vld [vmem:[%s2 + $0x20] sm:$0xf]
  %v50 = vld [vmem:[%s2 + $0x24] sm:$0xf]
  %v51 = vld [vmem:[%s2 + $0x28] sm:$0xf]
  %v52 = vld [vmem:[%s2 + $0x2c] sm:$0xf]
  %v53 = vld [vmem:[%s2 + $0x30] sm:$0xf]
  %v54 = vld [vmem:[%s2 + $0x34] sm:$0xf]
  %v55 = vld [vmem:[%s2 + $0x38] sm:$0xf]
  %v56 = vld [vmem:[%s2 + $0x3c] sm:$0xf]
  %v57 = vld [vmem:[%s3] sm:$0xf]
  %v58 = vld [vmem:[%s3 + $0x4] sm:$0xf]
  %v59 = vld [vmem:[%s3 + $0x8] sm:$0xf]
  %v60 = vld [vmem:[%s3 + $0xc] sm:$0xf]
  %v61 = vld [vmem:[%s3 + $0x10] sm:$0xf]
  %v62 = vld [vmem:[%s3 + $0x14] sm:$0xf]
  %v63 = vld [vmem:[%s3 + $0x18] sm:$0xf]
  %v64 = vld [vmem:[%s3 + $0x1c] sm:$0xf]
  %v65 = vld [vmem:[%s3 + $0x20] sm:$0xf]
  %v66 = vld [vmem:[%s3 + $0x24] sm:$0xf]
  %v67 = vld [vmem:[%s3 + $0x28] sm:$0xf]
  %v68 = vld [vmem:[%s3 + $0x2c] sm:$0xf]
  %v69 = vld [vmem:[%s3 + $0x30] sm:$0xf]
  %v70 = vld [vmem:[%s3 + $0x34] sm:$0xf]
  %v71 = vld [vmem:[%s3 + $0x38] sm:$0xf]
  %v72 = vld [vmem:[%s3 + $0x3c] sm:$0xf]
  %v89 = vunpack.c.l.b16 %v41
  %v90 = vunpack.c.l.b16 %v42
  %v91 = vunpack.c.l.b16 %v43
  %v92 = vunpack.c.l.b16 %v44
  %v93 = vunpack.c.l.b16 %v45
  %v94 = vunpack.c.l.b16 %v46
  %v95 = vunpack.c.l.b16 %v47
  %v96 = vunpack.c.l.b16 %v48
  %v97 = vunpack.c.l.b16 %v49
  %v98 = vunpack.c.l.b16 %v50
  %v99 = vunpack.c.l.b16 %v51
  %v100 = vunpack.c.l.b16 %v52
  %v101 = vunpack.c.l.b16 %v53
  %v102 = vunpack.c.l.b16 %v54
  %v103 = vunpack.c.l.b16 %v55
  %v104 = vunpack.c.l.b16 %v56
  %v105 = vpack.c.b16 %v90, %v89
  %v106 = vpack.c.b16 %v92, %v91
  %v107 = vpack.c.b16 %v94, %v93
  %v108 = vpack.c.b16 %v96, %v95
  %v109 = vpack.c.b16 %v98, %v97
  %v110 = vpack.c.b16 %v100, %v99
  %v111 = vpack.c.b16 %v102, %v101
  %v112 = vpack.c.b16 %v104, %v103
  %v137 = vunpack.c.l.b16 %v57
  %v138 = vunpack.c.l.b16 %v58
  %v139 = vunpack.c.l.b16 %v59
  %v140 = vunpack.c.l.b16 %v60
  %v141 = vunpack.c.l.b16 %v61
  %v142 = vunpack.c.l.b16 %v62
  %v143 = vunpack.c.l.b16 %v63
  %v144 = vunpack.c.l.b16 %v64
  %v145 = vunpack.c.l.b16 %v65
  %v146 = vunpack.c.l.b16 %v66
  %v147 = vunpack.c.l.b16 %v67
  %v148 = vunpack.c.l.b16 %v68
  %v149 = vunpack.c.l.b16 %v69
  %v150 = vunpack.c.l.b16 %v70
  %v151 = vunpack.c.l.b16 %v71
  %v152 = vunpack.c.l.b16 %v72
  %v153 = vpack.c.b16 %v138, %v137
  %v154 = vpack.c.b16 %v140, %v139
  %v155 = vpack.c.b16 %v142, %v141
  %v156 = vpack.c.b16 %v144, %v143
  %v157 = vpack.c.b16 %v146, %v145
  %v158 = vpack.c.b16 %v148, %v147
  %v159 = vpack.c.b16 %v150, %v149
  %v160 = vpack.c.b16 %v152, %v151
  %169 = vmatprep.subr.bf16.mxu0 0
  %170 = vmatpush1.bf16.msra.mxu0 %v153
  %171 = vmatprep.subr.bf16.mxu0 0
  %172 = vmatpush1.bf16.msra.mxu0 %v154
  %173 = vmatprep.subr.bf16.mxu0 0
  %174 = vmatpush1.bf16.msra.mxu0 %v155
  %175 = vmatprep.subr.bf16.mxu0 0
  %176 = vmatpush1.bf16.msra.mxu0 %v156
  %177 = vmatprep.subr.bf16.mxu0 0
  %178 = vmatpush1.bf16.msra.mxu0 %v157
  %179 = vmatprep.subr.bf16.mxu0 0
  %180 = vmatpush1.bf16.msra.mxu0 %v158
  %181 = vmatprep.subr.bf16.mxu0 0
  %182 = vmatpush1.bf16.msra.mxu0 %v159
  %183 = vmatprep.subr.bf16.mxu0 0
  %184 = vmatpush1.bf16.msra.mxu0 %v160
  %185 = vmatprep.subr.bf16.mxu0 0
  %186 = vmatpush1.bf16.msra.mxu0 0
  %187 = vmatprep.subr.bf16.mxu0 0
  %188 = vmatpush1.bf16.msra.mxu0 0
  %189 = vmatprep.subr.bf16.mxu0 0
  %190 = vmatpush1.bf16.msra.mxu0 0
  %191 = vmatprep.subr.bf16.mxu0 0
  %192 = vmatpush1.bf16.msra.mxu0 0
  %193 = vmatprep.subr.bf16.mxu0 0
  %194 = vmatpush1.bf16.msra.mxu0 0
  %195 = vmatprep.subr.bf16.mxu0 0
  %196 = vmatpush1.bf16.msra.mxu0 0
  %197 = vmatprep.subr.bf16.mxu0 0
  %198 = vmatpush1.bf16.msra.mxu0 0
  %199 = vmatprep.subr.bf16.mxu0 0
  %200 = vmatpush1.bf16.msra.mxu0 0
  %201 = vmatprep.mubr.bf16.mxu0 0
  %202 = vmatmul.mubr.bf16.gmra.mrb[0].mxu0 %v105
  %v203 = vpop.f32.mrb[0].mxu0
  %v204 = vadd.f32 0.0, %v203
  %v205 = vpop.f32.mrb[0].mxu0
  %v206 = vpop.f32.mrb[0].mxu0
  %v207 = vadd.f32 0.0, %v206
  %v208 = vpop.f32.mrb[0].mxu0
  %209 = vmatprep.mubr.bf16.mxu0 0
  %210 = vmatmul.mubr.bf16.gmra.mrb[0].mxu0 %v106
  %v211 = vpop.f32.mrb[0].mxu0
  %v212 = vadd.f32 0.0, %v211
  %v213 = vpop.f32.mrb[0].mxu0
  %v214 = vpop.f32.mrb[0].mxu0
  %v215 = vadd.f32 0.0, %v214
  %v216 = vpop.f32.mrb[0].mxu0
  %217 = vmatprep.mubr.bf16.mxu0 0
  %218 = vmatmul.mubr.bf16.gmra.mrb[0].mxu0 %v107
  %v219 = vpop.f32.mrb[0].mxu0
  %v220 = vadd.f32 0.0, %v219
  %v221 = vpop.f32.mrb[0].mxu0
  %v222 = vpop.f32.mrb[0].mxu0
  %v223 = vadd.f32 0.0, %v222
  %v224 = vpop.f32.mrb[0].mxu0
  %225 = vmatprep.mubr.bf16.mxu0 0
  %226 = vmatmul.mubr.bf16.gmra.mrb[0].mxu0 %v108
  %v227 = vpop.f32.mrb[0].mxu0
  %v228 = vadd.f32 0.0, %v227
  %v229 = vpop.f32.mrb[0].mxu0
  %v230 = vpop.f32.mrb[0].mxu0
  %v231 = vadd.f32 0.0, %v230
  %v232 = vpop.f32.mrb[0].mxu0
  %233 = vmatprep.mubr.bf16.mxu0 0
  %234 = vmatmul.mubr.bf16.gmra.mrb[0].mxu0 %v109
  %v235 = vpop.f32.mrb[0].mxu0
  %v236 = vadd.f32 0.0, %v235
  %v237 = vpop.f32.mrb[0].mxu0
  %v238 = vpop.f32.mrb[0].mxu0
  %v239 = vadd.f32 0.0, %v238
  %v240 = vpop.f32.mrb[0].mxu0
  %241 = vmatprep.mubr.bf16.mxu0 0
  %242 = vmatmul.mubr.bf16.gmra.mrb[0].mxu0 %v110
  %v243 = vpop.f32.mrb[0].mxu0
  %v244 = vadd.f32 0.0, %v243
  %v245 = vpop.f32.mrb[0].mxu0
  %v246 = vpop.f32.mrb[0].mxu0
  %v247 = vadd.f32 0.0, %v246
  %v248 = vpop.f32.mrb[0].mxu0
  %249 = vmatprep.mubr.bf16.mxu0 0
  %250 = vmatmul.mubr.bf16.gmra.mrb[0].mxu0 %v111
  %v251 = vpop.f32.mrb[0].mxu0
  %v252 = vadd.f32 0.0, %v251
  %v253 = vpop.f32.mrb[0].mxu0
  %v254 = vpop.f32.mrb[0].mxu0
  %v255 = vadd.f32 0.0, %v254
  %v256 = vpop.f32.mrb[0].mxu0
  %257 = vmatprep.mubr.bf16.mxu0 0
  %258 = vmatmul.mubr.bf16.gmra.mrb[0].mxu0 %v112
  %v259 = vpop.f32.mrb[0].mxu0
  %v260 = vadd.f32 0.0, %v259
  %v261 = vpop.f32.mrb[0].mxu0
  %v262 = vpop.f32.mrb[0].mxu0
  %v263 = vadd.f32 0.0, %v262
  %v264 = vpop.f32.mrb[0].mxu0
  %265 = vdwg.mxu0
  %v282 = vunpack.c.l.b16 %v21
  %v283 = vunpack.c.l.b16 %v22
  %v284 = vunpack.c.l.b16 %v23
  %v285 = vunpack.c.l.b16 %v24
  %v286 = vunpack.c.l.b16 %v25
  %v287 = vunpack.c.l.b16 %v26
  %v288 = vunpack.c.l.b16 %v27
  %v289 = vunpack.c.l.b16 %v28
  %v290 = vunpack.c.l.b16 %v29
  %v291 = vunpack.c.l.b16 %v30
  %v292 = vunpack.c.l.b16 %v31
  %v293 = vunpack.c.l.b16 %v32
  %v294 = vunpack.c.l.b16 %v33
  %v295 = vunpack.c.l.b16 %v34
  %v296 = vunpack.c.l.b16 %v35
  %v297 = vunpack.c.l.b16 %v36
  %v298 = vpack.c.b16 %v283, %v282
  %v299 = vpack.c.b16 %v285, %v284
  %v300 = vpack.c.b16 %v287, %v286
  %v301 = vpack.c.b16 %v289, %v288
  %v302 = vpack.c.b16 %v291, %v290
  %v303 = vpack.c.b16 %v293, %v292
  %v304 = vpack.c.b16 %v295, %v294
  %v305 = vpack.c.b16 %v297, %v296
  %v310 = vunpack.c.l.b16 %v37
  %v311 = vunpack.c.l.b16 %v38
  %v312 = vunpack.c.l.b16 %v39
  %v313 = vunpack.c.l.b16 %v40
  %v314 = vpack.c.b16 %v311, %v310
  %v315 = vpack.c.b16 %v313, %v312
  %vm318 = vcmask 261120
  %v320 = vsel %vm318, %v298, 0
  %v323 = vsel %vm318, %v299, 0
  %v326 = vsel %vm318, %v300, 0
  %v329 = vsel %vm318, %v301, 0
  %v332 = vsel %vm318, %v302, 0
  %v335 = vsel %vm318, %v303, 0
  %v338 = vsel %vm318, %v304, 0
  %v341 = vsel %vm318, %v305, 0
  %343 = vmatprep.subr.bf16.mxu0 0
  %344 = vmatpush1.bf16.msra.mxu0 %v314
  %345 = vmatprep.subr.bf16.mxu0 0
  %346 = vmatpush1.bf16.msra.mxu0 %v315
  %347 = vmatprep.subr.bf16.mxu0 0
  %348 = vmatpush1.bf16.msra.mxu0 0
  %349 = vmatprep.subr.bf16.mxu0 0
  %350 = vmatpush1.bf16.msra.mxu0 0
  %351 = vmatprep.subr.bf16.mxu0 0
  %352 = vmatpush1.bf16.msra.mxu0 0
  %353 = vmatprep.subr.bf16.mxu0 0
  %354 = vmatpush1.bf16.msra.mxu0 0
  %355 = vmatprep.subr.bf16.mxu0 0
  %356 = vmatpush1.bf16.msra.mxu0 0
  %357 = vmatprep.subr.bf16.mxu0 0
  %358 = vmatpush1.bf16.msra.mxu0 0
  %359 = vmatprep.subr.bf16.mxu0 0
  %360 = vmatpush1.bf16.msra.mxu0 0
  %361 = vmatprep.subr.bf16.mxu0 0
  %362 = vmatpush1.bf16.msra.mxu0 0
  %363 = vmatprep.subr.bf16.mxu0 0
  %364 = vmatpush1.bf16.msra.mxu0 0
  %365 = vmatprep.subr.bf16.mxu0 0
  %366 = vmatpush1.bf16.msra.mxu0 0
  %367 = vmatprep.subr.bf16.mxu0 0
  %368 = vmatpush1.bf16.msra.mxu0 0
  %369 = vmatprep.subr.bf16.mxu0 0
  %370 = vmatpush1.bf16.msra.mxu0 0
  %371 = vmatprep.subr.bf16.mxu0 0
  %372 = vmatpush1.bf16.msra.mxu0 0
  %373 = vmatprep.subr.bf16.mxu0 0
  %374 = vmatpush1.bf16.msra.mxu0 0
  %375 = vmatprep.mubr.bf16.mxu0 0
  %376 = vmatmul.mubr.bf16.gmra.mrb[0].mxu0 %v320
  %v377 = vpop.f32.mrb[0].mxu0
  %v378 = vadd.f32 %v204, %v377
  %v379 = vpop.f32.mrb[0].mxu0
  %v380 = vpop.f32.mrb[0].mxu0
  %v381 = vadd.f32 %v207, %v380
  %v382 = vpop.f32.mrb[0].mxu0
  %383 = vmatprep.mubr.bf16.mxu0 0
  %384 = vmatmul.mubr.bf16.gmra.mrb[0].mxu0 %v323
  %v385 = vpop.f32.mrb[0].mxu0
  %v386 = vadd.f32 %v212, %v385
  %v387 = vpop.f32.mrb[0].mxu0
  %v388 = vpop.f32.mrb[0].mxu0
  %v389 = vadd.f32 %v215, %v388
  %v390 = vpop.f32.mrb[0].mxu0
  %391 = vmatprep.mubr.bf16.mxu0 0
  %392 = vmatmul.mubr.bf16.gmra.mrb[0].mxu0 %v326
  %v393 = vpop.f32.mrb[0].mxu0
  %v394 = vadd.f32 %v220, %v393
  %v395 = vpop.f32.mrb[0].mxu0
  %v396 = vpop.f32.mrb[0].mxu0
  %v397 = vadd.f32 %v223, %v396
  %v398 = vpop.f32.mrb[0].mxu0
  %399 = vmatprep.mubr.bf16.mxu0 0
  %400 = vmatmul.mubr.bf16.gmra.mrb[0].mxu0 %v329
  %v401 = vpop.f32.mrb[0].mxu0
  %v402 = vadd.f32 %v228, %v401
  %v403 = vpop.f32.mrb[0].mxu0
  %v404 = vpop.f32.mrb[0].mxu0
  %v405 = vadd.f32 %v231, %v404
  %v406 = vpop.f32.mrb[0].mxu0
  %407 = vmatprep.mubr.bf16.mxu0 0
  %408 = vmatmul.mubr.bf16.gmra.mrb[0].mxu0 %v332
  %v409 = vpop.f32.mrb[0].mxu0
  %v410 = vadd.f32 %v236, %v409
  %v411 = vpop.f32.mrb[0].mxu0
  %v412 = vpop.f32.mrb[0].mxu0
  %v413 = vadd.f32 %v239, %v412
  %v414 = vpop.f32.mrb[0].mxu0
  %415 = vmatprep.mubr.bf16.mxu0 0
  %416 = vmatmul.mubr.bf16.gmra.mrb[0].mxu0 %v335
  %v417 = vpop.f32.mrb[0].mxu0
  %v418 = vadd.f32 %v244, %v417
  %v419 = vpop.f32.mrb[0].mxu0
  %v420 = vpop.f32.mrb[0].mxu0
  %v421 = vadd.f32 %v247, %v420
  %v422 = vpop.f32.mrb[0].mxu0
  %423 = vmatprep.mubr.bf16.mxu0 0
  %424 = vmatmul.mubr.bf16.gmra.mrb[0].mxu0 %v338
  %v425 = vpop.f32.mrb[0].mxu0
  %v426 = vadd.f32 %v252, %v425
  %v427 = vpop.f32.mrb[0].mxu0
  %v428 = vpop.f32.mrb[0].mxu0
  %v429 = vadd.f32 %v255, %v428
  %v430 = vpop.f32.mrb[0].mxu0
  %431 = vmatprep.mubr.bf16.mxu0 0
  %432 = vmatmul.mubr.bf16.gmra.mrb[0].mxu0 %v341
  %v433 = vpop.f32.mrb[0].mxu0
  %v434 = vadd.f32 %v260, %v433
  %v435 = vpop.f32.mrb[0].mxu0
  %v436 = vpop.f32.mrb[0].mxu0
  %v437 = vadd.f32 %v263, %v436
  %v438 = vpop.f32.mrb[0].mxu0
  %439 = vdwg.mxu0
  %v440 = vld [vmem:[%s4] sm:$0x1]
  %v442 = vlaneseq
  %v443 = vshrl.u32 %v442, 7
  %v444 = vsub.s32 0, %v443
  %v445 = vrot.slane %v440, %v444
  %v447 = vadd.f32 %v378, %v445
  %v448 = vadd.f32 %v381, %v445
  %v449 = vadd.f32 %v386, %v445
  %v450 = vadd.f32 %v389, %v445
  %v451 = vadd.f32 %v394, %v445
  %v452 = vadd.f32 %v397, %v445
  %v453 = vadd.f32 %v402, %v445
  %v454 = vadd.f32 %v405, %v445
  %v455 = vadd.f32 %v410, %v445
  %v456 = vadd.f32 %v413, %v445
  %v457 = vadd.f32 %v418, %v445
  %v458 = vadd.f32 %v421, %v445
  %v459 = vadd.f32 %v426, %v445
  %v460 = vadd.f32 %v429, %v445
  %v461 = vadd.f32 %v434, %v445
  %v462 = vadd.f32 %v437, %v445
  %v463 = vmax.f32 %v447, 0.0
  %v464 = vmax.f32 %v448, 0.0
  %v465 = vmax.f32 %v449, 0.0
  %v466 = vmax.f32 %v450, 0.0
  %v467 = vmax.f32 %v451, 0.0
  %v468 = vmax.f32 %v452, 0.0
  %v469 = vmax.f32 %v453, 0.0
  %v470 = vmax.f32 %v454, 0.0
  %v471 = vmax.f32 %v455, 0.0
  %v472 = vmax.f32 %v456, 0.0
  %v473 = vmax.f32 %v457, 0.0
  %v474 = vmax.f32 %v458, 0.0
  %v475 = vmax.f32 %v459, 0.0
  %v476 = vmax.f32 %v460, 0.0
  %v477 = vmax.f32 %v461, 0.0
  %v478 = vmax.f32 %v462, 0.0
  %v479 = vpack.c.bf16 %v464, %v463
  %v480 = vpack.c.bf16 %v466, %v465
  %v481 = vpack.c.bf16 %v468, %v467
  %v482 = vpack.c.bf16 %v470, %v469
  %v483 = vpack.c.bf16 %v472, %v471
  %v484 = vpack.c.bf16 %v474, %v473
  %v485 = vpack.c.bf16 %v476, %v475
  %v486 = vpack.c.bf16 %v478, %v477
  %v495 = vunpack.c.l.b16 %v479
  %v496 = vunpack.c.h.b16 %v479
  %v497 = vunpack.c.l.b16 %v480
  %v498 = vunpack.c.h.b16 %v480
  %v499 = vunpack.c.l.b16 %v481
  %v500 = vunpack.c.h.b16 %v481
  %v501 = vunpack.c.l.b16 %v482
  %v502 = vunpack.c.h.b16 %v482
  %v503 = vunpack.c.l.b16 %v483
  %v504 = vunpack.c.h.b16 %v483
  %v505 = vunpack.c.l.b16 %v484
  %v506 = vunpack.c.h.b16 %v484
  %v507 = vunpack.c.l.b16 %v485
  %v508 = vunpack.c.h.b16 %v485
  %v509 = vunpack.c.l.b16 %v486
  %v510 = vunpack.c.h.b16 %v486
  %v511 = vpack.c.b16 %v495, %v495
  %v512 = vpack.c.b16 %v496, %v496
  %v513 = vpack.c.b16 %v497, %v497
  %v514 = vpack.c.b16 %v498, %v498
  %v515 = vpack.c.b16 %v499, %v499
  %v516 = vpack.c.b16 %v500, %v500
  %v517 = vpack.c.b16 %v501, %v501
  %v518 = vpack.c.b16 %v502, %v502
  %v519 = vpack.c.b16 %v503, %v503
  %v520 = vpack.c.b16 %v504, %v504
  %v521 = vpack.c.b16 %v505, %v505
  %v522 = vpack.c.b16 %v506, %v506
  %v523 = vpack.c.b16 %v507, %v507
  %v524 = vpack.c.b16 %v508, %v508
  %v525 = vpack.c.b16 %v509, %v509
  %v526 = vpack.c.b16 %v510, %v510
  %vm543 = vcmask 519168
  %544 = vst.msk [vmem:[%s5] sm:$0xf] %vm543, %v511
  %545 = vst.msk [vmem:[%s5 + $0x4] sm:$0xf] %vm543, %v512
  %546 = vst.msk [vmem:[%s5 + $0x8] sm:$0xf] %vm543, %v513
  %547 = vst.msk [vmem:[%s5 + $0xc] sm:$0xf] %vm543, %v514
  %548 = vst.msk [vmem:[%s5 + $0x10] sm:$0xf] %vm543, %v515
  %549 = vst.msk [vmem:[%s5 + $0x14] sm:$0xf] %vm543, %v516
  %550 = vst.msk [vmem:[%s5 + $0x18] sm:$0xf] %vm543, %v517
  %551 = vst.msk [vmem:[%s5 + $0x1c] sm:$0xf] %vm543, %v518
  %552 = vst.msk [vmem:[%s5 + $0x20] sm:$0xf] %vm543, %v519
  %553 = vst.msk [vmem:[%s5 + $0x24] sm:$0xf] %vm543, %v520
  %554 = vst.msk [vmem:[%s5 + $0x28] sm:$0xf] %vm543, %v521
  %555 = vst.msk [vmem:[%s5 + $0x2c] sm:$0xf] %vm543, %v522
  %556 = vst.msk [vmem:[%s5 + $0x30] sm:$0xf] %vm543, %v523
  %557 = vst.msk [vmem:[%s5 + $0x34] sm:$0xf] %vm543, %v524
  %558 = vst.msk [vmem:[%s5 + $0x38] sm:$0xf] %vm543, %v525
  %559 = vst.msk [vmem:[%s5 + $0x3c] sm:$0xf] %vm543, %v526
  // Predicated region
  $region22: #{_lambda_.25} parent=0 // pred_check
    _
  $region23: #{_lambda_.25} parent=0 // pred_check_branch
    %561 = sbr.rel (0) target = $region25
  $region24: #{_lambda_.25} parent=0 // pred_region
    _
  $region25: #{_lambda_.25} parent=0 // pred_fallthru
    _
  // Predicated region
  $region26: #{_lambda_.25} parent=0 // pred_check
    _
  $region27: #{_lambda_.25} parent=0 // pred_check_branch
    %563 = sbr.rel (0) target = $region29
  $region28: #{_lambda_.25} parent=0 // pred_region
    _
  $region29: #{_lambda_.25} parent=0 // pred_fallthru
    _

// kernel: _lambda_.24
$region0: #{_lambda_.24}
  #allocation0 [shape = 'u32[]', space=smem, size = 0x4, offset = 0x4, fixed_abs, tag = 'smem constant byte address 0x4 - core index']
  #allocation1 [shape = 'u32[144,128]{1,0:T(1,128)}', space=vmem, size = 0x12000, scoped, tag = 'internal scratch']
  %s0 = inlined_call_operand.vmem [shape: bf16[128,288], index: 0, kind: input, shape index: {}]
  %s1 = inlined_call_operand.vmem [shape: bf16[288,32], index: 1, kind: input, shape index: {}]
  %s2 = inlined_call_operand.vmem [shape: f32[1,32], index: 2, kind: input, shape index: {}]
  %s3 = inlined_call_operand.vmem [shape: bf16[128,32], index: 3, kind: output, shape index: {}]
  %s4 = sld [smem:[#allocation0]]
  $region22: #{_lambda_.24} parent=0
    _
  %s6 = ssub.s32 1, %s4
  %s7 = scalar_select 0, %s6, %s4
  // Predicated region
  $region2: #{_lambda_.24} parent=0 // pred_check
    _
  $region3: #{_lambda_.24} parent=0 // pred_check_branch
    %9 = sbr.rel (0) target = $region5
  $region4: #{_lambda_.24} parent=0 // pred_region
    _
  $region5: #{_lambda_.24} parent=0 // pred_fallthru
    _
  // Predicated region
  $region6: #{_lambda_.24} parent=0 // pred_check
    _
  $region7: #{_lambda_.24} parent=0 // pred_check_branch
    %11 = sbr.rel (0) target = $region9
  $region8: #{_lambda_.24} parent=0 // pred_region
    _
  $region9: #{_lambda_.24} parent=0 // pred_fallthru
    _
  // Predicated region
  $region10: #{_lambda_.24} parent=0 // pred_check
    _
  $region11: #{_lambda_.24} parent=0 // pred_check_branch
    %13 = sbr.rel (0) target = $region13
  $region12: #{_lambda_.24} parent=0 // pred_region
    _
  $region13: #{_lambda_.24} parent=0 // pred_fallthru
    _
  %v15 = vld [vmem:[%s0] sm:$0xff]
  %v16 = vld [vmem:[%s0 + $0x8] sm:$0xf]
  %v17 = vld [vmem:[%s0 + $0xc] sm:$0xff]
  %v18 = vld [vmem:[%s0 + $0x14] sm:$0xf]
  %v19 = vld [vmem:[%s0 + $0x18] sm:$0xff]
  %v20 = vld [vmem:[%s0 + $0x20] sm:$0xf]
  %v21 = vld [vmem:[%s0 + $0x24] sm:$0xff]
  %v22 = vld [vmem:[%s0 + $0x2c] sm:$0xf]
  %v23 = vld [vmem:[%s0 + $0x30] sm:$0xff]
  %v24 = vld [vmem:[%s0 + $0x38] sm:$0xf]
  %v25 = vld [vmem:[%s0 + $0x3c] sm:$0xff]
  %v26 = vld [vmem:[%s0 + $0x44] sm:$0xf]
  %v27 = vld [vmem:[%s0 + $0x48] sm:$0xff]
  %v28 = vld [vmem:[%s0 + $0x50] sm:$0xf]
  %v29 = vld [vmem:[%s0 + $0x54] sm:$0xff]
  %v30 = vld [vmem:[%s0 + $0x5c] sm:$0xf]
  %v31 = vld [vmem:[%s0 + $0x60] sm:$0xff]
  %v32 = vld [vmem:[%s0 + $0x68] sm:$0xf]
  %v33 = vld [vmem:[%s0 + $0x6c] sm:$0xff]
  %v34 = vld [vmem:[%s0 + $0x74] sm:$0xf]
  %v35 = vld [vmem:[%s0 + $0x78] sm:$0xff]
  %v36 = vld [vmem:[%s0 + $0x80] sm:$0xf]
  %v37 = vld [vmem:[%s0 + $0x84] sm:$0xff]
  %v38 = vld [vmem:[%s0 + $0x8c] sm:$0xf]
  %v39 = vld [vmem:[%s0 + $0x90] sm:$0xff]
  %v40 = vld [vmem:[%s0 + $0x98] sm:$0xf]
  %v41 = vld [vmem:[%s0 + $0x9c] sm:$0xff]
  %v42 = vld [vmem:[%s0 + $0xa4] sm:$0xf]
  %v43 = vld [vmem:[%s0 + $0xa8] sm:$0xff]
  %v44 = vld [vmem:[%s0 + $0xb0] sm:$0xf]
  %v45 = vld [vmem:[%s0 + $0xb4] sm:$0xff]
  %v46 = vld [vmem:[%s0 + $0xbc] sm:$0xf]
  %v47 = vld [vmem:[%s1] sm:$0xf]
  %v48 = vld [vmem:[%s1 + $0x4] sm:$0xf]
  %v49 = vld [vmem:[%s1 + $0x8] sm:$0xf]
  %v50 = vld [vmem:[%s1 + $0xc] sm:$0xf]
  %v51 = vld [vmem:[%s1 + $0x10] sm:$0xf]
  %v52 = vld [vmem:[%s1 + $0x14] sm:$0xf]
  %v53 = vld [vmem:[%s1 + $0x18] sm:$0xf]
  %v54 = vld [vmem:[%s1 + $0x1c] sm:$0xf]
  %v55 = vld [vmem:[%s1 + $0x20] sm:$0xf]
  %v56 = vld [vmem:[%s1 + $0x24] sm:$0xf]
  %v57 = vld [vmem:[%s1 + $0x28] sm:$0xf]
  %v58 = vld [vmem:[%s1 + $0x2c] sm:$0xf]
  %v59 = vld [vmem:[%s1 + $0x30] sm:$0xf]
  %v60 = vld [vmem:[%s1 + $0x34] sm:$0xf]
  %v61 = vld [vmem:[%s1 + $0x38] sm:$0xf]
  %v62 = vld [vmem:[%s1 + $0x3c] sm:$0xf]
  %v63 = vld [vmem:[%s1 + $0x40] sm:$0xf]
  %v64 = vld [vmem:[%s1 + $0x44] sm:$0xf]
  %v65 = vld [vmem:[%s1 + $0x48] sm:$0xf]
  %v66 = vld [vmem:[%s1 + $0x4c] sm:$0xf]
  %v67 = vld [vmem:[%s1 + $0x50] sm:$0xf]
  %v68 = vld [vmem:[%s1 + $0x54] sm:$0xf]
  %v69 = vld [vmem:[%s1 + $0x58] sm:$0xf]
  %v70 = vld [vmem:[%s1 + $0x5c] sm:$0xf]
  %v71 = vld [vmem:[%s1 + $0x60] sm:$0xf]
  %v72 = vld [vmem:[%s1 + $0x64] sm:$0xf]
  %v73 = vld [vmem:[%s1 + $0x68] sm:$0xf]
  %v74 = vld [vmem:[%s1 + $0x6c] sm:$0xf]
  %v75 = vld [vmem:[%s1 + $0x70] sm:$0xf]
  %v76 = vld [vmem:[%s1 + $0x74] sm:$0xf]
  %v77 = vld [vmem:[%s1 + $0x78] sm:$0xf]
  %v78 = vld [vmem:[%s1 + $0x7c] sm:$0xf]
  %v79 = vld [vmem:[%s1 + $0x80] sm:$0xf]
  %v80 = vld [vmem:[%s1 + $0x84] sm:$0xf]
  %v81 = vld [vmem:[%s1 + $0x88] sm:$0xf]
  %v82 = vld [vmem:[%s1 + $0x8c] sm:$0xf]
  %v83 = vld [vmem:[%s2] sm:$0x1]
  %v85 = vlaneseq
  %v86 = vshrl.u32 %v85, 7
  %v87 = vsub.s32 0, %v86
  %v88 = vrot.slane %v83, %v87
  %v122 = vunpack.c.l.b16 %v15
  %v123 = vunpack.c.h.b16 %v15
  %v124 = vunpack.c.l.b16 %v16
  %v125 = vunpack.c.l.b16 %v17
  %v126 = vunpack.c.h.b16 %v17
  %v127 = vunpack.c.l.b16 %v18
  %v128 = vunpack.c.l.b16 %v19
  %v129 = vunpack.c.h.b16 %v19
  %v130 = vunpack.c.l.b16 %v20
  %v131 = vunpack.c.l.b16 %v21
  %v132 = vunpack.c.h.b16 %v21
  %v133 = vunpack.c.l.b16 %v22
  %v134 = vunpack.c.l.b16 %v23
  %v135 = vunpack.c.h.b16 %v23
  %v136 = vunpack.c.l.b16 %v24
  %v137 = vunpack.c.l.b16 %v25
  %v138 = vunpack.c.h.b16 %v25
  %v139 = vunpack.c.l.b16 %v26
  %v140 = vunpack.c.l.b16 %v27
  %v141 = vunpack.c.h.b16 %v27
  %v142 = vunpack.c.l.b16 %v28
  %v143 = vunpack.c.l.b16 %v29
  %v144 = vunpack.c.h.b16 %v29
  %v145 = vunpack.c.l.b16 %v30
  %v146 = vunpack.c.l.b16 %v31
  %v147 = vunpack.c.h.b16 %v31
  %v148 = vunpack.c.l.b16 %v32
  %v149 = vunpack.c.l.b16 %v33
  %v150 = vunpack.c.h.b16 %v33
  %v151 = vunpack.c.l.b16 %v34
  %v152 = vunpack.c.l.b16 %v35
  %v153 = vunpack.c.h.b16 %v35
  %v154 = vunpack.c.l.b16 %v36
  %v155 = vunpack.c.l.b16 %v37
  %v156 = vunpack.c.h.b16 %v37
  %v157 = vunpack.c.l.b16 %v38
  %v158 = vunpack.c.l.b16 %v39
  %v159 = vunpack.c.h.b16 %v39
  %v160 = vunpack.c.l.b16 %v40
  %v161 = vunpack.c.l.b16 %v41
  %v162 = vunpack.c.h.b16 %v41
  %v163 = vunpack.c.l.b16 %v42
  %v164 = vunpack.c.l.b16 %v43
  %v165 = vunpack.c.h.b16 %v43
  %v166 = vunpack.c.l.b16 %v44
  %v167 = vunpack.c.l.b16 %v45
  %v168 = vunpack.c.h.b16 %v45
  %v169 = vunpack.c.l.b16 %v46
  %v170 = vpack.c.b16 %v125, %v122
  %v171 = vpack.c.b16 %v126, %v123
  %v172 = vpack.c.b16 %v127, %v124
  %v173 = vpack.c.b16 %v131, %v128
  %v174 = vpack.c.b16 %v132, %v129
  %v175 = vpack.c.b16 %v133, %v130
  %v176 = vpack.c.b16 %v137, %v134
  %v177 = vpack.c.b16 %v138, %v135
  %v178 = vpack.c.b16 %v139, %v136
  %v179 = vpack.c.b16 %v143, %v140
  %v180 = vpack.c.b16 %v144, %v141
  %v181 = vpack.c.b16 %v145, %v142
  %v182 = vpack.c.b16 %v149, %v146
  %v183 = vpack.c.b16 %v150, %v147
  %v184 = vpack.c.b16 %v151, %v148
  %v185 = vpack.c.b16 %v155, %v152
  %v186 = vpack.c.b16 %v156, %v153
  %v187 = vpack.c.b16 %v157, %v154
  %v188 = vpack.c.b16 %v161, %v158
  %v189 = vpack.c.b16 %v162, %v159
  %v190 = vpack.c.b16 %v163, %v160
  %v191 = vpack.c.b16 %v167, %v164
  %v192 = vpack.c.b16 %v168, %v165
  %v193 = vpack.c.b16 %v169, %v166
  %v246 = vunpack.c.l.b16 %v47
  %v247 = vunpack.c.l.b16 %v48
  %v248 = vunpack.c.l.b16 %v49
  %v249 = vunpack.c.l.b16 %v50
  %v250 = vunpack.c.l.b16 %v51
  %v251 = vunpack.c.l.b16 %v52
  %v252 = vunpack.c.l.b16 %v53
  %v253 = vunpack.c.l.b16 %v54
  %v254 = vunpack.c.l.b16 %v55
  %v255 = vunpack.c.l.b16 %v56
  %v256 = vunpack.c.l.b16 %v57
  %v257 = vunpack.c.l.b16 %v58
  %v258 = vunpack.c.l.b16 %v59
  %v259 = vunpack.c.l.b16 %v60
  %v260 = vunpack.c.l.b16 %v61
  %v261 = vunpack.c.l.b16 %v62
  %v262 = vunpack.c.l.b16 %v63
  %v263 = vunpack.c.l.b16 %v64
  %v264 = vunpack.c.l.b16 %v65
  %v265 = vunpack.c.l.b16 %v66
  %v266 = vunpack.c.l.b16 %v67
  %v267 = vunpack.c.l.b16 %v68
  %v268 = vunpack.c.l.b16 %v69
  %v269 = vunpack.c.l.b16 %v70
  %v270 = vunpack.c.l.b16 %v71
  %v271 = vunpack.c.l.b16 %v72
  %v272 = vunpack.c.l.b16 %v73
  %v273 = vunpack.c.l.b16 %v74
  %v274 = vunpack.c.l.b16 %v75
  %v275 = vunpack.c.l.b16 %v76
  %v276 = vunpack.c.l.b16 %v77
  %v277 = vunpack.c.l.b16 %v78
  %v278 = vunpack.c.l.b16 %v79
  %v279 = vunpack.c.l.b16 %v80
  %v280 = vunpack.c.l.b16 %v81
  %v281 = vunpack.c.l.b16 %v82
  %v282 = vpack.c.b16 %v247, %v246
  %v283 = vpack.c.b16 %v249, %v248
  %v284 = vpack.c.b16 %v251, %v250
  %v285 = vpack.c.b16 %v253, %v252
  %v286 = vpack.c.b16 %v255, %v254
  %v287 = vpack.c.b16 %v257, %v256
  %v288 = vpack.c.b16 %v259, %v258
  %v289 = vpack.c.b16 %v261, %v260
  %v290 = vpack.c.b16 %v263, %v262
  %v291 = vpack.c.b16 %v265, %v264
  %v292 = vpack.c.b16 %v267, %v266
  %v293 = vpack.c.b16 %v269, %v268
  %v294 = vpack.c.b16 %v271, %v270
  %v295 = vpack.c.b16 %v273, %v272
  %v296 = vpack.c.b16 %v275, %v274
  %v297 = vpack.c.b16 %v277, %v276
  %v298 = vpack.c.b16 %v279, %v278
  %v299 = vpack.c.b16 %v281, %v280
  %vm318 = vcmask 261120
  %v320 = vsel %vm318, %v172, 0
  %v323 = vsel %vm318, %v175, 0
  %v326 = vsel %vm318, %v178, 0
  %v329 = vsel %vm318, %v181, 0
  %v332 = vsel %vm318, %v184, 0
  %v335 = vsel %vm318, %v187, 0
  %v338 = vsel %vm318, %v190, 0
  %v341 = vsel %vm318, %v193, 0
  %343 = vmatprep.subr.bf16.mxu0 0
  %344 = vmatpush1.bf16.msra.mxu0 %v282
  %345 = vmatprep.subr.bf16.mxu0 0
  %346 = vmatpush1.bf16.msra.mxu0 %v283
  %347 = vmatprep.subr.bf16.mxu0 0
  %348 = vmatpush1.bf16.msra.mxu0 %v284
  %349 = vmatprep.subr.bf16.mxu0 0
  %350 = vmatpush1.bf16.msra.mxu0 %v285
  %351 = vmatprep.subr.bf16.mxu0 0
  %352 = vmatpush1.bf16.msra.mxu0 %v286
  %353 = vmatprep.subr.bf16.mxu0 0
  %354 = vmatpush1.bf16.msra.mxu0 %v287
  %355 = vmatprep.subr.bf16.mxu0 0
  %356 = vmatpush1.bf16.msra.mxu0 %v288
  %357 = vmatprep.subr.bf16.mxu0 0
  %358 = vmatpush1.bf16.msra.mxu0 %v289
  %359 = vmatprep.subr.bf16.mxu0 0
  %360 = vmatpush1.bf16.msra.mxu0 %v290
  %361 = vmatprep.subr.bf16.mxu0 0
  %362 = vmatpush1.bf16.msra.mxu0 %v291
  %363 = vmatprep.subr.bf16.mxu0 0
  %364 = vmatpush1.bf16.msra.mxu0 %v292
  %365 = vmatprep.subr.bf16.mxu0 0
  %366 = vmatpush1.bf16.msra.mxu0 %v293
  %367 = vmatprep.subr.bf16.mxu0 0
  %368 = vmatpush1.bf16.msra.mxu0 %v294
  %369 = vmatprep.subr.bf16.mxu0 0
  %370 = vmatpush1.bf16.msra.mxu0 %v295
  %371 = vmatprep.subr.bf16.mxu0 0
  %372 = vmatpush1.bf16.msra.mxu0 %v296
  %373 = vmatprep.subr.bf16.mxu0 0
  %374 = vmatpush1.bf16.msra.mxu0 %v297
  %375 = vmatprep.mubr.bf16.mxu0 %v171
  %376 = vmatmul.mubr.bf16.gmra.mrb[0].mxu0 %v170
  %v377 = vpop.f32.mrb[0].mxu0
  %v378 = vadd.f32 %v88, %v377
  %v379 = vpop.f32.mrb[0].mxu0
  %v380 = vpop.f32.mrb[0].mxu0
  %v381 = vadd.f32 %v88, %v380
  %v382 = vpop.f32.mrb[0].mxu0
  %383 = vmatprep.mubr.bf16.mxu0 %v174
  %384 = vmatmul.mubr.bf16.gmra.mrb[0].mxu0 %v173
  %v385 = vpop.f32.mrb[0].mxu0
  %v386 = vadd.f32 %v88, %v385
  %v387 = vpop.f32.mrb[0].mxu0
  %v388 = vpop.f32.mrb[0].mxu0
  %v389 = vadd.f32 %v88, %v388
  %v390 = vpop.f32.mrb[0].mxu0
  %391 = vmatprep.mubr.bf16.mxu0 %v177
  %392 = vmatmul.mubr.bf16.gmra.mrb[0].mxu0 %v176
  %v393 = vpop.f32.mrb[0].mxu0
  %v394 = vadd.f32 %v88, %v393
  %v395 = vpop.f32.mrb[0].mxu0
  %v396 = vpop.f32.mrb[0].mxu0
  %v397 = vadd.f32 %v88, %v396
  %v398 = vpop.f32.mrb[0].mxu0
  %399 = vmatprep.mubr.bf16.mxu0 %v180
  %400 = vmatmul.mubr.bf16.gmra.mrb[0].mxu0 %v179
  %v401 = vpop.f32.mrb[0].mxu0
  %v402 = vadd.f32 %v88, %v401
  %v403 = vpop.f32.mrb[0].mxu0
  %v404 = vpop.f32.mrb[0].mxu0
  %v405 = vadd.f32 %v88, %v404
  %v406 = vpop.f32.mrb[0].mxu0
  %407 = vmatprep.mubr.bf16.mxu0 %v183
  %408 = vmatmul.mubr.bf16.gmra.mrb[0].mxu0 %v182
  %v409 = vpop.f32.mrb[0].mxu0
  %v410 = vadd.f32 %v88, %v409
  %v411 = vpop.f32.mrb[0].mxu0
  %v412 = vpop.f32.mrb[0].mxu0
  %v413 = vadd.f32 %v88, %v412
  %v414 = vpop.f32.mrb[0].mxu0
  %415 = vmatprep.mubr.bf16.mxu0 %v186
  %416 = vmatmul.mubr.bf16.gmra.mrb[0].mxu0 %v185
  %v417 = vpop.f32.mrb[0].mxu0
  %v418 = vadd.f32 %v88, %v417
  %v419 = vpop.f32.mrb[0].mxu0
  %v420 = vpop.f32.mrb[0].mxu0
  %v421 = vadd.f32 %v88, %v420
  %v422 = vpop.f32.mrb[0].mxu0
  %423 = vmatprep.mubr.bf16.mxu0 %v189
  %424 = vmatmul.mubr.bf16.gmra.mrb[0].mxu0 %v188
  %v425 = vpop.f32.mrb[0].mxu0
  %v426 = vadd.f32 %v88, %v425
  %v427 = vpop.f32.mrb[0].mxu0
  %v428 = vpop.f32.mrb[0].mxu0
  %v429 = vadd.f32 %v88, %v428
  %v430 = vpop.f32.mrb[0].mxu0
  %431 = vmatprep.mubr.bf16.mxu0 %v192
  %432 = vmatmul.mubr.bf16.gmra.mrb[0].mxu0 %v191
  %v433 = vpop.f32.mrb[0].mxu0
  %v434 = vadd.f32 %v88, %v433
  %v435 = vpop.f32.mrb[0].mxu0
  %v436 = vpop.f32.mrb[0].mxu0
  %v437 = vadd.f32 %v88, %v436
  %v438 = vpop.f32.mrb[0].mxu0
  %439 = vdwg.mxu0
  %440 = vmatprep.subr.bf16.mxu0 0
  %441 = vmatpush1.bf16.msra.mxu0 %v298
  %442 = vmatprep.subr.bf16.mxu0 0
  %443 = vmatpush1.bf16.msra.mxu0 %v299
  %444 = vmatprep.subr.bf16.mxu0 0
  %445 = vmatpush1.bf16.msra.mxu0 0
  %446 = vmatprep.subr.bf16.mxu0 0
  %447 = vmatpush1.bf16.msra.mxu0 0
  %448 = vmatprep.subr.bf16.mxu0 0
  %449 = vmatpush1.bf16.msra.mxu0 0
  %450 = vmatprep.subr.bf16.mxu0 0
  %451 = vmatpush1.bf16.msra.mxu0 0
  %452 = vmatprep.subr.bf16.mxu0 0
  %453 = vmatpush1.bf16.msra.mxu0 0
  %454 = vmatprep.subr.bf16.mxu0 0
  %455 = vmatpush1.bf16.msra.mxu0 0
  %456 = vmatprep.subr.bf16.mxu0 0
  %457 = vmatpush1.bf16.msra.mxu0 0
  %458 = vmatprep.subr.bf16.mxu0 0
  %459 = vmatpush1.bf16.msra.mxu0 0
  %460 = vmatprep.subr.bf16.mxu0 0
  %461 = vmatpush1.bf16.msra.mxu0 0
  %462 = vmatprep.subr.bf16.mxu0 0
  %463 = vmatpush1.bf16.msra.mxu0 0
  %464 = vmatprep.subr.bf16.mxu0 0
  %465 = vmatpush1.bf16.msra.mxu0 0
  %466 = vmatprep.subr.bf16.mxu0 0
  %467 = vmatpush1.bf16.msra.mxu0 0
  %468 = vmatprep.subr.bf16.mxu0 0
  %469 = vmatpush1.bf16.msra.mxu0 0
  %470 = vmatprep.subr.bf16.mxu0 0
  %471 = vmatpush1.bf16.msra.mxu0 0
  %472 = vmatprep.mubr.bf16.mxu0 0
  %473 = vmatmul.mubr.bf16.gmra.mrb[0].mxu0 %v320
  %v474 = vpop.f32.mrb[0].mxu0
  %v475 = vadd.f32 %v378, %v474
  %v476 = vpop.f32.mrb[0].mxu0
  %v477 = vpop.f32.mrb[0].mxu0
  %v478 = vadd.f32 %v381, %v477
  %v479 = vpop.f32.mrb[0].mxu0
  %480 = vmatprep.mubr.bf16.mxu0 0
  %481 = vmatmul.mubr.bf16.gmra.mrb[0].mxu0 %v323
  %v482 = vpop.f32.mrb[0].mxu0
  %v483 = vadd.f32 %v386, %v482
  %v484 = vpop.f32.mrb[0].mxu0
  %v485 = vpop.f32.mrb[0].mxu0
  %v486 = vadd.f32 %v389, %v485
  %v487 = vpop.f32.mrb[0].mxu0
  %488 = vmatprep.mubr.bf16.mxu0 0
  %489 = vmatmul.mubr.bf16.gmra.mrb[0].mxu0 %v326
  %v490 = vpop.f32.mrb[0].mxu0
  %v491 = vadd.f32 %v394, %v490
  %v492 = vpop.f32.mrb[0].mxu0
  %v493 = vpop.f32.mrb[0].mxu0
  %v494 = vadd.f32 %v397, %v493
  %v495 = vpop.f32.mrb[0].mxu0
  %496 = vmatprep.mubr.bf16.mxu0 0
  %497 = vmatmul.mubr.bf16.gmra.mrb[0].mxu0 %v329
  %v498 = vpop.f32.mrb[0].mxu0
  %v499 = vadd.f32 %v402, %v498
  %v500 = vpop.f32.mrb[0].mxu0
  %v501 = vpop.f32.mrb[0].mxu0
  %v502 = vadd.f32 %v405, %v501
  %v503 = vpop.f32.mrb[0].mxu0
  %504 = vmatprep.mubr.bf16.mxu0 0
  %505 = vmatmul.mubr.bf16.gmra.mrb[0].mxu0 %v332
  %v506 = vpop.f32.mrb[0].mxu0
  %v507 = vadd.f32 %v410, %v506
  %v508 = vpop.f32.mrb[0].mxu0
  %v509 = vpop.f32.mrb[0].mxu0
  %v510 = vadd.f32 %v413, %v509
  %v511 = vpop.f32.mrb[0].mxu0
  %512 = vmatprep.mubr.bf16.mxu0 0
  %513 = vmatmul.mubr.bf16.gmra.mrb[0].mxu0 %v335
  %v514 = vpop.f32.mrb[0].mxu0
  %v515 = vadd.f32 %v418, %v514
  %v516 = vpop.f32.mrb[0].mxu0
  %v517 = vpop.f32.mrb[0].mxu0
  %v518 = vadd.f32 %v421, %v517
  %v519 = vpop.f32.mrb[0].mxu0
  %520 = vmatprep.mubr.bf16.mxu0 0
  %521 = vmatmul.mubr.bf16.gmra.mrb[0].mxu0 %v338
  %v522 = vpop.f32.mrb[0].mxu0
  %v523 = vadd.f32 %v426, %v522
  %v524 = vpop.f32.mrb[0].mxu0
  %v525 = vpop.f32.mrb[0].mxu0
  %v526 = vadd.f32 %v429, %v525
  %v527 = vpop.f32.mrb[0].mxu0
  %528 = vmatprep.mubr.bf16.mxu0 0
  %529 = vmatmul.mubr.bf16.gmra.mrb[0].mxu0 %v341
  %v530 = vpop.f32.mrb[0].mxu0
  %v531 = vadd.f32 %v434, %v530
  %v532 = vpop.f32.mrb[0].mxu0
  %v533 = vpop.f32.mrb[0].mxu0
  %v534 = vadd.f32 %v437, %v533
  %v535 = vpop.f32.mrb[0].mxu0
  %536 = vdwg.mxu0
  %v537 = vmax.f32 %v475, 0.0
  %v538 = vmax.f32 %v478, 0.0
  %v539 = vmax.f32 %v483, 0.0
  %v540 = vmax.f32 %v486, 0.0
  %v541 = vmax.f32 %v491, 0.0
  %v542 = vmax.f32 %v494, 0.0
  %v543 = vmax.f32 %v499, 0.0
  %v544 = vmax.f32 %v502, 0.0
  %v545 = vmax.f32 %v507, 0.0
  %v546 = vmax.f32 %v510, 0.0
  %v547 = vmax.f32 %v515, 0.0
  %v548 = vmax.f32 %v518, 0.0
  %v549 = vmax.f32 %v523, 0.0
  %v550 = vmax.f32 %v526, 0.0
  %v551 = vmax.f32 %v531, 0.0
  %v552 = vmax.f32 %v534, 0.0
  %v553 = vpack.c.bf16 %v538, %v537
  %v554 = vpack.c.bf16 %v540, %v539
  %v555 = vpack.c.bf16 %v542, %v541
  %v556 = vpack.c.bf16 %v544, %v543
  %v557 = vpack.c.bf16 %v546, %v545
  %v558 = vpack.c.bf16 %v548, %v547
  %v559 = vpack.c.bf16 %v550, %v549
  %v560 = vpack.c.bf16 %v552, %v551
  %v569 = vunpack.c.l.b16 %v553
  %v570 = vunpack.c.h.b16 %v553
  %v571 = vunpack.c.l.b16 %v554
  %v572 = vunpack.c.h.b16 %v554
  %v573 = vunpack.c.l.b16 %v555
  %v574 = vunpack.c.h.b16 %v555
  %v575 = vunpack.c.l.b16 %v556
  %v576 = vunpack.c.h.b16 %v556
  %v577 = vunpack.c.l.b16 %v557
  %v578 = vunpack.c.h.b16 %v557
  %v579 = vunpack.c.l.b16 %v558
  %v580 = vunpack.c.h.b16 %v558
  %v581 = vunpack.c.l.b16 %v559
  %v582 = vunpack.c.h.b16 %v559
  %v583 = vunpack.c.l.b16 %v560
  %v584 = vunpack.c.h.b16 %v560
  %v585 = vpack.c.b16 %v569, %v569
  %v586 = vpack.c.b16 %v570, %v570
  %v587 = vpack.c.b16 %v571, %v571
  %v588 = vpack.c.b16 %v572, %v572
  %v589 = vpack.c.b16 %v573, %v573
  %v590 = vpack.c.b16 %v574, %v574
  %v591 = vpack.c.b16 %v575, %v575
  %v592 = vpack.c.b16 %v576, %v576
  %v593 = vpack.c.b16 %v577, %v577
  %v594 = vpack.c.b16 %v578, %v578
  %v595 = vpack.c.b16 %v579, %v579
  %v596 = vpack.c.b16 %v580, %v580
  %v597 = vpack.c.b16 %v581, %v581
  %v598 = vpack.c.b16 %v582, %v582
  %v599 = vpack.c.b16 %v583, %v583
  %v600 = vpack.c.b16 %v584, %v584
  %vm617 = vcmask 257024
  %618 = vst.msk [vmem:[%s3] sm:$0xf] %vm617, %v585
  %619 = vst.msk [vmem:[%s3 + $0x4] sm:$0xf] %vm617, %v586
  %620 = vst.msk [vmem:[%s3 + $0x8] sm:$0xf] %vm617, %v587
  %621 = vst.msk [vmem:[%s3 + $0xc] sm:$0xf] %vm617, %v588
  %622 = vst.msk [vmem:[%s3 + $0x10] sm:$0xf] %vm617, %v589
  %623 = vst.msk [vmem:[%s3 + $0x14] sm:$0xf] %vm617, %v590
  %624 = vst.msk [vmem:[%s3 + $0x18] sm:$0xf] %vm617, %v591
  %625 = vst.msk [vmem:[%s3 + $0x1c] sm:$0xf] %vm617, %v592
  %626 = vst.msk [vmem:[%s3 + $0x20] sm:$0xf] %vm617, %v593
  %627 = vst.msk [vmem:[%s3 + $0x24] sm:$0xf] %vm617, %v594
  %628 = vst.msk [vmem:[%s3 + $0x28] sm:$0xf] %vm617, %v595
  %629 = vst.msk [vmem:[%s3 + $0x2c] sm:$0xf] %vm617, %v596
  %630 = vst.msk [vmem:[%s3 + $0x30] sm:$0xf] %vm617, %v597
  %631 = vst.msk [vmem:[%s3 + $0x34] sm:$0xf] %vm617, %v598
  %632 = vst.msk [vmem:[%s3 + $0x38] sm:$0xf] %vm617, %v599
  %633 = vst.msk [vmem:[%s3 + $0x3c] sm:$0xf] %vm617, %v600
  // Predicated region
  $region14: #{_lambda_.24} parent=0 // pred_check
    _
  $region15: #{_lambda_.24} parent=0 // pred_check_branch
    %635 = sbr.rel (0) target = $region17
  $region16: #{_lambda_.24} parent=0 // pred_region
    _
  $region17: #{_lambda_.24} parent=0 // pred_fallthru
    _
  // Predicated region
  $region18: #{_lambda_.24} parent=0 // pred_check
    _
  $region19: #{_lambda_.24} parent=0 // pred_check_branch
    %637 = sbr.rel (0) target = $region21
  $region20: #{_lambda_.24} parent=0 // pred_region
    _
  $region21: #{_lambda_.24} parent=0 // pred_fallthru
    _

// kernel: _lambda_.26
$region0: #{_lambda_.26}
  #allocation0 [shape = 'u32[]', space=smem, size = 0x4, offset = 0x4, fixed_abs, tag = 'smem constant byte address 0x4 - core index']
  #allocation1 [shape = 'u32[144,128]{1,0:T(1,128)}', space=vmem, size = 0x12000, scoped, tag = 'internal scratch']
  %s0 = inlined_call_operand.vmem [shape: bf16[128,64], index: 0, kind: input, shape index: {}]
  %s1 = inlined_call_operand.vmem [shape: bf16[64,64], index: 1, kind: input, shape index: {}]
  %s2 = inlined_call_operand.vmem [shape: f32[1,64], index: 2, kind: input, shape index: {}]
  %s3 = inlined_call_operand.vmem [shape: bf16[128,64], index: 3, kind: output, shape index: {}]
  %s4 = sld [smem:[#allocation0]]
  $region22: #{_lambda_.26} parent=0
    _
  %s6 = ssub.s32 1, %s4
  %s7 = scalar_select 0, %s6, %s4
  // Predicated region
  $region2: #{_lambda_.26} parent=0 // pred_check
    _
  $region3: #{_lambda_.26} parent=0 // pred_check_branch
    %9 = sbr.rel (0) target = $region5
  $region4: #{_lambda_.26} parent=0 // pred_region
    _
  $region5: #{_lambda_.26} parent=0 // pred_fallthru
    _
  // Predicated region
  $region6: #{_lambda_.26} parent=0 // pred_check
    _
  $region7: #{_lambda_.26} parent=0 // pred_check_branch
    %11 = sbr.rel (0) target = $region9
  $region8: #{_lambda_.26} parent=0 // pred_region
    _
  $region9: #{_lambda_.26} parent=0 // pred_fallthru
    _
  // Predicated region
  $region10: #{_lambda_.26} parent=0 // pred_check
    _
  $region11: #{_lambda_.26} parent=0 // pred_check_branch
    %13 = sbr.rel (0) target = $region13
  $region12: #{_lambda_.26} parent=0 // pred_region
    _
  $region13: #{_lambda_.26} parent=0 // pred_fallthru
    _
  %v15 = vld [vmem:[%s0] sm:$0xf]
  %v16 = vld [vmem:[%s0 + $0x4] sm:$0xf]
  %v17 = vld [vmem:[%s0 + $0x8] sm:$0xf]
  %v18 = vld [vmem:[%s0 + $0xc] sm:$0xf]
  %v19 = vld [vmem:[%s0 + $0x10] sm:$0xf]
  %v20 = vld [vmem:[%s0 + $0x14] sm:$0xf]
  %v21 = vld [vmem:[%s0 + $0x18] sm:$0xf]
  %v22 = vld [vmem:[%s0 + $0x1c] sm:$0xf]
  %v23 = vld [vmem:[%s0 + $0x20] sm:$0xf]
  %v24 = vld [vmem:[%s0 + $0x24] sm:$0xf]
  %v25 = vld [vmem:[%s0 + $0x28] sm:$0xf]
  %v26 = vld [vmem:[%s0 + $0x2c] sm:$0xf]
  %v27 = vld [vmem:[%s0 + $0x30] sm:$0xf]
  %v28 = vld [vmem:[%s0 + $0x34] sm:$0xf]
  %v29 = vld [vmem:[%s0 + $0x38] sm:$0xf]
  %v30 = vld [vmem:[%s0 + $0x3c] sm:$0xf]
  %v31 = vld [vmem:[%s1] sm:$0xf]
  %v32 = vld [vmem:[%s1 + $0x4] sm:$0xf]
  %v33 = vld [vmem:[%s1 + $0x8] sm:$0xf]
  %v34 = vld [vmem:[%s1 + $0xc] sm:$0xf]
  %v35 = vld [vmem:[%s1 + $0x10] sm:$0xf]
  %v36 = vld [vmem:[%s1 + $0x14] sm:$0xf]
  %v37 = vld [vmem:[%s1 + $0x18] sm:$0xf]
  %v38 = vld [vmem:[%s1 + $0x1c] sm:$0xf]
  %v39 = vld [vmem:[%s2] sm:$0x1]
  %v41 = vlaneseq
  %v42 = vshrl.u32 %v41, 7
  %v43 = vsub.s32 0, %v42
  %v44 = vrot.slane %v39, %v43
  %v62 = vunpack.c.l.b16 %v15
  %v63 = vunpack.c.l.b16 %v16
  %v64 = vunpack.c.l.b16 %v17
  %v65 = vunpack.c.l.b16 %v18
  %v66 = vunpack.c.l.b16 %v19
  %v67 = vunpack.c.l.b16 %v20
  %v68 = vunpack.c.l.b16 %v21
  %v69 = vunpack.c.l.b16 %v22
  %v70 = vunpack.c.l.b16 %v23
  %v71 = vunpack.c.l.b16 %v24
  %v72 = vunpack.c.l.b16 %v25
  %v73 = vunpack.c.l.b16 %v26
  %v74 = vunpack.c.l.b16 %v27
  %v75 = vunpack.c.l.b16 %v28
  %v76 = vunpack.c.l.b16 %v29
  %v77 = vunpack.c.l.b16 %v30
  %v78 = vpack.c.b16 %v63, %v62
  %v79 = vpack.c.b16 %v65, %v64
  %v80 = vpack.c.b16 %v67, %v66
  %v81 = vpack.c.b16 %v69, %v68
  %v82 = vpack.c.b16 %v71, %v70
  %v83 = vpack.c.b16 %v73, %v72
  %v84 = vpack.c.b16 %v75, %v74
  %v85 = vpack.c.b16 %v77, %v76
  %v94 = vunpack.c.l.b16 %v31
  %v95 = vunpack.c.l.b16 %v32
  %v96 = vunpack.c.l.b16 %v33
  %v97 = vunpack.c.l.b16 %v34
  %v98 = vunpack.c.l.b16 %v35
  %v99 = vunpack.c.l.b16 %v36
  %v100 = vunpack.c.l.b16 %v37
  %v101 = vunpack.c.l.b16 %v38
  %v102 = vpack.c.b16 %v95, %v94
  %v103 = vpack.c.b16 %v97, %v96
  %v104 = vpack.c.b16 %v99, %v98
  %v105 = vpack.c.b16 %v101, %v100
  %vm110 = vcmask 523264
  %v112 = vsel %vm110, %v78, 0
  %v115 = vsel %vm110, %v79, 0
  %v118 = vsel %vm110, %v80, 0
  %v121 = vsel %vm110, %v81, 0
  %v124 = vsel %vm110, %v82, 0
  %v127 = vsel %vm110, %v83, 0
  %v130 = vsel %vm110, %v84, 0
  %v133 = vsel %vm110, %v85, 0
  %135 = vmatprep.subr.bf16.mxu0 0
  %136 = vmatpush1.bf16.msra.mxu0 %v102
  %137 = vmatprep.subr.bf16.mxu0 0
  %138 = vmatpush1.bf16.msra.mxu0 %v103
  %139 = vmatprep.subr.bf16.mxu0 0
  %140 = vmatpush1.bf16.msra.mxu0 %v104
  %141 = vmatprep.subr.bf16.mxu0 0
  %142 = vmatpush1.bf16.msra.mxu0 %v105
  %143 = vmatprep.subr.bf16.mxu0 0
  %144 = vmatpush1.bf16.msra.mxu0 0
  %145 = vmatprep.subr.bf16.mxu0 0
  %146 = vmatpush1.bf16.msra.mxu0 0
  %147 = vmatprep.subr.bf16.mxu0 0
  %148 = vmatpush1.bf16.msra.mxu0 0
  %149 = vmatprep.subr.bf16.mxu0 0
  %150 = vmatpush1.bf16.msra.mxu0 0
  %151 = vmatprep.subr.bf16.mxu0 0
  %152 = vmatpush1.bf16.msra.mxu0 0
  %153 = vmatprep.subr.bf16.mxu0 0
  %154 = vmatpush1.bf16.msra.mxu0 0
  %155 = vmatprep.subr.bf16.mxu0 0
  %156 = vmatpush1.bf16.msra.mxu0 0
  %157 = vmatprep.subr.bf16.mxu0 0
  %158 = vmatpush1.bf16.msra.mxu0 0
  %159 = vmatprep.subr.bf16.mxu0 0
  %160 = vmatpush1.bf16.msra.mxu0 0
  %161 = vmatprep.subr.bf16.mxu0 0
  %162 = vmatpush1.bf16.msra.mxu0 0
  %163 = vmatprep.subr.bf16.mxu0 0
  %164 = vmatpush1.bf16.msra.mxu0 0
  %165 = vmatprep.subr.bf16.mxu0 0
  %166 = vmatpush1.bf16.msra.mxu0 0
  %167 = vmatprep.mubr.bf16.mxu0 0
  %168 = vmatmul.mubr.bf16.gmra.mrb[0].mxu0 %v112
  %v169 = vpop.f32.mrb[0].mxu0
  %v170 = vadd.f32 %v44, %v169
  %v171 = vpop.f32.mrb[0].mxu0
  %v172 = vpop.f32.mrb[0].mxu0
  %v173 = vadd.f32 %v44, %v172
  %v174 = vpop.f32.mrb[0].mxu0
  %175 = vmatprep.mubr.bf16.mxu0 0
  %176 = vmatmul.mubr.bf16.gmra.mrb[0].mxu0 %v115
  %v177 = vpop.f32.mrb[0].mxu0
  %v178 = vadd.f32 %v44, %v177
  %v179 = vpop.f32.mrb[0].mxu0
  %v180 = vpop.f32.mrb[0].mxu0
  %v181 = vadd.f32 %v44, %v180
  %v182 = vpop.f32.mrb[0].mxu0
  %183 = vmatprep.mubr.bf16.mxu0 0
  %184 = vmatmul.mubr.bf16.gmra.mrb[0].mxu0 %v118
  %v185 = vpop.f32.mrb[0].mxu0
  %v186 = vadd.f32 %v44, %v185
  %v187 = vpop.f32.mrb[0].mxu0
  %v188 = vpop.f32.mrb[0].mxu0
  %v189 = vadd.f32 %v44, %v188
  %v190 = vpop.f32.mrb[0].mxu0
  %191 = vmatprep.mubr.bf16.mxu0 0
  %192 = vmatmul.mubr.bf16.gmra.mrb[0].mxu0 %v121
  %v193 = vpop.f32.mrb[0].mxu0
  %v194 = vadd.f32 %v44, %v193
  %v195 = vpop.f32.mrb[0].mxu0
  %v196 = vpop.f32.mrb[0].mxu0
  %v197 = vadd.f32 %v44, %v196
  %v198 = vpop.f32.mrb[0].mxu0
  %199 = vmatprep.mubr.bf16.mxu0 0
  %200 = vmatmul.mubr.bf16.gmra.mrb[0].mxu0 %v124
  %v201 = vpop.f32.mrb[0].mxu0
  %v202 = vadd.f32 %v44, %v201
  %v203 = vpop.f32.mrb[0].mxu0
  %v204 = vpop.f32.mrb[0].mxu0
  %v205 = vadd.f32 %v44, %v204
  %v206 = vpop.f32.mrb[0].mxu0
  %207 = vmatprep.mubr.bf16.mxu0 0
  %208 = vmatmul.mubr.bf16.gmra.mrb[0].mxu0 %v127
  %v209 = vpop.f32.mrb[0].mxu0
  %v210 = vadd.f32 %v44, %v209
  %v211 = vpop.f32.mrb[0].mxu0
  %v212 = vpop.f32.mrb[0].mxu0
  %v213 = vadd.f32 %v44, %v212
  %v214 = vpop.f32.mrb[0].mxu0
  %215 = vmatprep.mubr.bf16.mxu0 0
  %216 = vmatmul.mubr.bf16.gmra.mrb[0].mxu0 %v130
  %v217 = vpop.f32.mrb[0].mxu0
  %v218 = vadd.f32 %v44, %v217
  %v219 = vpop.f32.mrb[0].mxu0
  %v220 = vpop.f32.mrb[0].mxu0
  %v221 = vadd.f32 %v44, %v220
  %v222 = vpop.f32.mrb[0].mxu0
  %223 = vmatprep.mubr.bf16.mxu0 0
  %224 = vmatmul.mubr.bf16.gmra.mrb[0].mxu0 %v133
  %v225 = vpop.f32.mrb[0].mxu0
  %v226 = vadd.f32 %v44, %v225
  %v227 = vpop.f32.mrb[0].mxu0
  %v228 = vpop.f32.mrb[0].mxu0
  %v229 = vadd.f32 %v44, %v228
  %v230 = vpop.f32.mrb[0].mxu0
  %231 = vdwg.mxu0
  %v232 = vmax.f32 %v170, 0.0
  %v233 = vmax.f32 %v173, 0.0
  %v234 = vmax.f32 %v178, 0.0
  %v235 = vmax.f32 %v181, 0.0
  %v236 = vmax.f32 %v186, 0.0
  %v237 = vmax.f32 %v189, 0.0
  %v238 = vmax.f32 %v194, 0.0
  %v239 = vmax.f32 %v197, 0.0
  %v240 = vmax.f32 %v202, 0.0
  %v241 = vmax.f32 %v205, 0.0
  %v242 = vmax.f32 %v210, 0.0
  %v243 = vmax.f32 %v213, 0.0
  %v244 = vmax.f32 %v218, 0.0
  %v245 = vmax.f32 %v221, 0.0
  %v246 = vmax.f32 %v226, 0.0
  %v247 = vmax.f32 %v229, 0.0
  %v248 = vpack.c.bf16 %v233, %v232
  %v249 = vpack.c.bf16 %v235, %v234
  %v250 = vpack.c.bf16 %v237, %v236
  %v251 = vpack.c.bf16 %v239, %v238
  %v252 = vpack.c.bf16 %v241, %v240
  %v253 = vpack.c.bf16 %v243, %v242
  %v254 = vpack.c.bf16 %v245, %v244
  %v255 = vpack.c.bf16 %v247, %v246
  %v264 = vunpack.c.l.b16 %v248
  %v265 = vunpack.c.h.b16 %v248
  %v266 = vunpack.c.l.b16 %v249
  %v267 = vunpack.c.h.b16 %v249
  %v268 = vunpack.c.l.b16 %v250
  %v269 = vunpack.c.h.b16 %v250
  %v270 = vunpack.c.l.b16 %v251
  %v271 = vunpack.c.h.b16 %v251
  %v272 = vunpack.c.l.b16 %v252
  %v273 = vunpack.c.h.b16 %v252
  %v274 = vunpack.c.l.b16 %v253
  %v275 = vunpack.c.h.b16 %v253
  %v276 = vunpack.c.l.b16 %v254
  %v277 = vunpack.c.h.b16 %v254
  %v278 = vunpack.c.l.b16 %v255
  %v279 = vunpack.c.h.b16 %v255
  %v280 = vpack.c.b16 %v264, %v264
  %v281 = vpack.c.b16 %v265, %v265
  %v282 = vpack.c.b16 %v266, %v266
  %v283 = vpack.c.b16 %v267, %v267
  %v284 = vpack.c.b16 %v268, %v268
  %v285 = vpack.c.b16 %v269, %v269
  %v286 = vpack.c.b16 %v270, %v270
  %v287 = vpack.c.b16 %v271, %v271
  %v288 = vpack.c.b16 %v272, %v272
  %v289 = vpack.c.b16 %v273, %v273
  %v290 = vpack.c.b16 %v274, %v274
  %v291 = vpack.c.b16 %v275, %v275
  %v292 = vpack.c.b16 %v276, %v276
  %v293 = vpack.c.b16 %v277, %v277
  %v294 = vpack.c.b16 %v278, %v278
  %v295 = vpack.c.b16 %v279, %v279
  %vm312 = vcmask 519168
  %313 = vst.msk [vmem:[%s3] sm:$0xf] %vm312, %v280
  %314 = vst.msk [vmem:[%s3 + $0x4] sm:$0xf] %vm312, %v281
  %315 = vst.msk [vmem:[%s3 + $0x8] sm:$0xf] %vm312, %v282
  %316 = vst.msk [vmem:[%s3 + $0xc] sm:$0xf] %vm312, %v283
  %317 = vst.msk [vmem:[%s3 + $0x10] sm:$0xf] %vm312, %v284
  %318 = vst.msk [vmem:[%s3 + $0x14] sm:$0xf] %vm312, %v285
  %319 = vst.msk [vmem:[%s3 + $0x18] sm:$0xf] %vm312, %v286
  %320 = vst.msk [vmem:[%s3 + $0x1c] sm:$0xf] %vm312, %v287
  %321 = vst.msk [vmem:[%s3 + $0x20] sm:$0xf] %vm312, %v288
  %322 = vst.msk [vmem:[%s3 + $0x24] sm:$0xf] %vm312, %v289
  %323 = vst.msk [vmem:[%s3 + $0x28] sm:$0xf] %vm312, %v290
  %324 = vst.msk [vmem:[%s3 + $0x2c] sm:$0xf] %vm312, %v291
  %325 = vst.msk [vmem:[%s3 + $0x30] sm:$0xf] %vm312, %v292
  %326 = vst.msk [vmem:[%s3 + $0x34] sm:$0xf] %vm312, %v293
  %327 = vst.msk [vmem:[%s3 + $0x38] sm:$0xf] %vm312, %v294
  %328 = vst.msk [vmem:[%s3 + $0x3c] sm:$0xf] %vm312, %v295
  // Predicated region
  $region14: #{_lambda_.26} parent=0 // pred_check
    _
  $region15: #{_lambda_.26} parent=0 // pred_check_branch
    %330 = sbr.rel (0) target = $region17
  $region16: #{_lambda_.26} parent=0 // pred_region
    _
  $region17: #{_lambda_.26} parent=0 // pred_fallthru
    _
  // Predicated region
  $region18: #{_lambda_.26} parent=0 // pred_check
    _
  $region19: #{_lambda_.26} parent=0 // pred_check_branch
    %332 = sbr.rel (0) target = $region21
  $region20: #{_lambda_.26} parent=0 // pred_region
    _
  $region21: #{_lambda_.26} parent=0 // pred_fallthru
    _

// kernel: _lambda_.28
$region0: #{_lambda_.28}
  #allocation0 [shape = 'u32[]', space=smem, size = 0x4, offset = 0x4, fixed_abs, tag = 'smem constant byte address 0x4 - core index']
  #allocation1 [shape = 'u32[144,128]{1,0:T(1,128)}', space=vmem, size = 0x12000, scoped, tag = 'internal scratch']
  %s0 = inlined_call_operand.vmem [shape: bf16[32,64], index: 0, kind: input, shape index: {}]
  %s1 = inlined_call_operand.vmem [shape: bf16[64,128], index: 1, kind: input, shape index: {}]
  %s2 = inlined_call_operand.vmem [shape: bf16[32,256], index: 2, kind: input, shape index: {}]
  %s3 = inlined_call_operand.vmem [shape: bf16[256,128], index: 3, kind: input, shape index: {}]
  %s4 = inlined_call_operand.vmem [shape: f32[1,128], index: 4, kind: input, shape index: {}]
  %s5 = inlined_call_operand.vmem [shape: bf16[32,128], index: 5, kind: output, shape index: {}]
  %s6 = sld [smem:[#allocation0]]
  $region30: #{_lambda_.28} parent=0
    _
  %s8 = ssub.s32 1, %s6
  %s9 = scalar_select 0, %s8, %s6
  // Predicated region
  $region2: #{_lambda_.28} parent=0 // pred_check
    _
  $region3: #{_lambda_.28} parent=0 // pred_check_branch
    %11 = sbr.rel (0) target = $region5
  $region4: #{_lambda_.28} parent=0 // pred_region
    _
  $region5: #{_lambda_.28} parent=0 // pred_fallthru
    _
  // Predicated region
  $region6: #{_lambda_.28} parent=0 // pred_check
    _
  $region7: #{_lambda_.28} parent=0 // pred_check_branch
    %13 = sbr.rel (0) target = $region9
  $region8: #{_lambda_.28} parent=0 // pred_region
    _
  $region9: #{_lambda_.28} parent=0 // pred_fallthru
    _
  // Predicated region
  $region10: #{_lambda_.28} parent=0 // pred_check
    _
  $region11: #{_lambda_.28} parent=0 // pred_check_branch
    %15 = sbr.rel (0) target = $region13
  $region12: #{_lambda_.28} parent=0 // pred_region
    _
  $region13: #{_lambda_.28} parent=0 // pred_fallthru
    _
  // Predicated region
  $region14: #{_lambda_.28} parent=0 // pred_check
    _
  $region15: #{_lambda_.28} parent=0 // pred_check_branch
    %17 = sbr.rel (0) target = $region17
  $region16: #{_lambda_.28} parent=0 // pred_region
    _
  $region17: #{_lambda_.28} parent=0 // pred_fallthru
    _
  // Predicated region
  $region18: #{_lambda_.28} parent=0 // pred_check
    _
  $region19: #{_lambda_.28} parent=0 // pred_check_branch
    %19 = sbr.rel (0) target = $region21
  $region20: #{_lambda_.28} parent=0 // pred_region
    _
  $region21: #{_lambda_.28} parent=0 // pred_fallthru
    _
  %v21 = vld [vmem:[%s0] sm:$0xf]
  %v22 = vld [vmem:[%s0 + $0x4] sm:$0xf]
  %v23 = vld [vmem:[%s0 + $0x8] sm:$0xf]
  %v24 = vld [vmem:[%s0 + $0xc] sm:$0xf]
  %v25 = vld [vmem:[%s1] sm:$0xf]
  %v26 = vld [vmem:[%s1 + $0x4] sm:$0xf]
  %v27 = vld [vmem:[%s1 + $0x8] sm:$0xf]
  %v28 = vld [vmem:[%s1 + $0xc] sm:$0xf]
  %v29 = vld [vmem:[%s1 + $0x10] sm:$0xf]
  %v30 = vld [vmem:[%s1 + $0x14] sm:$0xf]
  %v31 = vld [vmem:[%s1 + $0x18] sm:$0xf]
  %v32 = vld [vmem:[%s1 + $0x1c] sm:$0xf]
  %v33 = vld [vmem:[%s2] sm:$0xff]
  %v34 = vld [vmem:[%s2 + $0x8] sm:$0xff]
  %v35 = vld [vmem:[%s2 + $0x10] sm:$0xff]
  %v36 = vld [vmem:[%s2 + $0x18] sm:$0xff]
  %v37 = vld [vmem:[%s3] sm:$0xf]
  %v38 = vld [vmem:[%s3 + $0x4] sm:$0xf]
  %v39 = vld [vmem:[%s3 + $0x8] sm:$0xf]
  %v40 = vld [vmem:[%s3 + $0xc] sm:$0xf]
  %v41 = vld [vmem:[%s3 + $0x10] sm:$0xf]
  %v42 = vld [vmem:[%s3 + $0x14] sm:$0xf]
  %v43 = vld [vmem:[%s3 + $0x18] sm:$0xf]
  %v44 = vld [vmem:[%s3 + $0x1c] sm:$0xf]
  %v45 = vld [vmem:[%s3 + $0x20] sm:$0xf]
  %v46 = vld [vmem:[%s3 + $0x24] sm:$0xf]
  %v47 = vld [vmem:[%s3 + $0x28] sm:$0xf]
  %v48 = vld [vmem:[%s3 + $0x2c] sm:$0xf]
  %v49 = vld [vmem:[%s3 + $0x30] sm:$0xf]
  %v50 = vld [vmem:[%s3 + $0x34] sm:$0xf]
  %v51 = vld [vmem:[%s3 + $0x38] sm:$0xf]
  %v52 = vld [vmem:[%s3 + $0x3c] sm:$0xf]
  %v53 = vld [vmem:[%s3 + $0x40] sm:$0xf]
  %v54 = vld [vmem:[%s3 + $0x44] sm:$0xf]
  %v55 = vld [vmem:[%s3 + $0x48] sm:$0xf]
  %v56 = vld [vmem:[%s3 + $0x4c] sm:$0xf]
  %v57 = vld [vmem:[%s3 + $0x50] sm:$0xf]
  %v58 = vld [vmem:[%s3 + $0x54] sm:$0xf]
  %v59 = vld [vmem:[%s3 + $0x58] sm:$0xf]
  %v60 = vld [vmem:[%s3 + $0x5c] sm:$0xf]
  %v61 = vld [vmem:[%s3 + $0x60] sm:$0xf]
  %v62 = vld [vmem:[%s3 + $0x64] sm:$0xf]
  %v63 = vld [vmem:[%s3 + $0x68] sm:$0xf]
  %v64 = vld [vmem:[%s3 + $0x6c] sm:$0xf]
  %v65 = vld [vmem:[%s3 + $0x70] sm:$0xf]
  %v66 = vld [vmem:[%s3 + $0x74] sm:$0xf]
  %v67 = vld [vmem:[%s3 + $0x78] sm:$0xf]
  %v68 = vld [vmem:[%s3 + $0x7c] sm:$0xf]
  %v73 = vunpack.c.l.b16 %v33
  %v74 = vunpack.c.h.b16 %v33
  %v75 = vunpack.c.l.b16 %v34
  %v76 = vunpack.c.h.b16 %v34
  %v77 = vunpack.c.l.b16 %v35
  %v78 = vunpack.c.h.b16 %v35
  %v79 = vunpack.c.l.b16 %v36
  %v80 = vunpack.c.h.b16 %v36
  %v81 = vpack.c.b16 %v75, %v73
  %v82 = vpack.c.b16 %v76, %v74
  %v83 = vpack.c.b16 %v79, %v77
  %v84 = vpack.c.b16 %v80, %v78
  %v121 = vunpack.c.l.b16 %v37
  %v122 = vunpack.c.l.b16 %v38
  %v123 = vunpack.c.l.b16 %v39
  %v124 = vunpack.c.l.b16 %v40
  %v125 = vunpack.c.l.b16 %v41
  %v126 = vunpack.c.l.b16 %v42
  %v127 = vunpack.c.l.b16 %v43
  %v128 = vunpack.c.l.b16 %v44
  %v129 = vunpack.c.l.b16 %v45
  %v130 = vunpack.c.l.b16 %v46
  %v131 = vunpack.c.l.b16 %v47
  %v132 = vunpack.c.l.b16 %v48
  %v133 = vunpack.c.l.b16 %v49
  %v134 = vunpack.c.l.b16 %v50
  %v135 = vunpack.c.l.b16 %v51
  %v136 = vunpack.c.l.b16 %v52
  %v137 = vunpack.c.l.b16 %v53
  %v138 = vunpack.c.l.b16 %v54
  %v139 = vunpack.c.l.b16 %v55
  %v140 = vunpack.c.l.b16 %v56
  %v141 = vunpack.c.l.b16 %v57
  %v142 = vunpack.c.l.b16 %v58
  %v143 = vunpack.c.l.b16 %v59
  %v144 = vunpack.c.l.b16 %v60
  %v145 = vunpack.c.l.b16 %v61
  %v146 = vunpack.c.l.b16 %v62
  %v147 = vunpack.c.l.b16 %v63
  %v148 = vunpack.c.l.b16 %v64
  %v149 = vunpack.c.l.b16 %v65
  %v150 = vunpack.c.l.b16 %v66
  %v151 = vunpack.c.l.b16 %v67
  %v152 = vunpack.c.l.b16 %v68
  %v153 = vpack.c.b16 %v122, %v121
  %v154 = vpack.c.b16 %v124, %v123
  %v155 = vpack.c.b16 %v126, %v125
  %v156 = vpack.c.b16 %v128, %v127
  %v157 = vpack.c.b16 %v130, %v129
  %v158 = vpack.c.b16 %v132, %v131
  %v159 = vpack.c.b16 %v134, %v133
  %v160 = vpack.c.b16 %v136, %v135
  %v161 = vpack.c.b16 %v138, %v137
  %v162 = vpack.c.b16 %v140, %v139
  %v163 = vpack.c.b16 %v142, %v141
  %v164 = vpack.c.b16 %v144, %v143
  %v165 = vpack.c.b16 %v146, %v145
  %v166 = vpack.c.b16 %v148, %v147
  %v167 = vpack.c.b16 %v150, %v149
  %v168 = vpack.c.b16 %v152, %v151
  %185 = vmatprep.subr.bf16.mxu0 0
  %186 = vmatpush1.bf16.msra.mxu0 %v153
  %187 = vmatprep.subr.bf16.mxu0 0
  %188 = vmatpush1.bf16.msra.mxu0 %v154
  %189 = vmatprep.subr.bf16.mxu0 0
  %190 = vmatpush1.bf16.msra.mxu0 %v155
  %191 = vmatprep.subr.bf16.mxu0 0
  %192 = vmatpush1.bf16.msra.mxu0 %v156
  %193 = vmatprep.subr.bf16.mxu0 0
  %194 = vmatpush1.bf16.msra.mxu0 %v157
  %195 = vmatprep.subr.bf16.mxu0 0
  %196 = vmatpush1.bf16.msra.mxu0 %v158
  %197 = vmatprep.subr.bf16.mxu0 0
  %198 = vmatpush1.bf16.msra.mxu0 %v159
  %199 = vmatprep.subr.bf16.mxu0 0
  %200 = vmatpush1.bf16.msra.mxu0 %v160
  %201 = vmatprep.subr.bf16.mxu0 0
  %202 = vmatpush1.bf16.msra.mxu0 %v161
  %203 = vmatprep.subr.bf16.mxu0 0
  %204 = vmatpush1.bf16.msra.mxu0 %v162
  %205 = vmatprep.subr.bf16.mxu0 0
  %206 = vmatpush1.bf16.msra.mxu0 %v163
  %207 = vmatprep.subr.bf16.mxu0 0
  %208 = vmatpush1.bf16.msra.mxu0 %v164
  %209 = vmatprep.subr.bf16.mxu0 0
  %210 = vmatpush1.bf16.msra.mxu0 %v165
  %211 = vmatprep.subr.bf16.mxu0 0
  %212 = vmatpush1.bf16.msra.mxu0 %v166
  %213 = vmatprep.subr.bf16.mxu0 0
  %214 = vmatpush1.bf16.msra.mxu0 %v167
  %215 = vmatprep.subr.bf16.mxu0 0
  %216 = vmatpush1.bf16.msra.mxu0 %v168
  %217 = vmatprep.mubr.bf16.mxu0 %v82
  %218 = vmatmul.mubr.bf16.gmra.mrb[0].mxu0 %v81
  %v219 = vpop.f32.mrb[0].mxu0
  %v220 = vadd.f32 0.0, %v219
  %v221 = vpop.f32.mrb[0].mxu0
  %v222 = vpop.f32.mrb[0].mxu0
  %v223 = vadd.f32 0.0, %v222
  %v224 = vpop.f32.mrb[0].mxu0
  %225 = vmatprep.mubr.bf16.mxu0 %v84
  %226 = vmatmul.mubr.bf16.gmra.mrb[0].mxu0 %v83
  %v227 = vpop.f32.mrb[0].mxu0
  %v228 = vadd.f32 0.0, %v227
  %v229 = vpop.f32.mrb[0].mxu0
  %v230 = vpop.f32.mrb[0].mxu0
  %v231 = vadd.f32 0.0, %v230
  %v232 = vpop.f32.mrb[0].mxu0
  %233 = vdwg.mxu0
  %v238 = vunpack.c.l.b16 %v21
  %v239 = vunpack.c.l.b16 %v22
  %v240 = vunpack.c.l.b16 %v23
  %v241 = vunpack.c.l.b16 %v24
  %v242 = vpack.c.b16 %v239, %v238
  %v243 = vpack.c.b16 %v241, %v240
  %v252 = vunpack.c.l.b16 %v25
  %v253 = vunpack.c.l.b16 %v26
  %v254 = vunpack.c.l.b16 %v27
  %v255 = vunpack.c.l.b16 %v28
  %v256 = vunpack.c.l.b16 %v29
  %v257 = vunpack.c.l.b16 %v30
  %v258 = vunpack.c.l.b16 %v31
  %v259 = vunpack.c.l.b16 %v32
  %v260 = vpack.c.b16 %v253, %v252
  %v261 = vpack.c.b16 %v255, %v254
  %v262 = vpack.c.b16 %v257, %v256
  %v263 = vpack.c.b16 %v259, %v258
  %vm268 = vcmask 523264
  %v270 = vsel %vm268, %v242, 0
  %v273 = vsel %vm268, %v243, 0
  %275 = vmatprep.subr.bf16.mxu0 0
  %276 = vmatpush1.bf16.msra.mxu0 %v260
  %277 = vmatprep.subr.bf16.mxu0 0
  %278 = vmatpush1.bf16.msra.mxu0 %v261
  %279 = vmatprep.subr.bf16.mxu0 0
  %280 = vmatpush1.bf16.msra.mxu0 %v262
  %281 = vmatprep.subr.bf16.mxu0 0
  %282 = vmatpush1.bf16.msra.mxu0 %v263
  %283 = vmatprep.subr.bf16.mxu0 0
  %284 = vmatpush1.bf16.msra.mxu0 0
  %285 = vmatprep.subr.bf16.mxu0 0
  %286 = vmatpush1.bf16.msra.mxu0 0
  %287 = vmatprep.subr.bf16.mxu0 0
  %288 = vmatpush1.bf16.msra.mxu0 0
  %289 = vmatprep.subr.bf16.mxu0 0
  %290 = vmatpush1.bf16.msra.mxu0 0
  %291 = vmatprep.subr.bf16.mxu0 0
  %292 = vmatpush1.bf16.msra.mxu0 0
  %293 = vmatprep.subr.bf16.mxu0 0
  %294 = vmatpush1.bf16.msra.mxu0 0
  %295 = vmatprep.subr.bf16.mxu0 0
  %296 = vmatpush1.bf16.msra.mxu0 0
  %297 = vmatprep.subr.bf16.mxu0 0
  %298 = vmatpush1.bf16.msra.mxu0 0
  %299 = vmatprep.subr.bf16.mxu0 0
  %300 = vmatpush1.bf16.msra.mxu0 0
  %301 = vmatprep.subr.bf16.mxu0 0
  %302 = vmatpush1.bf16.msra.mxu0 0
  %303 = vmatprep.subr.bf16.mxu0 0
  %304 = vmatpush1.bf16.msra.mxu0 0
  %305 = vmatprep.subr.bf16.mxu0 0
  %306 = vmatpush1.bf16.msra.mxu0 0
  %307 = vmatprep.mubr.bf16.mxu0 0
  %308 = vmatmul.mubr.bf16.gmra.mrb[0].mxu0 %v270
  %v309 = vpop.f32.mrb[0].mxu0
  %v310 = vadd.f32 %v220, %v309
  %v311 = vpop.f32.mrb[0].mxu0
  %v312 = vpop.f32.mrb[0].mxu0
  %v313 = vadd.f32 %v223, %v312
  %v314 = vpop.f32.mrb[0].mxu0
  %315 = vmatprep.mubr.bf16.mxu0 0
  %316 = vmatmul.mubr.bf16.gmra.mrb[0].mxu0 %v273
  %v317 = vpop.f32.mrb[0].mxu0
  %v318 = vadd.f32 %v228, %v317
  %v319 = vpop.f32.mrb[0].mxu0
  %v320 = vpop.f32.mrb[0].mxu0
  %v321 = vadd.f32 %v231, %v320
  %v322 = vpop.f32.mrb[0].mxu0
  %323 = vdwg.mxu0
  %v324 = vld [vmem:[%s4] sm:$0x1]
  %v326 = vlaneseq
  %v327 = vshrl.u32 %v326, 7
  %v328 = vsub.s32 0, %v327
  %v329 = vrot.slane %v324, %v328
  %v331 = vadd.f32 %v310, %v329
  %v332 = vadd.f32 %v313, %v329
  %v333 = vadd.f32 %v318, %v329
  %v334 = vadd.f32 %v321, %v329
  %v335 = vmax.f32 %v331, 0.0
  %v336 = vmax.f32 %v332, 0.0
  %v337 = vmax.f32 %v333, 0.0
  %v338 = vmax.f32 %v334, 0.0
  %v339 = vpack.c.bf16 %v336, %v335
  %v340 = vpack.c.bf16 %v338, %v337
  %v343 = vunpack.c.l.b16 %v339
  %v344 = vunpack.c.h.b16 %v339
  %v345 = vunpack.c.l.b16 %v340
  %v346 = vunpack.c.h.b16 %v340
  %v347 = vpack.c.b16 %v343, %v343
  %v348 = vpack.c.b16 %v344, %v344
  %v349 = vpack.c.b16 %v345, %v345
  %v350 = vpack.c.b16 %v346, %v346
  %355 = vst [vmem:[%s5] sm:$0xf] %v347
  %356 = vst [vmem:[%s5 + $0x4] sm:$0xf] %v348
  %357 = vst [vmem:[%s5 + $0x8] sm:$0xf] %v349
  %358 = vst [vmem:[%s5 + $0xc] sm:$0xf] %v350
  // Predicated region
  $region22: #{_lambda_.28} parent=0 // pred_check
    _
  $region23: #{_lambda_.28} parent=0 // pred_check_branch
    %360 = sbr.rel (0) target = $region25
  $region24: #{_lambda_.28} parent=0 // pred_region
    _
  $region25: #{_lambda_.28} parent=0 // pred_fallthru
    _
  // Predicated region
  $region26: #{_lambda_.28} parent=0 // pred_check
    _
  $region27: #{_lambda_.28} parent=0 // pred_check_branch
    %362 = sbr.rel (0) target = $region29
  $region28: #{_lambda_.28} parent=0 // pred_region
    _
  $region29: #{_lambda_.28} parent=0 // pred_fallthru
    _

// kernel: _lambda_.27
$region0: #{_lambda_.27}
  #allocation0 [shape = 'u32[]', space=smem, size = 0x4, offset = 0x4, fixed_abs, tag = 'smem constant byte address 0x4 - core index']
  #allocation1 [shape = 'u32[144,128]{1,0:T(1,128)}', space=vmem, size = 0x12000, scoped, tag = 'internal scratch']
  %s0 = inlined_call_operand.vmem [shape: bf16[32,576], index: 0, kind: input, shape index: {}]
  %s1 = inlined_call_operand.vmem [shape: bf16[576,64], index: 1, kind: input, shape index: {}]
  %s2 = inlined_call_operand.vmem [shape: f32[1,64], index: 2, kind: input, shape index: {}]
  %s3 = inlined_call_operand.vmem [shape: bf16[32,64], index: 3, kind: output, shape index: {}]
  %s4 = sld [smem:[#allocation0]]
  $region22: #{_lambda_.27} parent=0
    _
  %s6 = ssub.s32 1, %s4
  %s7 = scalar_select 0, %s6, %s4
  // Predicated region
  $region2: #{_lambda_.27} parent=0 // pred_check
    _
  $region3: #{_lambda_.27} parent=0 // pred_check_branch
    %9 = sbr.rel (0) target = $region5
  $region4: #{_lambda_.27} parent=0 // pred_region
    _
  $region5: #{_lambda_.27} parent=0 // pred_fallthru
    _
  // Predicated region
  $region6: #{_lambda_.27} parent=0 // pred_check
    _
  $region7: #{_lambda_.27} parent=0 // pred_check_branch
    %11 = sbr.rel (0) target = $region9
  $region8: #{_lambda_.27} parent=0 // pred_region
    _
  $region9: #{_lambda_.27} parent=0 // pred_fallthru
    _
  // Predicated region
  $region10: #{_lambda_.27} parent=0 // pred_check
    _
  $region11: #{_lambda_.27} parent=0 // pred_check_branch
    %13 = sbr.rel (0) target = $region13
  $region12: #{_lambda_.27} parent=0 // pred_region
    _
  $region13: #{_lambda_.27} parent=0 // pred_fallthru
    _
  %v15 = vld [vmem:[%s0] sm:$0xff]
  %v16 = vld [vmem:[%s0 + $0x8] sm:$0xff]
  %v17 = vld [vmem:[%s0 + $0x10] sm:$0xf]
  %v18 = vld [vmem:[%s0 + $0x14] sm:$0xff]
  %v19 = vld [vmem:[%s0 + $0x1c] sm:$0xff]
  %v20 = vld [vmem:[%s0 + $0x24] sm:$0xf]
  %v21 = vld [vmem:[%s0 + $0x28] sm:$0xff]
  %v22 = vld [vmem:[%s0 + $0x30] sm:$0xff]
  %v23 = vld [vmem:[%s0 + $0x38] sm:$0xf]
  %v24 = vld [vmem:[%s0 + $0x3c] sm:$0xff]
  %v25 = vld [vmem:[%s0 + $0x44] sm:$0xff]
  %v26 = vld [vmem:[%s0 + $0x4c] sm:$0xf]
  %v27 = vld [vmem:[%s1] sm:$0xf]
  %v28 = vld [vmem:[%s1 + $0x4] sm:$0xf]
  %v29 = vld [vmem:[%s1 + $0x8] sm:$0xf]
  %v30 = vld [vmem:[%s1 + $0xc] sm:$0xf]
  %v31 = vld [vmem:[%s1 + $0x10] sm:$0xf]
  %v32 = vld [vmem:[%s1 + $0x14] sm:$0xf]
  %v33 = vld [vmem:[%s1 + $0x18] sm:$0xf]
  %v34 = vld [vmem:[%s1 + $0x1c] sm:$0xf]
  %v35 = vld [vmem:[%s1 + $0x20] sm:$0xf]
  %v36 = vld [vmem:[%s1 + $0x24] sm:$0xf]
  %v37 = vld [vmem:[%s1 + $0x28] sm:$0xf]
  %v38 = vld [vmem:[%s1 + $0x2c] sm:$0xf]
  %v39 = vld [vmem:[%s1 + $0x30] sm:$0xf]
  %v40 = vld [vmem:[%s1 + $0x34] sm:$0xf]
  %v41 = vld [vmem:[%s1 + $0x38] sm:$0xf]
  %v42 = vld [vmem:[%s1 + $0x3c] sm:$0xf]
  %v43 = vld [vmem:[%s1 + $0x40] sm:$0xf]
  %v44 = vld [vmem:[%s1 + $0x44] sm:$0xf]
  %v45 = vld [vmem:[%s1 + $0x48] sm:$0xf]
  %v46 = vld [vmem:[%s1 + $0x4c] sm:$0xf]
  %v47 = vld [vmem:[%s1 + $0x50] sm:$0xf]
  %v48 = vld [vmem:[%s1 + $0x54] sm:$0xf]
  %v49 = vld [vmem:[%s1 + $0x58] sm:$0xf]
  %v50 = vld [vmem:[%s1 + $0x5c] sm:$0xf]
  %v51 = vld [vmem:[%s1 + $0x60] sm:$0xf]
  %v52 = vld [vmem:[%s1 + $0x64] sm:$0xf]
  %v53 = vld [vmem:[%s1 + $0x68] sm:$0xf]
  %v54 = vld [vmem:[%s1 + $0x6c] sm:$0xf]
  %v55 = vld [vmem:[%s1 + $0x70] sm:$0xf]
  %v56 = vld [vmem:[%s1 + $0x74] sm:$0xf]
  %v57 = vld [vmem:[%s1 + $0x78] sm:$0xf]
  %v58 = vld [vmem:[%s1 + $0x7c] sm:$0xf]
  %v59 = vld [vmem:[%s1 + $0x80] sm:$0xf]
  %v60 = vld [vmem:[%s1 + $0x84] sm:$0xf]
  %v61 = vld [vmem:[%s1 + $0x88] sm:$0xf]
  %v62 = vld [vmem:[%s1 + $0x8c] sm:$0xf]
  %v63 = vld [vmem:[%s1 + $0x90] sm:$0xf]
  %v64 = vld [vmem:[%s1 + $0x94] sm:$0xf]
  %v65 = vld [vmem:[%s1 + $0x98] sm:$0xf]
  %v66 = vld [vmem:[%s1 + $0x9c] sm:$0xf]
  %v67 = vld [vmem:[%s1 + $0xa0] sm:$0xf]
  %v68 = vld [vmem:[%s1 + $0xa4] sm:$0xf]
  %v69 = vld [vmem:[%s1 + $0xa8] sm:$0xf]
  %v70 = vld [vmem:[%s1 + $0xac] sm:$0xf]
  %v71 = vld [vmem:[%s1 + $0xb0] sm:$0xf]
  %v72 = vld [vmem:[%s1 + $0xb4] sm:$0xf]
  %v73 = vld [vmem:[%s1 + $0xb8] sm:$0xf]
  %v74 = vld [vmem:[%s1 + $0xbc] sm:$0xf]
  %v75 = vld [vmem:[%s1 + $0xc0] sm:$0xf]
  %v76 = vld [vmem:[%s1 + $0xc4] sm:$0xf]
  %v77 = vld [vmem:[%s1 + $0xc8] sm:$0xf]
  %v78 = vld [vmem:[%s1 + $0xcc] sm:$0xf]
  %v79 = vld [vmem:[%s1 + $0xd0] sm:$0xf]
  %v80 = vld [vmem:[%s1 + $0xd4] sm:$0xf]
  %v81 = vld [vmem:[%s1 + $0xd8] sm:$0xf]
  %v82 = vld [vmem:[%s1 + $0xdc] sm:$0xf]
  %v83 = vld [vmem:[%s1 + $0xe0] sm:$0xf]
  %v84 = vld [vmem:[%s1 + $0xe4] sm:$0xf]
  %v85 = vld [vmem:[%s1 + $0xe8] sm:$0xf]
  %v86 = vld [vmem:[%s1 + $0xec] sm:$0xf]
  %v87 = vld [vmem:[%s1 + $0xf0] sm:$0xf]
  %v88 = vld [vmem:[%s1 + $0xf4] sm:$0xf]
  %v89 = vld [vmem:[%s1 + $0xf8] sm:$0xf]
  %v90 = vld [vmem:[%s1 + $0xfc] sm:$0xf]
  %v91 = vld [vmem:[%s1 + $0x100] sm:$0xf]
  %v92 = vld [vmem:[%s1 + $0x104] sm:$0xf]
  %v93 = vld [vmem:[%s1 + $0x108] sm:$0xf]
  %v94 = vld [vmem:[%s1 + $0x10c] sm:$0xf]
  %v95 = vld [vmem:[%s1 + $0x110] sm:$0xf]
  %v96 = vld [vmem:[%s1 + $0x114] sm:$0xf]
  %v97 = vld [vmem:[%s1 + $0x118] sm:$0xf]
  %v98 = vld [vmem:[%s1 + $0x11c] sm:$0xf]
  %v99 = vld [vmem:[%s2] sm:$0x1]
  %v101 = vlaneseq
  %v102 = vshrl.u32 %v101, 7
  %v103 = vsub.s32 0, %v102
  %v104 = vrot.slane %v99, %v103
  %v118 = vunpack.c.l.b16 %v15
  %v119 = vunpack.c.h.b16 %v15
  %v120 = vunpack.c.l.b16 %v16
  %v121 = vunpack.c.h.b16 %v16
  %v122 = vunpack.c.l.b16 %v17
  %v123 = vunpack.c.l.b16 %v18
  %v124 = vunpack.c.h.b16 %v18
  %v125 = vunpack.c.l.b16 %v19
  %v126 = vunpack.c.h.b16 %v19
  %v127 = vunpack.c.l.b16 %v20
  %v128 = vunpack.c.l.b16 %v21
  %v129 = vunpack.c.h.b16 %v21
  %v130 = vunpack.c.l.b16 %v22
  %v131 = vunpack.c.h.b16 %v22
  %v132 = vunpack.c.l.b16 %v23
  %v133 = vunpack.c.l.b16 %v24
  %v134 = vunpack.c.h.b16 %v24
  %v135 = vunpack.c.l.b16 %v25
  %v136 = vunpack.c.h.b16 %v25
  %v137 = vunpack.c.l.b16 %v26
  %v138 = vpack.c.b16 %v123, %v118
  %v139 = vpack.c.b16 %v124, %v119
  %v140 = vpack.c.b16 %v125, %v120
  %v141 = vpack.c.b16 %v126, %v121
  %v142 = vpack.c.b16 %v127, %v122
  %v143 = vpack.c.b16 %v133, %v128
  %v144 = vpack.c.b16 %v134, %v129
  %v145 = vpack.c.b16 %v135, %v130
  %v146 = vpack.c.b16 %v136, %v131
  %v147 = vpack.c.b16 %v137, %v132
  %v228 = vunpack.c.l.b16 %v27
  %v229 = vunpack.c.l.b16 %v28
  %v230 = vunpack.c.l.b16 %v29
  %v231 = vunpack.c.l.b16 %v30
  %v232 = vunpack.c.l.b16 %v31
  %v233 = vunpack.c.l.b16 %v32
  %v234 = vunpack.c.l.b16 %v33
  %v235 = vunpack.c.l.b16 %v34
  %v236 = vunpack.c.l.b16 %v35
  %v237 = vunpack.c.l.b16 %v36
  %v238 = vunpack.c.l.b16 %v37
  %v239 = vunpack.c.l.b16 %v38
  %v240 = vunpack.c.l.b16 %v39
  %v241 = vunpack.c.l.b16 %v40
  %v242 = vunpack.c.l.b16 %v41
  %v243 = vunpack.c.l.b16 %v42
  %v244 = vunpack.c.l.b16 %v43
  %v245 = vunpack.c.l.b16 %v44
  %v246 = vunpack.c.l.b16 %v45
  %v247 = vunpack.c.l.b16 %v46
  %v248 = vunpack.c.l.b16 %v47
  %v249 = vunpack.c.l.b16 %v48
  %v250 = vunpack.c.l.b16 %v49
  %v251 = vunpack.c.l.b16 %v50
  %v252 = vunpack.c.l.b16 %v51
  %v253 = vunpack.c.l.b16 %v52
  %v254 = vunpack.c.l.b16 %v53
  %v255 = vunpack.c.l.b16 %v54
  %v256 = vunpack.c.l.b16 %v55
  %v257 = vunpack.c.l.b16 %v56
  %v258 = vunpack.c.l.b16 %v57
  %v259 = vunpack.c.l.b16 %v58
  %v260 = vunpack.c.l.b16 %v59
  %v261 = vunpack.c.l.b16 %v60
  %v262 = vunpack.c.l.b16 %v61
  %v263 = vunpack.c.l.b16 %v62
  %v264 = vunpack.c.l.b16 %v63
  %v265 = vunpack.c.l.b16 %v64
  %v266 = vunpack.c.l.b16 %v65
  %v267 = vunpack.c.l.b16 %v66
  %v268 = vunpack.c.l.b16 %v67
  %v269 = vunpack.c.l.b16 %v68
  %v270 = vunpack.c.l.b16 %v69
  %v271 = vunpack.c.l.b16 %v70
  %v272 = vunpack.c.l.b16 %v71
  %v273 = vunpack.c.l.b16 %v72
  %v274 = vunpack.c.l.b16 %v73
  %v275 = vunpack.c.l.b16 %v74
  %v276 = vunpack.c.l.b16 %v75
  %v277 = vunpack.c.l.b16 %v76
  %v278 = vunpack.c.l.b16 %v77
  %v279 = vunpack.c.l.b16 %v78
  %v280 = vunpack.c.l.b16 %v79
  %v281 = vunpack.c.l.b16 %v80
  %v282 = vunpack.c.l.b16 %v81
  %v283 = vunpack.c.l.b16 %v82
  %v284 = vunpack.c.l.b16 %v83
  %v285 = vunpack.c.l.b16 %v84
  %v286 = vunpack.c.l.b16 %v85
  %v287 = vunpack.c.l.b16 %v86
  %v288 = vunpack.c.l.b16 %v87
  %v289 = vunpack.c.l.b16 %v88
  %v290 = vunpack.c.l.b16 %v89
  %v291 = vunpack.c.l.b16 %v90
  %v292 = vunpack.c.l.b16 %v91
  %v293 = vunpack.c.l.b16 %v92
  %v294 = vunpack.c.l.b16 %v93
  %v295 = vunpack.c.l.b16 %v94
  %v296 = vunpack.c.l.b16 %v95
  %v297 = vunpack.c.l.b16 %v96
  %v298 = vunpack.c.l.b16 %v97
  %v299 = vunpack.c.l.b16 %v98
  %v300 = vpack.c.b16 %v229, %v228
  %v301 = vpack.c.b16 %v231, %v230
  %v302 = vpack.c.b16 %v233, %v232
  %v303 = vpack.c.b16 %v235, %v234
  %v304 = vpack.c.b16 %v237, %v236
  %v305 = vpack.c.b16 %v239, %v238
  %v306 = vpack.c.b16 %v241, %v240
  %v307 = vpack.c.b16 %v243, %v242
  %v308 = vpack.c.b16 %v245, %v244
  %v309 = vpack.c.b16 %v247, %v246
  %v310 = vpack.c.b16 %v249, %v248
  %v311 = vpack.c.b16 %v251, %v250
  %v312 = vpack.c.b16 %v253, %v252
  %v313 = vpack.c.b16 %v255, %v254
  %v314 = vpack.c.b16 %v257, %v256
  %v315 = vpack.c.b16 %v259, %v258
  %v316 = vpack.c.b16 %v261, %v260
  %v317 = vpack.c.b16 %v263, %v262
  %v318 = vpack.c.b16 %v265, %v264
  %v319 = vpack.c.b16 %v267, %v266
  %v320 = vpack.c.b16 %v269, %v268
  %v321 = vpack.c.b16 %v271, %v270
  %v322 = vpack.c.b16 %v273, %v272
  %v323 = vpack.c.b16 %v275, %v274
  %v324 = vpack.c.b16 %v277, %v276
  %v325 = vpack.c.b16 %v279, %v278
  %v326 = vpack.c.b16 %v281, %v280
  %v327 = vpack.c.b16 %v283, %v282
  %v328 = vpack.c.b16 %v285, %v284
  %v329 = vpack.c.b16 %v287, %v286
  %v330 = vpack.c.b16 %v289, %v288
  %v331 = vpack.c.b16 %v291, %v290
  %v332 = vpack.c.b16 %v293, %v292
  %v333 = vpack.c.b16 %v295, %v294
  %v334 = vpack.c.b16 %v297, %v296
  %v335 = vpack.c.b16 %v299, %v298
  %vm372 = vcmask 523264
  %v374 = vsel %vm372, %v142, 0
  %v377 = vsel %vm372, %v147, 0
  %379 = vmatprep.subr.bf16.mxu0 0
  %380 = vmatpush1.bf16.msra.mxu0 %v300
  %381 = vmatprep.subr.bf16.mxu0 0
  %382 = vmatpush1.bf16.msra.mxu0 %v301
  %383 = vmatprep.subr.bf16.mxu0 0
  %384 = vmatpush1.bf16.msra.mxu0 %v302
  %385 = vmatprep.subr.bf16.mxu0 0
  %386 = vmatpush1.bf16.msra.mxu0 %v303
  %387 = vmatprep.subr.bf16.mxu0 0
  %388 = vmatpush1.bf16.msra.mxu0 %v304
  %389 = vmatprep.subr.bf16.mxu0 0
  %390 = vmatpush1.bf16.msra.mxu0 %v305
  %391 = vmatprep.subr.bf16.mxu0 0
  %392 = vmatpush1.bf16.msra.mxu0 %v306
  %393 = vmatprep.subr.bf16.mxu0 0
  %394 = vmatpush1.bf16.msra.mxu0 %v307
  %395 = vmatprep.subr.bf16.mxu0 0
  %396 = vmatpush1.bf16.msra.mxu0 %v308
  %397 = vmatprep.subr.bf16.mxu0 0
  %398 = vmatpush1.bf16.msra.mxu0 %v309
  %399 = vmatprep.subr.bf16.mxu0 0
  %400 = vmatpush1.bf16.msra.mxu0 %v310
  %401 = vmatprep.subr.bf16.mxu0 0
  %402 = vmatpush1.bf16.msra.mxu0 %v311
  %403 = vmatprep.subr.bf16.mxu0 0
  %404 = vmatpush1.bf16.msra.mxu0 %v312
  %405 = vmatprep.subr.bf16.mxu0 0
  %406 = vmatpush1.bf16.msra.mxu0 %v313
  %407 = vmatprep.subr.bf16.mxu0 0
  %408 = vmatpush1.bf16.msra.mxu0 %v314
  %409 = vmatprep.subr.bf16.mxu0 0
  %410 = vmatpush1.bf16.msra.mxu0 %v315
  %411 = vmatprep.mubr.bf16.mxu0 %v139
  %412 = vmatmul.mubr.bf16.gmra.mrb[0].mxu0 %v138
  %v413 = vpop.f32.mrb[0].mxu0
  %v414 = vadd.f32 %v104, %v413
  %v415 = vpop.f32.mrb[0].mxu0
  %v416 = vpop.f32.mrb[0].mxu0
  %v417 = vadd.f32 %v104, %v416
  %v418 = vpop.f32.mrb[0].mxu0
  %419 = vmatprep.mubr.bf16.mxu0 %v144
  %420 = vmatmul.mubr.bf16.gmra.mrb[0].mxu0 %v143
  %v421 = vpop.f32.mrb[0].mxu0
  %v422 = vadd.f32 %v104, %v421
  %v423 = vpop.f32.mrb[0].mxu0
  %v424 = vpop.f32.mrb[0].mxu0
  %v425 = vadd.f32 %v104, %v424
  %v426 = vpop.f32.mrb[0].mxu0
  %427 = vdwg.mxu0
  %428 = vmatprep.subr.bf16.mxu0 0
  %429 = vmatpush1.bf16.msra.mxu0 %v316
  %430 = vmatprep.subr.bf16.mxu0 0
  %431 = vmatpush1.bf16.msra.mxu0 %v317
  %432 = vmatprep.subr.bf16.mxu0 0
  %433 = vmatpush1.bf16.msra.mxu0 %v318
  %434 = vmatprep.subr.bf16.mxu0 0
  %435 = vmatpush1.bf16.msra.mxu0 %v319
  %436 = vmatprep.subr.bf16.mxu0 0
  %437 = vmatpush1.bf16.msra.mxu0 %v320
  %438 = vmatprep.subr.bf16.mxu0 0
  %439 = vmatpush1.bf16.msra.mxu0 %v321
  %440 = vmatprep.subr.bf16.mxu0 0
  %441 = vmatpush1.bf16.msra.mxu0 %v322
  %442 = vmatprep.subr.bf16.mxu0 0
  %443 = vmatpush1.bf16.msra.mxu0 %v323
  %444 = vmatprep.subr.bf16.mxu0 0
  %445 = vmatpush1.bf16.msra.mxu0 %v324
  %446 = vmatprep.subr.bf16.mxu0 0
  %447 = vmatpush1.bf16.msra.mxu0 %v325
  %448 = vmatprep.subr.bf16.mxu0 0
  %449 = vmatpush1.bf16.msra.mxu0 %v326
  %450 = vmatprep.subr.bf16.mxu0 0
  %451 = vmatpush1.bf16.msra.mxu0 %v327
  %452 = vmatprep.subr.bf16.mxu0 0
  %453 = vmatpush1.bf16.msra.mxu0 %v328
  %454 = vmatprep.subr.bf16.mxu0 0
  %455 = vmatpush1.bf16.msra.mxu0 %v329
  %456 = vmatprep.subr.bf16.mxu0 0
  %457 = vmatpush1.bf16.msra.mxu0 %v330
  %458 = vmatprep.subr.bf16.mxu0 0
  %459 = vmatpush1.bf16.msra.mxu0 %v331
  %460 = vmatprep.mubr.bf16.mxu0 %v141
  %461 = vmatmul.mubr.bf16.gmra.mrb[0].mxu0 %v140
  %v462 = vpop.f32.mrb[0].mxu0
  %v463 = vadd.f32 %v414, %v462
  %v464 = vpop.f32.mrb[0].mxu0
  %v465 = vpop.f32.mrb[0].mxu0
  %v466 = vadd.f32 %v417, %v465
  %v467 = vpop.f32.mrb[0].mxu0
  %468 = vmatprep.mubr.bf16.mxu0 %v146
  %469 = vmatmul.mubr.bf16.gmra.mrb[0].mxu0 %v145
  %v470 = vpop.f32.mrb[0].mxu0
  %v471 = vadd.f32 %v422, %v470
  %v472 = vpop.f32.mrb[0].mxu0
  %v473 = vpop.f32.mrb[0].mxu0
  %v474 = vadd.f32 %v425, %v473
  %v475 = vpop.f32.mrb[0].mxu0
  %476 = vdwg.mxu0
  %477 = vmatprep.subr.bf16.mxu0 0
  %478 = vmatpush1.bf16.msra.mxu0 %v332
  %479 = vmatprep.subr.bf16.mxu0 0
  %480 = vmatpush1.bf16.msra.mxu0 %v333
  %481 = vmatprep.subr.bf16.mxu0 0
  %482 = vmatpush1.bf16.msra.mxu0 %v334
  %483 = vmatprep.subr.bf16.mxu0 0
  %484 = vmatpush1.bf16.msra.mxu0 %v335
  %485 = vmatprep.subr.bf16.mxu0 0
  %486 = vmatpush1.bf16.msra.mxu0 0
  %487 = vmatprep.subr.bf16.mxu0 0
  %488 = vmatpush1.bf16.msra.mxu0 0
  %489 = vmatprep.subr.bf16.mxu0 0
  %490 = vmatpush1.bf16.msra.mxu0 0
  %491 = vmatprep.subr.bf16.mxu0 0
  %492 = vmatpush1.bf16.msra.mxu0 0
  %493 = vmatprep.subr.bf16.mxu0 0
  %494 = vmatpush1.bf16.msra.mxu0 0
  %495 = vmatprep.subr.bf16.mxu0 0
  %496 = vmatpush1.bf16.msra.mxu0 0
  %497 = vmatprep.subr.bf16.mxu0 0
  %498 = vmatpush1.bf16.msra.mxu0 0
  %499 = vmatprep.subr.bf16.mxu0 0
  %500 = vmatpush1.bf16.msra.mxu0 0
  %501 = vmatprep.subr.bf16.mxu0 0
  %502 = vmatpush1.bf16.msra.mxu0 0
  %503 = vmatprep.subr.bf16.mxu0 0
  %504 = vmatpush1.bf16.msra.mxu0 0
  %505 = vmatprep.subr.bf16.mxu0 0
  %506 = vmatpush1.bf16.msra.mxu0 0
  %507 = vmatprep.subr.bf16.mxu0 0
  %508 = vmatpush1.bf16.msra.mxu0 0
  %509 = vmatprep.mubr.bf16.mxu0 0
  %510 = vmatmul.mubr.bf16.gmra.mrb[0].mxu0 %v374
  %v511 = vpop.f32.mrb[0].mxu0
  %v512 = vadd.f32 %v463, %v511
  %v513 = vpop.f32.mrb[0].mxu0
  %v514 = vpop.f32.mrb[0].mxu0
  %v515 = vadd.f32 %v466, %v514
  %v516 = vpop.f32.mrb[0].mxu0
  %517 = vmatprep.mubr.bf16.mxu0 0
  %518 = vmatmul.mubr.bf16.gmra.mrb[0].mxu0 %v377
  %v519 = vpop.f32.mrb[0].mxu0
  %v520 = vadd.f32 %v471, %v519
  %v521 = vpop.f32.mrb[0].mxu0
  %v522 = vpop.f32.mrb[0].mxu0
  %v523 = vadd.f32 %v474, %v522
  %v524 = vpop.f32.mrb[0].mxu0
  %525 = vdwg.mxu0
  %v526 = vmax.f32 %v512, 0.0
  %v527 = vmax.f32 %v515, 0.0
  %v528 = vmax.f32 %v520, 0.0
  %v529 = vmax.f32 %v523, 0.0
  %v530 = vpack.c.bf16 %v527, %v526
  %v531 = vpack.c.bf16 %v529, %v528
  %v534 = vunpack.c.l.b16 %v530
  %v535 = vunpack.c.h.b16 %v530
  %v536 = vunpack.c.l.b16 %v531
  %v537 = vunpack.c.h.b16 %v531
  %v538 = vpack.c.b16 %v534, %v534
  %v539 = vpack.c.b16 %v535, %v535
  %v540 = vpack.c.b16 %v536, %v536
  %v541 = vpack.c.b16 %v537, %v537
  %vm546 = vcmask 519168
  %547 = vst.msk [vmem:[%s3] sm:$0xf] %vm546, %v538
  %548 = vst.msk [vmem:[%s3 + $0x4] sm:$0xf] %vm546, %v539
  %549 = vst.msk [vmem:[%s3 + $0x8] sm:$0xf] %vm546, %v540
  %550 = vst.msk [vmem:[%s3 + $0xc] sm:$0xf] %vm546, %v541
  // Predicated region
  $region14: #{_lambda_.27} parent=0 // pred_check
    _
  $region15: #{_lambda_.27} parent=0 // pred_check_branch
    %552 = sbr.rel (0) target = $region17
  $region16: #{_lambda_.27} parent=0 // pred_region
    _
  $region17: #{_lambda_.27} parent=0 // pred_fallthru
    _
  // Predicated region
  $region18: #{_lambda_.27} parent=0 // pred_check
    _
  $region19: #{_lambda_.27} parent=0 // pred_check_branch
    %554 = sbr.rel (0) target = $region21
  $region20: #{_lambda_.27} parent=0 // pred_region
    _
  $region21: #{_lambda_.27} parent=0 // pred_fallthru
    _

// kernel: _lambda_.29
$region0: #{_lambda_.29}
  #allocation0 [shape = 'u32[]', space=smem, size = 0x4, offset = 0x4, fixed_abs, tag = 'smem constant byte address 0x4 - core index']
  #allocation1 [shape = 'u32[144,128]{1,0:T(1,128)}', space=vmem, size = 0x12000, scoped, tag = 'internal scratch']
  %s0 = inlined_call_operand.vmem [shape: bf16[32,128], index: 0, kind: input, shape index: {}]
  %s1 = inlined_call_operand.vmem [shape: bf16[128,128], index: 1, kind: input, shape index: {}]
  %s2 = inlined_call_operand.vmem [shape: f32[1,128], index: 2, kind: input, shape index: {}]
  %s3 = inlined_call_operand.vmem [shape: bf16[32,128], index: 3, kind: output, shape index: {}]
  %s4 = sld [smem:[#allocation0]]
  $region22: #{_lambda_.29} parent=0
    _
  %s6 = ssub.s32 1, %s4
  %s7 = scalar_select 0, %s6, %s4
  // Predicated region
  $region2: #{_lambda_.29} parent=0 // pred_check
    _
  $region3: #{_lambda_.29} parent=0 // pred_check_branch
    %9 = sbr.rel (0) target = $region5
  $region4: #{_lambda_.29} parent=0 // pred_region
    _
  $region5: #{_lambda_.29} parent=0 // pred_fallthru
    _
  // Predicated region
  $region6: #{_lambda_.29} parent=0 // pred_check
    _
  $region7: #{_lambda_.29} parent=0 // pred_check_branch
    %11 = sbr.rel (0) target = $region9
  $region8: #{_lambda_.29} parent=0 // pred_region
    _
  $region9: #{_lambda_.29} parent=0 // pred_fallthru
    _
  // Predicated region
  $region10: #{_lambda_.29} parent=0 // pred_check
    _
  $region11: #{_lambda_.29} parent=0 // pred_check_branch
    %13 = sbr.rel (0) target = $region13
  $region12: #{_lambda_.29} parent=0 // pred_region
    _
  $region13: #{_lambda_.29} parent=0 // pred_fallthru
    _
  %v15 = vld [vmem:[%s0] sm:$0xf]
  %v16 = vld [vmem:[%s0 + $0x4] sm:$0xf]
  %v17 = vld [vmem:[%s0 + $0x8] sm:$0xf]
  %v18 = vld [vmem:[%s0 + $0xc] sm:$0xf]
  %v19 = vld [vmem:[%s1] sm:$0xf]
  %v20 = vld [vmem:[%s1 + $0x4] sm:$0xf]
  %v21 = vld [vmem:[%s1 + $0x8] sm:$0xf]
  %v22 = vld [vmem:[%s1 + $0xc] sm:$0xf]
  %v23 = vld [vmem:[%s1 + $0x10] sm:$0xf]
  %v24 = vld [vmem:[%s1 + $0x14] sm:$0xf]
  %v25 = vld [vmem:[%s1 + $0x18] sm:$0xf]
  %v26 = vld [vmem:[%s1 + $0x1c] sm:$0xf]
  %v27 = vld [vmem:[%s1 + $0x20] sm:$0xf]
  %v28 = vld [vmem:[%s1 + $0x24] sm:$0xf]
  %v29 = vld [vmem:[%s1 + $0x28] sm:$0xf]
  %v30 = vld [vmem:[%s1 + $0x2c] sm:$0xf]
  %v31 = vld [vmem:[%s1 + $0x30] sm:$0xf]
  %v32 = vld [vmem:[%s1 + $0x34] sm:$0xf]
  %v33 = vld [vmem:[%s1 + $0x38] sm:$0xf]
  %v34 = vld [vmem:[%s1 + $0x3c] sm:$0xf]
  %v35 = vld [vmem:[%s2] sm:$0x1]
  %v37 = vlaneseq
  %v38 = vshrl.u32 %v37, 7
  %v39 = vsub.s32 0, %v38
  %v40 = vrot.slane %v35, %v39
  %v46 = vunpack.c.l.b16 %v15
  %v47 = vunpack.c.l.b16 %v16
  %v48 = vunpack.c.l.b16 %v17
  %v49 = vunpack.c.l.b16 %v18
  %v50 = vpack.c.b16 %v47, %v46
  %v51 = vpack.c.b16 %v49, %v48
  %v70 = vunpack.c.l.b16 %v19
  %v71 = vunpack.c.l.b16 %v20
  %v72 = vunpack.c.l.b16 %v21
  %v73 = vunpack.c.l.b16 %v22
  %v74 = vunpack.c.l.b16 %v23
  %v75 = vunpack.c.l.b16 %v24
  %v76 = vunpack.c.l.b16 %v25
  %v77 = vunpack.c.l.b16 %v26
  %v78 = vunpack.c.l.b16 %v27
  %v79 = vunpack.c.l.b16 %v28
  %v80 = vunpack.c.l.b16 %v29
  %v81 = vunpack.c.l.b16 %v30
  %v82 = vunpack.c.l.b16 %v31
  %v83 = vunpack.c.l.b16 %v32
  %v84 = vunpack.c.l.b16 %v33
  %v85 = vunpack.c.l.b16 %v34
  %v86 = vpack.c.b16 %v71, %v70
  %v87 = vpack.c.b16 %v73, %v72
  %v88 = vpack.c.b16 %v75, %v74
  %v89 = vpack.c.b16 %v77, %v76
  %v90 = vpack.c.b16 %v79, %v78
  %v91 = vpack.c.b16 %v81, %v80
  %v92 = vpack.c.b16 %v83, %v82
  %v93 = vpack.c.b16 %v85, %v84
  %102 = vmatprep.subr.bf16.mxu0 0
  %103 = vmatpush1.bf16.msra.mxu0 %v86
  %104 = vmatprep.subr.bf16.mxu0 0
  %105 = vmatpush1.bf16.msra.mxu0 %v87
  %106 = vmatprep.subr.bf16.mxu0 0
  %107 = vmatpush1.bf16.msra.mxu0 %v88
  %108 = vmatprep.subr.bf16.mxu0 0
  %109 = vmatpush1.bf16.msra.mxu0 %v89
  %110 = vmatprep.subr.bf16.mxu0 0
  %111 = vmatpush1.bf16.msra.mxu0 %v90
  %112 = vmatprep.subr.bf16.mxu0 0
  %113 = vmatpush1.bf16.msra.mxu0 %v91
  %114 = vmatprep.subr.bf16.mxu0 0
  %115 = vmatpush1.bf16.msra.mxu0 %v92
  %116 = vmatprep.subr.bf16.mxu0 0
  %117 = vmatpush1.bf16.msra.mxu0 %v93
  %118 = vmatprep.subr.bf16.mxu0 0
  %119 = vmatpush1.bf16.msra.mxu0 0
  %120 = vmatprep.subr.bf16.mxu0 0
  %121 = vmatpush1.bf16.msra.mxu0 0
  %122 = vmatprep.subr.bf16.mxu0 0
  %123 = vmatpush1.bf16.msra.mxu0 0
  %124 = vmatprep.subr.bf16.mxu0 0
  %125 = vmatpush1.bf16.msra.mxu0 0
  %126 = vmatprep.subr.bf16.mxu0 0
  %127 = vmatpush1.bf16.msra.mxu0 0
  %128 = vmatprep.subr.bf16.mxu0 0
  %129 = vmatpush1.bf16.msra.mxu0 0
  %130 = vmatprep.subr.bf16.mxu0 0
  %131 = vmatpush1.bf16.msra.mxu0 0
  %132 = vmatprep.subr.bf16.mxu0 0
  %133 = vmatpush1.bf16.msra.mxu0 0
  %134 = vmatprep.mubr.bf16.mxu0 0
  %135 = vmatmul.mubr.bf16.gmra.mrb[0].mxu0 %v50
  %v136 = vpop.f32.mrb[0].mxu0
  %v137 = vadd.f32 %v40, %v136
  %v138 = vpop.f32.mrb[0].mxu0
  %v139 = vpop.f32.mrb[0].mxu0
  %v140 = vadd.f32 %v40, %v139
  %v141 = vpop.f32.mrb[0].mxu0
  %142 = vmatprep.mubr.bf16.mxu0 0
  %143 = vmatmul.mubr.bf16.gmra.mrb[0].mxu0 %v51
  %v144 = vpop.f32.mrb[0].mxu0
  %v145 = vadd.f32 %v40, %v144
  %v146 = vpop.f32.mrb[0].mxu0
  %v147 = vpop.f32.mrb[0].mxu0
  %v148 = vadd.f32 %v40, %v147
  %v149 = vpop.f32.mrb[0].mxu0
  %150 = vdwg.mxu0
  %v151 = vmax.f32 %v137, 0.0
  %v152 = vmax.f32 %v140, 0.0
  %v153 = vmax.f32 %v145, 0.0
  %v154 = vmax.f32 %v148, 0.0
  %v155 = vpack.c.bf16 %v152, %v151
  %v156 = vpack.c.bf16 %v154, %v153
  %v159 = vunpack.c.l.b16 %v155
  %v160 = vunpack.c.h.b16 %v155
  %v161 = vunpack.c.l.b16 %v156
  %v162 = vunpack.c.h.b16 %v156
  %v163 = vpack.c.b16 %v159, %v159
  %v164 = vpack.c.b16 %v160, %v160
  %v165 = vpack.c.b16 %v161, %v161
  %v166 = vpack.c.b16 %v162, %v162
  %171 = vst [vmem:[%s3] sm:$0xf] %v163
  %172 = vst [vmem:[%s3 + $0x4] sm:$0xf] %v164
  %173 = vst [vmem:[%s3 + $0x8] sm:$0xf] %v165
  %174 = vst [vmem:[%s3 + $0xc] sm:$0xf] %v166
  // Predicated region
  $region14: #{_lambda_.29} parent=0 // pred_check
    _
  $region15: #{_lambda_.29} parent=0 // pred_check_branch
    %176 = sbr.rel (0) target = $region17
  $region16: #{_lambda_.29} parent=0 // pred_region
    _
  $region17: #{_lambda_.29} parent=0 // pred_fallthru
    _
  // Predicated region
  $region18: #{_lambda_.29} parent=0 // pred_check
    _
  $region19: #{_lambda_.29} parent=0 // pred_check_branch
    %178 = sbr.rel (0) target = $region21
  $region20: #{_lambda_.29} parent=0 // pred_region
    _
  $region21: #{_lambda_.29} parent=0 // pred_fallthru
    _

// kernel: _lambda_.30
$region0: #{_lambda_.30}
  #allocation0 [shape = 'u32[]', space=smem, size = 0x4, offset = 0x4, fixed_abs, tag = 'smem constant byte address 0x4 - core index']
  #allocation1 [shape = 'u32[144,128]{1,0:T(1,128)}', space=vmem, size = 0x12000, scoped, tag = 'internal scratch']
  %s0 = inlined_call_operand.vmem [shape: bf16[8,1152], index: 0, kind: input, shape index: {}]
  %s1 = inlined_call_operand.vmem [shape: bf16[1152,128], index: 1, kind: input, shape index: {}]
  %s2 = inlined_call_operand.vmem [shape: f32[1,128], index: 2, kind: input, shape index: {}]
  %s3 = inlined_call_operand.vmem [shape: bf16[8,128], index: 3, kind: output, shape index: {}]
  %s4 = sld [smem:[#allocation0]]
  $region22: #{_lambda_.30} parent=0
    _
  %s6 = ssub.s32 1, %s4
  %s7 = scalar_select 0, %s6, %s4
  // Predicated region
  $region2: #{_lambda_.30} parent=0 // pred_check
    _
  $region3: #{_lambda_.30} parent=0 // pred_check_branch
    %9 = sbr.rel (0) target = $region5
  $region4: #{_lambda_.30} parent=0 // pred_region
    _
  $region5: #{_lambda_.30} parent=0 // pred_fallthru
    _
  // Predicated region
  $region6: #{_lambda_.30} parent=0 // pred_check
    _
  $region7: #{_lambda_.30} parent=0 // pred_check_branch
    %11 = sbr.rel (0) target = $region9
  $region8: #{_lambda_.30} parent=0 // pred_region
    _
  $region9: #{_lambda_.30} parent=0 // pred_fallthru
    _
  // Predicated region
  $region10: #{_lambda_.30} parent=0 // pred_check
    _
  $region11: #{_lambda_.30} parent=0 // pred_check_branch
    %13 = sbr.rel (0) target = $region13
  $region12: #{_lambda_.30} parent=0 // pred_region
    _
  $region13: #{_lambda_.30} parent=0 // pred_fallthru
    _
  %v15 = vld [vmem:[%s0] sm:$0xff]
  %v16 = vld [vmem:[%s0 + $0x8] sm:$0xff]
  %v17 = vld [vmem:[%s0 + $0x10] sm:$0xff]
  %v18 = vld [vmem:[%s0 + $0x18] sm:$0xff]
  %v19 = vld [vmem:[%s0 + $0x20] sm:$0xf]
  %v20 = vld [vmem:[%s1] sm:$0xf]
  %v21 = vld [vmem:[%s1 + $0x4] sm:$0xf]
  %v22 = vld [vmem:[%s1 + $0x8] sm:$0xf]
  %v23 = vld [vmem:[%s1 + $0xc] sm:$0xf]
  %v24 = vld [vmem:[%s1 + $0x10] sm:$0xf]
  %v25 = vld [vmem:[%s1 + $0x14] sm:$0xf]
  %v26 = vld [vmem:[%s1 + $0x18] sm:$0xf]
  %v27 = vld [vmem:[%s1 + $0x1c] sm:$0xf]
  %v28 = vld [vmem:[%s1 + $0x20] sm:$0xf]
  %v29 = vld [vmem:[%s1 + $0x24] sm:$0xf]
  %v30 = vld [vmem:[%s1 + $0x28] sm:$0xf]
  %v31 = vld [vmem:[%s1 + $0x2c] sm:$0xf]
  %v32 = vld [vmem:[%s1 + $0x30] sm:$0xf]
  %v33 = vld [vmem:[%s1 + $0x34] sm:$0xf]
  %v34 = vld [vmem:[%s1 + $0x38] sm:$0xf]
  %v35 = vld [vmem:[%s1 + $0x3c] sm:$0xf]
  %v36 = vld [vmem:[%s1 + $0x40] sm:$0xf]
  %v37 = vld [vmem:[%s1 + $0x44] sm:$0xf]
  %v38 = vld [vmem:[%s1 + $0x48] sm:$0xf]
  %v39 = vld [vmem:[%s1 + $0x4c] sm:$0xf]
  %v40 = vld [vmem:[%s1 + $0x50] sm:$0xf]
  %v41 = vld [vmem:[%s1 + $0x54] sm:$0xf]
  %v42 = vld [vmem:[%s1 + $0x58] sm:$0xf]
  %v43 = vld [vmem:[%s1 + $0x5c] sm:$0xf]
  %v44 = vld [vmem:[%s1 + $0x60] sm:$0xf]
  %v45 = vld [vmem:[%s1 + $0x64] sm:$0xf]
  %v46 = vld [vmem:[%s1 + $0x68] sm:$0xf]
  %v47 = vld [vmem:[%s1 + $0x6c] sm:$0xf]
  %v48 = vld [vmem:[%s1 + $0x70] sm:$0xf]
  %v49 = vld [vmem:[%s1 + $0x74] sm:$0xf]
  %v50 = vld [vmem:[%s1 + $0x78] sm:$0xf]
  %v51 = vld [vmem:[%s1 + $0x7c] sm:$0xf]
  %v52 = vld [vmem:[%s1 + $0x80] sm:$0xf]
  %v53 = vld [vmem:[%s1 + $0x84] sm:$0xf]
  %v54 = vld [vmem:[%s1 + $0x88] sm:$0xf]
  %v55 = vld [vmem:[%s1 + $0x8c] sm:$0xf]
  %v56 = vld [vmem:[%s1 + $0x90] sm:$0xf]
  %v57 = vld [vmem:[%s1 + $0x94] sm:$0xf]
  %v58 = vld [vmem:[%s1 + $0x98] sm:$0xf]
  %v59 = vld [vmem:[%s1 + $0x9c] sm:$0xf]
  %v60 = vld [vmem:[%s1 + $0xa0] sm:$0xf]
  %v61 = vld [vmem:[%s1 + $0xa4] sm:$0xf]
  %v62 = vld [vmem:[%s1 + $0xa8] sm:$0xf]
  %v63 = vld [vmem:[%s1 + $0xac] sm:$0xf]
  %v64 = vld [vmem:[%s1 + $0xb0] sm:$0xf]
  %v65 = vld [vmem:[%s1 + $0xb4] sm:$0xf]
  %v66 = vld [vmem:[%s1 + $0xb8] sm:$0xf]
  %v67 = vld [vmem:[%s1 + $0xbc] sm:$0xf]
  %v68 = vld [vmem:[%s1 + $0xc0] sm:$0xf]
  %v69 = vld [vmem:[%s1 + $0xc4] sm:$0xf]
  %v70 = vld [vmem:[%s1 + $0xc8] sm:$0xf]
  %v71 = vld [vmem:[%s1 + $0xcc] sm:$0xf]
  %v72 = vld [vmem:[%s1 + $0xd0] sm:$0xf]
  %v73 = vld [vmem:[%s1 + $0xd4] sm:$0xf]
  %v74 = vld [vmem:[%s1 + $0xd8] sm:$0xf]
  %v75 = vld [vmem:[%s1 + $0xdc] sm:$0xf]
  %v76 = vld [vmem:[%s1 + $0xe0] sm:$0xf]
  %v77 = vld [vmem:[%s1 + $0xe4] sm:$0xf]
  %v78 = vld [vmem:[%s1 + $0xe8] sm:$0xf]
  %v79 = vld [vmem:[%s1 + $0xec] sm:$0xf]
  %v80 = vld [vmem:[%s1 + $0xf0] sm:$0xf]
  %v81 = vld [vmem:[%s1 + $0xf4] sm:$0xf]
  %v82 = vld [vmem:[%s1 + $0xf8] sm:$0xf]
  %v83 = vld [vmem:[%s1 + $0xfc] sm:$0xf]
  %v84 = vld [vmem:[%s1 + $0x100] sm:$0xf]
  %v85 = vld [vmem:[%s1 + $0x104] sm:$0xf]
  %v86 = vld [vmem:[%s1 + $0x108] sm:$0xf]
  %v87 = vld [vmem:[%s1 + $0x10c] sm:$0xf]
  %v88 = vld [vmem:[%s1 + $0x110] sm:$0xf]
  %v89 = vld [vmem:[%s1 + $0x114] sm:$0xf]
  %v90 = vld [vmem:[%s1 + $0x118] sm:$0xf]
  %v91 = vld [vmem:[%s1 + $0x11c] sm:$0xf]
  %v92 = vld [vmem:[%s1 + $0x120] sm:$0xf]
  %v93 = vld [vmem:[%s1 + $0x124] sm:$0xf]
  %v94 = vld [vmem:[%s1 + $0x128] sm:$0xf]
  %v95 = vld [vmem:[%s1 + $0x12c] sm:$0xf]
  %v96 = vld [vmem:[%s1 + $0x130] sm:$0xf]
  %v97 = vld [vmem:[%s1 + $0x134] sm:$0xf]
  %v98 = vld [vmem:[%s1 + $0x138] sm:$0xf]
  %v99 = vld [vmem:[%s1 + $0x13c] sm:$0xf]
  %v100 = vld [vmem:[%s1 + $0x140] sm:$0xf]
  %v101 = vld [vmem:[%s1 + $0x144] sm:$0xf]
  %v102 = vld [vmem:[%s1 + $0x148] sm:$0xf]
  %v103 = vld [vmem:[%s1 + $0x14c] sm:$0xf]
  %v104 = vld [vmem:[%s1 + $0x150] sm:$0xf]
  %v105 = vld [vmem:[%s1 + $0x154] sm:$0xf]
  %v106 = vld [vmem:[%s1 + $0x158] sm:$0xf]
  %v107 = vld [vmem:[%s1 + $0x15c] sm:$0xf]
  %v108 = vld [vmem:[%s1 + $0x160] sm:$0xf]
  %v109 = vld [vmem:[%s1 + $0x164] sm:$0xf]
  %v110 = vld [vmem:[%s1 + $0x168] sm:$0xf]
  %v111 = vld [vmem:[%s1 + $0x16c] sm:$0xf]
  %v112 = vld [vmem:[%s1 + $0x170] sm:$0xf]
  %v113 = vld [vmem:[%s1 + $0x174] sm:$0xf]
  %v114 = vld [vmem:[%s1 + $0x178] sm:$0xf]
  %v115 = vld [vmem:[%s1 + $0x17c] sm:$0xf]
  %v116 = vld [vmem:[%s1 + $0x180] sm:$0xf]
  %v117 = vld [vmem:[%s1 + $0x184] sm:$0xf]
  %v118 = vld [vmem:[%s1 + $0x188] sm:$0xf]
  %v119 = vld [vmem:[%s1 + $0x18c] sm:$0xf]
  %v120 = vld [vmem:[%s1 + $0x190] sm:$0xf]
  %v121 = vld [vmem:[%s1 + $0x194] sm:$0xf]
  %v122 = vld [vmem:[%s1 + $0x198] sm:$0xf]
  %v123 = vld [vmem:[%s1 + $0x19c] sm:$0xf]
  %v124 = vld [vmem:[%s1 + $0x1a0] sm:$0xf]
  %v125 = vld [vmem:[%s1 + $0x1a4] sm:$0xf]
  %v126 = vld [vmem:[%s1 + $0x1a8] sm:$0xf]
  %v127 = vld [vmem:[%s1 + $0x1ac] sm:$0xf]
  %v128 = vld [vmem:[%s1 + $0x1b0] sm:$0xf]
  %v129 = vld [vmem:[%s1 + $0x1b4] sm:$0xf]
  %v130 = vld [vmem:[%s1 + $0x1b8] sm:$0xf]
  %v131 = vld [vmem:[%s1 + $0x1bc] sm:$0xf]
  %v132 = vld [vmem:[%s1 + $0x1c0] sm:$0xf]
  %v133 = vld [vmem:[%s1 + $0x1c4] sm:$0xf]
  %v134 = vld [vmem:[%s1 + $0x1c8] sm:$0xf]
  %v135 = vld [vmem:[%s1 + $0x1cc] sm:$0xf]
  %v136 = vld [vmem:[%s1 + $0x1d0] sm:$0xf]
  %v137 = vld [vmem:[%s1 + $0x1d4] sm:$0xf]
  %v138 = vld [vmem:[%s1 + $0x1d8] sm:$0xf]
  %v139 = vld [vmem:[%s1 + $0x1dc] sm:$0xf]
  %v140 = vld [vmem:[%s1 + $0x1e0] sm:$0xf]
  %v141 = vld [vmem:[%s1 + $0x1e4] sm:$0xf]
  %v142 = vld [vmem:[%s1 + $0x1e8] sm:$0xf]
  %v143 = vld [vmem:[%s1 + $0x1ec] sm:$0xf]
  %v144 = vld [vmem:[%s1 + $0x1f0] sm:$0xf]
  %v145 = vld [vmem:[%s1 + $0x1f4] sm:$0xf]
  %v146 = vld [vmem:[%s1 + $0x1f8] sm:$0xf]
  %v147 = vld [vmem:[%s1 + $0x1fc] sm:$0xf]
  %v148 = vld [vmem:[%s1 + $0x200] sm:$0xf]
  %v149 = vld [vmem:[%s1 + $0x204] sm:$0xf]
  %v150 = vld [vmem:[%s1 + $0x208] sm:$0xf]
  %v151 = vld [vmem:[%s1 + $0x20c] sm:$0xf]
  %v152 = vld [vmem:[%s1 + $0x210] sm:$0xf]
  %v153 = vld [vmem:[%s1 + $0x214] sm:$0xf]
  %v154 = vld [vmem:[%s1 + $0x218] sm:$0xf]
  %v155 = vld [vmem:[%s1 + $0x21c] sm:$0xf]
  %v156 = vld [vmem:[%s1 + $0x220] sm:$0xf]
  %v157 = vld [vmem:[%s1 + $0x224] sm:$0xf]
  %v158 = vld [vmem:[%s1 + $0x228] sm:$0xf]
  %v159 = vld [vmem:[%s1 + $0x22c] sm:$0xf]
  %v160 = vld [vmem:[%s1 + $0x230] sm:$0xf]
  %v161 = vld [vmem:[%s1 + $0x234] sm:$0xf]
  %v162 = vld [vmem:[%s1 + $0x238] sm:$0xf]
  %v163 = vld [vmem:[%s1 + $0x23c] sm:$0xf]
  %v164 = vld [vmem:[%s2] sm:$0x1]
  %v166 = vlaneseq
  %v167 = vshrl.u32 %v166, 7
  %v168 = vsub.s32 0, %v167
  %v169 = vrot.slane %v164, %v168
  %v176 = vunpack.c.l.b16 %v15
  %v177 = vunpack.c.h.b16 %v15
  %v178 = vunpack.c.l.b16 %v16
  %v179 = vunpack.c.h.b16 %v16
  %v180 = vunpack.c.l.b16 %v17
  %v181 = vunpack.c.h.b16 %v17
  %v182 = vunpack.c.l.b16 %v18
  %v183 = vunpack.c.h.b16 %v18
  %v184 = vunpack.c.l.b16 %v19
  %v185 = vpack.c.b16 %v176, %v176
  %v186 = vpack.c.b16 %v177, %v177
  %v187 = vpack.c.b16 %v178, %v178
  %v188 = vpack.c.b16 %v179, %v179
  %v189 = vpack.c.b16 %v180, %v180
  %v190 = vpack.c.b16 %v181, %v181
  %v191 = vpack.c.b16 %v182, %v182
  %v192 = vpack.c.b16 %v183, %v183
  %v193 = vpack.c.b16 %v184, %v184
  %v347 = vunpack.c.l.b16 %v20
  %v348 = vunpack.c.l.b16 %v21
  %v349 = vunpack.c.l.b16 %v22
  %v350 = vunpack.c.l.b16 %v23
  %v351 = vunpack.c.l.b16 %v24
  %v352 = vunpack.c.l.b16 %v25
  %v353 = vunpack.c.l.b16 %v26
  %v354 = vunpack.c.l.b16 %v27
  %v355 = vunpack.c.l.b16 %v28
  %v356 = vunpack.c.l.b16 %v29
  %v357 = vunpack.c.l.b16 %v30
  %v358 = vunpack.c.l.b16 %v31
  %v359 = vunpack.c.l.b16 %v32
  %v360 = vunpack.c.l.b16 %v33
  %v361 = vunpack.c.l.b16 %v34
  %v362 = vunpack.c.l.b16 %v35
  %v363 = vunpack.c.l.b16 %v36
  %v364 = vunpack.c.l.b16 %v37
  %v365 = vunpack.c.l.b16 %v38
  %v366 = vunpack.c.l.b16 %v39
  %v367 = vunpack.c.l.b16 %v40
  %v368 = vunpack.c.l.b16 %v41
  %v369 = vunpack.c.l.b16 %v42
  %v370 = vunpack.c.l.b16 %v43
  %v371 = vunpack.c.l.b16 %v44
  %v372 = vunpack.c.l.b16 %v45
  %v373 = vunpack.c.l.b16 %v46
  %v374 = vunpack.c.l.b16 %v47
  %v375 = vunpack.c.l.b16 %v48
  %v376 = vunpack.c.l.b16 %v49
  %v377 = vunpack.c.l.b16 %v50
  %v378 = vunpack.c.l.b16 %v51
  %v379 = vunpack.c.l.b16 %v52
  %v380 = vunpack.c.l.b16 %v53
  %v381 = vunpack.c.l.b16 %v54
  %v382 = vunpack.c.l.b16 %v55
  %v383 = vunpack.c.l.b16 %v56
  %v384 = vunpack.c.l.b16 %v57
  %v385 = vunpack.c.l.b16 %v58
  %v386 = vunpack.c.l.b16 %v59
  %v387 = vunpack.c.l.b16 %v60
  %v388 = vunpack.c.l.b16 %v61
  %v389 = vunpack.c.l.b16 %v62
  %v390 = vunpack.c.l.b16 %v63
  %v391 = vunpack.c.l.b16 %v64
  %v392 = vunpack.c.l.b16 %v65
  %v393 = vunpack.c.l.b16 %v66
  %v394 = vunpack.c.l.b16 %v67
  %v395 = vunpack.c.l.b16 %v68
  %v396 = vunpack.c.l.b16 %v69
  %v397 = vunpack.c.l.b16 %v70
  %v398 = vunpack.c.l.b16 %v71
  %v399 = vunpack.c.l.b16 %v72
  %v400 = vunpack.c.l.b16 %v73
  %v401 = vunpack.c.l.b16 %v74
  %v402 = vunpack.c.l.b16 %v75
  %v403 = vunpack.c.l.b16 %v76
  %v404 = vunpack.c.l.b16 %v77
  %v405 = vunpack.c.l.b16 %v78
  %v406 = vunpack.c.l.b16 %v79
  %v407 = vunpack.c.l.b16 %v80
  %v408 = vunpack.c.l.b16 %v81
  %v409 = vunpack.c.l.b16 %v82
  %v410 = vunpack.c.l.b16 %v83
  %v411 = vunpack.c.l.b16 %v84
  %v412 = vunpack.c.l.b16 %v85
  %v413 = vunpack.c.l.b16 %v86
  %v414 = vunpack.c.l.b16 %v87
  %v415 = vunpack.c.l.b16 %v88
  %v416 = vunpack.c.l.b16 %v89
  %v417 = vunpack.c.l.b16 %v90
  %v418 = vunpack.c.l.b16 %v91
  %v419 = vunpack.c.l.b16 %v92
  %v420 = vunpack.c.l.b16 %v93
  %v421 = vunpack.c.l.b16 %v94
  %v422 = vunpack.c.l.b16 %v95
  %v423 = vunpack.c.l.b16 %v96
  %v424 = vunpack.c.l.b16 %v97
  %v425 = vunpack.c.l.b16 %v98
  %v426 = vunpack.c.l.b16 %v99
  %v427 = vunpack.c.l.b16 %v100
  %v428 = vunpack.c.l.b16 %v101
  %v429 = vunpack.c.l.b16 %v102
  %v430 = vunpack.c.l.b16 %v103
  %v431 = vunpack.c.l.b16 %v104
  %v432 = vunpack.c.l.b16 %v105
  %v433 = vunpack.c.l.b16 %v106
  %v434 = vunpack.c.l.b16 %v107
  %v435 = vunpack.c.l.b16 %v108
  %v436 = vunpack.c.l.b16 %v109
  %v437 = vunpack.c.l.b16 %v110
  %v438 = vunpack.c.l.b16 %v111
  %v439 = vunpack.c.l.b16 %v112
  %v440 = vunpack.c.l.b16 %v113
  %v441 = vunpack.c.l.b16 %v114
  %v442 = vunpack.c.l.b16 %v115
  %v443 = vunpack.c.l.b16 %v116
  %v444 = vunpack.c.l.b16 %v117
  %v445 = vunpack.c.l.b16 %v118
  %v446 = vunpack.c.l.b16 %v119
  %v447 = vunpack.c.l.b16 %v120
  %v448 = vunpack.c.l.b16 %v121
  %v449 = vunpack.c.l.b16 %v122
  %v450 = vunpack.c.l.b16 %v123
  %v451 = vunpack.c.l.b16 %v124
  %v452 = vunpack.c.l.b16 %v125
  %v453 = vunpack.c.l.b16 %v126
  %v454 = vunpack.c.l.b16 %v127
  %v455 = vunpack.c.l.b16 %v128
  %v456 = vunpack.c.l.b16 %v129
  %v457 = vunpack.c.l.b16 %v130
  %v458 = vunpack.c.l.b16 %v131
  %v459 = vunpack.c.l.b16 %v132
  %v460 = vunpack.c.l.b16 %v133
  %v461 = vunpack.c.l.b16 %v134
  %v462 = vunpack.c.l.b16 %v135
  %v463 = vunpack.c.l.b16 %v136
  %v464 = vunpack.c.l.b16 %v137
  %v465 = vunpack.c.l.b16 %v138
  %v466 = vunpack.c.l.b16 %v139
  %v467 = vunpack.c.l.b16 %v140
  %v468 = vunpack.c.l.b16 %v141
  %v469 = vunpack.c.l.b16 %v142
  %v470 = vunpack.c.l.b16 %v143
  %v471 = vunpack.c.l.b16 %v144
  %v472 = vunpack.c.l.b16 %v145
  %v473 = vunpack.c.l.b16 %v146
  %v474 = vunpack.c.l.b16 %v147
  %v475 = vunpack.c.l.b16 %v148
  %v476 = vunpack.c.l.b16 %v149
  %v477 = vunpack.c.l.b16 %v150
  %v478 = vunpack.c.l.b16 %v151
  %v479 = vunpack.c.l.b16 %v152
  %v480 = vunpack.c.l.b16 %v153
  %v481 = vunpack.c.l.b16 %v154
  %v482 = vunpack.c.l.b16 %v155
  %v483 = vunpack.c.l.b16 %v156
  %v484 = vunpack.c.l.b16 %v157
  %v485 = vunpack.c.l.b16 %v158
  %v486 = vunpack.c.l.b16 %v159
  %v487 = vunpack.c.l.b16 %v160
  %v488 = vunpack.c.l.b16 %v161
  %v489 = vunpack.c.l.b16 %v162
  %v490 = vunpack.c.l.b16 %v163
  %v491 = vpack.c.b16 %v348, %v347
  %v492 = vpack.c.b16 %v350, %v349
  %v493 = vpack.c.b16 %v352, %v351
  %v494 = vpack.c.b16 %v354, %v353
  %v495 = vpack.c.b16 %v356, %v355
  %v496 = vpack.c.b16 %v358, %v357
  %v497 = vpack.c.b16 %v360, %v359
  %v498 = vpack.c.b16 %v362, %v361
  %v499 = vpack.c.b16 %v364, %v363
  %v500 = vpack.c.b16 %v366, %v365
  %v501 = vpack.c.b16 %v368, %v367
  %v502 = vpack.c.b16 %v370, %v369
  %v503 = vpack.c.b16 %v372, %v371
  %v504 = vpack.c.b16 %v374, %v373
  %v505 = vpack.c.b16 %v376, %v375
  %v506 = vpack.c.b16 %v378, %v377
  %v507 = vpack.c.b16 %v380, %v379
  %v508 = vpack.c.b16 %v382, %v381
  %v509 = vpack.c.b16 %v384, %v383
  %v510 = vpack.c.b16 %v386, %v385
  %v511 = vpack.c.b16 %v388, %v387
  %v512 = vpack.c.b16 %v390, %v389
  %v513 = vpack.c.b16 %v392, %v391
  %v514 = vpack.c.b16 %v394, %v393
  %v515 = vpack.c.b16 %v396, %v395
  %v516 = vpack.c.b16 %v398, %v397
  %v517 = vpack.c.b16 %v400, %v399
  %v518 = vpack.c.b16 %v402, %v401
  %v519 = vpack.c.b16 %v404, %v403
  %v520 = vpack.c.b16 %v406, %v405
  %v521 = vpack.c.b16 %v408, %v407
  %v522 = vpack.c.b16 %v410, %v409
  %v523 = vpack.c.b16 %v412, %v411
  %v524 = vpack.c.b16 %v414, %v413
  %v525 = vpack.c.b16 %v416, %v415
  %v526 = vpack.c.b16 %v418, %v417
  %v527 = vpack.c.b16 %v420, %v419
  %v528 = vpack.c.b16 %v422, %v421
  %v529 = vpack.c.b16 %v424, %v423
  %v530 = vpack.c.b16 %v426, %v425
  %v531 = vpack.c.b16 %v428, %v427
  %v532 = vpack.c.b16 %v430, %v429
  %v533 = vpack.c.b16 %v432, %v431
  %v534 = vpack.c.b16 %v434, %v433
  %v535 = vpack.c.b16 %v436, %v435
  %v536 = vpack.c.b16 %v438, %v437
  %v537 = vpack.c.b16 %v440, %v439
  %v538 = vpack.c.b16 %v442, %v441
  %v539 = vpack.c.b16 %v444, %v443
  %v540 = vpack.c.b16 %v446, %v445
  %v541 = vpack.c.b16 %v448, %v447
  %v542 = vpack.c.b16 %v450, %v449
  %v543 = vpack.c.b16 %v452, %v451
  %v544 = vpack.c.b16 %v454, %v453
  %v545 = vpack.c.b16 %v456, %v455
  %v546 = vpack.c.b16 %v458, %v457
  %v547 = vpack.c.b16 %v460, %v459
  %v548 = vpack.c.b16 %v462, %v461
  %v549 = vpack.c.b16 %v464, %v463
  %v550 = vpack.c.b16 %v466, %v465
  %v551 = vpack.c.b16 %v468, %v467
  %v552 = vpack.c.b16 %v470, %v469
  %v553 = vpack.c.b16 %v472, %v471
  %v554 = vpack.c.b16 %v474, %v473
  %v555 = vpack.c.b16 %v476, %v475
  %v556 = vpack.c.b16 %v478, %v477
  %v557 = vpack.c.b16 %v480, %v479
  %v558 = vpack.c.b16 %v482, %v481
  %v559 = vpack.c.b16 %v484, %v483
  %v560 = vpack.c.b16 %v486, %v485
  %v561 = vpack.c.b16 %v488, %v487
  %v562 = vpack.c.b16 %v490, %v489
  %635 = vmatprep.subr.bf16.mxu0 0
  %636 = vmatpush1.bf16.msra.mxu0 %v491
  %637 = vmatprep.subr.bf16.mxu0 0
  %638 = vmatpush1.bf16.msra.mxu0 %v492
  %639 = vmatprep.subr.bf16.mxu0 0
  %640 = vmatpush1.bf16.msra.mxu0 %v493
  %641 = vmatprep.subr.bf16.mxu0 0
  %642 = vmatpush1.bf16.msra.mxu0 %v494
  %643 = vmatprep.subr.bf16.mxu0 0
  %644 = vmatpush1.bf16.msra.mxu0 %v495
  %645 = vmatprep.subr.bf16.mxu0 0
  %646 = vmatpush1.bf16.msra.mxu0 %v496
  %647 = vmatprep.subr.bf16.mxu0 0
  %648 = vmatpush1.bf16.msra.mxu0 %v497
  %649 = vmatprep.subr.bf16.mxu0 0
  %650 = vmatpush1.bf16.msra.mxu0 %v498
  %651 = vmatprep.subr.bf16.mxu0 0
  %652 = vmatpush1.bf16.msra.mxu0 %v499
  %653 = vmatprep.subr.bf16.mxu0 0
  %654 = vmatpush1.bf16.msra.mxu0 %v500
  %655 = vmatprep.subr.bf16.mxu0 0
  %656 = vmatpush1.bf16.msra.mxu0 %v501
  %657 = vmatprep.subr.bf16.mxu0 0
  %658 = vmatpush1.bf16.msra.mxu0 %v502
  %659 = vmatprep.subr.bf16.mxu0 0
  %660 = vmatpush1.bf16.msra.mxu0 %v503
  %661 = vmatprep.subr.bf16.mxu0 0
  %662 = vmatpush1.bf16.msra.mxu0 %v504
  %663 = vmatprep.subr.bf16.mxu0 0
  %664 = vmatpush1.bf16.msra.mxu0 %v505
  %665 = vmatprep.subr.bf16.mxu0 0
  %666 = vmatpush1.bf16.msra.mxu0 %v506
  %667 = vmatprep.mubr.bf16.mxu0 %v186
  %668 = vmatmul.mubr.bf16.gmra.mrb[0].mxu0 %v185
  %v669 = vpop.f32.mrb[0].mxu0
  %v670 = vadd.f32 %v169, %v669
  %v671 = vpop.f32.mrb[0].mxu0
  %v672 = vpop.f32.mrb[0].mxu0
  %v673 = vpop.f32.mrb[0].mxu0
  %674 = vdwg.mxu0
  %675 = vmatprep.subr.bf16.mxu0 0
  %676 = vmatpush1.bf16.msra.mxu0 %v507
  %677 = vmatprep.subr.bf16.mxu0 0
  %678 = vmatpush1.bf16.msra.mxu0 %v508
  %679 = vmatprep.subr.bf16.mxu0 0
  %680 = vmatpush1.bf16.msra.mxu0 %v509
  %681 = vmatprep.subr.bf16.mxu0 0
  %682 = vmatpush1.bf16.msra.mxu0 %v510
  %683 = vmatprep.subr.bf16.mxu0 0
  %684 = vmatpush1.bf16.msra.mxu0 %v511
  %685 = vmatprep.subr.bf16.mxu0 0
  %686 = vmatpush1.bf16.msra.mxu0 %v512
  %687 = vmatprep.subr.bf16.mxu0 0
  %688 = vmatpush1.bf16.msra.mxu0 %v513
  %689 = vmatprep.subr.bf16.mxu0 0
  %690 = vmatpush1.bf16.msra.mxu0 %v514
  %691 = vmatprep.subr.bf16.mxu0 0
  %692 = vmatpush1.bf16.msra.mxu0 %v515
  %693 = vmatprep.subr.bf16.mxu0 0
  %694 = vmatpush1.bf16.msra.mxu0 %v516
  %695 = vmatprep.subr.bf16.mxu0 0
  %696 = vmatpush1.bf16.msra.mxu0 %v517
  %697 = vmatprep.subr.bf16.mxu0 0
  %698 = vmatpush1.bf16.msra.mxu0 %v518
  %699 = vmatprep.subr.bf16.mxu0 0
  %700 = vmatpush1.bf16.msra.mxu0 %v519
  %701 = vmatprep.subr.bf16.mxu0 0
  %702 = vmatpush1.bf16.msra.mxu0 %v520
  %703 = vmatprep.subr.bf16.mxu0 0
  %704 = vmatpush1.bf16.msra.mxu0 %v521
  %705 = vmatprep.subr.bf16.mxu0 0
  %706 = vmatpush1.bf16.msra.mxu0 %v522
  %707 = vmatprep.mubr.bf16.mxu0 %v188
  %708 = vmatmul.mubr.bf16.gmra.mrb[0].mxu0 %v187
  %v709 = vpop.f32.mrb[0].mxu0
  %v710 = vadd.f32 %v670, %v709
  %v711 = vpop.f32.mrb[0].mxu0
  %v712 = vpop.f32.mrb[0].mxu0
  %v713 = vpop.f32.mrb[0].mxu0
  %714 = vdwg.mxu0
  %715 = vmatprep.subr.bf16.mxu0 0
  %716 = vmatpush1.bf16.msra.mxu0 %v523
  %717 = vmatprep.subr.bf16.mxu0 0
  %718 = vmatpush1.bf16.msra.mxu0 %v524
  %719 = vmatprep.subr.bf16.mxu0 0
  %720 = vmatpush1.bf16.msra.mxu0 %v525
  %721 = vmatprep.subr.bf16.mxu0 0
  %722 = vmatpush1.bf16.msra.mxu0 %v526
  %723 = vmatprep.subr.bf16.mxu0 0
  %724 = vmatpush1.bf16.msra.mxu0 %v527
  %725 = vmatprep.subr.bf16.mxu0 0
  %726 = vmatpush1.bf16.msra.mxu0 %v528
  %727 = vmatprep.subr.bf16.mxu0 0
  %728 = vmatpush1.bf16.msra.mxu0 %v529
  %729 = vmatprep.subr.bf16.mxu0 0
  %730 = vmatpush1.bf16.msra.mxu0 %v530
  %731 = vmatprep.subr.bf16.mxu0 0
  %732 = vmatpush1.bf16.msra.mxu0 %v531
  %733 = vmatprep.subr.bf16.mxu0 0
  %734 = vmatpush1.bf16.msra.mxu0 %v532
  %735 = vmatprep.subr.bf16.mxu0 0
  %736 = vmatpush1.bf16.msra.mxu0 %v533
  %737 = vmatprep.subr.bf16.mxu0 0
  %738 = vmatpush1.bf16.msra.mxu0 %v534
  %739 = vmatprep.subr.bf16.mxu0 0
  %740 = vmatpush1.bf16.msra.mxu0 %v535
  %741 = vmatprep.subr.bf16.mxu0 0
  %742 = vmatpush1.bf16.msra.mxu0 %v536
  %743 = vmatprep.subr.bf16.mxu0 0
  %744 = vmatpush1.bf16.msra.mxu0 %v537
  %745 = vmatprep.subr.bf16.mxu0 0
  %746 = vmatpush1.bf16.msra.mxu0 %v538
  %747 = vmatprep.mubr.bf16.mxu0 %v190
  %748 = vmatmul.mubr.bf16.gmra.mrb[0].mxu0 %v189
  %v749 = vpop.f32.mrb[0].mxu0
  %v750 = vadd.f32 %v710, %v749
  %v751 = vpop.f32.mrb[0].mxu0
  %v752 = vpop.f32.mrb[0].mxu0
  %v753 = vpop.f32.mrb[0].mxu0
  %754 = vdwg.mxu0
  %755 = vmatprep.subr.bf16.mxu0 0
  %756 = vmatpush1.bf16.msra.mxu0 %v539
  %757 = vmatprep.subr.bf16.mxu0 0
  %758 = vmatpush1.bf16.msra.mxu0 %v540
  %759 = vmatprep.subr.bf16.mxu0 0
  %760 = vmatpush1.bf16.msra.mxu0 %v541
  %761 = vmatprep.subr.bf16.mxu0 0
  %762 = vmatpush1.bf16.msra.mxu0 %v542
  %763 = vmatprep.subr.bf16.mxu0 0
  %764 = vmatpush1.bf16.msra.mxu0 %v543
  %765 = vmatprep.subr.bf16.mxu0 0
  %766 = vmatpush1.bf16.msra.mxu0 %v544
  %767 = vmatprep.subr.bf16.mxu0 0
  %768 = vmatpush1.bf16.msra.mxu0 %v545
  %769 = vmatprep.subr.bf16.mxu0 0
  %770 = vmatpush1.bf16.msra.mxu0 %v546
  %771 = vmatprep.subr.bf16.mxu0 0
  %772 = vmatpush1.bf16.msra.mxu0 %v547
  %773 = vmatprep.subr.bf16.mxu0 0
  %774 = vmatpush1.bf16.msra.mxu0 %v548
  %775 = vmatprep.subr.bf16.mxu0 0
  %776 = vmatpush1.bf16.msra.mxu0 %v549
  %777 = vmatprep.subr.bf16.mxu0 0
  %778 = vmatpush1.bf16.msra.mxu0 %v550
  %779 = vmatprep.subr.bf16.mxu0 0
  %780 = vmatpush1.bf16.msra.mxu0 %v551
  %781 = vmatprep.subr.bf16.mxu0 0
  %782 = vmatpush1.bf16.msra.mxu0 %v552
  %783 = vmatprep.subr.bf16.mxu0 0
  %784 = vmatpush1.bf16.msra.mxu0 %v553
  %785 = vmatprep.subr.bf16.mxu0 0
  %786 = vmatpush1.bf16.msra.mxu0 %v554
  %787 = vmatprep.mubr.bf16.mxu0 %v192
  %788 = vmatmul.mubr.bf16.gmra.mrb[0].mxu0 %v191
  %v789 = vpop.f32.mrb[0].mxu0
  %v790 = vadd.f32 %v750, %v789
  %v791 = vpop.f32.mrb[0].mxu0
  %v792 = vpop.f32.mrb[0].mxu0
  %v793 = vpop.f32.mrb[0].mxu0
  %794 = vdwg.mxu0
  %795 = vmatprep.subr.bf16.mxu0 0
  %796 = vmatpush1.bf16.msra.mxu0 %v555
  %797 = vmatprep.subr.bf16.mxu0 0
  %798 = vmatpush1.bf16.msra.mxu0 %v556
  %799 = vmatprep.subr.bf16.mxu0 0
  %800 = vmatpush1.bf16.msra.mxu0 %v557
  %801 = vmatprep.subr.bf16.mxu0 0
  %802 = vmatpush1.bf16.msra.mxu0 %v558
  %803 = vmatprep.subr.bf16.mxu0 0
  %804 = vmatpush1.bf16.msra.mxu0 %v559
  %805 = vmatprep.subr.bf16.mxu0 0
  %806 = vmatpush1.bf16.msra.mxu0 %v560
  %807 = vmatprep.subr.bf16.mxu0 0
  %808 = vmatpush1.bf16.msra.mxu0 %v561
  %809 = vmatprep.subr.bf16.mxu0 0
  %810 = vmatpush1.bf16.msra.mxu0 %v562
  %811 = vmatprep.subr.bf16.mxu0 0
  %812 = vmatpush1.bf16.msra.mxu0 0
  %813 = vmatprep.subr.bf16.mxu0 0
  %814 = vmatpush1.bf16.msra.mxu0 0
  %815 = vmatprep.subr.bf16.mxu0 0
  %816 = vmatpush1.bf16.msra.mxu0 0
  %817 = vmatprep.subr.bf16.mxu0 0
  %818 = vmatpush1.bf16.msra.mxu0 0
  %819 = vmatprep.subr.bf16.mxu0 0
  %820 = vmatpush1.bf16.msra.mxu0 0
  %821 = vmatprep.subr.bf16.mxu0 0
  %822 = vmatpush1.bf16.msra.mxu0 0
  %823 = vmatprep.subr.bf16.mxu0 0
  %824 = vmatpush1.bf16.msra.mxu0 0
  %825 = vmatprep.subr.bf16.mxu0 0
  %826 = vmatpush1.bf16.msra.mxu0 0
  %827 = vmatprep.mubr.bf16.mxu0 0
  %828 = vmatmul.mubr.bf16.gmra.mrb[0].mxu0 %v193
  %v829 = vpop.f32.mrb[0].mxu0
  %v830 = vadd.f32 %v790, %v829
  %v831 = vpop.f32.mrb[0].mxu0
  %v832 = vpop.f32.mrb[0].mxu0
  %v833 = vpop.f32.mrb[0].mxu0
  %834 = vdwg.mxu0
  %v835 = vmax.f32 %v830, 0.0
  %v836 = vpack.c.bf16 %v835, %v835
  %837 = vst [vmem:[%s3] sm:$0xf] %v836
  // Predicated region
  $region14: #{_lambda_.30} parent=0 // pred_check
    _
  $region15: #{_lambda_.30} parent=0 // pred_check_branch
    %839 = sbr.rel (0) target = $region17
  $region16: #{_lambda_.30} parent=0 // pred_region
    _
  $region17: #{_lambda_.30} parent=0 // pred_fallthru
    _
  // Predicated region
  $region18: #{_lambda_.30} parent=0 // pred_check
    _
  $region19: #{_lambda_.30} parent=0 // pred_check_branch
    %841 = sbr.rel (0) target = $region21
  $region20: #{_lambda_.30} parent=0 // pred_region
    _
  $region21: #{_lambda_.30} parent=0 // pred_fallthru
    _

// kernel: _lambda_.31
$region0: #{_lambda_.31}
  #allocation0 [shape = 'u32[]', space=smem, size = 0x4, offset = 0x4, fixed_abs, tag = 'smem constant byte address 0x4 - core index']
  #allocation1 [shape = 'u32[144,128]{1,0:T(1,128)}', space=vmem, size = 0x12000, scoped, tag = 'internal scratch']
  %s0 = inlined_call_operand.vmem [shape: bf16[8,128], index: 0, kind: input, shape index: {}]
  %s1 = inlined_call_operand.vmem [shape: bf16[128,256], index: 1, kind: input, shape index: {}]
  %s2 = inlined_call_operand.vmem [shape: bf16[8,512], index: 2, kind: input, shape index: {}]
  %s3 = inlined_call_operand.vmem [shape: bf16[512,256], index: 3, kind: input, shape index: {}]
  %s4 = inlined_call_operand.vmem [shape: f32[1,256], index: 4, kind: input, shape index: {}]
  %s5 = inlined_call_operand.vmem [shape: bf16[8,256], index: 5, kind: output, shape index: {}]
  %s6 = sld [smem:[#allocation0]]
  $region30: #{_lambda_.31} parent=0
    _
  %s8 = ssub.s32 1, %s6
  %s9 = scalar_select 0, %s8, %s6
  // Predicated region
  $region2: #{_lambda_.31} parent=0 // pred_check
    _
  $region3: #{_lambda_.31} parent=0 // pred_check_branch
    %11 = sbr.rel (0) target = $region5
  $region4: #{_lambda_.31} parent=0 // pred_region
    _
  $region5: #{_lambda_.31} parent=0 // pred_fallthru
    _
  // Predicated region
  $region6: #{_lambda_.31} parent=0 // pred_check
    _
  $region7: #{_lambda_.31} parent=0 // pred_check_branch
    %13 = sbr.rel (0) target = $region9
  $region8: #{_lambda_.31} parent=0 // pred_region
    _
  $region9: #{_lambda_.31} parent=0 // pred_fallthru
    _
  // Predicated region
  $region10: #{_lambda_.31} parent=0 // pred_check
    _
  $region11: #{_lambda_.31} parent=0 // pred_check_branch
    %15 = sbr.rel (0) target = $region13
  $region12: #{_lambda_.31} parent=0 // pred_region
    _
  $region13: #{_lambda_.31} parent=0 // pred_fallthru
    _
  // Predicated region
  $region14: #{_lambda_.31} parent=0 // pred_check
    _
  $region15: #{_lambda_.31} parent=0 // pred_check_branch
    %17 = sbr.rel (0) target = $region17
  $region16: #{_lambda_.31} parent=0 // pred_region
    _
  $region17: #{_lambda_.31} parent=0 // pred_fallthru
    _
  // Predicated region
  $region18: #{_lambda_.31} parent=0 // pred_check
    _
  $region19: #{_lambda_.31} parent=0 // pred_check_branch
    %19 = sbr.rel (0) target = $region21
  $region20: #{_lambda_.31} parent=0 // pred_region
    _
  $region21: #{_lambda_.31} parent=0 // pred_fallthru
    _
  %v21 = vld [vmem:[%s0] sm:$0xf]
  %v22 = vld [vmem:[%s1] sm:$0xff]
  %v23 = vld [vmem:[%s1 + $0x8] sm:$0xff]
  %v24 = vld [vmem:[%s1 + $0x10] sm:$0xff]
  %v25 = vld [vmem:[%s1 + $0x18] sm:$0xff]
  %v26 = vld [vmem:[%s1 + $0x20] sm:$0xff]
  %v27 = vld [vmem:[%s1 + $0x28] sm:$0xff]
  %v28 = vld [vmem:[%s1 + $0x30] sm:$0xff]
  %v29 = vld [vmem:[%s1 + $0x38] sm:$0xff]
  %v30 = vld [vmem:[%s1 + $0x40] sm:$0xff]
  %v31 = vld [vmem:[%s1 + $0x48] sm:$0xff]
  %v32 = vld [vmem:[%s1 + $0x50] sm:$0xff]
  %v33 = vld [vmem:[%s1 + $0x58] sm:$0xff]
  %v34 = vld [vmem:[%s1 + $0x60] sm:$0xff]
  %v35 = vld [vmem:[%s1 + $0x68] sm:$0xff]
  %v36 = vld [vmem:[%s1 + $0x70] sm:$0xff]
  %v37 = vld [vmem:[%s1 + $0x78] sm:$0xff]
  %v38 = vld [vmem:[%s2] sm:$0xff]
  %v39 = vld [vmem:[%s2 + $0x8] sm:$0xff]
  %v40 = vld [vmem:[%s3] sm:$0xff]
  %v41 = vld [vmem:[%s3 + $0x8] sm:$0xff]
  %v42 = vld [vmem:[%s3 + $0x10] sm:$0xff]
  %v43 = vld [vmem:[%s3 + $0x18] sm:$0xff]
  %v44 = vld [vmem:[%s3 + $0x20] sm:$0xff]
  %v45 = vld [vmem:[%s3 + $0x28] sm:$0xff]
  %v46 = vld [vmem:[%s3 + $0x30] sm:$0xff]
  %v47 = vld [vmem:[%s3 + $0x38] sm:$0xff]
  %v48 = vld [vmem:[%s3 + $0x40] sm:$0xff]
  %v49 = vld [vmem:[%s3 + $0x48] sm:$0xff]
  %v50 = vld [vmem:[%s3 + $0x50] sm:$0xff]
  %v51 = vld [vmem:[%s3 + $0x58] sm:$0xff]
  %v52 = vld [vmem:[%s3 + $0x60] sm:$0xff]
  %v53 = vld [vmem:[%s3 + $0x68] sm:$0xff]
  %v54 = vld [vmem:[%s3 + $0x70] sm:$0xff]
  %v55 = vld [vmem:[%s3 + $0x78] sm:$0xff]
  %v56 = vld [vmem:[%s3 + $0x80] sm:$0xff]
  %v57 = vld [vmem:[%s3 + $0x88] sm:$0xff]
  %v58 = vld [vmem:[%s3 + $0x90] sm:$0xff]
  %v59 = vld [vmem:[%s3 + $0x98] sm:$0xff]
  %v60 = vld [vmem:[%s3 + $0xa0] sm:$0xff]
  %v61 = vld [vmem:[%s3 + $0xa8] sm:$0xff]
  %v62 = vld [vmem:[%s3 + $0xb0] sm:$0xff]
  %v63 = vld [vmem:[%s3 + $0xb8] sm:$0xff]
  %v64 = vld [vmem:[%s3 + $0xc0] sm:$0xff]
  %v65 = vld [vmem:[%s3 + $0xc8] sm:$0xff]
  %v66 = vld [vmem:[%s3 + $0xd0] sm:$0xff]
  %v67 = vld [vmem:[%s3 + $0xd8] sm:$0xff]
  %v68 = vld [vmem:[%s3 + $0xe0] sm:$0xff]
  %v69 = vld [vmem:[%s3 + $0xe8] sm:$0xff]
  %v70 = vld [vmem:[%s3 + $0xf0] sm:$0xff]
  %v71 = vld [vmem:[%s3 + $0xf8] sm:$0xff]
  %v72 = vld [vmem:[%s3 + $0x100] sm:$0xff]
  %v73 = vld [vmem:[%s3 + $0x108] sm:$0xff]
  %v74 = vld [vmem:[%s3 + $0x110] sm:$0xff]
  %v75 = vld [vmem:[%s3 + $0x118] sm:$0xff]
  %v76 = vld [vmem:[%s3 + $0x120] sm:$0xff]
  %v77 = vld [vmem:[%s3 + $0x128] sm:$0xff]
  %v78 = vld [vmem:[%s3 + $0x130] sm:$0xff]
  %v79 = vld [vmem:[%s3 + $0x138] sm:$0xff]
  %v80 = vld [vmem:[%s3 + $0x140] sm:$0xff]
  %v81 = vld [vmem:[%s3 + $0x148] sm:$0xff]
  %v82 = vld [vmem:[%s3 + $0x150] sm:$0xff]
  %v83 = vld [vmem:[%s3 + $0x158] sm:$0xff]
  %v84 = vld [vmem:[%s3 + $0x160] sm:$0xff]
  %v85 = vld [vmem:[%s3 + $0x168] sm:$0xff]
  %v86 = vld [vmem:[%s3 + $0x170] sm:$0xff]
  %v87 = vld [vmem:[%s3 + $0x178] sm:$0xff]
  %v88 = vld [vmem:[%s3 + $0x180] sm:$0xff]
  %v89 = vld [vmem:[%s3 + $0x188] sm:$0xff]
  %v90 = vld [vmem:[%s3 + $0x190] sm:$0xff]
  %v91 = vld [vmem:[%s3 + $0x198] sm:$0xff]
  %v92 = vld [vmem:[%s3 + $0x1a0] sm:$0xff]
  %v93 = vld [vmem:[%s3 + $0x1a8] sm:$0xff]
  %v94 = vld [vmem:[%s3 + $0x1b0] sm:$0xff]
  %v95 = vld [vmem:[%s3 + $0x1b8] sm:$0xff]
  %v96 = vld [vmem:[%s3 + $0x1c0] sm:$0xff]
  %v97 = vld [vmem:[%s3 + $0x1c8] sm:$0xff]
  %v98 = vld [vmem:[%s3 + $0x1d0] sm:$0xff]
  %v99 = vld [vmem:[%s3 + $0x1d8] sm:$0xff]
  %v100 = vld [vmem:[%s3 + $0x1e0] sm:$0xff]
  %v101 = vld [vmem:[%s3 + $0x1e8] sm:$0xff]
  %v102 = vld [vmem:[%s3 + $0x1f0] sm:$0xff]
  %v103 = vld [vmem:[%s3 + $0x1f8] sm:$0xff]
  %v106 = vunpack.c.l.b16 %v38
  %v107 = vunpack.c.h.b16 %v38
  %v108 = vunpack.c.l.b16 %v39
  %v109 = vunpack.c.h.b16 %v39
  %v110 = vpack.c.b16 %v106, %v106
  %v111 = vpack.c.b16 %v107, %v107
  %v112 = vpack.c.b16 %v108, %v108
  %v113 = vpack.c.b16 %v109, %v109
  %v182 = vunpack.c.l.b16 %v40
  %v183 = vunpack.c.h.b16 %v40
  %v184 = vunpack.c.l.b16 %v41
  %v185 = vunpack.c.h.b16 %v41
  %v186 = vunpack.c.l.b16 %v42
  %v187 = vunpack.c.h.b16 %v42
  %v188 = vunpack.c.l.b16 %v43
  %v189 = vunpack.c.h.b16 %v43
  %v190 = vunpack.c.l.b16 %v44
  %v191 = vunpack.c.h.b16 %v44
  %v192 = vunpack.c.l.b16 %v45
  %v193 = vunpack.c.h.b16 %v45
  %v194 = vunpack.c.l.b16 %v46
  %v195 = vunpack.c.h.b16 %v46
  %v196 = vunpack.c.l.b16 %v47
  %v197 = vunpack.c.h.b16 %v47
  %v198 = vunpack.c.l.b16 %v48
  %v199 = vunpack.c.h.b16 %v48
  %v200 = vunpack.c.l.b16 %v49
  %v201 = vunpack.c.h.b16 %v49
  %v202 = vunpack.c.l.b16 %v50
  %v203 = vunpack.c.h.b16 %v50
  %v204 = vunpack.c.l.b16 %v51
  %v205 = vunpack.c.h.b16 %v51
  %v206 = vunpack.c.l.b16 %v52
  %v207 = vunpack.c.h.b16 %v52
  %v208 = vunpack.c.l.b16 %v53
  %v209 = vunpack.c.h.b16 %v53
  %v210 = vunpack.c.l.b16 %v54
  %v211 = vunpack.c.h.b16 %v54
  %v212 = vunpack.c.l.b16 %v55
  %v213 = vunpack.c.h.b16 %v55
  %v214 = vunpack.c.l.b16 %v56
  %v215 = vunpack.c.h.b16 %v56
  %v216 = vunpack.c.l.b16 %v57
  %v217 = vunpack.c.h.b16 %v57
  %v218 = vunpack.c.l.b16 %v58
  %v219 = vunpack.c.h.b16 %v58
  %v220 = vunpack.c.l.b16 %v59
  %v221 = vunpack.c.h.b16 %v59
  %v222 = vunpack.c.l.b16 %v60
  %v223 = vunpack.c.h.b16 %v60
  %v224 = vunpack.c.l.b16 %v61
  %v225 = vunpack.c.h.b16 %v61
  %v226 = vunpack.c.l.b16 %v62
  %v227 = vunpack.c.h.b16 %v62
  %v228 = vunpack.c.l.b16 %v63
  %v229 = vunpack.c.h.b16 %v63
  %v230 = vunpack.c.l.b16 %v64
  %v231 = vunpack.c.h.b16 %v64
  %v232 = vunpack.c.l.b16 %v65
  %v233 = vunpack.c.h.b16 %v65
  %v234 = vunpack.c.l.b16 %v66
  %v235 = vunpack.c.h.b16 %v66
  %v236 = vunpack.c.l.b16 %v67
  %v237 = vunpack.c.h.b16 %v67
  %v238 = vunpack.c.l.b16 %v68
  %v239 = vunpack.c.h.b16 %v68
  %v240 = vunpack.c.l.b16 %v69
  %v241 = vunpack.c.h.b16 %v69
  %v242 = vunpack.c.l.b16 %v70
  %v243 = vunpack.c.h.b16 %v70
  %v244 = vunpack.c.l.b16 %v71
  %v245 = vunpack.c.h.b16 %v71
  %v246 = vunpack.c.l.b16 %v72
  %v247 = vunpack.c.h.b16 %v72
  %v248 = vunpack.c.l.b16 %v73
  %v249 = vunpack.c.h.b16 %v73
  %v250 = vunpack.c.l.b16 %v74
  %v251 = vunpack.c.h.b16 %v74
  %v252 = vunpack.c.l.b16 %v75
  %v253 = vunpack.c.h.b16 %v75
  %v254 = vunpack.c.l.b16 %v76
  %v255 = vunpack.c.h.b16 %v76
  %v256 = vunpack.c.l.b16 %v77
  %v257 = vunpack.c.h.b16 %v77
  %v258 = vunpack.c.l.b16 %v78
  %v259 = vunpack.c.h.b16 %v78
  %v260 = vunpack.c.l.b16 %v79
  %v261 = vunpack.c.h.b16 %v79
  %v262 = vunpack.c.l.b16 %v80
  %v263 = vunpack.c.h.b16 %v80
  %v264 = vunpack.c.l.b16 %v81
  %v265 = vunpack.c.h.b16 %v81
  %v266 = vunpack.c.l.b16 %v82
  %v267 = vunpack.c.h.b16 %v82
  %v268 = vunpack.c.l.b16 %v83
  %v269 = vunpack.c.h.b16 %v83
  %v270 = vunpack.c.l.b16 %v84
  %v271 = vunpack.c.h.b16 %v84
  %v272 = vunpack.c.l.b16 %v85
  %v273 = vunpack.c.h.b16 %v85
  %v274 = vunpack.c.l.b16 %v86
  %v275 = vunpack.c.h.b16 %v86
  %v276 = vunpack.c.l.b16 %v87
  %v277 = vunpack.c.h.b16 %v87
  %v278 = vunpack.c.l.b16 %v88
  %v279 = vunpack.c.h.b16 %v88
  %v280 = vunpack.c.l.b16 %v89
  %v281 = vunpack.c.h.b16 %v89
  %v282 = vunpack.c.l.b16 %v90
  %v283 = vunpack.c.h.b16 %v90
  %v284 = vunpack.c.l.b16 %v91
  %v285 = vunpack.c.h.b16 %v91
  %v286 = vunpack.c.l.b16 %v92
  %v287 = vunpack.c.h.b16 %v92
  %v288 = vunpack.c.l.b16 %v93
  %v289 = vunpack.c.h.b16 %v93
  %v290 = vunpack.c.l.b16 %v94
  %v291 = vunpack.c.h.b16 %v94
  %v292 = vunpack.c.l.b16 %v95
  %v293 = vunpack.c.h.b16 %v95
  %v294 = vunpack.c.l.b16 %v96
  %v295 = vunpack.c.h.b16 %v96
  %v296 = vunpack.c.l.b16 %v97
  %v297 = vunpack.c.h.b16 %v97
  %v298 = vunpack.c.l.b16 %v98
  %v299 = vunpack.c.h.b16 %v98
  %v300 = vunpack.c.l.b16 %v99
  %v301 = vunpack.c.h.b16 %v99
  %v302 = vunpack.c.l.b16 %v100
  %v303 = vunpack.c.h.b16 %v100
  %v304 = vunpack.c.l.b16 %v101
  %v305 = vunpack.c.h.b16 %v101
  %v306 = vunpack.c.l.b16 %v102
  %v307 = vunpack.c.h.b16 %v102
  %v308 = vunpack.c.l.b16 %v103
  %v309 = vunpack.c.h.b16 %v103
  %v310 = vpack.c.b16 %v184, %v182
  %v311 = vpack.c.b16 %v185, %v183
  %v312 = vpack.c.b16 %v188, %v186
  %v313 = vpack.c.b16 %v189, %v187
  %v314 = vpack.c.b16 %v192, %v190
  %v315 = vpack.c.b16 %v193, %v191
  %v316 = vpack.c.b16 %v196, %v194
  %v317 = vpack.c.b16 %v197, %v195
  %v318 = vpack.c.b16 %v200, %v198
  %v319 = vpack.c.b16 %v201, %v199
  %v320 = vpack.c.b16 %v204, %v202
  %v321 = vpack.c.b16 %v205, %v203
  %v322 = vpack.c.b16 %v208, %v206
  %v323 = vpack.c.b16 %v209, %v207
  %v324 = vpack.c.b16 %v212, %v210
  %v325 = vpack.c.b16 %v213, %v211
  %v326 = vpack.c.b16 %v216, %v214
  %v327 = vpack.c.b16 %v217, %v215
  %v328 = vpack.c.b16 %v220, %v218
  %v329 = vpack.c.b16 %v221, %v219
  %v330 = vpack.c.b16 %v224, %v222
  %v331 = vpack.c.b16 %v225, %v223
  %v332 = vpack.c.b16 %v228, %v226
  %v333 = vpack.c.b16 %v229, %v227
  %v334 = vpack.c.b16 %v232, %v230
  %v335 = vpack.c.b16 %v233, %v231
  %v336 = vpack.c.b16 %v236, %v234
  %v337 = vpack.c.b16 %v237, %v235
  %v338 = vpack.c.b16 %v240, %v238
  %v339 = vpack.c.b16 %v241, %v239
  %v340 = vpack.c.b16 %v244, %v242
  %v341 = vpack.c.b16 %v245, %v243
  %v342 = vpack.c.b16 %v248, %v246
  %v343 = vpack.c.b16 %v249, %v247
  %v344 = vpack.c.b16 %v252, %v250
  %v345 = vpack.c.b16 %v253, %v251
  %v346 = vpack.c.b16 %v256, %v254
  %v347 = vpack.c.b16 %v257, %v255
  %v348 = vpack.c.b16 %v260, %v258
  %v349 = vpack.c.b16 %v261, %v259
  %v350 = vpack.c.b16 %v264, %v262
  %v351 = vpack.c.b16 %v265, %v263
  %v352 = vpack.c.b16 %v268, %v266
  %v353 = vpack.c.b16 %v269, %v267
  %v354 = vpack.c.b16 %v272, %v270
  %v355 = vpack.c.b16 %v273, %v271
  %v356 = vpack.c.b16 %v276, %v274
  %v357 = vpack.c.b16 %v277, %v275
  %v358 = vpack.c.b16 %v280, %v278
  %v359 = vpack.c.b16 %v281, %v279
  %v360 = vpack.c.b16 %v284, %v282
  %v361 = vpack.c.b16 %v285, %v283
  %v362 = vpack.c.b16 %v288, %v286
  %v363 = vpack.c.b16 %v289, %v287
  %v364 = vpack.c.b16 %v292, %v290
  %v365 = vpack.c.b16 %v293, %v291
  %v366 = vpack.c.b16 %v296, %v294
  %v367 = vpack.c.b16 %v297, %v295
  %v368 = vpack.c.b16 %v300, %v298
  %v369 = vpack.c.b16 %v301, %v299
  %v370 = vpack.c.b16 %v304, %v302
  %v371 = vpack.c.b16 %v305, %v303
  %v372 = vpack.c.b16 %v308, %v306
  %v373 = vpack.c.b16 %v309, %v307
  %438 = vmatprep.subr.bf16.mxu0 %v311
  %439 = vmatpush1.bf16.msra.mxu0 %v310
  %440 = vmatprep.subr.bf16.mxu0 %v313
  %441 = vmatpush1.bf16.msra.mxu0 %v312
  %442 = vmatprep.subr.bf16.mxu0 %v315
  %443 = vmatpush1.bf16.msra.mxu0 %v314
  %444 = vmatprep.subr.bf16.mxu0 %v317
  %445 = vmatpush1.bf16.msra.mxu0 %v316
  %446 = vmatprep.subr.bf16.mxu0 %v319
  %447 = vmatpush1.bf16.msra.mxu0 %v318
  %448 = vmatprep.subr.bf16.mxu0 %v321
  %449 = vmatpush1.bf16.msra.mxu0 %v320
  %450 = vmatprep.subr.bf16.mxu0 %v323
  %451 = vmatpush1.bf16.msra.mxu0 %v322
  %452 = vmatprep.subr.bf16.mxu0 %v325
  %453 = vmatpush1.bf16.msra.mxu0 %v324
  %454 = vmatprep.subr.bf16.mxu0 %v327
  %455 = vmatpush1.bf16.msra.mxu0 %v326
  %456 = vmatprep.subr.bf16.mxu0 %v329
  %457 = vmatpush1.bf16.msra.mxu0 %v328
  %458 = vmatprep.subr.bf16.mxu0 %v331
  %459 = vmatpush1.bf16.msra.mxu0 %v330
  %460 = vmatprep.subr.bf16.mxu0 %v333
  %461 = vmatpush1.bf16.msra.mxu0 %v332
  %462 = vmatprep.subr.bf16.mxu0 %v335
  %463 = vmatpush1.bf16.msra.mxu0 %v334
  %464 = vmatprep.subr.bf16.mxu0 %v337
  %465 = vmatpush1.bf16.msra.mxu0 %v336
  %466 = vmatprep.subr.bf16.mxu0 %v339
  %467 = vmatpush1.bf16.msra.mxu0 %v338
  %468 = vmatprep.subr.bf16.mxu0 %v341
  %469 = vmatpush1.bf16.msra.mxu0 %v340
  %470 = vmatprep.mubr.bf16.mxu0 %v111
  %471 = vmatmul.mubr.bf16.gmra.mrb[0].mxu0 %v110
  %v472 = vpop.f32.mrb[0].mxu0
  %v473 = vadd.f32 0.0, %v472
  %v474 = vpop.f32.mrb[0].mxu0
  %v475 = vadd.f32 0.0, %v474
  %v476 = vpop.f32.mrb[0].mxu0
  %v477 = vpop.f32.mrb[0].mxu0
  %478 = vdwg.mxu0
  %479 = vmatprep.subr.bf16.mxu0 %v343
  %480 = vmatpush1.bf16.msra.mxu0 %v342
  %481 = vmatprep.subr.bf16.mxu0 %v345
  %482 = vmatpush1.bf16.msra.mxu0 %v344
  %483 = vmatprep.subr.bf16.mxu0 %v347
  %484 = vmatpush1.bf16.msra.mxu0 %v346
  %485 = vmatprep.subr.bf16.mxu0 %v349
  %486 = vmatpush1.bf16.msra.mxu0 %v348
  %487 = vmatprep.subr.bf16.mxu0 %v351
  %488 = vmatpush1.bf16.msra.mxu0 %v350
  %489 = vmatprep.subr.bf16.mxu0 %v353
  %490 = vmatpush1.bf16.msra.mxu0 %v352
  %491 = vmatprep.subr.bf16.mxu0 %v355
  %492 = vmatpush1.bf16.msra.mxu0 %v354
  %493 = vmatprep.subr.bf16.mxu0 %v357
  %494 = vmatpush1.bf16.msra.mxu0 %v356
  %495 = vmatprep.subr.bf16.mxu0 %v359
  %496 = vmatpush1.bf16.msra.mxu0 %v358
  %497 = vmatprep.subr.bf16.mxu0 %v361
  %498 = vmatpush1.bf16.msra.mxu0 %v360
  %499 = vmatprep.subr.bf16.mxu0 %v363
  %500 = vmatpush1.bf16.msra.mxu0 %v362
  %501 = vmatprep.subr.bf16.mxu0 %v365
  %502 = vmatpush1.bf16.msra.mxu0 %v364
  %503 = vmatprep.subr.bf16.mxu0 %v367
  %504 = vmatpush1.bf16.msra.mxu0 %v366
  %505 = vmatprep.subr.bf16.mxu0 %v369
  %506 = vmatpush1.bf16.msra.mxu0 %v368
  %507 = vmatprep.subr.bf16.mxu0 %v371
  %508 = vmatpush1.bf16.msra.mxu0 %v370
  %509 = vmatprep.subr.bf16.mxu0 %v373
  %510 = vmatpush1.bf16.msra.mxu0 %v372
  %511 = vmatprep.mubr.bf16.mxu0 %v113
  %512 = vmatmul.mubr.bf16.gmra.mrb[0].mxu0 %v112
  %v513 = vpop.f32.mrb[0].mxu0
  %v514 = vadd.f32 %v473, %v513
  %v515 = vpop.f32.mrb[0].mxu0
  %v516 = vadd.f32 %v475, %v515
  %v517 = vpop.f32.mrb[0].mxu0
  %v518 = vpop.f32.mrb[0].mxu0
  %519 = vdwg.mxu0
  %v536 = vunpack.c.l.b16 %v22
  %v537 = vunpack.c.h.b16 %v22
  %v538 = vunpack.c.l.b16 %v23
  %v539 = vunpack.c.h.b16 %v23
  %v540 = vunpack.c.l.b16 %v24
  %v541 = vunpack.c.h.b16 %v24
  %v542 = vunpack.c.l.b16 %v25
  %v543 = vunpack.c.h.b16 %v25
  %v544 = vunpack.c.l.b16 %v26
  %v545 = vunpack.c.h.b16 %v26
  %v546 = vunpack.c.l.b16 %v27
  %v547 = vunpack.c.h.b16 %v27
  %v548 = vunpack.c.l.b16 %v28
  %v549 = vunpack.c.h.b16 %v28
  %v550 = vunpack.c.l.b16 %v29
  %v551 = vunpack.c.h.b16 %v29
  %v552 = vunpack.c.l.b16 %v30
  %v553 = vunpack.c.h.b16 %v30
  %v554 = vunpack.c.l.b16 %v31
  %v555 = vunpack.c.h.b16 %v31
  %v556 = vunpack.c.l.b16 %v32
  %v557 = vunpack.c.h.b16 %v32
  %v558 = vunpack.c.l.b16 %v33
  %v559 = vunpack.c.h.b16 %v33
  %v560 = vunpack.c.l.b16 %v34
  %v561 = vunpack.c.h.b16 %v34
  %v562 = vunpack.c.l.b16 %v35
  %v563 = vunpack.c.h.b16 %v35
  %v564 = vunpack.c.l.b16 %v36
  %v565 = vunpack.c.h.b16 %v36
  %v566 = vunpack.c.l.b16 %v37
  %v567 = vunpack.c.h.b16 %v37
  %v568 = vpack.c.b16 %v538, %v536
  %v569 = vpack.c.b16 %v539, %v537
  %v570 = vpack.c.b16 %v542, %v540
  %v571 = vpack.c.b16 %v543, %v541
  %v572 = vpack.c.b16 %v546, %v544
  %v573 = vpack.c.b16 %v547, %v545
  %v574 = vpack.c.b16 %v550, %v548
  %v575 = vpack.c.b16 %v551, %v549
  %v576 = vpack.c.b16 %v554, %v552
  %v577 = vpack.c.b16 %v555, %v553
  %v578 = vpack.c.b16 %v558, %v556
  %v579 = vpack.c.b16 %v559, %v557
  %v580 = vpack.c.b16 %v562, %v560
  %v581 = vpack.c.b16 %v563, %v561
  %v582 = vpack.c.b16 %v566, %v564
  %v583 = vpack.c.b16 %v567, %v565
  %600 = vmatprep.subr.bf16.mxu0 %v569
  %601 = vmatpush1.bf16.msra.mxu0 %v568
  %602 = vmatprep.subr.bf16.mxu0 %v571
  %603 = vmatpush1.bf16.msra.mxu0 %v570
  %604 = vmatprep.subr.bf16.mxu0 %v573
  %605 = vmatpush1.bf16.msra.mxu0 %v572
  %606 = vmatprep.subr.bf16.mxu0 %v575
  %607 = vmatpush1.bf16.msra.mxu0 %v574
  %608 = vmatprep.subr.bf16.mxu0 %v577
  %609 = vmatpush1.bf16.msra.mxu0 %v576
  %610 = vmatprep.subr.bf16.mxu0 %v579
  %611 = vmatpush1.bf16.msra.mxu0 %v578
  %612 = vmatprep.subr.bf16.mxu0 %v581
  %613 = vmatpush1.bf16.msra.mxu0 %v580
  %614 = vmatprep.subr.bf16.mxu0 %v583
  %615 = vmatpush1.bf16.msra.mxu0 %v582
  %616 = vmatprep.subr.bf16.mxu0 0
  %617 = vmatpush1.bf16.msra.mxu0 0
  %618 = vmatprep.subr.bf16.mxu0 0
  %619 = vmatpush1.bf16.msra.mxu0 0
  %620 = vmatprep.subr.bf16.mxu0 0
  %621 = vmatpush1.bf16.msra.mxu0 0
  %622 = vmatprep.subr.bf16.mxu0 0
  %623 = vmatpush1.bf16.msra.mxu0 0
  %624 = vmatprep.subr.bf16.mxu0 0
  %625 = vmatpush1.bf16.msra.mxu0 0
  %626 = vmatprep.subr.bf16.mxu0 0
  %627 = vmatpush1.bf16.msra.mxu0 0
  %628 = vmatprep.subr.bf16.mxu0 0
  %629 = vmatpush1.bf16.msra.mxu0 0
  %630 = vmatprep.subr.bf16.mxu0 0
  %631 = vmatpush1.bf16.msra.mxu0 0
  %632 = vmatprep.mubr.bf16.mxu0 0
  %633 = vmatmul.mubr.bf16.gmra.mrb[0].mxu0 %v21
  %v634 = vpop.f32.mrb[0].mxu0
  %v635 = vadd.f32 %v514, %v634
  %v636 = vpop.f32.mrb[0].mxu0
  %v637 = vadd.f32 %v516, %v636
  %v638 = vpop.f32.mrb[0].mxu0
  %v639 = vpop.f32.mrb[0].mxu0
  %640 = vdwg.mxu0
  %v641 = vld [vmem:[%s4] sm:$0x3]
  %v643 = vlaneseq
  %v644 = vshrl.u32 %v643, 7
  %v645 = vsub.s32 0, %v644
  %v646 = vrot.slane %v641, %v645
  %v647 = vlaneseq
  %v648 = vshrl.u32 %v647, 7
  %v649 = vsub.s32 1, %v648
  %v650 = vrot.slane %v641, %v649
  %v653 = vadd.f32 %v635, %v646
  %v654 = vadd.f32 %v637, %v650
  %v655 = vmax.f32 %v653, 0.0
  %v656 = vmax.f32 %v654, 0.0
  %v657 = vpack.c.bf16 %v655, %v655
  %v658 = vpack.c.bf16 %v656, %v656
  %v661 = vunpack.c.l.b16 %v657
  %v662 = vunpack.c.l.b16 %v658
  %v663 = vpack.c.b16 %v662, %v661
  %665 = vst [vmem:[%s5] sm:$0xff] %v663
  // Predicated region
  $region22: #{_lambda_.31} parent=0 // pred_check
    _
  $region23: #{_lambda_.31} parent=0 // pred_check_branch
    %667 = sbr.rel (0) target = $region25
  $region24: #{_lambda_.31} parent=0 // pred_region
    _
  $region25: #{_lambda_.31} parent=0 // pred_fallthru
    _
  // Predicated region
  $region26: #{_lambda_.31} parent=0 // pred_check
    _
  $region27: #{_lambda_.31} parent=0 // pred_check_branch
    %669 = sbr.rel (0) target = $region29
  $region28: #{_lambda_.31} parent=0 // pred_region
    _
  $region29: #{_lambda_.31} parent=0 // pred_fallthru
    _

</llo_original>
